<compile_context>
chip_gen: v5e
topology: v5e:2x2
jax: 0.10.0
libtpu: 0.0.40
codegen_flags: <defaults>
</compile_context>

<pallas_src>
import math

import jax
import jax.numpy as jnp
from jax.experimental import pallas as pl
from jax.experimental.pallas import tpu as pltpu


def make_msda_kernel(spatial_shapes, n_heads, n_levels, n_points, d_head):
    """Build the kernel. spatial_shapes is a static tuple of (H, W)."""
    level_starts = [0]
    for (h_, w_) in spatial_shapes:
        level_starts.append(level_starts[-1] + h_ * w_)
    HP = n_heads * n_points          # columns per (level, coordinate)
    LP = n_levels * n_points         # softmax width per head

    def kernel(q_ref, ref_ref, v_ref, m_ref,
               wv_ref, bv_ref, wo_ref, bo_ref, wa_ref, ba_ref, wout_ref, bout_ref,
               out_ref, vcache_ref):
        # ---- value projection + masked fill: once per batch element ----------
        @pl.when(pl.program_id(1) == 0)
        def _():
            v = jnp.dot(v_ref[0], wv_ref[...], preferred_element_type=jnp.float32)
            v = (v + bv_ref[...]) * (1.0 - m_ref[0])
            vcache_ref[...] = v.astype(jnp.bfloat16)

        q = q_ref[0]            # (tq, C)   bf16
        refp = ref_ref[0]       # (tq, 2L)  f32
        tq = q.shape[0]

        # ---- sampling-offset / attention-weight projections (bf16 MXU) -------
        # so columns are laid out (level, xy, head, point) -- see host-side permute.
        so = jnp.dot(q, wo_ref[...], preferred_element_type=jnp.float32) + bo_ref[...]
        aw = jnp.dot(q, wa_ref[...], preferred_element_type=jnp.float32) + ba_ref[...]

        # ---- per-head softmax over (levels * points), f32 ---------------------
        attn = []
        for h in range(n_heads):
            logits = aw[:, h * LP:(h + 1) * LP]
            mx = jnp.max(logits, axis=-1, keepdims=True)
            ex = jnp.exp(logits - mx)
            attn.append(ex * pl.reciprocal(jnp.sum(ex, axis=-1, keepdims=True),
                                           approx=True))

        head_acc = [jnp.zeros((tq, d_head), jnp.float32) for _ in range(n_heads)]

        for l, (h_sp, w_sp) in enumerate(spatial_shapes):
            n_l = h_sp * w_sp
            start = level_starts[l]
            base = l * 2 * HP

            # ---- lane-dense coordinate math across all (head, point) columns --
            ref_x = refp[:, 2 * l:2 * l + 1]          # (tq, 1)
            ref_y = refp[:, 2 * l + 1:2 * l + 2]
            # grid_sample(align_corners=False) pixel coords; the 1/W (1/H) offset
            # normalizer cancels against the *W (*H) pixel scale.
            ix = ref_x * float(w_sp) + so[:, base:base + HP] - 0.5            # (tq, HP)
            iy = ref_y * float(h_sp) + so[:, base + HP:base + 2 * HP] - 0.5   # (tq, HP)
            x0f = jnp.floor(ix)
            y0f = jnp.floor(iy)
            fx = ix - x0f
            fy = iy - y0f
            x0 = x0f.astype(jnp.int32)
            y0 = y0f.astype(jnp.int32)
            x1 = x0 + 1
            y1 = y0 + 1
            inb_x0 = ((x0 >= 0) & (x0 <= w_sp - 1)).astype(jnp.float32)
            inb_x1 = ((x1 >= 0) & (x1 <= w_sp - 1)).astype(jnp.float32)
            inb_y0 = ((y0 >= 0) & (y0 <= h_sp - 1)).astype(jnp.float32)
            inb_y1 = ((y1 >= 0) & (y1 <= h_sp - 1)).astype(jnp.float32)
            mwx0 = (1.0 - fx) * inb_x0
            mwx1 = fx * inb_x1
            mwy0 = (1.0 - fy) * inb_y0
            mwy1 = fy * inb_y1
            flat00 = y0 * w_sp + x0                                           # (tq, HP) int32

            iota2 = jax.lax.broadcasted_iota(jnp.int32, (tq, n_l), 1)

            for h in range(n_heads):
                gmat = jnp.zeros((tq, n_l), jnp.float32)
                for p in range(n_points):
                    j = h * n_points + p
                    a_p = attn[h][:, l * n_points + p:l * n_points + p + 1]   # (tq, 1)
                    awx0 = a_p * mwx0[:, j:j + 1]
                    awx1 = a_p * mwx1[:, j:j + 1]
                    wy0 = mwy0[:, j:j + 1]
                    wy1 = mwy1[:, j:j + 1]
                    f00 = flat00[:, j:j + 1]
                    # un-clipped flat index: out-of-range never matches, wrapped-in-range
                    # positions carry zero weight (inb folded into mwx*/mwy*).
                    gmat = gmat + jnp.where(f00 == iota2, awx0 * wy0, 0.0)
                    gmat = gmat + jnp.where(f00 + 1 == iota2, awx1 * wy0, 0.0)
                    gmat = gmat + jnp.where(f00 + w_sp == iota2, awx0 * wy1, 0.0)
                    gmat = gmat + jnp.where(f00 + w_sp + 1 == iota2, awx1 * wy1, 0.0)

                v_hl = vcache_ref[start:start + n_l, h * d_head:(h + 1) * d_head]  # bf16
                head_acc[h] = head_acc[h] + jnp.dot(
                    gmat.astype(jnp.bfloat16), v_hl,
                    preferred_element_type=jnp.float32)

        # ---- single fused output projection -----------------------------------
        acc = jnp.concatenate(head_acc, axis=-1)          # (tq, C) f32
        out = jnp.dot(acc.astype(jnp.bfloat16), wout_ref[...],
                      preferred_element_type=jnp.float32) + bout_ref[...]
        out_ref[0] = out.astype(out_ref.dtype)

    return kernel


def ms_deform_attn_pallas(params, query, reference_points, value, spatial_shapes,
                          value_mask, n_heads, n_levels, n_points, tq=128):
    # TODO(synk): reference_points with last dim == 4 (box form) is not implemented;
    #             only the 2-d point form of the PyTorch forward is covered.
    bs, lq, c = query.shape
    lv = value.shape[1]
    d_head = c // n_heads
    H, L, P = n_heads, n_levels, n_points
    HLP = H * L * P

    # ---- len_q tiling (bf16 query blocks -> keep tq a multiple of 16) --------
    tq = max(16, (int(tq) // 16) * 16)
    tq = min(tq, ((lq + 15) // 16) * 16)
    lq_pad = ((lq + tq - 1) // tq) * tq
    n_qt = lq_pad // tq
    if lq_pad != lq:
        query = jnp.pad(query, ((0, 0), (0, lq_pad - lq), (0, 0)))
        reference_points = jnp.pad(reference_points,
                                   ((0, 0), (0, lq_pad - lq), (0, 0), (0, 0)),
                                   constant_values=0.5)

    ref_flat = reference_points.reshape(bs, lq_pad, L * 2).astype(jnp.float32)
    maskf = value_mask.astype(jnp.float32)[..., None]                # (bs, Lv, 1)

    # bf16 activations / weights for MXU + DMA savings; biases stay f32.
    q_bf = query.astype(jnp.bfloat16)
    v_bf = value.astype(jnp.bfloat16)
    wv = params["Wv"].astype(jnp.bfloat16)
    wa = params["Wa"].astype(jnp.bfloat16)
    wout = params["Wout"].astype(jnp.bfloat16)
    # permute sampling-offset columns (h, l, p, xy) -> (l, xy, h, p) so each level's
    # x/y columns are contiguous => lane-dense coordinate math in the kernel.
    wo = (params["Wo"].reshape(c, H, L, P, 2)
          .transpose(0, 2, 4, 1, 3).reshape(c, HLP * 2).astype(jnp.bfloat16))
    bo = (params["bo"].reshape(H, L, P, 2)
          .transpose(1, 3, 0, 2).reshape(1, HLP * 2).astype(jnp.float32))
    bv = params["bv"].reshape(1, c).astype(jnp.float32)
    ba = params["ba"].reshape(1, HLP).astype(jnp.float32)
    bout = params["bout"].reshape(1, c).astype(jnp.float32)

    kernel = make_msda_kernel(tuple(tuple(int(x) for x in s) for s in spatial_shapes),
                              H, L, P, d_head)

    in_specs = [
        pl.BlockSpec((1, tq, c), lambda b, qt: (b, qt, 0)),            # query tile
        pl.BlockSpec((1, tq, L * 2), lambda b, qt: (b, qt, 0)),        # reference points tile
        pl.BlockSpec((1, lv, c), lambda b, qt: (b, 0, 0)),             # value: resident per batch
        pl.BlockSpec((1, lv, 1), lambda b, qt: (b, 0, 0)),             # mask (float)
        pl.BlockSpec((c, c), lambda b, qt: (0, 0)),                    # Wv
        pl.BlockSpec((1, c), lambda b, qt: (0, 0)),                    # bv
        pl.BlockSpec((c, HLP * 2), lambda b, qt: (0, 0)),              # Wo (permuted)
        pl.BlockSpec((1, HLP * 2), lambda b, qt: (0, 0)),              # bo (permuted)
        pl.BlockSpec((c, HLP), lambda b, qt: (0, 0)),                  # Wa
        pl.BlockSpec((1, HLP), lambda b, qt: (0, 0)),                  # ba
        pl.BlockSpec((c, c), lambda b, qt: (0, 0)),                    # Wout
        pl.BlockSpec((1, c), lambda b, qt: (0, 0)),                    # bout
    ]

    out = pl.pallas_call(
        kernel,
        out_shape=jax.ShapeDtypeStruct((bs, lq_pad, c), jnp.float32),
        grid=(bs, n_qt),
        in_specs=in_specs,
        out_specs=pl.BlockSpec((1, tq, c), lambda b, qt: (b, qt, 0)),
        scratch_shapes=[pltpu.VMEM((lv, c), jnp.bfloat16)],            # projected-value cache
        compiler_params=pltpu.CompilerParams(
            dimension_semantics=("parallel", "arbitrary"),
            vmem_limit_bytes=48 * 1024 * 1024),
    )(q_bf, ref_flat, v_bf, maskf, wv, bv, wo, bo, wa, ba, wout, bout)

    return out[:, :lq, :]


# ---------------- pure-JAX reference (mirrors the PyTorch forward) ----------------
def ms_deform_attn_ref(params, query, reference_points, value, spatial_shapes,
                       value_mask, n_heads, n_levels, n_points):
    bs, lq, c = query.shape
    lv = value.shape[1]
    d = c // n_heads

    v = value @ params["Wv"] + params["bv"]
    v = jnp.where(value_mask[..., None], 0.0, v)
    v = v.reshape(bs, lv, n_heads, d)

    so = (query @ params["Wo"] + params["bo"]).reshape(bs, lq, n_heads, n_levels, n_points, 2)
    aw = (query @ params["Wa"] + params["ba"]).reshape(bs, lq, n_heads, n_levels * n_points)
    aw = jax.nn.softmax(aw, axis=-1).reshape(bs, lq, n_heads, n_levels, n_points)

    normalizer = jnp.array([[w_, h_] for (h_, w_) in spatial_shapes], jnp.float32)
    loc = reference_points[:, :, None, :, None, :] + so / normalizer[None, None, None, :, None, :]

    acc = jnp.zeros((bs, lq, n_heads, d), jnp.float32)
    b_idx = jnp.arange(bs)[:, None, None, None]
    h_idx = jnp.arange(n_heads)[None, None, :, None]
    start = 0
    for l, (h_sp, w_sp) in enumerate(spatial_shapes):
        n_l = h_sp * w_sp
        v_l = v[:, start:start + n_l].reshape(bs, h_sp, w_sp, n_heads, d)
        start += n_l
        ix = loc[:, :, :, l, :, 0] * w_sp - 0.5          # (bs, Lq, H, P)
        iy = loc[:, :, :, l, :, 1] * h_sp - 0.5
        x0f = jnp.floor(ix); y0f = jnp.floor(iy)
        wx1 = ix - x0f; wx0 = 1.0 - wx1
        wy1 = iy - y0f; wy0 = 1.0 - wy1
        x0 = x0f.astype(jnp.int32); y0 = y0f.astype(jnp.int32)
        samp = jnp.zeros((bs, lq, n_heads, n_points, d), jnp.float32)
        for (xc, yc, wgt_x, wgt_y) in ((x0, y0, wx0, wy0), (x0 + 1, y0, wx1, wy0),
                                       (x0, y0 + 1, wx0, wy1), (x0 + 1, y0 + 1, wx1, wy1)):
            inb = ((xc >= 0) & (xc < w_sp) & (yc >= 0) & (yc < h_sp)).astype(jnp.float32)
            xcl = jnp.clip(xc, 0, w_sp - 1)
            ycl = jnp.clip(yc, 0, h_sp - 1)
            g = v_l[b_idx, ycl, xcl, h_idx]              # (bs, Lq, H, P, d)
            samp = samp + (wgt_x * wgt_y * inb)[..., None] * g
        acc = acc + jnp.sum(aw[:, :, :, l, :, None] * samp, axis=3)

    out = acc.reshape(bs, lq, c)
    return out @ params["Wout"] + params["bout"]


def init_params(key, d_model, n_heads, n_levels, n_points):
    ks = jax.random.split(key, 4)
    hlp = n_heads * n_levels * n_points

    def xavier(k, shape):
        lim = math.sqrt(6.0 / (shape[0] + shape[1]))
        return jax.random.uniform(k, shape, jnp.float32, -lim, lim)

    # sampling_offsets: structured directional bias as in _reset_parameters();
    # weight is a small deterministic random (instead of zeros) to exercise the path.
    thetas = jnp.arange(n_heads, dtype=jnp.float32) * (2.0 * math.pi / n_heads)
    grid = jnp.stack([jnp.cos(thetas), jnp.sin(thetas)], -1)
    grid = grid / jnp.max(jnp.abs(grid), axis=-1, keepdims=True)
    grid = jnp.tile(grid[:, None, None, :], (1, n_levels, n_points, 1))
    grid = grid * jnp.arange(1, n_points + 1, dtype=jnp.float32)[None, None, :, None]
    bo = grid.reshape(-1)

    return dict(
        Wo=0.02 * jax.random.normal(ks[0], (d_model, hlp * 2), jnp.float32),
        bo=bo,
        Wa=0.02 * jax.random.normal(ks[1], (d_model, hlp), jnp.float32),
        ba=jnp.zeros((hlp,), jnp.float32),
        Wv=xavier(ks[2], (d_model, d_model)),
        bv=jnp.zeros((d_model,), jnp.float32),
        Wout=xavier(ks[3], (d_model, d_model)),
        bout=jnp.zeros((d_model,), jnp.float32),
    )


if __name__ == "__main__":
    d_model, n_heads, n_levels, n_points = 32, 4, 2, 4
    spatial_shapes = ((8, 8), (4, 4))
    bs, len_q = 2, 24                                    # 24 -> exercises q-padding (tq=16)
    len_v = sum(h * w for (h, w) in spatial_shapes)      # 80

    key = jax.random.PRNGKey(0)
    k_par, k_q, k_v, k_r, k_m = jax.random.split(key, 5)
    params = init_params(k_par, d_model, n_heads, n_levels, n_points)

    query = jax.random.normal(k_q, (bs, len_q, d_model), jnp.float32)
    value = jax.random.normal(k_v, (bs, len_v, d_model), jnp.float32)
    reference_points = jax.random.uniform(k_r, (bs, len_q, n_levels, 2), jnp.float32, 0.1, 0.9)
    value_mask = jax.random.bernoulli(k_m, 0.1, (bs, len_v))  # True => zeroed (masked_fill semantics)

    out_kernel = ms_deform_attn_pallas(params, query, reference_points, value,
                                       spatial_shapes, value_mask,
                                       n_heads, n_levels, n_points, tq=16)
    out_kernel = jax.block_until_ready(out_kernel)

    out_ref = ms_deform_attn_ref(params, query, reference_points, value,
                                 spatial_shapes, value_mask,
                                 n_heads, n_levels, n_points)

    assert out_kernel.shape == (bs, len_q, d_model)
    max_err = float(jnp.max(jnp.abs(out_kernel - out_ref)))
    # bf16 MXU inputs with f32 accumulation vs. an all-f32 reference -> ~1e-2 level error.
    if not bool(jnp.all(jnp.isfinite(out_kernel))) or max_err > 1e-1:
        raise SystemExit(f"MISMATCH: max abs err = {max_err}")
    print("KERNEL_OK")
</pallas_src>

<mosaic_0001>
module attributes {stable_mosaic.version = 11 : i64} {
  func.func @kernel(%arg0: i32, %arg1: i32, %arg2: memref<1x16x32xbf16, #tpu.memory_space<vmem>>, %arg3: memref<1x16x4xf32, #tpu.memory_space<vmem>>, %arg4: memref<1x80x32xbf16, #tpu.memory_space<vmem>>, %arg5: memref<1x80x1xf32, #tpu.memory_space<vmem>>, %arg6: memref<32x32xbf16, #tpu.memory_space<vmem>>, %arg7: memref<1x32xf32, #tpu.memory_space<vmem>>, %arg8: memref<32x64xbf16, #tpu.memory_space<vmem>>, %arg9: memref<1x64xf32, #tpu.memory_space<vmem>>, %arg10: memref<32x32xbf16, #tpu.memory_space<vmem>>, %arg11: memref<1x32xf32, #tpu.memory_space<vmem>>, %arg12: memref<32x32xbf16, #tpu.memory_space<vmem>>, %arg13: memref<1x32xf32, #tpu.memory_space<vmem>>, %arg14: memref<1x16x32xf32, #tpu.memory_space<vmem>>, %arg15: memref<80x32xbf16, #tpu.memory_space<vmem>>) attributes {dimension_semantics = [#tpu.dimension_semantics<parallel>, #tpu.dimension_semantics<arbitrary>], iteration_bounds = array<i64: 2, 2>, scalar_prefetch = 0 : i64, scratch_operands = 1 : i64, tpu.core_type = #tpu.core_type<tc>, window_params = [{transform_indices = @transform_0, window_bounds = array<i64: 1, 16, 32>}, {transform_indices = @transform_1, window_bounds = array<i64: 1, 16, 4>}, {transform_indices = @transform_2, window_bounds = array<i64: 1, 80, 32>}, {transform_indices = @transform_3, window_bounds = array<i64: 1, 80, 1>}, {pipeline_mode = #tpu.pipeline_mode<synchronous>, transform_indices = @transform_4, window_bounds = array<i64: 32, 32>}, {pipeline_mode = #tpu.pipeline_mode<synchronous>, transform_indices = @transform_5, window_bounds = array<i64: 1, 32>}, {pipeline_mode = #tpu.pipeline_mode<synchronous>, transform_indices = @transform_6, window_bounds = array<i64: 32, 64>}, {pipeline_mode = #tpu.pipeline_mode<synchronous>, transform_indices = @transform_7, window_bounds = array<i64: 1, 64>}, {pipeline_mode = #tpu.pipeline_mode<synchronous>, transform_indices = @transform_8, window_bounds = array<i64: 32, 32>}, {pipeline_mode = #tpu.pipeline_mode<synchronous>, transform_indices = @transform_9, window_bounds = array<i64: 1, 32>}, {pipeline_mode = #tpu.pipeline_mode<synchronous>, transform_indices = @transform_10, window_bounds = array<i64: 32, 32>}, {pipeline_mode = #tpu.pipeline_mode<synchronous>, transform_indices = @transform_11, window_bounds = array<i64: 1, 32>}, {transform_indices = @transform_12, window_bounds = array<i64: 1, 16, 32>}]} {
    %c0_i32 = arith.constant 0 : i32
    %0 = arith.cmpi eq, %arg1, %c0_i32 : i32
    %1 = arith.extui %0 : i1 to i32
    %c0_i32_0 = arith.constant 0 : i32
    %2 = arith.cmpi ne, %1, %c0_i32_0 : i32
    scf.if %2 {
      %c0_348 = arith.constant 0 : index
      %c0_349 = arith.constant 0 : index
      %c0_350 = arith.constant 0 : index
      %1783 = vector.load %arg4[%c0_348, %c0_349, %c0_350] : memref<1x80x32xbf16, #tpu.memory_space<vmem>>, vector<1x80x32xbf16>
      %1784 = vector.shape_cast %1783 : vector<1x80x32xbf16> to vector<80x32xbf16>
      %c0_351 = arith.constant 0 : index
      %c0_352 = arith.constant 0 : index
      %1785 = vector.load %arg6[%c0_351, %c0_352] : memref<32x32xbf16, #tpu.memory_space<vmem>>, vector<32x32xbf16>
      %cst_353 = arith.constant dense<0.000000e+00> : vector<80x32xf32>
      %1786 = tpu.matmul %1784, %1785, %cst_353 {dimension_numbers = #tpu.dot_dimension_numbers<[1], [0], [0], [1], [0, 0, 1, 1], [], []>} : vector<80x32xbf16>, vector<32x32xbf16>, vector<80x32xf32> -> vector<80x32xf32>
      %c0_354 = arith.constant 0 : index
      %c0_355 = arith.constant 0 : index
      %1787 = vector.load %arg7[%c0_354, %c0_355] : memref<1x32xf32, #tpu.memory_space<vmem>>, vector<1x32xf32>
      %1788 = vector.broadcast %1787 : vector<1x32xf32> to vector<80x32xf32>
      %1789 = arith.addf %1786, %1788 : vector<80x32xf32>
      %c0_356 = arith.constant 0 : index
      %c0_357 = arith.constant 0 : index
      %c0_358 = arith.constant 0 : index
      %1790 = vector.load %arg5[%c0_356, %c0_357, %c0_358] : memref<1x80x1xf32, #tpu.memory_space<vmem>>, vector<1x80x1xf32>
      %1791 = vector.shape_cast %1790 : vector<1x80x1xf32> to vector<80x1xf32>
      %cst_359 = arith.constant 1.000000e+00 : f32
      %1792 = vector.broadcast %cst_359 : f32 to vector<80x1xf32>
      %1793 = arith.subf %1792, %1791 : vector<80x1xf32>
      %1794 = vector.broadcast %1793 : vector<80x1xf32> to vector<80x32xf32>
      %1795 = arith.mulf %1789, %1794 : vector<80x32xf32>
      %1796 = arith.truncf %1795 : vector<80x32xf32> to vector<80x32xbf16>
      %c0_360 = arith.constant 0 : index
      %c0_361 = arith.constant 0 : index
      %1797 = vector.load %arg15[%c0_360, %c0_361] : memref<80x32xbf16, #tpu.memory_space<vmem>>, vector<80x32xbf16>
      tpu.vector_store %arg15[%c0_360, %c0_361], %1796 {strides = array<i32>} : memref<80x32xbf16, #tpu.memory_space<vmem>>, vector<80x32xbf16>,
    } else {
    }
    %c0 = arith.constant 0 : index
    %c0_1 = arith.constant 0 : index
    %c0_2 = arith.constant 0 : index
    %3 = vector.load %arg2[%c0, %c0_1, %c0_2] : memref<1x16x32xbf16, #tpu.memory_space<vmem>>, vector<1x16x32xbf16>
    %4 = vector.shape_cast %3 : vector<1x16x32xbf16> to vector<16x32xbf16>
    %c0_3 = arith.constant 0 : index
    %c0_4 = arith.constant 0 : index
    %c0_5 = arith.constant 0 : index
    %5 = vector.load %arg3[%c0_3, %c0_4, %c0_5] : memref<1x16x4xf32, #tpu.memory_space<vmem>>, vector<1x16x4xf32>
    %6 = vector.shape_cast %5 : vector<1x16x4xf32> to vector<16x4xf32>
    %c0_6 = arith.constant 0 : index
    %c0_7 = arith.constant 0 : index
    %7 = vector.load %arg8[%c0_6, %c0_7] : memref<32x64xbf16, #tpu.memory_space<vmem>>, vector<32x64xbf16>
    %cst = arith.constant dense<0.000000e+00> : vector<16x64xf32>
    %8 = tpu.matmul %4, %7, %cst {dimension_numbers = #tpu.dot_dimension_numbers<[1], [0], [0], [1], [0, 0, 1, 1], [], []>} : vector<16x32xbf16>, vector<32x64xbf16>, vector<16x64xf32> -> vector<16x64xf32>
    %c0_8 = arith.constant 0 : index
    %c0_9 = arith.constant 0 : index
    %9 = vector.load %arg9[%c0_8, %c0_9] : memref<1x64xf32, #tpu.memory_space<vmem>>, vector<1x64xf32>
    %10 = vector.broadcast %9 : vector<1x64xf32> to vector<16x64xf32>
    %11 = arith.addf %8, %10 : vector<16x64xf32>
    %c0_10 = arith.constant 0 : index
    %c0_11 = arith.constant 0 : index
    %12 = vector.load %arg10[%c0_10, %c0_11] : memref<32x32xbf16, #tpu.memory_space<vmem>>, vector<32x32xbf16>
    %cst_12 = arith.constant dense<0.000000e+00> : vector<16x32xf32>
    %13 = tpu.matmul %4, %12, %cst_12 {dimension_numbers = #tpu.dot_dimension_numbers<[1], [0], [0], [1], [0, 0, 1, 1], [], []>} : vector<16x32xbf16>, vector<32x32xbf16>, vector<16x32xf32> -> vector<16x32xf32>
    %c0_13 = arith.constant 0 : index
    %c0_14 = arith.constant 0 : index
    %14 = vector.load %arg11[%c0_13, %c0_14] : memref<1x32xf32, #tpu.memory_space<vmem>>, vector<1x32xf32>
    %15 = vector.broadcast %14 : vector<1x32xf32> to vector<16x32xf32>
    %16 = arith.addf %13, %15 : vector<16x32xf32>
    %17 = vector.extract_strided_slice %16 {offsets = [0, 0], sizes = [16, 8], strides = [1, 1]} : vector<16x32xf32> to vector<16x8xf32>
    %cst_15 = arith.constant dense<0xFF800000> : vector<16xf32>
    %18 = vector.multi_reduction <maximumf>, %17, %cst_15 [1] : vector<16x8xf32> to vector<16xf32>
    %19 = vector.shape_cast %18 : vector<16xf32> to vector<16x1xf32>
    %20 = vector.broadcast %19 : vector<16x1xf32> to vector<16x8xf32>
    %21 = arith.subf %17, %20 : vector<16x8xf32>
    %22 = math.exp %21 : vector<16x8xf32>
    %cst_16 = arith.constant dense<0.000000e+00> : vector<16xf32>
    %23 = vector.multi_reduction <add>, %22, %cst_16 [1] : vector<16x8xf32> to vector<16xf32>
    %24 = vector.shape_cast %23 : vector<16xf32> to vector<16x1xf32>
    %25 = tpu.reciprocal %24 {approx = true} : vector<16x1xf32> -> vector<16x1xf32>
    %26 = vector.broadcast %25 : vector<16x1xf32> to vector<16x8xf32>
    %27 = arith.mulf %22, %26 : vector<16x8xf32>
    %28 = vector.extract_strided_slice %16 {offsets = [0, 8], sizes = [16, 8], strides = [1, 1]} : vector<16x32xf32> to vector<16x8xf32>
    %cst_17 = arith.constant dense<0xFF800000> : vector<16xf32>
    %29 = vector.multi_reduction <maximumf>, %28, %cst_17 [1] : vector<16x8xf32> to vector<16xf32>
    %30 = vector.shape_cast %29 : vector<16xf32> to vector<16x1xf32>
    %31 = vector.broadcast %30 : vector<16x1xf32> to vector<16x8xf32>
    %32 = arith.subf %28, %31 : vector<16x8xf32>
    %33 = math.exp %32 : vector<16x8xf32>
    %cst_18 = arith.constant dense<0.000000e+00> : vector<16xf32>
    %34 = vector.multi_reduction <add>, %33, %cst_18 [1] : vector<16x8xf32> to vector<16xf32>
    %35 = vector.shape_cast %34 : vector<16xf32> to vector<16x1xf32>
    %36 = tpu.reciprocal %35 {approx = true} : vector<16x1xf32> -> vector<16x1xf32>
    %37 = vector.broadcast %36 : vector<16x1xf32> to vector<16x8xf32>
    %38 = arith.mulf %33, %37 : vector<16x8xf32>
    %39 = vector.extract_strided_slice %16 {offsets = [0, 16], sizes = [16, 8], strides = [1, 1]} : vector<16x32xf32> to vector<16x8xf32>
    %cst_19 = arith.constant dense<0xFF800000> : vector<16xf32>
    %40 = vector.multi_reduction <maximumf>, %39, %cst_19 [1] : vector<16x8xf32> to vector<16xf32>
    %41 = vector.shape_cast %40 : vector<16xf32> to vector<16x1xf32>
    %42 = vector.broadcast %41 : vector<16x1xf32> to vector<16x8xf32>
    %43 = arith.subf %39, %42 : vector<16x8xf32>
    %44 = math.exp %43 : vector<16x8xf32>
    %cst_20 = arith.constant dense<0.000000e+00> : vector<16xf32>
    %45 = vector.multi_reduction <add>, %44, %cst_20 [1] : vector<16x8xf32> to vector<16xf32>
    %46 = vector.shape_cast %45 : vector<16xf32> to vector<16x1xf32>
    %47 = tpu.reciprocal %46 {approx = true} : vector<16x1xf32> -> vector<16x1xf32>
    %48 = vector.broadcast %47 : vector<16x1xf32> to vector<16x8xf32>
    %49 = arith.mulf %44, %48 : vector<16x8xf32>
    %50 = vector.extract_strided_slice %16 {offsets = [0, 24], sizes = [16, 8], strides = [1, 1]} : vector<16x32xf32> to vector<16x8xf32>
    %cst_21 = arith.constant dense<0xFF800000> : vector<16xf32>
    %51 = vector.multi_reduction <maximumf>, %50, %cst_21 [1] : vector<16x8xf32> to vector<16xf32>
    %52 = vector.shape_cast %51 : vector<16xf32> to vector<16x1xf32>
    %53 = vector.broadcast %52 : vector<16x1xf32> to vector<16x8xf32>
    %54 = arith.subf %50, %53 : vector<16x8xf32>
    %55 = math.exp %54 : vector<16x8xf32>
    %cst_22 = arith.constant dense<0.000000e+00> : vector<16xf32>
    %56 = vector.multi_reduction <add>, %55, %cst_22 [1] : vector<16x8xf32> to vector<16xf32>
    %57 = vector.shape_cast %56 : vector<16xf32> to vector<16x1xf32>
    %58 = tpu.reciprocal %57 {approx = true} : vector<16x1xf32> -> vector<16x1xf32>
    %59 = vector.broadcast %58 : vector<16x1xf32> to vector<16x8xf32>
    %60 = arith.mulf %55, %59 : vector<16x8xf32>
    %cst_23 = arith.constant 0.000000e+00 : f32
    %61 = vector.broadcast %cst_23 : f32 to vector<16x8xf32>
    %cst_24 = arith.constant 0.000000e+00 : f32
    %62 = vector.broadcast %cst_24 : f32 to vector<16x8xf32>
    %cst_25 = arith.constant 0.000000e+00 : f32
    %63 = vector.broadcast %cst_25 : f32 to vector<16x8xf32>
    %cst_26 = arith.constant 0.000000e+00 : f32
    %64 = vector.broadcast %cst_26 : f32 to vector<16x8xf32>
    %65 = vector.extract_strided_slice %6 {offsets = [0, 0], sizes = [16, 1], strides = [1, 1]} : vector<16x4xf32> to vector<16x1xf32>
    %66 = vector.extract_strided_slice %6 {offsets = [0, 1], sizes = [16, 1], strides = [1, 1]} : vector<16x4xf32> to vector<16x1xf32>
    %cst_27 = arith.constant 8.000000e+00 : f32
    %67 = vector.broadcast %cst_27 : f32 to vector<16x1xf32>
    %68 = arith.mulf %65, %67 : vector<16x1xf32>
    %69 = vector.extract_strided_slice %11 {offsets = [0, 0], sizes = [16, 16], strides = [1, 1]} : vector<16x64xf32> to vector<16x16xf32>
    %70 = vector.broadcast %68 : vector<16x1xf32> to vector<16x16xf32>
    %71 = arith.addf %70, %69 : vector<16x16xf32>
    %cst_28 = arith.constant 5.000000e-01 : f32
    %72 = vector.broadcast %cst_28 : f32 to vector<16x16xf32>
    %73 = arith.subf %71, %72 : vector<16x16xf32>
    %cst_29 = arith.constant 8.000000e+00 : f32
    %74 = vector.broadcast %cst_29 : f32 to vector<16x1xf32>
    %75 = arith.mulf %66, %74 : vector<16x1xf32>
    %76 = vector.extract_strided_slice %11 {offsets = [0, 16], sizes = [16, 16], strides = [1, 1]} : vector<16x64xf32> to vector<16x16xf32>
    %77 = vector.broadcast %75 : vector<16x1xf32> to vector<16x16xf32>
    %78 = arith.addf %77, %76 : vector<16x16xf32>
    %cst_30 = arith.constant 5.000000e-01 : f32
    %79 = vector.broadcast %cst_30 : f32 to vector<16x16xf32>
    %80 = arith.subf %78, %79 : vector<16x16xf32>
    %81 = math.floor %73 : vector<16x16xf32>
    %82 = math.floor %80 : vector<16x16xf32>
    %83 = arith.subf %73, %81 : vector<16x16xf32>
    %84 = arith.subf %80, %82 : vector<16x16xf32>
    %85 = arith.fptosi %81 : vector<16x16xf32> to vector<16x16xi32>
    %86 = arith.fptosi %82 : vector<16x16xf32> to vector<16x16xi32>
    %c1_i32 = arith.constant 1 : i32
    %87 = vector.broadcast %c1_i32 : i32 to vector<16x16xi32>
    %88 = arith.addi %85, %87 : vector<16x16xi32>
    %c1_i32_31 = arith.constant 1 : i32
    %89 = vector.broadcast %c1_i32_31 : i32 to vector<16x16xi32>
    %90 = arith.addi %86, %89 : vector<16x16xi32>
    %c0_i32_32 = arith.constant 0 : i32
    %91 = vector.broadcast %c0_i32_32 : i32 to vector<16x16xi32>
    %92 = arith.cmpi sge, %85, %91 : vector<16x16xi32>
    %c7_i32 = arith.constant 7 : i32
    %93 = vector.broadcast %c7_i32 : i32 to vector<16x16xi32>
    %94 = arith.cmpi sle, %85, %93 : vector<16x16xi32>
    %95 = arith.andi %92, %94 : vector<16x16xi1>
    %96 = arith.extui %95 : vector<16x16xi1> to vector<16x16xi32>
    %97 = arith.sitofp %96 : vector<16x16xi32> to vector<16x16xf32>
    %c0_i32_33 = arith.constant 0 : i32
    %98 = vector.broadcast %c0_i32_33 : i32 to vector<16x16xi32>
    %99 = arith.cmpi sge, %88, %98 : vector<16x16xi32>
    %c7_i32_34 = arith.constant 7 : i32
    %100 = vector.broadcast %c7_i32_34 : i32 to vector<16x16xi32>
    %101 = arith.cmpi sle, %88, %100 : vector<16x16xi32>
    %102 = arith.andi %99, %101 : vector<16x16xi1>
    %103 = arith.extui %102 : vector<16x16xi1> to vector<16x16xi32>
    %104 = arith.sitofp %103 : vector<16x16xi32> to vector<16x16xf32>
    %c0_i32_35 = arith.constant 0 : i32
    %105 = vector.broadcast %c0_i32_35 : i32 to vector<16x16xi32>
    %106 = arith.cmpi sge, %86, %105 : vector<16x16xi32>
    %c7_i32_36 = arith.constant 7 : i32
    %107 = vector.broadcast %c7_i32_36 : i32 to vector<16x16xi32>
    %108 = arith.cmpi sle, %86, %107 : vector<16x16xi32>
    %109 = arith.andi %106, %108 : vector<16x16xi1>
    %110 = arith.extui %109 : vector<16x16xi1> to vector<16x16xi32>
    %111 = arith.sitofp %110 : vector<16x16xi32> to vector<16x16xf32>
    %c0_i32_37 = arith.constant 0 : i32
    %112 = vector.broadcast %c0_i32_37 : i32 to vector<16x16xi32>
    %113 = arith.cmpi sge, %90, %112 : vector<16x16xi32>
    %c7_i32_38 = arith.constant 7 : i32
    %114 = vector.broadcast %c7_i32_38 : i32 to vector<16x16xi32>
    %115 = arith.cmpi sle, %90, %114 : vector<16x16xi32>
    %116 = arith.andi %113, %115 : vector<16x16xi1>
    %117 = arith.extui %116 : vector<16x16xi1> to vector<16x16xi32>
    %118 = arith.sitofp %117 : vector<16x16xi32> to vector<16x16xf32>
    %cst_39 = arith.constant 1.000000e+00 : f32
    %119 = vector.broadcast %cst_39 : f32 to vector<16x16xf32>
    %120 = arith.subf %119, %83 : vector<16x16xf32>
    %121 = arith.mulf %120, %97 : vector<16x16xf32>
    %122 = arith.mulf %83, %104 : vector<16x16xf32>
    %cst_40 = arith.constant 1.000000e+00 : f32
    %123 = vector.broadcast %cst_40 : f32 to vector<16x16xf32>
    %124 = arith.subf %123, %84 : vector<16x16xf32>
    %125 = arith.mulf %124, %111 : vector<16x16xf32>
    %126 = arith.mulf %84, %118 : vector<16x16xf32>
    %c8_i32 = arith.constant 8 : i32
    %127 = vector.broadcast %c8_i32 : i32 to vector<16x16xi32>
    %128 = arith.muli %86, %127 : vector<16x16xi32>
    %129 = arith.addi %128, %85 : vector<16x16xi32>
    %130 = tpu.iota {dimensions = array<i32: 1>} : vector<16x64xi32>
    %cst_41 = arith.constant 0.000000e+00 : f32
    %131 = vector.broadcast %cst_41 : f32 to vector<16x64xf32>
    %132 = vector.extract_strided_slice %27 {offsets = [0, 0], sizes = [16, 1], strides = [1, 1]} : vector<16x8xf32> to vector<16x1xf32>
    %133 = vector.extract_strided_slice %121 {offsets = [0, 0], sizes = [16, 1], strides = [1, 1]} : vector<16x16xf32> to vector<16x1xf32>
    %134 = arith.mulf %132, %133 : vector<16x1xf32>
    %135 = vector.extract_strided_slice %122 {offsets = [0, 0], sizes = [16, 1], strides = [1, 1]} : vector<16x16xf32> to vector<16x1xf32>
    %136 = arith.mulf %132, %135 : vector<16x1xf32>
    %137 = vector.extract_strided_slice %125 {offsets = [0, 0], sizes = [16, 1], strides = [1, 1]} : vector<16x16xf32> to vector<16x1xf32>
    %138 = vector.extract_strided_slice %126 {offsets = [0, 0], sizes = [16, 1], strides = [1, 1]} : vector<16x16xf32> to vector<16x1xf32>
    %139 = vector.extract_strided_slice %129 {offsets = [0, 0], sizes = [16, 1], strides = [1, 1]} : vector<16x16xi32> to vector<16x1xi32>
    %140 = vector.broadcast %139 : vector<16x1xi32> to vector<16x64xi32>
    %141 = arith.cmpi eq, %140, %130 : vector<16x64xi32>
    %142 = arith.mulf %134, %137 : vector<16x1xf32>
    %cst_42 = arith.constant 0.000000e+00 : f32
    %143 = vector.shape_cast %142 : vector<16x1xf32> to vector<16x1xf32>
    %144 = vector.broadcast %143 : vector<16x1xf32> to vector<16x64xf32>
    %145 = vector.broadcast %cst_42 : f32 to vector<16x64xf32>
    %146 = arith.select %141, %144, %145 : vector<16x64xi1>, vector<16x64xf32>
    %147 = arith.addf %131, %146 : vector<16x64xf32>
    %c1_i32_43 = arith.constant 1 : i32
    %148 = vector.broadcast %c1_i32_43 : i32 to vector<16x1xi32>
    %149 = arith.addi %139, %148 : vector<16x1xi32>
    %150 = vector.broadcast %149 : vector<16x1xi32> to vector<16x64xi32>
    %151 = arith.cmpi eq, %150, %130 : vector<16x64xi32>
    %152 = arith.mulf %136, %137 : vector<16x1xf32>
    %cst_44 = arith.constant 0.000000e+00 : f32
    %153 = vector.shape_cast %152 : vector<16x1xf32> to vector<16x1xf32>
    %154 = vector.broadcast %153 : vector<16x1xf32> to vector<16x64xf32>
    %155 = vector.broadcast %cst_44 : f32 to vector<16x64xf32>
    %156 = arith.select %151, %154, %155 : vector<16x64xi1>, vector<16x64xf32>
    %157 = arith.addf %147, %156 : vector<16x64xf32>
    %c8_i32_45 = arith.constant 8 : i32
    %158 = vector.broadcast %c8_i32_45 : i32 to vector<16x1xi32>
    %159 = arith.addi %139, %158 : vector<16x1xi32>
    %160 = vector.broadcast %159 : vector<16x1xi32> to vector<16x64xi32>
    %161 = arith.cmpi eq, %160, %130 : vector<16x64xi32>
    %162 = arith.mulf %134, %138 : vector<16x1xf32>
    %cst_46 = arith.constant 0.000000e+00 : f32
    %163 = vector.shape_cast %162 : vector<16x1xf32> to vector<16x1xf32>
    %164 = vector.broadcast %163 : vector<16x1xf32> to vector<16x64xf32>
    %165 = vector.broadcast %cst_46 : f32 to vector<16x64xf32>
    %166 = arith.select %161, %164, %165 : vector<16x64xi1>, vector<16x64xf32>
    %167 = arith.addf %157, %166 : vector<16x64xf32>
    %c8_i32_47 = arith.constant 8 : i32
    %168 = vector.broadcast %c8_i32_47 : i32 to vector<16x1xi32>
    %169 = arith.addi %139, %168 : vector<16x1xi32>
    %c1_i32_48 = arith.constant 1 : i32
    %170 = vector.broadcast %c1_i32_48 : i32 to vector<16x1xi32>
    %171 = arith.addi %169, %170 : vector<16x1xi32>
    %172 = vector.broadcast %171 : vector<16x1xi32> to vector<16x64xi32>
    %173 = arith.cmpi eq, %172, %130 : vector<16x64xi32>
    %174 = arith.mulf %136, %138 : vector<16x1xf32>
    %cst_49 = arith.constant 0.000000e+00 : f32
    %175 = vector.shape_cast %174 : vector<16x1xf32> to vector<16x1xf32>
    %176 = vector.broadcast %175 : vector<16x1xf32> to vector<16x64xf32>
    %177 = vector.broadcast %cst_49 : f32 to vector<16x64xf32>
    %178 = arith.select %173, %176, %177 : vector<16x64xi1>, vector<16x64xf32>
    %179 = arith.addf %167, %178 : vector<16x64xf32>
    %180 = vector.extract_strided_slice %27 {offsets = [0, 1], sizes = [16, 1], strides = [1, 1]} : vector<16x8xf32> to vector<16x1xf32>
    %181 = vector.extract_strided_slice %121 {offsets = [0, 1], sizes = [16, 1], strides = [1, 1]} : vector<16x16xf32> to vector<16x1xf32>
    %182 = arith.mulf %180, %181 : vector<16x1xf32>
    %183 = vector.extract_strided_slice %122 {offsets = [0, 1], sizes = [16, 1], strides = [1, 1]} : vector<16x16xf32> to vector<16x1xf32>
    %184 = arith.mulf %180, %183 : vector<16x1xf32>
    %185 = vector.extract_strided_slice %125 {offsets = [0, 1], sizes = [16, 1], strides = [1, 1]} : vector<16x16xf32> to vector<16x1xf32>
    %186 = vector.extract_strided_slice %126 {offsets = [0, 1], sizes = [16, 1], strides = [1, 1]} : vector<16x16xf32> to vector<16x1xf32>
    %187 = vector.extract_strided_slice %129 {offsets = [0, 1], sizes = [16, 1], strides = [1, 1]} : vector<16x16xi32> to vector<16x1xi32>
    %188 = vector.broadcast %187 : vector<16x1xi32> to vector<16x64xi32>
    %189 = arith.cmpi eq, %188, %130 : vector<16x64xi32>
    %190 = arith.mulf %182, %185 : vector<16x1xf32>
    %cst_50 = arith.constant 0.000000e+00 : f32
    %191 = vector.shape_cast %190 : vector<16x1xf32> to vector<16x1xf32>
    %192 = vector.broadcast %191 : vector<16x1xf32> to vector<16x64xf32>
    %193 = vector.broadcast %cst_50 : f32 to vector<16x64xf32>
    %194 = arith.select %189, %192, %193 : vector<16x64xi1>, vector<16x64xf32>
    %195 = arith.addf %179, %194 : vector<16x64xf32>
    %c1_i32_51 = arith.constant 1 : i32
    %196 = vector.broadcast %c1_i32_51 : i32 to vector<16x1xi32>
    %197 = arith.addi %187, %196 : vector<16x1xi32>
    %198 = vector.broadcast %197 : vector<16x1xi32> to vector<16x64xi32>
    %199 = arith.cmpi eq, %198, %130 : vector<16x64xi32>
    %200 = arith.mulf %184, %185 : vector<16x1xf32>
    %cst_52 = arith.constant 0.000000e+00 : f32
    %201 = vector.shape_cast %200 : vector<16x1xf32> to vector<16x1xf32>
    %202 = vector.broadcast %201 : vector<16x1xf32> to vector<16x64xf32>
    %203 = vector.broadcast %cst_52 : f32 to vector<16x64xf32>
    %204 = arith.select %199, %202, %203 : vector<16x64xi1>, vector<16x64xf32>
    %205 = arith.addf %195, %204 : vector<16x64xf32>
    %c8_i32_53 = arith.constant 8 : i32
    %206 = vector.broadcast %c8_i32_53 : i32 to vector<16x1xi32>
    %207 = arith.addi %187, %206 : vector<16x1xi32>
    %208 = vector.broadcast %207 : vector<16x1xi32> to vector<16x64xi32>
    %209 = arith.cmpi eq, %208, %130 : vector<16x64xi32>
    %210 = arith.mulf %182, %186 : vector<16x1xf32>
    %cst_54 = arith.constant 0.000000e+00 : f32
    %211 = vector.shape_cast %210 : vector<16x1xf32> to vector<16x1xf32>
    %212 = vector.broadcast %211 : vector<16x1xf32> to vector<16x64xf32>
    %213 = vector.broadcast %cst_54 : f32 to vector<16x64xf32>
    %214 = arith.select %209, %212, %213 : vector<16x64xi1>, vector<16x64xf32>
    %215 = arith.addf %205, %214 : vector<16x64xf32>
    %c8_i32_55 = arith.constant 8 : i32
    %216 = vector.broadcast %c8_i32_55 : i32 to vector<16x1xi32>
    %217 = arith.addi %187, %216 : vector<16x1xi32>
    %c1_i32_56 = arith.constant 1 : i32
    %218 = vector.broadcast %c1_i32_56 : i32 to vector<16x1xi32>
    %219 = arith.addi %217, %218 : vector<16x1xi32>
    %220 = vector.broadcast %219 : vector<16x1xi32> to vector<16x64xi32>
    %221 = arith.cmpi eq, %220, %130 : vector<16x64xi32>
    %222 = arith.mulf %184, %186 : vector<16x1xf32>
    %cst_57 = arith.constant 0.000000e+00 : f32
    %223 = vector.shape_cast %222 : vector<16x1xf32> to vector<16x1xf32>
    %224 = vector.broadcast %223 : vector<16x1xf32> to vector<16x64xf32>
    %225 = vector.broadcast %cst_57 : f32 to vector<16x64xf32>
    %226 = arith.select %221, %224, %225 : vector<16x64xi1>, vector<16x64xf32>
    %227 = arith.addf %215, %226 : vector<16x64xf32>
    %228 = vector.extract_strided_slice %27 {offsets = [0, 2], sizes = [16, 1], strides = [1, 1]} : vector<16x8xf32> to vector<16x1xf32>
    %229 = vector.extract_strided_slice %121 {offsets = [0, 2], sizes = [16, 1], strides = [1, 1]} : vector<16x16xf32> to vector<16x1xf32>
    %230 = arith.mulf %228, %229 : vector<16x1xf32>
    %231 = vector.extract_strided_slice %122 {offsets = [0, 2], sizes = [16, 1], strides = [1, 1]} : vector<16x16xf32> to vector<16x1xf32>
    %232 = arith.mulf %228, %231 : vector<16x1xf32>
    %233 = vector.extract_strided_slice %125 {offsets = [0, 2], sizes = [16, 1], strides = [1, 1]} : vector<16x16xf32> to vector<16x1xf32>
    %234 = vector.extract_strided_slice %126 {offsets = [0, 2], sizes = [16, 1], strides = [1, 1]} : vector<16x16xf32> to vector<16x1xf32>
    %235 = vector.extract_strided_slice %129 {offsets = [0, 2], sizes = [16, 1], strides = [1, 1]} : vector<16x16xi32> to vector<16x1xi32>
    %236 = vector.broadcast %235 : vector<16x1xi32> to vector<16x64xi32>
    %237 = arith.cmpi eq, %236, %130 : vector<16x64xi32>
    %238 = arith.mulf %230, %233 : vector<16x1xf32>
    %cst_58 = arith.constant 0.000000e+00 : f32
    %239 = vector.shape_cast %238 : vector<16x1xf32> to vector<16x1xf32>
    %240 = vector.broadcast %239 : vector<16x1xf32> to vector<16x64xf32>
    %241 = vector.broadcast %cst_58 : f32 to vector<16x64xf32>
    %242 = arith.select %237, %240, %241 : vector<16x64xi1>, vector<16x64xf32>
    %243 = arith.addf %227, %242 : vector<16x64xf32>
    %c1_i32_59 = arith.constant 1 : i32
    %244 = vector.broadcast %c1_i32_59 : i32 to vector<16x1xi32>
    %245 = arith.addi %235, %244 : vector<16x1xi32>
    %246 = vector.broadcast %245 : vector<16x1xi32> to vector<16x64xi32>
    %247 = arith.cmpi eq, %246, %130 : vector<16x64xi32>
    %248 = arith.mulf %232, %233 : vector<16x1xf32>
    %cst_60 = arith.constant 0.000000e+00 : f32
    %249 = vector.shape_cast %248 : vector<16x1xf32> to vector<16x1xf32>
    %250 = vector.broadcast %249 : vector<16x1xf32> to vector<16x64xf32>
    %251 = vector.broadcast %cst_60 : f32 to vector<16x64xf32>
    %252 = arith.select %247, %250, %251 : vector<16x64xi1>, vector<16x64xf32>
    %253 = arith.addf %243, %252 : vector<16x64xf32>
    %c8_i32_61 = arith.constant 8 : i32
    %254 = vector.broadcast %c8_i32_61 : i32 to vector<16x1xi32>
    %255 = arith.addi %235, %254 : vector<16x1xi32>
    %256 = vector.broadcast %255 : vector<16x1xi32> to vector<16x64xi32>
    %257 = arith.cmpi eq, %256, %130 : vector<16x64xi32>
    %258 = arith.mulf %230, %234 : vector<16x1xf32>
    %cst_62 = arith.constant 0.000000e+00 : f32
    %259 = vector.shape_cast %258 : vector<16x1xf32> to vector<16x1xf32>
    %260 = vector.broadcast %259 : vector<16x1xf32> to vector<16x64xf32>
    %261 = vector.broadcast %cst_62 : f32 to vector<16x64xf32>
    %262 = arith.select %257, %260, %261 : vector<16x64xi1>, vector<16x64xf32>
    %263 = arith.addf %253, %262 : vector<16x64xf32>
    %c8_i32_63 = arith.constant 8 : i32
    %264 = vector.broadcast %c8_i32_63 : i32 to vector<16x1xi32>
    %265 = arith.addi %235, %264 : vector<16x1xi32>
    %c1_i32_64 = arith.constant 1 : i32
    %266 = vector.broadcast %c1_i32_64 : i32 to vector<16x1xi32>
    %267 = arith.addi %265, %266 : vector<16x1xi32>
    %268 = vector.broadcast %267 : vector<16x1xi32> to vector<16x64xi32>
    %269 = arith.cmpi eq, %268, %130 : vector<16x64xi32>
    %270 = arith.mulf %232, %234 : vector<16x1xf32>
    %cst_65 = arith.constant 0.000000e+00 : f32
    %271 = vector.shape_cast %270 : vector<16x1xf32> to vector<16x1xf32>
    %272 = vector.broadcast %271 : vector<16x1xf32> to vector<16x64xf32>
    %273 = vector.broadcast %cst_65 : f32 to vector<16x64xf32>
    %274 = arith.select %269, %272, %273 : vector<16x64xi1>, vector<16x64xf32>
    %275 = arith.addf %263, %274 : vector<16x64xf32>
    %276 = vector.extract_strided_slice %27 {offsets = [0, 3], sizes = [16, 1], strides = [1, 1]} : vector<16x8xf32> to vector<16x1xf32>
    %277 = vector.extract_strided_slice %121 {offsets = [0, 3], sizes = [16, 1], strides = [1, 1]} : vector<16x16xf32> to vector<16x1xf32>
    %278 = arith.mulf %276, %277 : vector<16x1xf32>
    %279 = vector.extract_strided_slice %122 {offsets = [0, 3], sizes = [16, 1], strides = [1, 1]} : vector<16x16xf32> to vector<16x1xf32>
    %280 = arith.mulf %276, %279 : vector<16x1xf32>
    %281 = vector.extract_strided_slice %125 {offsets = [0, 3], sizes = [16, 1], strides = [1, 1]} : vector<16x16xf32> to vector<16x1xf32>
    %282 = vector.extract_strided_slice %126 {offsets = [0, 3], sizes = [16, 1], strides = [1, 1]} : vector<16x16xf32> to vector<16x1xf32>
    %283 = vector.extract_strided_slice %129 {offsets = [0, 3], sizes = [16, 1], strides = [1, 1]} : vector<16x16xi32> to vector<16x1xi32>
    %284 = vector.broadcast %283 : vector<16x1xi32> to vector<16x64xi32>
    %285 = arith.cmpi eq, %284, %130 : vector<16x64xi32>
    %286 = arith.mulf %278, %281 : vector<16x1xf32>
    %cst_66 = arith.constant 0.000000e+00 : f32
    %287 = vector.shape_cast %286 : vector<16x1xf32> to vector<16x1xf32>
    %288 = vector.broadcast %287 : vector<16x1xf32> to vector<16x64xf32>
    %289 = vector.broadcast %cst_66 : f32 to vector<16x64xf32>
    %290 = arith.select %285, %288, %289 : vector<16x64xi1>, vector<16x64xf32>
    %291 = arith.addf %275, %290 : vector<16x64xf32>
    %c1_i32_67 = arith.constant 1 : i32
    %292 = vector.broadcast %c1_i32_67 : i32 to vector<16x1xi32>
    %293 = arith.addi %283, %292 : vector<16x1xi32>
    %294 = vector.broadcast %293 : vector<16x1xi32> to vector<16x64xi32>
    %295 = arith.cmpi eq, %294, %130 : vector<16x64xi32>
    %296 = arith.mulf %280, %281 : vector<16x1xf32>
    %cst_68 = arith.constant 0.000000e+00 : f32
    %297 = vector.shape_cast %296 : vector<16x1xf32> to vector<16x1xf32>
    %298 = vector.broadcast %297 : vector<16x1xf32> to vector<16x64xf32>
    %299 = vector.broadcast %cst_68 : f32 to vector<16x64xf32>
    %300 = arith.select %295, %298, %299 : vector<16x64xi1>, vector<16x64xf32>
    %301 = arith.addf %291, %300 : vector<16x64xf32>
    %c8_i32_69 = arith.constant 8 : i32
    %302 = vector.broadcast %c8_i32_69 : i32 to vector<16x1xi32>
    %303 = arith.addi %283, %302 : vector<16x1xi32>
    %304 = vector.broadcast %303 : vector<16x1xi32> to vector<16x64xi32>
    %305 = arith.cmpi eq, %304, %130 : vector<16x64xi32>
    %306 = arith.mulf %278, %282 : vector<16x1xf32>
    %cst_70 = arith.constant 0.000000e+00 : f32
    %307 = vector.shape_cast %306 : vector<16x1xf32> to vector<16x1xf32>
    %308 = vector.broadcast %307 : vector<16x1xf32> to vector<16x64xf32>
    %309 = vector.broadcast %cst_70 : f32 to vector<16x64xf32>
    %310 = arith.select %305, %308, %309 : vector<16x64xi1>, vector<16x64xf32>
    %311 = arith.addf %301, %310 : vector<16x64xf32>
    %c8_i32_71 = arith.constant 8 : i32
    %312 = vector.broadcast %c8_i32_71 : i32 to vector<16x1xi32>
    %313 = arith.addi %283, %312 : vector<16x1xi32>
    %c1_i32_72 = arith.constant 1 : i32
    %314 = vector.broadcast %c1_i32_72 : i32 to vector<16x1xi32>
    %315 = arith.addi %313, %314 : vector<16x1xi32>
    %316 = vector.broadcast %315 : vector<16x1xi32> to vector<16x64xi32>
    %317 = arith.cmpi eq, %316, %130 : vector<16x64xi32>
    %318 = arith.mulf %280, %282 : vector<16x1xf32>
    %cst_73 = arith.constant 0.000000e+00 : f32
    %319 = vector.shape_cast %318 : vector<16x1xf32> to vector<16x1xf32>
    %320 = vector.broadcast %319 : vector<16x1xf32> to vector<16x64xf32>
    %321 = vector.broadcast %cst_73 : f32 to vector<16x64xf32>
    %322 = arith.select %317, %320, %321 : vector<16x64xi1>, vector<16x64xf32>
    %323 = arith.addf %311, %322 : vector<16x64xf32>
    %c0_74 = arith.constant 0 : index
    %c0_75 = arith.constant 0 : index
    %324 = vector.load %arg15[%c0_74, %c0_75] : memref<80x32xbf16, #tpu.memory_space<vmem>>, vector<64x8xbf16>
    %325 = arith.truncf %323 : vector<16x64xf32> to vector<16x64xbf16>
    %cst_76 = arith.constant dense<0.000000e+00> : vector<16x8xf32>
    %326 = tpu.matmul %325, %324, %cst_76 {dimension_numbers = #tpu.dot_dimension_numbers<[1], [0], [0], [1], [0, 0, 1, 1], [], []>} : vector<16x64xbf16>, vector<64x8xbf16>, vector<16x8xf32> -> vector<16x8xf32>
    %327 = arith.addf %61, %326 : vector<16x8xf32>
    %cst_77 = arith.constant 0.000000e+00 : f32
    %328 = vector.broadcast %cst_77 : f32 to vector<16x64xf32>
    %329 = vector.extract_strided_slice %38 {offsets = [0, 0], sizes = [16, 1], strides = [1, 1]} : vector<16x8xf32> to vector<16x1xf32>
    %330 = vector.extract_strided_slice %121 {offsets = [0, 4], sizes = [16, 1], strides = [1, 1]} : vector<16x16xf32> to vector<16x1xf32>
    %331 = arith.mulf %329, %330 : vector<16x1xf32>
    %332 = vector.extract_strided_slice %122 {offsets = [0, 4], sizes = [16, 1], strides = [1, 1]} : vector<16x16xf32> to vector<16x1xf32>
    %333 = arith.mulf %329, %332 : vector<16x1xf32>
    %334 = vector.extract_strided_slice %125 {offsets = [0, 4], sizes = [16, 1], strides = [1, 1]} : vector<16x16xf32> to vector<16x1xf32>
    %335 = vector.extract_strided_slice %126 {offsets = [0, 4], sizes = [16, 1], strides = [1, 1]} : vector<16x16xf32> to vector<16x1xf32>
    %336 = vector.extract_strided_slice %129 {offsets = [0, 4], sizes = [16, 1], strides = [1, 1]} : vector<16x16xi32> to vector<16x1xi32>
    %337 = vector.broadcast %336 : vector<16x1xi32> to vector<16x64xi32>
    %338 = arith.cmpi eq, %337, %130 : vector<16x64xi32>
    %339 = arith.mulf %331, %334 : vector<16x1xf32>
    %cst_78 = arith.constant 0.000000e+00 : f32
    %340 = vector.shape_cast %339 : vector<16x1xf32> to vector<16x1xf32>
    %341 = vector.broadcast %340 : vector<16x1xf32> to vector<16x64xf32>
    %342 = vector.broadcast %cst_78 : f32 to vector<16x64xf32>
    %343 = arith.select %338, %341, %342 : vector<16x64xi1>, vector<16x64xf32>
    %344 = arith.addf %328, %343 : vector<16x64xf32>
    %c1_i32_79 = arith.constant 1 : i32
    %345 = vector.broadcast %c1_i32_79 : i32 to vector<16x1xi32>
    %346 = arith.addi %336, %345 : vector<16x1xi32>
    %347 = vector.broadcast %346 : vector<16x1xi32> to vector<16x64xi32>
    %348 = arith.cmpi eq, %347, %130 : vector<16x64xi32>
    %349 = arith.mulf %333, %334 : vector<16x1xf32>
    %cst_80 = arith.constant 0.000000e+00 : f32
    %350 = vector.shape_cast %349 : vector<16x1xf32> to vector<16x1xf32>
    %351 = vector.broadcast %350 : vector<16x1xf32> to vector<16x64xf32>
    %352 = vector.broadcast %cst_80 : f32 to vector<16x64xf32>
    %353 = arith.select %348, %351, %352 : vector<16x64xi1>, vector<16x64xf32>
    %354 = arith.addf %344, %353 : vector<16x64xf32>
    %c8_i32_81 = arith.constant 8 : i32
    %355 = vector.broadcast %c8_i32_81 : i32 to vector<16x1xi32>
    %356 = arith.addi %336, %355 : vector<16x1xi32>
    %357 = vector.broadcast %356 : vector<16x1xi32> to vector<16x64xi32>
    %358 = arith.cmpi eq, %357, %130 : vector<16x64xi32>
    %359 = arith.mulf %331, %335 : vector<16x1xf32>
    %cst_82 = arith.constant 0.000000e+00 : f32
    %360 = vector.shape_cast %359 : vector<16x1xf32> to vector<16x1xf32>
    %361 = vector.broadcast %360 : vector<16x1xf32> to vector<16x64xf32>
    %362 = vector.broadcast %cst_82 : f32 to vector<16x64xf32>
    %363 = arith.select %358, %361, %362 : vector<16x64xi1>, vector<16x64xf32>
    %364 = arith.addf %354, %363 : vector<16x64xf32>
    %c8_i32_83 = arith.constant 8 : i32
    %365 = vector.broadcast %c8_i32_83 : i32 to vector<16x1xi32>
    %366 = arith.addi %336, %365 : vector<16x1xi32>
    %c1_i32_84 = arith.constant 1 : i32
    %367 = vector.broadcast %c1_i32_84 : i32 to vector<16x1xi32>
    %368 = arith.addi %366, %367 : vector<16x1xi32>
    %369 = vector.broadcast %368 : vector<16x1xi32> to vector<16x64xi32>
    %370 = arith.cmpi eq, %369, %130 : vector<16x64xi32>
    %371 = arith.mulf %333, %335 : vector<16x1xf32>
    %cst_85 = arith.constant 0.000000e+00 : f32
    %372 = vector.shape_cast %371 : vector<16x1xf32> to vector<16x1xf32>
    %373 = vector.broadcast %372 : vector<16x1xf32> to vector<16x64xf32>
    %374 = vector.broadcast %cst_85 : f32 to vector<16x64xf32>
    %375 = arith.select %370, %373, %374 : vector<16x64xi1>, vector<16x64xf32>
    %376 = arith.addf %364, %375 : vector<16x64xf32>
    %377 = vector.extract_strided_slice %38 {offsets = [0, 1], sizes = [16, 1], strides = [1, 1]} : vector<16x8xf32> to vector<16x1xf32>
    %378 = vector.extract_strided_slice %121 {offsets = [0, 5], sizes = [16, 1], strides = [1, 1]} : vector<16x16xf32> to vector<16x1xf32>
    %379 = arith.mulf %377, %378 : vector<16x1xf32>
    %380 = vector.extract_strided_slice %122 {offsets = [0, 5], sizes = [16, 1], strides = [1, 1]} : vector<16x16xf32> to vector<16x1xf32>
    %381 = arith.mulf %377, %380 : vector<16x1xf32>
    %382 = vector.extract_strided_slice %125 {offsets = [0, 5], sizes = [16, 1], strides = [1, 1]} : vector<16x16xf32> to vector<16x1xf32>
    %383 = vector.extract_strided_slice %126 {offsets = [0, 5], sizes = [16, 1], strides = [1, 1]} : vector<16x16xf32> to vector<16x1xf32>
    %384 = vector.extract_strided_slice %129 {offsets = [0, 5], sizes = [16, 1], strides = [1, 1]} : vector<16x16xi32> to vector<16x1xi32>
    %385 = vector.broadcast %384 : vector<16x1xi32> to vector<16x64xi32>
    %386 = arith.cmpi eq, %385, %130 : vector<16x64xi32>
    %387 = arith.mulf %379, %382 : vector<16x1xf32>
    %cst_86 = arith.constant 0.000000e+00 : f32
    %388 = vector.shape_cast %387 : vector<16x1xf32> to vector<16x1xf32>
    %389 = vector.broadcast %388 : vector<16x1xf32> to vector<16x64xf32>
    %390 = vector.broadcast %cst_86 : f32 to vector<16x64xf32>
    %391 = arith.select %386, %389, %390 : vector<16x64xi1>, vector<16x64xf32>
    %392 = arith.addf %376, %391 : vector<16x64xf32>
    %c1_i32_87 = arith.constant 1 : i32
    %393 = vector.broadcast %c1_i32_87 : i32 to vector<16x1xi32>
    %394 = arith.addi %384, %393 : vector<16x1xi32>
    %395 = vector.broadcast %394 : vector<16x1xi32> to vector<16x64xi32>
    %396 = arith.cmpi eq, %395, %130 : vector<16x64xi32>
    %397 = arith.mulf %381, %382 : vector<16x1xf32>
    %cst_88 = arith.constant 0.000000e+00 : f32
    %398 = vector.shape_cast %397 : vector<16x1xf32> to vector<16x1xf32>
    %399 = vector.broadcast %398 : vector<16x1xf32> to vector<16x64xf32>
    %400 = vector.broadcast %cst_88 : f32 to vector<16x64xf32>
    %401 = arith.select %396, %399, %400 : vector<16x64xi1>, vector<16x64xf32>
    %402 = arith.addf %392, %401 : vector<16x64xf32>
    %c8_i32_89 = arith.constant 8 : i32
    %403 = vector.broadcast %c8_i32_89 : i32 to vector<16x1xi32>
    %404 = arith.addi %384, %403 : vector<16x1xi32>
    %405 = vector.broadcast %404 : vector<16x1xi32> to vector<16x64xi32>
    %406 = arith.cmpi eq, %405, %130 : vector<16x64xi32>
    %407 = arith.mulf %379, %383 : vector<16x1xf32>
    %cst_90 = arith.constant 0.000000e+00 : f32
    %408 = vector.shape_cast %407 : vector<16x1xf32> to vector<16x1xf32>
    %409 = vector.broadcast %408 : vector<16x1xf32> to vector<16x64xf32>
    %410 = vector.broadcast %cst_90 : f32 to vector<16x64xf32>
    %411 = arith.select %406, %409, %410 : vector<16x64xi1>, vector<16x64xf32>
    %412 = arith.addf %402, %411 : vector<16x64xf32>
    %c8_i32_91 = arith.constant 8 : i32
    %413 = vector.broadcast %c8_i32_91 : i32 to vector<16x1xi32>
    %414 = arith.addi %384, %413 : vector<16x1xi32>
    %c1_i32_92 = arith.constant 1 : i32
    %415 = vector.broadcast %c1_i32_92 : i32 to vector<16x1xi32>
    %416 = arith.addi %414, %415 : vector<16x1xi32>
    %417 = vector.broadcast %416 : vector<16x1xi32> to vector<16x64xi32>
    %418 = arith.cmpi eq, %417, %130 : vector<16x64xi32>
    %419 = arith.mulf %381, %383 : vector<16x1xf32>
    %cst_93 = arith.constant 0.000000e+00 : f32
    %420 = vector.shape_cast %419 : vector<16x1xf32> to vector<16x1xf32>
    %421 = vector.broadcast %420 : vector<16x1xf32> to vector<16x64xf32>
    %422 = vector.broadcast %cst_93 : f32 to vector<16x64xf32>
    %423 = arith.select %418, %421, %422 : vector<16x64xi1>, vector<16x64xf32>
    %424 = arith.addf %412, %423 : vector<16x64xf32>
    %425 = vector.extract_strided_slice %38 {offsets = [0, 2], sizes = [16, 1], strides = [1, 1]} : vector<16x8xf32> to vector<16x1xf32>
    %426 = vector.extract_strided_slice %121 {offsets = [0, 6], sizes = [16, 1], strides = [1, 1]} : vector<16x16xf32> to vector<16x1xf32>
    %427 = arith.mulf %425, %426 : vector<16x1xf32>
    %428 = vector.extract_strided_slice %122 {offsets = [0, 6], sizes = [16, 1], strides = [1, 1]} : vector<16x16xf32> to vector<16x1xf32>
    %429 = arith.mulf %425, %428 : vector<16x1xf32>
    %430 = vector.extract_strided_slice %125 {offsets = [0, 6], sizes = [16, 1], strides = [1, 1]} : vector<16x16xf32> to vector<16x1xf32>
    %431 = vector.extract_strided_slice %126 {offsets = [0, 6], sizes = [16, 1], strides = [1, 1]} : vector<16x16xf32> to vector<16x1xf32>
    %432 = vector.extract_strided_slice %129 {offsets = [0, 6], sizes = [16, 1], strides = [1, 1]} : vector<16x16xi32> to vector<16x1xi32>
    %433 = vector.broadcast %432 : vector<16x1xi32> to vector<16x64xi32>
    %434 = arith.cmpi eq, %433, %130 : vector<16x64xi32>
    %435 = arith.mulf %427, %430 : vector<16x1xf32>
    %cst_94 = arith.constant 0.000000e+00 : f32
    %436 = vector.shape_cast %435 : vector<16x1xf32> to vector<16x1xf32>
    %437 = vector.broadcast %436 : vector<16x1xf32> to vector<16x64xf32>
    %438 = vector.broadcast %cst_94 : f32 to vector<16x64xf32>
    %439 = arith.select %434, %437, %438 : vector<16x64xi1>, vector<16x64xf32>
    %440 = arith.addf %424, %439 : vector<16x64xf32>
    %c1_i32_95 = arith.constant 1 : i32
    %441 = vector.broadcast %c1_i32_95 : i32 to vector<16x1xi32>
    %442 = arith.addi %432, %441 : vector<16x1xi32>
    %443 = vector.broadcast %442 : vector<16x1xi32> to vector<16x64xi32>
    %444 = arith.cmpi eq, %443, %130 : vector<16x64xi32>
    %445 = arith.mulf %429, %430 : vector<16x1xf32>
    %cst_96 = arith.constant 0.000000e+00 : f32
    %446 = vector.shape_cast %445 : vector<16x1xf32> to vector<16x1xf32>
    %447 = vector.broadcast %446 : vector<16x1xf32> to vector<16x64xf32>
    %448 = vector.broadcast %cst_96 : f32 to vector<16x64xf32>
    %449 = arith.select %444, %447, %448 : vector<16x64xi1>, vector<16x64xf32>
    %450 = arith.addf %440, %449 : vector<16x64xf32>
    %c8_i32_97 = arith.constant 8 : i32
    %451 = vector.broadcast %c8_i32_97 : i32 to vector<16x1xi32>
    %452 = arith.addi %432, %451 : vector<16x1xi32>
    %453 = vector.broadcast %452 : vector<16x1xi32> to vector<16x64xi32>
    %454 = arith.cmpi eq, %453, %130 : vector<16x64xi32>
    %455 = arith.mulf %427, %431 : vector<16x1xf32>
    %cst_98 = arith.constant 0.000000e+00 : f32
    %456 = vector.shape_cast %455 : vector<16x1xf32> to vector<16x1xf32>
    %457 = vector.broadcast %456 : vector<16x1xf32> to vector<16x64xf32>
    %458 = vector.broadcast %cst_98 : f32 to vector<16x64xf32>
    %459 = arith.select %454, %457, %458 : vector<16x64xi1>, vector<16x64xf32>
    %460 = arith.addf %450, %459 : vector<16x64xf32>
    %c8_i32_99 = arith.constant 8 : i32
    %461 = vector.broadcast %c8_i32_99 : i32 to vector<16x1xi32>
    %462 = arith.addi %432, %461 : vector<16x1xi32>
    %c1_i32_100 = arith.constant 1 : i32
    %463 = vector.broadcast %c1_i32_100 : i32 to vector<16x1xi32>
    %464 = arith.addi %462, %463 : vector<16x1xi32>
    %465 = vector.broadcast %464 : vector<16x1xi32> to vector<16x64xi32>
    %466 = arith.cmpi eq, %465, %130 : vector<16x64xi32>
    %467 = arith.mulf %429, %431 : vector<16x1xf32>
    %cst_101 = arith.constant 0.000000e+00 : f32
    %468 = vector.shape_cast %467 : vector<16x1xf32> to vector<16x1xf32>
    %469 = vector.broadcast %468 : vector<16x1xf32> to vector<16x64xf32>
    %470 = vector.broadcast %cst_101 : f32 to vector<16x64xf32>
    %471 = arith.select %466, %469, %470 : vector<16x64xi1>, vector<16x64xf32>
    %472 = arith.addf %460, %471 : vector<16x64xf32>
    %473 = vector.extract_strided_slice %38 {offsets = [0, 3], sizes = [16, 1], strides = [1, 1]} : vector<16x8xf32> to vector<16x1xf32>
    %474 = vector.extract_strided_slice %121 {offsets = [0, 7], sizes = [16, 1], strides = [1, 1]} : vector<16x16xf32> to vector<16x1xf32>
    %475 = arith.mulf %473, %474 : vector<16x1xf32>
    %476 = vector.extract_strided_slice %122 {offsets = [0, 7], sizes = [16, 1], strides = [1, 1]} : vector<16x16xf32> to vector<16x1xf32>
    %477 = arith.mulf %473, %476 : vector<16x1xf32>
    %478 = vector.extract_strided_slice %125 {offsets = [0, 7], sizes = [16, 1], strides = [1, 1]} : vector<16x16xf32> to vector<16x1xf32>
    %479 = vector.extract_strided_slice %126 {offsets = [0, 7], sizes = [16, 1], strides = [1, 1]} : vector<16x16xf32> to vector<16x1xf32>
    %480 = vector.extract_strided_slice %129 {offsets = [0, 7], sizes = [16, 1], strides = [1, 1]} : vector<16x16xi32> to vector<16x1xi32>
    %481 = vector.broadcast %480 : vector<16x1xi32> to vector<16x64xi32>
    %482 = arith.cmpi eq, %481, %130 : vector<16x64xi32>
    %483 = arith.mulf %475, %478 : vector<16x1xf32>
    %cst_102 = arith.constant 0.000000e+00 : f32
    %484 = vector.shape_cast %483 : vector<16x1xf32> to vector<16x1xf32>
    %485 = vector.broadcast %484 : vector<16x1xf32> to vector<16x64xf32>
    %486 = vector.broadcast %cst_102 : f32 to vector<16x64xf32>
    %487 = arith.select %482, %485, %486 : vector<16x64xi1>, vector<16x64xf32>
    %488 = arith.addf %472, %487 : vector<16x64xf32>
    %c1_i32_103 = arith.constant 1 : i32
    %489 = vector.broadcast %c1_i32_103 : i32 to vector<16x1xi32>
    %490 = arith.addi %480, %489 : vector<16x1xi32>
    %491 = vector.broadcast %490 : vector<16x1xi32> to vector<16x64xi32>
    %492 = arith.cmpi eq, %491, %130 : vector<16x64xi32>
    %493 = arith.mulf %477, %478 : vector<16x1xf32>
    %cst_104 = arith.constant 0.000000e+00 : f32
    %494 = vector.shape_cast %493 : vector<16x1xf32> to vector<16x1xf32>
    %495 = vector.broadcast %494 : vector<16x1xf32> to vector<16x64xf32>
    %496 = vector.broadcast %cst_104 : f32 to vector<16x64xf32>
    %497 = arith.select %492, %495, %496 : vector<16x64xi1>, vector<16x64xf32>
    %498 = arith.addf %488, %497 : vector<16x64xf32>
    %c8_i32_105 = arith.constant 8 : i32
    %499 = vector.broadcast %c8_i32_105 : i32 to vector<16x1xi32>
    %500 = arith.addi %480, %499 : vector<16x1xi32>
    %501 = vector.broadcast %500 : vector<16x1xi32> to vector<16x64xi32>
    %502 = arith.cmpi eq, %501, %130 : vector<16x64xi32>
    %503 = arith.mulf %475, %479 : vector<16x1xf32>
    %cst_106 = arith.constant 0.000000e+00 : f32
    %504 = vector.shape_cast %503 : vector<16x1xf32> to vector<16x1xf32>
    %505 = vector.broadcast %504 : vector<16x1xf32> to vector<16x64xf32>
    %506 = vector.broadcast %cst_106 : f32 to vector<16x64xf32>
    %507 = arith.select %502, %505, %506 : vector<16x64xi1>, vector<16x64xf32>
    %508 = arith.addf %498, %507 : vector<16x64xf32>
    %c8_i32_107 = arith.constant 8 : i32
    %509 = vector.broadcast %c8_i32_107 : i32 to vector<16x1xi32>
    %510 = arith.addi %480, %509 : vector<16x1xi32>
    %c1_i32_108 = arith.constant 1 : i32
    %511 = vector.broadcast %c1_i32_108 : i32 to vector<16x1xi32>
    %512 = arith.addi %510, %511 : vector<16x1xi32>
    %513 = vector.broadcast %512 : vector<16x1xi32> to vector<16x64xi32>
    %514 = arith.cmpi eq, %513, %130 : vector<16x64xi32>
    %515 = arith.mulf %477, %479 : vector<16x1xf32>
    %cst_109 = arith.constant 0.000000e+00 : f32
    %516 = vector.shape_cast %515 : vector<16x1xf32> to vector<16x1xf32>
    %517 = vector.broadcast %516 : vector<16x1xf32> to vector<16x64xf32>
    %518 = vector.broadcast %cst_109 : f32 to vector<16x64xf32>
    %519 = arith.select %514, %517, %518 : vector<16x64xi1>, vector<16x64xf32>
    %520 = arith.addf %508, %519 : vector<16x64xf32>
    %c0_110 = arith.constant 0 : index
    %c8 = arith.constant 8 : index
    %521 = vector.load %arg15[%c0_110, %c8] : memref<80x32xbf16, #tpu.memory_space<vmem>>, vector<64x8xbf16>
    %522 = arith.truncf %520 : vector<16x64xf32> to vector<16x64xbf16>
    %cst_111 = arith.constant dense<0.000000e+00> : vector<16x8xf32>
    %523 = tpu.matmul %522, %521, %cst_111 {dimension_numbers = #tpu.dot_dimension_numbers<[1], [0], [0], [1], [0, 0, 1, 1], [], []>} : vector<16x64xbf16>, vector<64x8xbf16>, vector<16x8xf32> -> vector<16x8xf32>
    %524 = arith.addf %62, %523 : vector<16x8xf32>
    %cst_112 = arith.constant 0.000000e+00 : f32
    %525 = vector.broadcast %cst_112 : f32 to vector<16x64xf32>
    %526 = vector.extract_strided_slice %49 {offsets = [0, 0], sizes = [16, 1], strides = [1, 1]} : vector<16x8xf32> to vector<16x1xf32>
    %527 = vector.extract_strided_slice %121 {offsets = [0, 8], sizes = [16, 1], strides = [1, 1]} : vector<16x16xf32> to vector<16x1xf32>
    %528 = arith.mulf %526, %527 : vector<16x1xf32>
    %529 = vector.extract_strided_slice %122 {offsets = [0, 8], sizes = [16, 1], strides = [1, 1]} : vector<16x16xf32> to vector<16x1xf32>
    %530 = arith.mulf %526, %529 : vector<16x1xf32>
    %531 = vector.extract_strided_slice %125 {offsets = [0, 8], sizes = [16, 1], strides = [1, 1]} : vector<16x16xf32> to vector<16x1xf32>
    %532 = vector.extract_strided_slice %126 {offsets = [0, 8], sizes = [16, 1], strides = [1, 1]} : vector<16x16xf32> to vector<16x1xf32>
    %533 = vector.extract_strided_slice %129 {offsets = [0, 8], sizes = [16, 1], strides = [1, 1]} : vector<16x16xi32> to vector<16x1xi32>
    %534 = vector.broadcast %533 : vector<16x1xi32> to vector<16x64xi32>
    %535 = arith.cmpi eq, %534, %130 : vector<16x64xi32>
    %536 = arith.mulf %528, %531 : vector<16x1xf32>
    %cst_113 = arith.constant 0.000000e+00 : f32
    %537 = vector.shape_cast %536 : vector<16x1xf32> to vector<16x1xf32>
    %538 = vector.broadcast %537 : vector<16x1xf32> to vector<16x64xf32>
    %539 = vector.broadcast %cst_113 : f32 to vector<16x64xf32>
    %540 = arith.select %535, %538, %539 : vector<16x64xi1>, vector<16x64xf32>
    %541 = arith.addf %525, %540 : vector<16x64xf32>
    %c1_i32_114 = arith.constant 1 : i32
    %542 = vector.broadcast %c1_i32_114 : i32 to vector<16x1xi32>
    %543 = arith.addi %533, %542 : vector<16x1xi32>
    %544 = vector.broadcast %543 : vector<16x1xi32> to vector<16x64xi32>
    %545 = arith.cmpi eq, %544, %130 : vector<16x64xi32>
    %546 = arith.mulf %530, %531 : vector<16x1xf32>
    %cst_115 = arith.constant 0.000000e+00 : f32
    %547 = vector.shape_cast %546 : vector<16x1xf32> to vector<16x1xf32>
    %548 = vector.broadcast %547 : vector<16x1xf32> to vector<16x64xf32>
    %549 = vector.broadcast %cst_115 : f32 to vector<16x64xf32>
    %550 = arith.select %545, %548, %549 : vector<16x64xi1>, vector<16x64xf32>
    %551 = arith.addf %541, %550 : vector<16x64xf32>
    %c8_i32_116 = arith.constant 8 : i32
    %552 = vector.broadcast %c8_i32_116 : i32 to vector<16x1xi32>
    %553 = arith.addi %533, %552 : vector<16x1xi32>
    %554 = vector.broadcast %553 : vector<16x1xi32> to vector<16x64xi32>
    %555 = arith.cmpi eq, %554, %130 : vector<16x64xi32>
    %556 = arith.mulf %528, %532 : vector<16x1xf32>
    %cst_117 = arith.constant 0.000000e+00 : f32
    %557 = vector.shape_cast %556 : vector<16x1xf32> to vector<16x1xf32>
    %558 = vector.broadcast %557 : vector<16x1xf32> to vector<16x64xf32>
    %559 = vector.broadcast %cst_117 : f32 to vector<16x64xf32>
    %560 = arith.select %555, %558, %559 : vector<16x64xi1>, vector<16x64xf32>
    %561 = arith.addf %551, %560 : vector<16x64xf32>
    %c8_i32_118 = arith.constant 8 : i32
    %562 = vector.broadcast %c8_i32_118 : i32 to vector<16x1xi32>
    %563 = arith.addi %533, %562 : vector<16x1xi32>
    %c1_i32_119 = arith.constant 1 : i32
    %564 = vector.broadcast %c1_i32_119 : i32 to vector<16x1xi32>
    %565 = arith.addi %563, %564 : vector<16x1xi32>
    %566 = vector.broadcast %565 : vector<16x1xi32> to vector<16x64xi32>
    %567 = arith.cmpi eq, %566, %130 : vector<16x64xi32>
    %568 = arith.mulf %530, %532 : vector<16x1xf32>
    %cst_120 = arith.constant 0.000000e+00 : f32
    %569 = vector.shape_cast %568 : vector<16x1xf32> to vector<16x1xf32>
    %570 = vector.broadcast %569 : vector<16x1xf32> to vector<16x64xf32>
    %571 = vector.broadcast %cst_120 : f32 to vector<16x64xf32>
    %572 = arith.select %567, %570, %571 : vector<16x64xi1>, vector<16x64xf32>
    %573 = arith.addf %561, %572 : vector<16x64xf32>
    %574 = vector.extract_strided_slice %49 {offsets = [0, 1], sizes = [16, 1], strides = [1, 1]} : vector<16x8xf32> to vector<16x1xf32>
    %575 = vector.extract_strided_slice %121 {offsets = [0, 9], sizes = [16, 1], strides = [1, 1]} : vector<16x16xf32> to vector<16x1xf32>
    %576 = arith.mulf %574, %575 : vector<16x1xf32>
    %577 = vector.extract_strided_slice %122 {offsets = [0, 9], sizes = [16, 1], strides = [1, 1]} : vector<16x16xf32> to vector<16x1xf32>
    %578 = arith.mulf %574, %577 : vector<16x1xf32>
    %579 = vector.extract_strided_slice %125 {offsets = [0, 9], sizes = [16, 1], strides = [1, 1]} : vector<16x16xf32> to vector<16x1xf32>
    %580 = vector.extract_strided_slice %126 {offsets = [0, 9], sizes = [16, 1], strides = [1, 1]} : vector<16x16xf32> to vector<16x1xf32>
    %581 = vector.extract_strided_slice %129 {offsets = [0, 9], sizes = [16, 1], strides = [1, 1]} : vector<16x16xi32> to vector<16x1xi32>
    %582 = vector.broadcast %581 : vector<16x1xi32> to vector<16x64xi32>
    %583 = arith.cmpi eq, %582, %130 : vector<16x64xi32>
    %584 = arith.mulf %576, %579 : vector<16x1xf32>
    %cst_121 = arith.constant 0.000000e+00 : f32
    %585 = vector.shape_cast %584 : vector<16x1xf32> to vector<16x1xf32>
    %586 = vector.broadcast %585 : vector<16x1xf32> to vector<16x64xf32>
    %587 = vector.broadcast %cst_121 : f32 to vector<16x64xf32>
    %588 = arith.select %583, %586, %587 : vector<16x64xi1>, vector<16x64xf32>
    %589 = arith.addf %573, %588 : vector<16x64xf32>
    %c1_i32_122 = arith.constant 1 : i32
    %590 = vector.broadcast %c1_i32_122 : i32 to vector<16x1xi32>
    %591 = arith.addi %581, %590 : vector<16x1xi32>
    %592 = vector.broadcast %591 : vector<16x1xi32> to vector<16x64xi32>
    %593 = arith.cmpi eq, %592, %130 : vector<16x64xi32>
    %594 = arith.mulf %578, %579 : vector<16x1xf32>
    %cst_123 = arith.constant 0.000000e+00 : f32
    %595 = vector.shape_cast %594 : vector<16x1xf32> to vector<16x1xf32>
    %596 = vector.broadcast %595 : vector<16x1xf32> to vector<16x64xf32>
    %597 = vector.broadcast %cst_123 : f32 to vector<16x64xf32>
    %598 = arith.select %593, %596, %597 : vector<16x64xi1>, vector<16x64xf32>
    %599 = arith.addf %589, %598 : vector<16x64xf32>
    %c8_i32_124 = arith.constant 8 : i32
    %600 = vector.broadcast %c8_i32_124 : i32 to vector<16x1xi32>
    %601 = arith.addi %581, %600 : vector<16x1xi32>
    %602 = vector.broadcast %601 : vector<16x1xi32> to vector<16x64xi32>
    %603 = arith.cmpi eq, %602, %130 : vector<16x64xi32>
    %604 = arith.mulf %576, %580 : vector<16x1xf32>
    %cst_125 = arith.constant 0.000000e+00 : f32
    %605 = vector.shape_cast %604 : vector<16x1xf32> to vector<16x1xf32>
    %606 = vector.broadcast %605 : vector<16x1xf32> to vector<16x64xf32>
    %607 = vector.broadcast %cst_125 : f32 to vector<16x64xf32>
    %608 = arith.select %603, %606, %607 : vector<16x64xi1>, vector<16x64xf32>
    %609 = arith.addf %599, %608 : vector<16x64xf32>
    %c8_i32_126 = arith.constant 8 : i32
    %610 = vector.broadcast %c8_i32_126 : i32 to vector<16x1xi32>
    %611 = arith.addi %581, %610 : vector<16x1xi32>
    %c1_i32_127 = arith.constant 1 : i32
    %612 = vector.broadcast %c1_i32_127 : i32 to vector<16x1xi32>
    %613 = arith.addi %611, %612 : vector<16x1xi32>
    %614 = vector.broadcast %613 : vector<16x1xi32> to vector<16x64xi32>
    %615 = arith.cmpi eq, %614, %130 : vector<16x64xi32>
    %616 = arith.mulf %578, %580 : vector<16x1xf32>
    %cst_128 = arith.constant 0.000000e+00 : f32
    %617 = vector.shape_cast %616 : vector<16x1xf32> to vector<16x1xf32>
    %618 = vector.broadcast %617 : vector<16x1xf32> to vector<16x64xf32>
    %619 = vector.broadcast %cst_128 : f32 to vector<16x64xf32>
    %620 = arith.select %615, %618, %619 : vector<16x64xi1>, vector<16x64xf32>
    %621 = arith.addf %609, %620 : vector<16x64xf32>
    %622 = vector.extract_strided_slice %49 {offsets = [0, 2], sizes = [16, 1], strides = [1, 1]} : vector<16x8xf32> to vector<16x1xf32>
    %623 = vector.extract_strided_slice %121 {offsets = [0, 10], sizes = [16, 1], strides = [1, 1]} : vector<16x16xf32> to vector<16x1xf32>
    %624 = arith.mulf %622, %623 : vector<16x1xf32>
    %625 = vector.extract_strided_slice %122 {offsets = [0, 10], sizes = [16, 1], strides = [1, 1]} : vector<16x16xf32> to vector<16x1xf32>
    %626 = arith.mulf %622, %625 : vector<16x1xf32>
    %627 = vector.extract_strided_slice %125 {offsets = [0, 10], sizes = [16, 1], strides = [1, 1]} : vector<16x16xf32> to vector<16x1xf32>
    %628 = vector.extract_strided_slice %126 {offsets = [0, 10], sizes = [16, 1], strides = [1, 1]} : vector<16x16xf32> to vector<16x1xf32>
    %629 = vector.extract_strided_slice %129 {offsets = [0, 10], sizes = [16, 1], strides = [1, 1]} : vector<16x16xi32> to vector<16x1xi32>
    %630 = vector.broadcast %629 : vector<16x1xi32> to vector<16x64xi32>
    %631 = arith.cmpi eq, %630, %130 : vector<16x64xi32>
    %632 = arith.mulf %624, %627 : vector<16x1xf32>
    %cst_129 = arith.constant 0.000000e+00 : f32
    %633 = vector.shape_cast %632 : vector<16x1xf32> to vector<16x1xf32>
    %634 = vector.broadcast %633 : vector<16x1xf32> to vector<16x64xf32>
    %635 = vector.broadcast %cst_129 : f32 to vector<16x64xf32>
    %636 = arith.select %631, %634, %635 : vector<16x64xi1>, vector<16x64xf32>
    %637 = arith.addf %621, %636 : vector<16x64xf32>
    %c1_i32_130 = arith.constant 1 : i32
    %638 = vector.broadcast %c1_i32_130 : i32 to vector<16x1xi32>
    %639 = arith.addi %629, %638 : vector<16x1xi32>
    %640 = vector.broadcast %639 : vector<16x1xi32> to vector<16x64xi32>
    %641 = arith.cmpi eq, %640, %130 : vector<16x64xi32>
    %642 = arith.mulf %626, %627 : vector<16x1xf32>
    %cst_131 = arith.constant 0.000000e+00 : f32
    %643 = vector.shape_cast %642 : vector<16x1xf32> to vector<16x1xf32>
    %644 = vector.broadcast %643 : vector<16x1xf32> to vector<16x64xf32>
    %645 = vector.broadcast %cst_131 : f32 to vector<16x64xf32>
    %646 = arith.select %641, %644, %645 : vector<16x64xi1>, vector<16x64xf32>
    %647 = arith.addf %637, %646 : vector<16x64xf32>
    %c8_i32_132 = arith.constant 8 : i32
    %648 = vector.broadcast %c8_i32_132 : i32 to vector<16x1xi32>
    %649 = arith.addi %629, %648 : vector<16x1xi32>
    %650 = vector.broadcast %649 : vector<16x1xi32> to vector<16x64xi32>
    %651 = arith.cmpi eq, %650, %130 : vector<16x64xi32>
    %652 = arith.mulf %624, %628 : vector<16x1xf32>
    %cst_133 = arith.constant 0.000000e+00 : f32
    %653 = vector.shape_cast %652 : vector<16x1xf32> to vector<16x1xf32>
    %654 = vector.broadcast %653 : vector<16x1xf32> to vector<16x64xf32>
    %655 = vector.broadcast %cst_133 : f32 to vector<16x64xf32>
    %656 = arith.select %651, %654, %655 : vector<16x64xi1>, vector<16x64xf32>
    %657 = arith.addf %647, %656 : vector<16x64xf32>
    %c8_i32_134 = arith.constant 8 : i32
    %658 = vector.broadcast %c8_i32_134 : i32 to vector<16x1xi32>
    %659 = arith.addi %629, %658 : vector<16x1xi32>
    %c1_i32_135 = arith.constant 1 : i32
    %660 = vector.broadcast %c1_i32_135 : i32 to vector<16x1xi32>
    %661 = arith.addi %659, %660 : vector<16x1xi32>
    %662 = vector.broadcast %661 : vector<16x1xi32> to vector<16x64xi32>
    %663 = arith.cmpi eq, %662, %130 : vector<16x64xi32>
    %664 = arith.mulf %626, %628 : vector<16x1xf32>
    %cst_136 = arith.constant 0.000000e+00 : f32
    %665 = vector.shape_cast %664 : vector<16x1xf32> to vector<16x1xf32>
    %666 = vector.broadcast %665 : vector<16x1xf32> to vector<16x64xf32>
    %667 = vector.broadcast %cst_136 : f32 to vector<16x64xf32>
    %668 = arith.select %663, %666, %667 : vector<16x64xi1>, vector<16x64xf32>
    %669 = arith.addf %657, %668 : vector<16x64xf32>
    %670 = vector.extract_strided_slice %49 {offsets = [0, 3], sizes = [16, 1], strides = [1, 1]} : vector<16x8xf32> to vector<16x1xf32>
    %671 = vector.extract_strided_slice %121 {offsets = [0, 11], sizes = [16, 1], strides = [1, 1]} : vector<16x16xf32> to vector<16x1xf32>
    %672 = arith.mulf %670, %671 : vector<16x1xf32>
    %673 = vector.extract_strided_slice %122 {offsets = [0, 11], sizes = [16, 1], strides = [1, 1]} : vector<16x16xf32> to vector<16x1xf32>
    %674 = arith.mulf %670, %673 : vector<16x1xf32>
    %675 = vector.extract_strided_slice %125 {offsets = [0, 11], sizes = [16, 1], strides = [1, 1]} : vector<16x16xf32> to vector<16x1xf32>
    %676 = vector.extract_strided_slice %126 {offsets = [0, 11], sizes = [16, 1], strides = [1, 1]} : vector<16x16xf32> to vector<16x1xf32>
    %677 = vector.extract_strided_slice %129 {offsets = [0, 11], sizes = [16, 1], strides = [1, 1]} : vector<16x16xi32> to vector<16x1xi32>
    %678 = vector.broadcast %677 : vector<16x1xi32> to vector<16x64xi32>
    %679 = arith.cmpi eq, %678, %130 : vector<16x64xi32>
    %680 = arith.mulf %672, %675 : vector<16x1xf32>
    %cst_137 = arith.constant 0.000000e+00 : f32
    %681 = vector.shape_cast %680 : vector<16x1xf32> to vector<16x1xf32>
    %682 = vector.broadcast %681 : vector<16x1xf32> to vector<16x64xf32>
    %683 = vector.broadcast %cst_137 : f32 to vector<16x64xf32>
    %684 = arith.select %679, %682, %683 : vector<16x64xi1>, vector<16x64xf32>
    %685 = arith.addf %669, %684 : vector<16x64xf32>
    %c1_i32_138 = arith.constant 1 : i32
    %686 = vector.broadcast %c1_i32_138 : i32 to vector<16x1xi32>
    %687 = arith.addi %677, %686 : vector<16x1xi32>
    %688 = vector.broadcast %687 : vector<16x1xi32> to vector<16x64xi32>
    %689 = arith.cmpi eq, %688, %130 : vector<16x64xi32>
    %690 = arith.mulf %674, %675 : vector<16x1xf32>
    %cst_139 = arith.constant 0.000000e+00 : f32
    %691 = vector.shape_cast %690 : vector<16x1xf32> to vector<16x1xf32>
    %692 = vector.broadcast %691 : vector<16x1xf32> to vector<16x64xf32>
    %693 = vector.broadcast %cst_139 : f32 to vector<16x64xf32>
    %694 = arith.select %689, %692, %693 : vector<16x64xi1>, vector<16x64xf32>
    %695 = arith.addf %685, %694 : vector<16x64xf32>
    %c8_i32_140 = arith.constant 8 : i32
    %696 = vector.broadcast %c8_i32_140 : i32 to vector<16x1xi32>
    %697 = arith.addi %677, %696 : vector<16x1xi32>
    %698 = vector.broadcast %697 : vector<16x1xi32> to vector<16x64xi32>
    %699 = arith.cmpi eq, %698, %130 : vector<16x64xi32>
    %700 = arith.mulf %672, %676 : vector<16x1xf32>
    %cst_141 = arith.constant 0.000000e+00 : f32
    %701 = vector.shape_cast %700 : vector<16x1xf32> to vector<16x1xf32>
    %702 = vector.broadcast %701 : vector<16x1xf32> to vector<16x64xf32>
    %703 = vector.broadcast %cst_141 : f32 to vector<16x64xf32>
    %704 = arith.select %699, %702, %703 : vector<16x64xi1>, vector<16x64xf32>
    %705 = arith.addf %695, %704 : vector<16x64xf32>
    %c8_i32_142 = arith.constant 8 : i32
    %706 = vector.broadcast %c8_i32_142 : i32 to vector<16x1xi32>
    %707 = arith.addi %677, %706 : vector<16x1xi32>
    %c1_i32_143 = arith.constant 1 : i32
    %708 = vector.broadcast %c1_i32_143 : i32 to vector<16x1xi32>
    %709 = arith.addi %707, %708 : vector<16x1xi32>
    %710 = vector.broadcast %709 : vector<16x1xi32> to vector<16x64xi32>
    %711 = arith.cmpi eq, %710, %130 : vector<16x64xi32>
    %712 = arith.mulf %674, %676 : vector<16x1xf32>
    %cst_144 = arith.constant 0.000000e+00 : f32
    %713 = vector.shape_cast %712 : vector<16x1xf32> to vector<16x1xf32>
    %714 = vector.broadcast %713 : vector<16x1xf32> to vector<16x64xf32>
    %715 = vector.broadcast %cst_144 : f32 to vector<16x64xf32>
    %716 = arith.select %711, %714, %715 : vector<16x64xi1>, vector<16x64xf32>
    %717 = arith.addf %705, %716 : vector<16x64xf32>
    %c0_145 = arith.constant 0 : index
    %c16 = arith.constant 16 : index
    %718 = vector.load %arg15[%c0_145, %c16] : memref<80x32xbf16, #tpu.memory_space<vmem>>, vector<64x8xbf16>
    %719 = arith.truncf %717 : vector<16x64xf32> to vector<16x64xbf16>
    %cst_146 = arith.constant dense<0.000000e+00> : vector<16x8xf32>
    %720 = tpu.matmul %719, %718, %cst_146 {dimension_numbers = #tpu.dot_dimension_numbers<[1], [0], [0], [1], [0, 0, 1, 1], [], []>} : vector<16x64xbf16>, vector<64x8xbf16>, vector<16x8xf32> -> vector<16x8xf32>
    %721 = arith.addf %63, %720 : vector<16x8xf32>
    %cst_147 = arith.constant 0.000000e+00 : f32
    %722 = vector.broadcast %cst_147 : f32 to vector<16x64xf32>
    %723 = vector.extract_strided_slice %60 {offsets = [0, 0], sizes = [16, 1], strides = [1, 1]} : vector<16x8xf32> to vector<16x1xf32>
    %724 = vector.extract_strided_slice %121 {offsets = [0, 12], sizes = [16, 1], strides = [1, 1]} : vector<16x16xf32> to vector<16x1xf32>
    %725 = arith.mulf %723, %724 : vector<16x1xf32>
    %726 = vector.extract_strided_slice %122 {offsets = [0, 12], sizes = [16, 1], strides = [1, 1]} : vector<16x16xf32> to vector<16x1xf32>
    %727 = arith.mulf %723, %726 : vector<16x1xf32>
    %728 = vector.extract_strided_slice %125 {offsets = [0, 12], sizes = [16, 1], strides = [1, 1]} : vector<16x16xf32> to vector<16x1xf32>
    %729 = vector.extract_strided_slice %126 {offsets = [0, 12], sizes = [16, 1], strides = [1, 1]} : vector<16x16xf32> to vector<16x1xf32>
    %730 = vector.extract_strided_slice %129 {offsets = [0, 12], sizes = [16, 1], strides = [1, 1]} : vector<16x16xi32> to vector<16x1xi32>
    %731 = vector.broadcast %730 : vector<16x1xi32> to vector<16x64xi32>
    %732 = arith.cmpi eq, %731, %130 : vector<16x64xi32>
    %733 = arith.mulf %725, %728 : vector<16x1xf32>
    %cst_148 = arith.constant 0.000000e+00 : f32
    %734 = vector.shape_cast %733 : vector<16x1xf32> to vector<16x1xf32>
    %735 = vector.broadcast %734 : vector<16x1xf32> to vector<16x64xf32>
    %736 = vector.broadcast %cst_148 : f32 to vector<16x64xf32>
    %737 = arith.select %732, %735, %736 : vector<16x64xi1>, vector<16x64xf32>
    %738 = arith.addf %722, %737 : vector<16x64xf32>
    %c1_i32_149 = arith.constant 1 : i32
    %739 = vector.broadcast %c1_i32_149 : i32 to vector<16x1xi32>
    %740 = arith.addi %730, %739 : vector<16x1xi32>
    %741 = vector.broadcast %740 : vector<16x1xi32> to vector<16x64xi32>
    %742 = arith.cmpi eq, %741, %130 : vector<16x64xi32>
    %743 = arith.mulf %727, %728 : vector<16x1xf32>
    %cst_150 = arith.constant 0.000000e+00 : f32
    %744 = vector.shape_cast %743 : vector<16x1xf32> to vector<16x1xf32>
    %745 = vector.broadcast %744 : vector<16x1xf32> to vector<16x64xf32>
    %746 = vector.broadcast %cst_150 : f32 to vector<16x64xf32>
    %747 = arith.select %742, %745, %746 : vector<16x64xi1>, vector<16x64xf32>
    %748 = arith.addf %738, %747 : vector<16x64xf32>
    %c8_i32_151 = arith.constant 8 : i32
    %749 = vector.broadcast %c8_i32_151 : i32 to vector<16x1xi32>
    %750 = arith.addi %730, %749 : vector<16x1xi32>
    %751 = vector.broadcast %750 : vector<16x1xi32> to vector<16x64xi32>
    %752 = arith.cmpi eq, %751, %130 : vector<16x64xi32>
    %753 = arith.mulf %725, %729 : vector<16x1xf32>
    %cst_152 = arith.constant 0.000000e+00 : f32
    %754 = vector.shape_cast %753 : vector<16x1xf32> to vector<16x1xf32>
    %755 = vector.broadcast %754 : vector<16x1xf32> to vector<16x64xf32>
    %756 = vector.broadcast %cst_152 : f32 to vector<16x64xf32>
    %757 = arith.select %752, %755, %756 : vector<16x64xi1>, vector<16x64xf32>
    %758 = arith.addf %748, %757 : vector<16x64xf32>
    %c8_i32_153 = arith.constant 8 : i32
    %759 = vector.broadcast %c8_i32_153 : i32 to vector<16x1xi32>
    %760 = arith.addi %730, %759 : vector<16x1xi32>
    %c1_i32_154 = arith.constant 1 : i32
    %761 = vector.broadcast %c1_i32_154 : i32 to vector<16x1xi32>
    %762 = arith.addi %760, %761 : vector<16x1xi32>
    %763 = vector.broadcast %762 : vector<16x1xi32> to vector<16x64xi32>
    %764 = arith.cmpi eq, %763, %130 : vector<16x64xi32>
    %765 = arith.mulf %727, %729 : vector<16x1xf32>
    %cst_155 = arith.constant 0.000000e+00 : f32
    %766 = vector.shape_cast %765 : vector<16x1xf32> to vector<16x1xf32>
    %767 = vector.broadcast %766 : vector<16x1xf32> to vector<16x64xf32>
    %768 = vector.broadcast %cst_155 : f32 to vector<16x64xf32>
    %769 = arith.select %764, %767, %768 : vector<16x64xi1>, vector<16x64xf32>
    %770 = arith.addf %758, %769 : vector<16x64xf32>
    %771 = vector.extract_strided_slice %60 {offsets = [0, 1], sizes = [16, 1], strides = [1, 1]} : vector<16x8xf32> to vector<16x1xf32>
    %772 = vector.extract_strided_slice %121 {offsets = [0, 13], sizes = [16, 1], strides = [1, 1]} : vector<16x16xf32> to vector<16x1xf32>
    %773 = arith.mulf %771, %772 : vector<16x1xf32>
    %774 = vector.extract_strided_slice %122 {offsets = [0, 13], sizes = [16, 1], strides = [1, 1]} : vector<16x16xf32> to vector<16x1xf32>
    %775 = arith.mulf %771, %774 : vector<16x1xf32>
    %776 = vector.extract_strided_slice %125 {offsets = [0, 13], sizes = [16, 1], strides = [1, 1]} : vector<16x16xf32> to vector<16x1xf32>
    %777 = vector.extract_strided_slice %126 {offsets = [0, 13], sizes = [16, 1], strides = [1, 1]} : vector<16x16xf32> to vector<16x1xf32>
    %778 = vector.extract_strided_slice %129 {offsets = [0, 13], sizes = [16, 1], strides = [1, 1]} : vector<16x16xi32> to vector<16x1xi32>
    %779 = vector.broadcast %778 : vector<16x1xi32> to vector<16x64xi32>
    %780 = arith.cmpi eq, %779, %130 : vector<16x64xi32>
    %781 = arith.mulf %773, %776 : vector<16x1xf32>
    %cst_156 = arith.constant 0.000000e+00 : f32
    %782 = vector.shape_cast %781 : vector<16x1xf32> to vector<16x1xf32>
    %783 = vector.broadcast %782 : vector<16x1xf32> to vector<16x64xf32>
    %784 = vector.broadcast %cst_156 : f32 to vector<16x64xf32>
    %785 = arith.select %780, %783, %784 : vector<16x64xi1>, vector<16x64xf32>
    %786 = arith.addf %770, %785 : vector<16x64xf32>
    %c1_i32_157 = arith.constant 1 : i32
    %787 = vector.broadcast %c1_i32_157 : i32 to vector<16x1xi32>
    %788 = arith.addi %778, %787 : vector<16x1xi32>
    %789 = vector.broadcast %788 : vector<16x1xi32> to vector<16x64xi32>
    %790 = arith.cmpi eq, %789, %130 : vector<16x64xi32>
    %791 = arith.mulf %775, %776 : vector<16x1xf32>
    %cst_158 = arith.constant 0.000000e+00 : f32
    %792 = vector.shape_cast %791 : vector<16x1xf32> to vector<16x1xf32>
    %793 = vector.broadcast %792 : vector<16x1xf32> to vector<16x64xf32>
    %794 = vector.broadcast %cst_158 : f32 to vector<16x64xf32>
    %795 = arith.select %790, %793, %794 : vector<16x64xi1>, vector<16x64xf32>
    %796 = arith.addf %786, %795 : vector<16x64xf32>
    %c8_i32_159 = arith.constant 8 : i32
    %797 = vector.broadcast %c8_i32_159 : i32 to vector<16x1xi32>
    %798 = arith.addi %778, %797 : vector<16x1xi32>
    %799 = vector.broadcast %798 : vector<16x1xi32> to vector<16x64xi32>
    %800 = arith.cmpi eq, %799, %130 : vector<16x64xi32>
    %801 = arith.mulf %773, %777 : vector<16x1xf32>
    %cst_160 = arith.constant 0.000000e+00 : f32
    %802 = vector.shape_cast %801 : vector<16x1xf32> to vector<16x1xf32>
    %803 = vector.broadcast %802 : vector<16x1xf32> to vector<16x64xf32>
    %804 = vector.broadcast %cst_160 : f32 to vector<16x64xf32>
    %805 = arith.select %800, %803, %804 : vector<16x64xi1>, vector<16x64xf32>
    %806 = arith.addf %796, %805 : vector<16x64xf32>
    %c8_i32_161 = arith.constant 8 : i32
    %807 = vector.broadcast %c8_i32_161 : i32 to vector<16x1xi32>
    %808 = arith.addi %778, %807 : vector<16x1xi32>
    %c1_i32_162 = arith.constant 1 : i32
    %809 = vector.broadcast %c1_i32_162 : i32 to vector<16x1xi32>
    %810 = arith.addi %808, %809 : vector<16x1xi32>
    %811 = vector.broadcast %810 : vector<16x1xi32> to vector<16x64xi32>
    %812 = arith.cmpi eq, %811, %130 : vector<16x64xi32>
    %813 = arith.mulf %775, %777 : vector<16x1xf32>
    %cst_163 = arith.constant 0.000000e+00 : f32
    %814 = vector.shape_cast %813 : vector<16x1xf32> to vector<16x1xf32>
    %815 = vector.broadcast %814 : vector<16x1xf32> to vector<16x64xf32>
    %816 = vector.broadcast %cst_163 : f32 to vector<16x64xf32>
    %817 = arith.select %812, %815, %816 : vector<16x64xi1>, vector<16x64xf32>
    %818 = arith.addf %806, %817 : vector<16x64xf32>
    %819 = vector.extract_strided_slice %60 {offsets = [0, 2], sizes = [16, 1], strides = [1, 1]} : vector<16x8xf32> to vector<16x1xf32>
    %820 = vector.extract_strided_slice %121 {offsets = [0, 14], sizes = [16, 1], strides = [1, 1]} : vector<16x16xf32> to vector<16x1xf32>
    %821 = arith.mulf %819, %820 : vector<16x1xf32>
    %822 = vector.extract_strided_slice %122 {offsets = [0, 14], sizes = [16, 1], strides = [1, 1]} : vector<16x16xf32> to vector<16x1xf32>
    %823 = arith.mulf %819, %822 : vector<16x1xf32>
    %824 = vector.extract_strided_slice %125 {offsets = [0, 14], sizes = [16, 1], strides = [1, 1]} : vector<16x16xf32> to vector<16x1xf32>
    %825 = vector.extract_strided_slice %126 {offsets = [0, 14], sizes = [16, 1], strides = [1, 1]} : vector<16x16xf32> to vector<16x1xf32>
    %826 = vector.extract_strided_slice %129 {offsets = [0, 14], sizes = [16, 1], strides = [1, 1]} : vector<16x16xi32> to vector<16x1xi32>
    %827 = vector.broadcast %826 : vector<16x1xi32> to vector<16x64xi32>
    %828 = arith.cmpi eq, %827, %130 : vector<16x64xi32>
    %829 = arith.mulf %821, %824 : vector<16x1xf32>
    %cst_164 = arith.constant 0.000000e+00 : f32
    %830 = vector.shape_cast %829 : vector<16x1xf32> to vector<16x1xf32>
    %831 = vector.broadcast %830 : vector<16x1xf32> to vector<16x64xf32>
    %832 = vector.broadcast %cst_164 : f32 to vector<16x64xf32>
    %833 = arith.select %828, %831, %832 : vector<16x64xi1>, vector<16x64xf32>
    %834 = arith.addf %818, %833 : vector<16x64xf32>
    %c1_i32_165 = arith.constant 1 : i32
    %835 = vector.broadcast %c1_i32_165 : i32 to vector<16x1xi32>
    %836 = arith.addi %826, %835 : vector<16x1xi32>
    %837 = vector.broadcast %836 : vector<16x1xi32> to vector<16x64xi32>
    %838 = arith.cmpi eq, %837, %130 : vector<16x64xi32>
    %839 = arith.mulf %823, %824 : vector<16x1xf32>
    %cst_166 = arith.constant 0.000000e+00 : f32
    %840 = vector.shape_cast %839 : vector<16x1xf32> to vector<16x1xf32>
    %841 = vector.broadcast %840 : vector<16x1xf32> to vector<16x64xf32>
    %842 = vector.broadcast %cst_166 : f32 to vector<16x64xf32>
    %843 = arith.select %838, %841, %842 : vector<16x64xi1>, vector<16x64xf32>
    %844 = arith.addf %834, %843 : vector<16x64xf32>
    %c8_i32_167 = arith.constant 8 : i32
    %845 = vector.broadcast %c8_i32_167 : i32 to vector<16x1xi32>
    %846 = arith.addi %826, %845 : vector<16x1xi32>
    %847 = vector.broadcast %846 : vector<16x1xi32> to vector<16x64xi32>
    %848 = arith.cmpi eq, %847, %130 : vector<16x64xi32>
    %849 = arith.mulf %821, %825 : vector<16x1xf32>
    %cst_168 = arith.constant 0.000000e+00 : f32
    %850 = vector.shape_cast %849 : vector<16x1xf32> to vector<16x1xf32>
    %851 = vector.broadcast %850 : vector<16x1xf32> to vector<16x64xf32>
    %852 = vector.broadcast %cst_168 : f32 to vector<16x64xf32>
    %853 = arith.select %848, %851, %852 : vector<16x64xi1>, vector<16x64xf32>
    %854 = arith.addf %844, %853 : vector<16x64xf32>
    %c8_i32_169 = arith.constant 8 : i32
    %855 = vector.broadcast %c8_i32_169 : i32 to vector<16x1xi32>
    %856 = arith.addi %826, %855 : vector<16x1xi32>
    %c1_i32_170 = arith.constant 1 : i32
    %857 = vector.broadcast %c1_i32_170 : i32 to vector<16x1xi32>
    %858 = arith.addi %856, %857 : vector<16x1xi32>
    %859 = vector.broadcast %858 : vector<16x1xi32> to vector<16x64xi32>
    %860 = arith.cmpi eq, %859, %130 : vector<16x64xi32>
    %861 = arith.mulf %823, %825 : vector<16x1xf32>
    %cst_171 = arith.constant 0.000000e+00 : f32
    %862 = vector.shape_cast %861 : vector<16x1xf32> to vector<16x1xf32>
    %863 = vector.broadcast %862 : vector<16x1xf32> to vector<16x64xf32>
    %864 = vector.broadcast %cst_171 : f32 to vector<16x64xf32>
    %865 = arith.select %860, %863, %864 : vector<16x64xi1>, vector<16x64xf32>
    %866 = arith.addf %854, %865 : vector<16x64xf32>
    %867 = vector.extract_strided_slice %60 {offsets = [0, 3], sizes = [16, 1], strides = [1, 1]} : vector<16x8xf32> to vector<16x1xf32>
    %868 = vector.extract_strided_slice %121 {offsets = [0, 15], sizes = [16, 1], strides = [1, 1]} : vector<16x16xf32> to vector<16x1xf32>
    %869 = arith.mulf %867, %868 : vector<16x1xf32>
    %870 = vector.extract_strided_slice %122 {offsets = [0, 15], sizes = [16, 1], strides = [1, 1]} : vector<16x16xf32> to vector<16x1xf32>
    %871 = arith.mulf %867, %870 : vector<16x1xf32>
    %872 = vector.extract_strided_slice %125 {offsets = [0, 15], sizes = [16, 1], strides = [1, 1]} : vector<16x16xf32> to vector<16x1xf32>
    %873 = vector.extract_strided_slice %126 {offsets = [0, 15], sizes = [16, 1], strides = [1, 1]} : vector<16x16xf32> to vector<16x1xf32>
    %874 = vector.extract_strided_slice %129 {offsets = [0, 15], sizes = [16, 1], strides = [1, 1]} : vector<16x16xi32> to vector<16x1xi32>
    %875 = vector.broadcast %874 : vector<16x1xi32> to vector<16x64xi32>
    %876 = arith.cmpi eq, %875, %130 : vector<16x64xi32>
    %877 = arith.mulf %869, %872 : vector<16x1xf32>
    %cst_172 = arith.constant 0.000000e+00 : f32
    %878 = vector.shape_cast %877 : vector<16x1xf32> to vector<16x1xf32>
    %879 = vector.broadcast %878 : vector<16x1xf32> to vector<16x64xf32>
    %880 = vector.broadcast %cst_172 : f32 to vector<16x64xf32>
    %881 = arith.select %876, %879, %880 : vector<16x64xi1>, vector<16x64xf32>
    %882 = arith.addf %866, %881 : vector<16x64xf32>
    %c1_i32_173 = arith.constant 1 : i32
    %883 = vector.broadcast %c1_i32_173 : i32 to vector<16x1xi32>
    %884 = arith.addi %874, %883 : vector<16x1xi32>
    %885 = vector.broadcast %884 : vector<16x1xi32> to vector<16x64xi32>
    %886 = arith.cmpi eq, %885, %130 : vector<16x64xi32>
    %887 = arith.mulf %871, %872 : vector<16x1xf32>
    %cst_174 = arith.constant 0.000000e+00 : f32
    %888 = vector.shape_cast %887 : vector<16x1xf32> to vector<16x1xf32>
    %889 = vector.broadcast %888 : vector<16x1xf32> to vector<16x64xf32>
    %890 = vector.broadcast %cst_174 : f32 to vector<16x64xf32>
    %891 = arith.select %886, %889, %890 : vector<16x64xi1>, vector<16x64xf32>
    %892 = arith.addf %882, %891 : vector<16x64xf32>
    %c8_i32_175 = arith.constant 8 : i32
    %893 = vector.broadcast %c8_i32_175 : i32 to vector<16x1xi32>
    %894 = arith.addi %874, %893 : vector<16x1xi32>
    %895 = vector.broadcast %894 : vector<16x1xi32> to vector<16x64xi32>
    %896 = arith.cmpi eq, %895, %130 : vector<16x64xi32>
    %897 = arith.mulf %869, %873 : vector<16x1xf32>
    %cst_176 = arith.constant 0.000000e+00 : f32
    %898 = vector.shape_cast %897 : vector<16x1xf32> to vector<16x1xf32>
    %899 = vector.broadcast %898 : vector<16x1xf32> to vector<16x64xf32>
    %900 = vector.broadcast %cst_176 : f32 to vector<16x64xf32>
    %901 = arith.select %896, %899, %900 : vector<16x64xi1>, vector<16x64xf32>
    %902 = arith.addf %892, %901 : vector<16x64xf32>
    %c8_i32_177 = arith.constant 8 : i32
    %903 = vector.broadcast %c8_i32_177 : i32 to vector<16x1xi32>
    %904 = arith.addi %874, %903 : vector<16x1xi32>
    %c1_i32_178 = arith.constant 1 : i32
    %905 = vector.broadcast %c1_i32_178 : i32 to vector<16x1xi32>
    %906 = arith.addi %904, %905 : vector<16x1xi32>
    %907 = vector.broadcast %906 : vector<16x1xi32> to vector<16x64xi32>
    %908 = arith.cmpi eq, %907, %130 : vector<16x64xi32>
    %909 = arith.mulf %871, %873 : vector<16x1xf32>
    %cst_179 = arith.constant 0.000000e+00 : f32
    %910 = vector.shape_cast %909 : vector<16x1xf32> to vector<16x1xf32>
    %911 = vector.broadcast %910 : vector<16x1xf32> to vector<16x64xf32>
    %912 = vector.broadcast %cst_179 : f32 to vector<16x64xf32>
    %913 = arith.select %908, %911, %912 : vector<16x64xi1>, vector<16x64xf32>
    %914 = arith.addf %902, %913 : vector<16x64xf32>
    %c0_180 = arith.constant 0 : index
    %c24 = arith.constant 24 : index
    %915 = vector.load %arg15[%c0_180, %c24] : memref<80x32xbf16, #tpu.memory_space<vmem>>, vector<64x8xbf16>
    %916 = arith.truncf %914 : vector<16x64xf32> to vector<16x64xbf16>
    %cst_181 = arith.constant dense<0.000000e+00> : vector<16x8xf32>
    %917 = tpu.matmul %916, %915, %cst_181 {dimension_numbers = #tpu.dot_dimension_numbers<[1], [0], [0], [1], [0, 0, 1, 1], [], []>} : vector<16x64xbf16>, vector<64x8xbf16>, vector<16x8xf32> -> vector<16x8xf32>
    %918 = arith.addf %64, %917 : vector<16x8xf32>
    %919 = vector.extract_strided_slice %6 {offsets = [0, 2], sizes = [16, 1], strides = [1, 1]} : vector<16x4xf32> to vector<16x1xf32>
    %920 = vector.extract_strided_slice %6 {offsets = [0, 3], sizes = [16, 1], strides = [1, 1]} : vector<16x4xf32> to vector<16x1xf32>
    %cst_182 = arith.constant 4.000000e+00 : f32
    %921 = vector.broadcast %cst_182 : f32 to vector<16x1xf32>
    %922 = arith.mulf %919, %921 : vector<16x1xf32>
    %923 = vector.extract_strided_slice %11 {offsets = [0, 32], sizes = [16, 16], strides = [1, 1]} : vector<16x64xf32> to vector<16x16xf32>
    %924 = vector.broadcast %922 : vector<16x1xf32> to vector<16x16xf32>
    %925 = arith.addf %924, %923 : vector<16x16xf32>
    %cst_183 = arith.constant 5.000000e-01 : f32
    %926 = vector.broadcast %cst_183 : f32 to vector<16x16xf32>
    %927 = arith.subf %925, %926 : vector<16x16xf32>
    %cst_184 = arith.constant 4.000000e+00 : f32
    %928 = vector.broadcast %cst_184 : f32 to vector<16x1xf32>
    %929 = arith.mulf %920, %928 : vector<16x1xf32>
    %930 = vector.extract_strided_slice %11 {offsets = [0, 48], sizes = [16, 16], strides = [1, 1]} : vector<16x64xf32> to vector<16x16xf32>
    %931 = vector.broadcast %929 : vector<16x1xf32> to vector<16x16xf32>
    %932 = arith.addf %931, %930 : vector<16x16xf32>
    %cst_185 = arith.constant 5.000000e-01 : f32
    %933 = vector.broadcast %cst_185 : f32 to vector<16x16xf32>
    %934 = arith.subf %932, %933 : vector<16x16xf32>
    %935 = math.floor %927 : vector<16x16xf32>
    %936 = math.floor %934 : vector<16x16xf32>
    %937 = arith.subf %927, %935 : vector<16x16xf32>
    %938 = arith.subf %934, %936 : vector<16x16xf32>
    %939 = arith.fptosi %935 : vector<16x16xf32> to vector<16x16xi32>
    %940 = arith.fptosi %936 : vector<16x16xf32> to vector<16x16xi32>
    %c1_i32_186 = arith.constant 1 : i32
    %941 = vector.broadcast %c1_i32_186 : i32 to vector<16x16xi32>
    %942 = arith.addi %939, %941 : vector<16x16xi32>
    %c1_i32_187 = arith.constant 1 : i32
    %943 = vector.broadcast %c1_i32_187 : i32 to vector<16x16xi32>
    %944 = arith.addi %940, %943 : vector<16x16xi32>
    %c0_i32_188 = arith.constant 0 : i32
    %945 = vector.broadcast %c0_i32_188 : i32 to vector<16x16xi32>
    %946 = arith.cmpi sge, %939, %945 : vector<16x16xi32>
    %c3_i32 = arith.constant 3 : i32
    %947 = vector.broadcast %c3_i32 : i32 to vector<16x16xi32>
    %948 = arith.cmpi sle, %939, %947 : vector<16x16xi32>
    %949 = arith.andi %946, %948 : vector<16x16xi1>
    %950 = arith.extui %949 : vector<16x16xi1> to vector<16x16xi32>
    %951 = arith.sitofp %950 : vector<16x16xi32> to vector<16x16xf32>
    %c0_i32_189 = arith.constant 0 : i32
    %952 = vector.broadcast %c0_i32_189 : i32 to vector<16x16xi32>
    %953 = arith.cmpi sge, %942, %952 : vector<16x16xi32>
    %c3_i32_190 = arith.constant 3 : i32
    %954 = vector.broadcast %c3_i32_190 : i32 to vector<16x16xi32>
    %955 = arith.cmpi sle, %942, %954 : vector<16x16xi32>
    %956 = arith.andi %953, %955 : vector<16x16xi1>
    %957 = arith.extui %956 : vector<16x16xi1> to vector<16x16xi32>
    %958 = arith.sitofp %957 : vector<16x16xi32> to vector<16x16xf32>
    %c0_i32_191 = arith.constant 0 : i32
    %959 = vector.broadcast %c0_i32_191 : i32 to vector<16x16xi32>
    %960 = arith.cmpi sge, %940, %959 : vector<16x16xi32>
    %c3_i32_192 = arith.constant 3 : i32
    %961 = vector.broadcast %c3_i32_192 : i32 to vector<16x16xi32>
    %962 = arith.cmpi sle, %940, %961 : vector<16x16xi32>
    %963 = arith.andi %960, %962 : vector<16x16xi1>
    %964 = arith.extui %963 : vector<16x16xi1> to vector<16x16xi32>
    %965 = arith.sitofp %964 : vector<16x16xi32> to vector<16x16xf32>
    %c0_i32_193 = arith.constant 0 : i32
    %966 = vector.broadcast %c0_i32_193 : i32 to vector<16x16xi32>
    %967 = arith.cmpi sge, %944, %966 : vector<16x16xi32>
    %c3_i32_194 = arith.constant 3 : i32
    %968 = vector.broadcast %c3_i32_194 : i32 to vector<16x16xi32>
    %969 = arith.cmpi sle, %944, %968 : vector<16x16xi32>
    %970 = arith.andi %967, %969 : vector<16x16xi1>
    %971 = arith.extui %970 : vector<16x16xi1> to vector<16x16xi32>
    %972 = arith.sitofp %971 : vector<16x16xi32> to vector<16x16xf32>
    %cst_195 = arith.constant 1.000000e+00 : f32
    %973 = vector.broadcast %cst_195 : f32 to vector<16x16xf32>
    %974 = arith.subf %973, %937 : vector<16x16xf32>
    %975 = arith.mulf %974, %951 : vector<16x16xf32>
    %976 = arith.mulf %937, %958 : vector<16x16xf32>
    %cst_196 = arith.constant 1.000000e+00 : f32
    %977 = vector.broadcast %cst_196 : f32 to vector<16x16xf32>
    %978 = arith.subf %977, %938 : vector<16x16xf32>
    %979 = arith.mulf %978, %965 : vector<16x16xf32>
    %980 = arith.mulf %938, %972 : vector<16x16xf32>
    %c4_i32 = arith.constant 4 : i32
    %981 = vector.broadcast %c4_i32 : i32 to vector<16x16xi32>
    %982 = arith.muli %940, %981 : vector<16x16xi32>
    %983 = arith.addi %982, %939 : vector<16x16xi32>
    %984 = tpu.iota {dimensions = array<i32: 1>} : vector<16x16xi32>
    %cst_197 = arith.constant 0.000000e+00 : f32
    %985 = vector.broadcast %cst_197 : f32 to vector<16x16xf32>
    %986 = vector.extract_strided_slice %27 {offsets = [0, 4], sizes = [16, 1], strides = [1, 1]} : vector<16x8xf32> to vector<16x1xf32>
    %987 = vector.extract_strided_slice %975 {offsets = [0, 0], sizes = [16, 1], strides = [1, 1]} : vector<16x16xf32> to vector<16x1xf32>
    %988 = arith.mulf %986, %987 : vector<16x1xf32>
    %989 = vector.extract_strided_slice %976 {offsets = [0, 0], sizes = [16, 1], strides = [1, 1]} : vector<16x16xf32> to vector<16x1xf32>
    %990 = arith.mulf %986, %989 : vector<16x1xf32>
    %991 = vector.extract_strided_slice %979 {offsets = [0, 0], sizes = [16, 1], strides = [1, 1]} : vector<16x16xf32> to vector<16x1xf32>
    %992 = vector.extract_strided_slice %980 {offsets = [0, 0], sizes = [16, 1], strides = [1, 1]} : vector<16x16xf32> to vector<16x1xf32>
    %993 = vector.extract_strided_slice %983 {offsets = [0, 0], sizes = [16, 1], strides = [1, 1]} : vector<16x16xi32> to vector<16x1xi32>
    %994 = vector.broadcast %993 : vector<16x1xi32> to vector<16x16xi32>
    %995 = arith.cmpi eq, %994, %984 : vector<16x16xi32>
    %996 = arith.mulf %988, %991 : vector<16x1xf32>
    %cst_198 = arith.constant 0.000000e+00 : f32
    %997 = vector.shape_cast %996 : vector<16x1xf32> to vector<16x1xf32>
    %998 = vector.broadcast %997 : vector<16x1xf32> to vector<16x16xf32>
    %999 = vector.broadcast %cst_198 : f32 to vector<16x16xf32>
    %1000 = arith.select %995, %998, %999 : vector<16x16xi1>, vector<16x16xf32>
    %1001 = arith.addf %985, %1000 : vector<16x16xf32>
    %c1_i32_199 = arith.constant 1 : i32
    %1002 = vector.broadcast %c1_i32_199 : i32 to vector<16x1xi32>
    %1003 = arith.addi %993, %1002 : vector<16x1xi32>
    %1004 = vector.broadcast %1003 : vector<16x1xi32> to vector<16x16xi32>
    %1005 = arith.cmpi eq, %1004, %984 : vector<16x16xi32>
    %1006 = arith.mulf %990, %991 : vector<16x1xf32>
    %cst_200 = arith.constant 0.000000e+00 : f32
    %1007 = vector.shape_cast %1006 : vector<16x1xf32> to vector<16x1xf32>
    %1008 = vector.broadcast %1007 : vector<16x1xf32> to vector<16x16xf32>
    %1009 = vector.broadcast %cst_200 : f32 to vector<16x16xf32>
    %1010 = arith.select %1005, %1008, %1009 : vector<16x16xi1>, vector<16x16xf32>
    %1011 = arith.addf %1001, %1010 : vector<16x16xf32>
    %c4_i32_201 = arith.constant 4 : i32
    %1012 = vector.broadcast %c4_i32_201 : i32 to vector<16x1xi32>
    %1013 = arith.addi %993, %1012 : vector<16x1xi32>
    %1014 = vector.broadcast %1013 : vector<16x1xi32> to vector<16x16xi32>
    %1015 = arith.cmpi eq, %1014, %984 : vector<16x16xi32>
    %1016 = arith.mulf %988, %992 : vector<16x1xf32>
    %cst_202 = arith.constant 0.000000e+00 : f32
    %1017 = vector.shape_cast %1016 : vector<16x1xf32> to vector<16x1xf32>
    %1018 = vector.broadcast %1017 : vector<16x1xf32> to vector<16x16xf32>
    %1019 = vector.broadcast %cst_202 : f32 to vector<16x16xf32>
    %1020 = arith.select %1015, %1018, %1019 : vector<16x16xi1>, vector<16x16xf32>
    %1021 = arith.addf %1011, %1020 : vector<16x16xf32>
    %c4_i32_203 = arith.constant 4 : i32
    %1022 = vector.broadcast %c4_i32_203 : i32 to vector<16x1xi32>
    %1023 = arith.addi %993, %1022 : vector<16x1xi32>
    %c1_i32_204 = arith.constant 1 : i32
    %1024 = vector.broadcast %c1_i32_204 : i32 to vector<16x1xi32>
    %1025 = arith.addi %1023, %1024 : vector<16x1xi32>
    %1026 = vector.broadcast %1025 : vector<16x1xi32> to vector<16x16xi32>
    %1027 = arith.cmpi eq, %1026, %984 : vector<16x16xi32>
    %1028 = arith.mulf %990, %992 : vector<16x1xf32>
    %cst_205 = arith.constant 0.000000e+00 : f32
    %1029 = vector.shape_cast %1028 : vector<16x1xf32> to vector<16x1xf32>
    %1030 = vector.broadcast %1029 : vector<16x1xf32> to vector<16x16xf32>
    %1031 = vector.broadcast %cst_205 : f32 to vector<16x16xf32>
    %1032 = arith.select %1027, %1030, %1031 : vector<16x16xi1>, vector<16x16xf32>
    %1033 = arith.addf %1021, %1032 : vector<16x16xf32>
    %1034 = vector.extract_strided_slice %27 {offsets = [0, 5], sizes = [16, 1], strides = [1, 1]} : vector<16x8xf32> to vector<16x1xf32>
    %1035 = vector.extract_strided_slice %975 {offsets = [0, 1], sizes = [16, 1], strides = [1, 1]} : vector<16x16xf32> to vector<16x1xf32>
    %1036 = arith.mulf %1034, %1035 : vector<16x1xf32>
    %1037 = vector.extract_strided_slice %976 {offsets = [0, 1], sizes = [16, 1], strides = [1, 1]} : vector<16x16xf32> to vector<16x1xf32>
    %1038 = arith.mulf %1034, %1037 : vector<16x1xf32>
    %1039 = vector.extract_strided_slice %979 {offsets = [0, 1], sizes = [16, 1], strides = [1, 1]} : vector<16x16xf32> to vector<16x1xf32>
    %1040 = vector.extract_strided_slice %980 {offsets = [0, 1], sizes = [16, 1], strides = [1, 1]} : vector<16x16xf32> to vector<16x1xf32>
    %1041 = vector.extract_strided_slice %983 {offsets = [0, 1], sizes = [16, 1], strides = [1, 1]} : vector<16x16xi32> to vector<16x1xi32>
    %1042 = vector.broadcast %1041 : vector<16x1xi32> to vector<16x16xi32>
    %1043 = arith.cmpi eq, %1042, %984 : vector<16x16xi32>
    %1044 = arith.mulf %1036, %1039 : vector<16x1xf32>
    %cst_206 = arith.constant 0.000000e+00 : f32
    %1045 = vector.shape_cast %1044 : vector<16x1xf32> to vector<16x1xf32>
    %1046 = vector.broadcast %1045 : vector<16x1xf32> to vector<16x16xf32>
    %1047 = vector.broadcast %cst_206 : f32 to vector<16x16xf32>
    %1048 = arith.select %1043, %1046, %1047 : vector<16x16xi1>, vector<16x16xf32>
    %1049 = arith.addf %1033, %1048 : vector<16x16xf32>
    %c1_i32_207 = arith.constant 1 : i32
    %1050 = vector.broadcast %c1_i32_207 : i32 to vector<16x1xi32>
    %1051 = arith.addi %1041, %1050 : vector<16x1xi32>
    %1052 = vector.broadcast %1051 : vector<16x1xi32> to vector<16x16xi32>
    %1053 = arith.cmpi eq, %1052, %984 : vector<16x16xi32>
    %1054 = arith.mulf %1038, %1039 : vector<16x1xf32>
    %cst_208 = arith.constant 0.000000e+00 : f32
    %1055 = vector.shape_cast %1054 : vector<16x1xf32> to vector<16x1xf32>
    %1056 = vector.broadcast %1055 : vector<16x1xf32> to vector<16x16xf32>
    %1057 = vector.broadcast %cst_208 : f32 to vector<16x16xf32>
    %1058 = arith.select %1053, %1056, %1057 : vector<16x16xi1>, vector<16x16xf32>
    %1059 = arith.addf %1049, %1058 : vector<16x16xf32>
    %c4_i32_209 = arith.constant 4 : i32
    %1060 = vector.broadcast %c4_i32_209 : i32 to vector<16x1xi32>
    %1061 = arith.addi %1041, %1060 : vector<16x1xi32>
    %1062 = vector.broadcast %1061 : vector<16x1xi32> to vector<16x16xi32>
    %1063 = arith.cmpi eq, %1062, %984 : vector<16x16xi32>
    %1064 = arith.mulf %1036, %1040 : vector<16x1xf32>
    %cst_210 = arith.constant 0.000000e+00 : f32
    %1065 = vector.shape_cast %1064 : vector<16x1xf32> to vector<16x1xf32>
    %1066 = vector.broadcast %1065 : vector<16x1xf32> to vector<16x16xf32>
    %1067 = vector.broadcast %cst_210 : f32 to vector<16x16xf32>
    %1068 = arith.select %1063, %1066, %1067 : vector<16x16xi1>, vector<16x16xf32>
    %1069 = arith.addf %1059, %1068 : vector<16x16xf32>
    %c4_i32_211 = arith.constant 4 : i32
    %1070 = vector.broadcast %c4_i32_211 : i32 to vector<16x1xi32>
    %1071 = arith.addi %1041, %1070 : vector<16x1xi32>
    %c1_i32_212 = arith.constant 1 : i32
    %1072 = vector.broadcast %c1_i32_212 : i32 to vector<16x1xi32>
    %1073 = arith.addi %1071, %1072 : vector<16x1xi32>
    %1074 = vector.broadcast %1073 : vector<16x1xi32> to vector<16x16xi32>
    %1075 = arith.cmpi eq, %1074, %984 : vector<16x16xi32>
    %1076 = arith.mulf %1038, %1040 : vector<16x1xf32>
    %cst_213 = arith.constant 0.000000e+00 : f32
    %1077 = vector.shape_cast %1076 : vector<16x1xf32> to vector<16x1xf32>
    %1078 = vector.broadcast %1077 : vector<16x1xf32> to vector<16x16xf32>
    %1079 = vector.broadcast %cst_213 : f32 to vector<16x16xf32>
    %1080 = arith.select %1075, %1078, %1079 : vector<16x16xi1>, vector<16x16xf32>
    %1081 = arith.addf %1069, %1080 : vector<16x16xf32>
    %1082 = vector.extract_strided_slice %27 {offsets = [0, 6], sizes = [16, 1], strides = [1, 1]} : vector<16x8xf32> to vector<16x1xf32>
    %1083 = vector.extract_strided_slice %975 {offsets = [0, 2], sizes = [16, 1], strides = [1, 1]} : vector<16x16xf32> to vector<16x1xf32>
    %1084 = arith.mulf %1082, %1083 : vector<16x1xf32>
    %1085 = vector.extract_strided_slice %976 {offsets = [0, 2], sizes = [16, 1], strides = [1, 1]} : vector<16x16xf32> to vector<16x1xf32>
    %1086 = arith.mulf %1082, %1085 : vector<16x1xf32>
    %1087 = vector.extract_strided_slice %979 {offsets = [0, 2], sizes = [16, 1], strides = [1, 1]} : vector<16x16xf32> to vector<16x1xf32>
    %1088 = vector.extract_strided_slice %980 {offsets = [0, 2], sizes = [16, 1], strides = [1, 1]} : vector<16x16xf32> to vector<16x1xf32>
    %1089 = vector.extract_strided_slice %983 {offsets = [0, 2], sizes = [16, 1], strides = [1, 1]} : vector<16x16xi32> to vector<16x1xi32>
    %1090 = vector.broadcast %1089 : vector<16x1xi32> to vector<16x16xi32>
    %1091 = arith.cmpi eq, %1090, %984 : vector<16x16xi32>
    %1092 = arith.mulf %1084, %1087 : vector<16x1xf32>
    %cst_214 = arith.constant 0.000000e+00 : f32
    %1093 = vector.shape_cast %1092 : vector<16x1xf32> to vector<16x1xf32>
    %1094 = vector.broadcast %1093 : vector<16x1xf32> to vector<16x16xf32>
    %1095 = vector.broadcast %cst_214 : f32 to vector<16x16xf32>
    %1096 = arith.select %1091, %1094, %1095 : vector<16x16xi1>, vector<16x16xf32>
    %1097 = arith.addf %1081, %1096 : vector<16x16xf32>
    %c1_i32_215 = arith.constant 1 : i32
    %1098 = vector.broadcast %c1_i32_215 : i32 to vector<16x1xi32>
    %1099 = arith.addi %1089, %1098 : vector<16x1xi32>
    %1100 = vector.broadcast %1099 : vector<16x1xi32> to vector<16x16xi32>
    %1101 = arith.cmpi eq, %1100, %984 : vector<16x16xi32>
    %1102 = arith.mulf %1086, %1087 : vector<16x1xf32>
    %cst_216 = arith.constant 0.000000e+00 : f32
    %1103 = vector.shape_cast %1102 : vector<16x1xf32> to vector<16x1xf32>
    %1104 = vector.broadcast %1103 : vector<16x1xf32> to vector<16x16xf32>
    %1105 = vector.broadcast %cst_216 : f32 to vector<16x16xf32>
    %1106 = arith.select %1101, %1104, %1105 : vector<16x16xi1>, vector<16x16xf32>
    %1107 = arith.addf %1097, %1106 : vector<16x16xf32>
    %c4_i32_217 = arith.constant 4 : i32
    %1108 = vector.broadcast %c4_i32_217 : i32 to vector<16x1xi32>
    %1109 = arith.addi %1089, %1108 : vector<16x1xi32>
    %1110 = vector.broadcast %1109 : vector<16x1xi32> to vector<16x16xi32>
    %1111 = arith.cmpi eq, %1110, %984 : vector<16x16xi32>
    %1112 = arith.mulf %1084, %1088 : vector<16x1xf32>
    %cst_218 = arith.constant 0.000000e+00 : f32
    %1113 = vector.shape_cast %1112 : vector<16x1xf32> to vector<16x1xf32>
    %1114 = vector.broadcast %1113 : vector<16x1xf32> to vector<16x16xf32>
    %1115 = vector.broadcast %cst_218 : f32 to vector<16x16xf32>
    %1116 = arith.select %1111, %1114, %1115 : vector<16x16xi1>, vector<16x16xf32>
    %1117 = arith.addf %1107, %1116 : vector<16x16xf32>
    %c4_i32_219 = arith.constant 4 : i32
    %1118 = vector.broadcast %c4_i32_219 : i32 to vector<16x1xi32>
    %1119 = arith.addi %1089, %1118 : vector<16x1xi32>
    %c1_i32_220 = arith.constant 1 : i32
    %1120 = vector.broadcast %c1_i32_220 : i32 to vector<16x1xi32>
    %1121 = arith.addi %1119, %1120 : vector<16x1xi32>
    %1122 = vector.broadcast %1121 : vector<16x1xi32> to vector<16x16xi32>
    %1123 = arith.cmpi eq, %1122, %984 : vector<16x16xi32>
    %1124 = arith.mulf %1086, %1088 : vector<16x1xf32>
    %cst_221 = arith.constant 0.000000e+00 : f32
    %1125 = vector.shape_cast %1124 : vector<16x1xf32> to vector<16x1xf32>
    %1126 = vector.broadcast %1125 : vector<16x1xf32> to vector<16x16xf32>
    %1127 = vector.broadcast %cst_221 : f32 to vector<16x16xf32>
    %1128 = arith.select %1123, %1126, %1127 : vector<16x16xi1>, vector<16x16xf32>
    %1129 = arith.addf %1117, %1128 : vector<16x16xf32>
    %1130 = vector.extract_strided_slice %27 {offsets = [0, 7], sizes = [16, 1], strides = [1, 1]} : vector<16x8xf32> to vector<16x1xf32>
    %1131 = vector.extract_strided_slice %975 {offsets = [0, 3], sizes = [16, 1], strides = [1, 1]} : vector<16x16xf32> to vector<16x1xf32>
    %1132 = arith.mulf %1130, %1131 : vector<16x1xf32>
    %1133 = vector.extract_strided_slice %976 {offsets = [0, 3], sizes = [16, 1], strides = [1, 1]} : vector<16x16xf32> to vector<16x1xf32>
    %1134 = arith.mulf %1130, %1133 : vector<16x1xf32>
    %1135 = vector.extract_strided_slice %979 {offsets = [0, 3], sizes = [16, 1], strides = [1, 1]} : vector<16x16xf32> to vector<16x1xf32>
    %1136 = vector.extract_strided_slice %980 {offsets = [0, 3], sizes = [16, 1], strides = [1, 1]} : vector<16x16xf32> to vector<16x1xf32>
    %1137 = vector.extract_strided_slice %983 {offsets = [0, 3], sizes = [16, 1], strides = [1, 1]} : vector<16x16xi32> to vector<16x1xi32>
    %1138 = vector.broadcast %1137 : vector<16x1xi32> to vector<16x16xi32>
    %1139 = arith.cmpi eq, %1138, %984 : vector<16x16xi32>
    %1140 = arith.mulf %1132, %1135 : vector<16x1xf32>
    %cst_222 = arith.constant 0.000000e+00 : f32
    %1141 = vector.shape_cast %1140 : vector<16x1xf32> to vector<16x1xf32>
    %1142 = vector.broadcast %1141 : vector<16x1xf32> to vector<16x16xf32>
    %1143 = vector.broadcast %cst_222 : f32 to vector<16x16xf32>
    %1144 = arith.select %1139, %1142, %1143 : vector<16x16xi1>, vector<16x16xf32>
    %1145 = arith.addf %1129, %1144 : vector<16x16xf32>
    %c1_i32_223 = arith.constant 1 : i32
    %1146 = vector.broadcast %c1_i32_223 : i32 to vector<16x1xi32>
    %1147 = arith.addi %1137, %1146 : vector<16x1xi32>
    %1148 = vector.broadcast %1147 : vector<16x1xi32> to vector<16x16xi32>
    %1149 = arith.cmpi eq, %1148, %984 : vector<16x16xi32>
    %1150 = arith.mulf %1134, %1135 : vector<16x1xf32>
    %cst_224 = arith.constant 0.000000e+00 : f32
    %1151 = vector.shape_cast %1150 : vector<16x1xf32> to vector<16x1xf32>
    %1152 = vector.broadcast %1151 : vector<16x1xf32> to vector<16x16xf32>
    %1153 = vector.broadcast %cst_224 : f32 to vector<16x16xf32>
    %1154 = arith.select %1149, %1152, %1153 : vector<16x16xi1>, vector<16x16xf32>
    %1155 = arith.addf %1145, %1154 : vector<16x16xf32>
    %c4_i32_225 = arith.constant 4 : i32
    %1156 = vector.broadcast %c4_i32_225 : i32 to vector<16x1xi32>
    %1157 = arith.addi %1137, %1156 : vector<16x1xi32>
    %1158 = vector.broadcast %1157 : vector<16x1xi32> to vector<16x16xi32>
    %1159 = arith.cmpi eq, %1158, %984 : vector<16x16xi32>
    %1160 = arith.mulf %1132, %1136 : vector<16x1xf32>
    %cst_226 = arith.constant 0.000000e+00 : f32
    %1161 = vector.shape_cast %1160 : vector<16x1xf32> to vector<16x1xf32>
    %1162 = vector.broadcast %1161 : vector<16x1xf32> to vector<16x16xf32>
    %1163 = vector.broadcast %cst_226 : f32 to vector<16x16xf32>
    %1164 = arith.select %1159, %1162, %1163 : vector<16x16xi1>, vector<16x16xf32>
    %1165 = arith.addf %1155, %1164 : vector<16x16xf32>
    %c4_i32_227 = arith.constant 4 : i32
    %1166 = vector.broadcast %c4_i32_227 : i32 to vector<16x1xi32>
    %1167 = arith.addi %1137, %1166 : vector<16x1xi32>
    %c1_i32_228 = arith.constant 1 : i32
    %1168 = vector.broadcast %c1_i32_228 : i32 to vector<16x1xi32>
    %1169 = arith.addi %1167, %1168 : vector<16x1xi32>
    %1170 = vector.broadcast %1169 : vector<16x1xi32> to vector<16x16xi32>
    %1171 = arith.cmpi eq, %1170, %984 : vector<16x16xi32>
    %1172 = arith.mulf %1134, %1136 : vector<16x1xf32>
    %cst_229 = arith.constant 0.000000e+00 : f32
    %1173 = vector.shape_cast %1172 : vector<16x1xf32> to vector<16x1xf32>
    %1174 = vector.broadcast %1173 : vector<16x1xf32> to vector<16x16xf32>
    %1175 = vector.broadcast %cst_229 : f32 to vector<16x16xf32>
    %1176 = arith.select %1171, %1174, %1175 : vector<16x16xi1>, vector<16x16xf32>
    %1177 = arith.addf %1165, %1176 : vector<16x16xf32>
    %c64 = arith.constant 64 : index
    %c0_230 = arith.constant 0 : index
    %1178 = vector.load %arg15[%c64, %c0_230] : memref<80x32xbf16, #tpu.memory_space<vmem>>, vector<16x8xbf16>
    %1179 = arith.truncf %1177 : vector<16x16xf32> to vector<16x16xbf16>
    %cst_231 = arith.constant dense<0.000000e+00> : vector<16x8xf32>
    %1180 = tpu.matmul %1179, %1178, %cst_231 {dimension_numbers = #tpu.dot_dimension_numbers<[1], [0], [0], [1], [0, 0, 1, 1], [], []>} : vector<16x16xbf16>, vector<16x8xbf16>, vector<16x8xf32> -> vector<16x8xf32>
    %1181 = arith.addf %327, %1180 : vector<16x8xf32>
    %cst_232 = arith.constant 0.000000e+00 : f32
    %1182 = vector.broadcast %cst_232 : f32 to vector<16x16xf32>
    %1183 = vector.extract_strided_slice %38 {offsets = [0, 4], sizes = [16, 1], strides = [1, 1]} : vector<16x8xf32> to vector<16x1xf32>
    %1184 = vector.extract_strided_slice %975 {offsets = [0, 4], sizes = [16, 1], strides = [1, 1]} : vector<16x16xf32> to vector<16x1xf32>
    %1185 = arith.mulf %1183, %1184 : vector<16x1xf32>
    %1186 = vector.extract_strided_slice %976 {offsets = [0, 4], sizes = [16, 1], strides = [1, 1]} : vector<16x16xf32> to vector<16x1xf32>
    %1187 = arith.mulf %1183, %1186 : vector<16x1xf32>
    %1188 = vector.extract_strided_slice %979 {offsets = [0, 4], sizes = [16, 1], strides = [1, 1]} : vector<16x16xf32> to vector<16x1xf32>
    %1189 = vector.extract_strided_slice %980 {offsets = [0, 4], sizes = [16, 1], strides = [1, 1]} : vector<16x16xf32> to vector<16x1xf32>
    %1190 = vector.extract_strided_slice %983 {offsets = [0, 4], sizes = [16, 1], strides = [1, 1]} : vector<16x16xi32> to vector<16x1xi32>
    %1191 = vector.broadcast %1190 : vector<16x1xi32> to vector<16x16xi32>
    %1192 = arith.cmpi eq, %1191, %984 : vector<16x16xi32>
    %1193 = arith.mulf %1185, %1188 : vector<16x1xf32>
    %cst_233 = arith.constant 0.000000e+00 : f32
    %1194 = vector.shape_cast %1193 : vector<16x1xf32> to vector<16x1xf32>
    %1195 = vector.broadcast %1194 : vector<16x1xf32> to vector<16x16xf32>
    %1196 = vector.broadcast %cst_233 : f32 to vector<16x16xf32>
    %1197 = arith.select %1192, %1195, %1196 : vector<16x16xi1>, vector<16x16xf32>
    %1198 = arith.addf %1182, %1197 : vector<16x16xf32>
    %c1_i32_234 = arith.constant 1 : i32
    %1199 = vector.broadcast %c1_i32_234 : i32 to vector<16x1xi32>
    %1200 = arith.addi %1190, %1199 : vector<16x1xi32>
    %1201 = vector.broadcast %1200 : vector<16x1xi32> to vector<16x16xi32>
    %1202 = arith.cmpi eq, %1201, %984 : vector<16x16xi32>
    %1203 = arith.mulf %1187, %1188 : vector<16x1xf32>
    %cst_235 = arith.constant 0.000000e+00 : f32
    %1204 = vector.shape_cast %1203 : vector<16x1xf32> to vector<16x1xf32>
    %1205 = vector.broadcast %1204 : vector<16x1xf32> to vector<16x16xf32>
    %1206 = vector.broadcast %cst_235 : f32 to vector<16x16xf32>
    %1207 = arith.select %1202, %1205, %1206 : vector<16x16xi1>, vector<16x16xf32>
    %1208 = arith.addf %1198, %1207 : vector<16x16xf32>
    %c4_i32_236 = arith.constant 4 : i32
    %1209 = vector.broadcast %c4_i32_236 : i32 to vector<16x1xi32>
    %1210 = arith.addi %1190, %1209 : vector<16x1xi32>
    %1211 = vector.broadcast %1210 : vector<16x1xi32> to vector<16x16xi32>
    %1212 = arith.cmpi eq, %1211, %984 : vector<16x16xi32>
    %1213 = arith.mulf %1185, %1189 : vector<16x1xf32>
    %cst_237 = arith.constant 0.000000e+00 : f32
    %1214 = vector.shape_cast %1213 : vector<16x1xf32> to vector<16x1xf32>
    %1215 = vector.broadcast %1214 : vector<16x1xf32> to vector<16x16xf32>
    %1216 = vector.broadcast %cst_237 : f32 to vector<16x16xf32>
    %1217 = arith.select %1212, %1215, %1216 : vector<16x16xi1>, vector<16x16xf32>
    %1218 = arith.addf %1208, %1217 : vector<16x16xf32>
    %c4_i32_238 = arith.constant 4 : i32
    %1219 = vector.broadcast %c4_i32_238 : i32 to vector<16x1xi32>
    %1220 = arith.addi %1190, %1219 : vector<16x1xi32>
    %c1_i32_239 = arith.constant 1 : i32
    %1221 = vector.broadcast %c1_i32_239 : i32 to vector<16x1xi32>
    %1222 = arith.addi %1220, %1221 : vector<16x1xi32>
    %1223 = vector.broadcast %1222 : vector<16x1xi32> to vector<16x16xi32>
    %1224 = arith.cmpi eq, %1223, %984 : vector<16x16xi32>
    %1225 = arith.mulf %1187, %1189 : vector<16x1xf32>
    %cst_240 = arith.constant 0.000000e+00 : f32
    %1226 = vector.shape_cast %1225 : vector<16x1xf32> to vector<16x1xf32>
    %1227 = vector.broadcast %1226 : vector<16x1xf32> to vector<16x16xf32>
    %1228 = vector.broadcast %cst_240 : f32 to vector<16x16xf32>
    %1229 = arith.select %1224, %1227, %1228 : vector<16x16xi1>, vector<16x16xf32>
    %1230 = arith.addf %1218, %1229 : vector<16x16xf32>
    %1231 = vector.extract_strided_slice %38 {offsets = [0, 5], sizes = [16, 1], strides = [1, 1]} : vector<16x8xf32> to vector<16x1xf32>
    %1232 = vector.extract_strided_slice %975 {offsets = [0, 5], sizes = [16, 1], strides = [1, 1]} : vector<16x16xf32> to vector<16x1xf32>
    %1233 = arith.mulf %1231, %1232 : vector<16x1xf32>
    %1234 = vector.extract_strided_slice %976 {offsets = [0, 5], sizes = [16, 1], strides = [1, 1]} : vector<16x16xf32> to vector<16x1xf32>
    %1235 = arith.mulf %1231, %1234 : vector<16x1xf32>
    %1236 = vector.extract_strided_slice %979 {offsets = [0, 5], sizes = [16, 1], strides = [1, 1]} : vector<16x16xf32> to vector<16x1xf32>
    %1237 = vector.extract_strided_slice %980 {offsets = [0, 5], sizes = [16, 1], strides = [1, 1]} : vector<16x16xf32> to vector<16x1xf32>
    %1238 = vector.extract_strided_slice %983 {offsets = [0, 5], sizes = [16, 1], strides = [1, 1]} : vector<16x16xi32> to vector<16x1xi32>
    %1239 = vector.broadcast %1238 : vector<16x1xi32> to vector<16x16xi32>
    %1240 = arith.cmpi eq, %1239, %984 : vector<16x16xi32>
    %1241 = arith.mulf %1233, %1236 : vector<16x1xf32>
    %cst_241 = arith.constant 0.000000e+00 : f32
    %1242 = vector.shape_cast %1241 : vector<16x1xf32> to vector<16x1xf32>
    %1243 = vector.broadcast %1242 : vector<16x1xf32> to vector<16x16xf32>
    %1244 = vector.broadcast %cst_241 : f32 to vector<16x16xf32>
    %1245 = arith.select %1240, %1243, %1244 : vector<16x16xi1>, vector<16x16xf32>
    %1246 = arith.addf %1230, %1245 : vector<16x16xf32>
    %c1_i32_242 = arith.constant 1 : i32
    %1247 = vector.broadcast %c1_i32_242 : i32 to vector<16x1xi32>
    %1248 = arith.addi %1238, %1247 : vector<16x1xi32>
    %1249 = vector.broadcast %1248 : vector<16x1xi32> to vector<16x16xi32>
    %1250 = arith.cmpi eq, %1249, %984 : vector<16x16xi32>
    %1251 = arith.mulf %1235, %1236 : vector<16x1xf32>
    %cst_243 = arith.constant 0.000000e+00 : f32
    %1252 = vector.shape_cast %1251 : vector<16x1xf32> to vector<16x1xf32>
    %1253 = vector.broadcast %1252 : vector<16x1xf32> to vector<16x16xf32>
    %1254 = vector.broadcast %cst_243 : f32 to vector<16x16xf32>
    %1255 = arith.select %1250, %1253, %1254 : vector<16x16xi1>, vector<16x16xf32>
    %1256 = arith.addf %1246, %1255 : vector<16x16xf32>
    %c4_i32_244 = arith.constant 4 : i32
    %1257 = vector.broadcast %c4_i32_244 : i32 to vector<16x1xi32>
    %1258 = arith.addi %1238, %1257 : vector<16x1xi32>
    %1259 = vector.broadcast %1258 : vector<16x1xi32> to vector<16x16xi32>
    %1260 = arith.cmpi eq, %1259, %984 : vector<16x16xi32>
    %1261 = arith.mulf %1233, %1237 : vector<16x1xf32>
    %cst_245 = arith.constant 0.000000e+00 : f32
    %1262 = vector.shape_cast %1261 : vector<16x1xf32> to vector<16x1xf32>
    %1263 = vector.broadcast %1262 : vector<16x1xf32> to vector<16x16xf32>
    %1264 = vector.broadcast %cst_245 : f32 to vector<16x16xf32>
    %1265 = arith.select %1260, %1263, %1264 : vector<16x16xi1>, vector<16x16xf32>
    %1266 = arith.addf %1256, %1265 : vector<16x16xf32>
    %c4_i32_246 = arith.constant 4 : i32
    %1267 = vector.broadcast %c4_i32_246 : i32 to vector<16x1xi32>
    %1268 = arith.addi %1238, %1267 : vector<16x1xi32>
    %c1_i32_247 = arith.constant 1 : i32
    %1269 = vector.broadcast %c1_i32_247 : i32 to vector<16x1xi32>
    %1270 = arith.addi %1268, %1269 : vector<16x1xi32>
    %1271 = vector.broadcast %1270 : vector<16x1xi32> to vector<16x16xi32>
    %1272 = arith.cmpi eq, %1271, %984 : vector<16x16xi32>
    %1273 = arith.mulf %1235, %1237 : vector<16x1xf32>
    %cst_248 = arith.constant 0.000000e+00 : f32
    %1274 = vector.shape_cast %1273 : vector<16x1xf32> to vector<16x1xf32>
    %1275 = vector.broadcast %1274 : vector<16x1xf32> to vector<16x16xf32>
    %1276 = vector.broadcast %cst_248 : f32 to vector<16x16xf32>
    %1277 = arith.select %1272, %1275, %1276 : vector<16x16xi1>, vector<16x16xf32>
    %1278 = arith.addf %1266, %1277 : vector<16x16xf32>
    %1279 = vector.extract_strided_slice %38 {offsets = [0, 6], sizes = [16, 1], strides = [1, 1]} : vector<16x8xf32> to vector<16x1xf32>
    %1280 = vector.extract_strided_slice %975 {offsets = [0, 6], sizes = [16, 1], strides = [1, 1]} : vector<16x16xf32> to vector<16x1xf32>
    %1281 = arith.mulf %1279, %1280 : vector<16x1xf32>
    %1282 = vector.extract_strided_slice %976 {offsets = [0, 6], sizes = [16, 1], strides = [1, 1]} : vector<16x16xf32> to vector<16x1xf32>
    %1283 = arith.mulf %1279, %1282 : vector<16x1xf32>
    %1284 = vector.extract_strided_slice %979 {offsets = [0, 6], sizes = [16, 1], strides = [1, 1]} : vector<16x16xf32> to vector<16x1xf32>
    %1285 = vector.extract_strided_slice %980 {offsets = [0, 6], sizes = [16, 1], strides = [1, 1]} : vector<16x16xf32> to vector<16x1xf32>
    %1286 = vector.extract_strided_slice %983 {offsets = [0, 6], sizes = [16, 1], strides = [1, 1]} : vector<16x16xi32> to vector<16x1xi32>
    %1287 = vector.broadcast %1286 : vector<16x1xi32> to vector<16x16xi32>
    %1288 = arith.cmpi eq, %1287, %984 : vector<16x16xi32>
    %1289 = arith.mulf %1281, %1284 : vector<16x1xf32>
    %cst_249 = arith.constant 0.000000e+00 : f32
    %1290 = vector.shape_cast %1289 : vector<16x1xf32> to vector<16x1xf32>
    %1291 = vector.broadcast %1290 : vector<16x1xf32> to vector<16x16xf32>
    %1292 = vector.broadcast %cst_249 : f32 to vector<16x16xf32>
    %1293 = arith.select %1288, %1291, %1292 : vector<16x16xi1>, vector<16x16xf32>
    %1294 = arith.addf %1278, %1293 : vector<16x16xf32>
    %c1_i32_250 = arith.constant 1 : i32
    %1295 = vector.broadcast %c1_i32_250 : i32 to vector<16x1xi32>
    %1296 = arith.addi %1286, %1295 : vector<16x1xi32>
    %1297 = vector.broadcast %1296 : vector<16x1xi32> to vector<16x16xi32>
    %1298 = arith.cmpi eq, %1297, %984 : vector<16x16xi32>
    %1299 = arith.mulf %1283, %1284 : vector<16x1xf32>
    %cst_251 = arith.constant 0.000000e+00 : f32
    %1300 = vector.shape_cast %1299 : vector<16x1xf32> to vector<16x1xf32>
    %1301 = vector.broadcast %1300 : vector<16x1xf32> to vector<16x16xf32>
    %1302 = vector.broadcast %cst_251 : f32 to vector<16x16xf32>
    %1303 = arith.select %1298, %1301, %1302 : vector<16x16xi1>, vector<16x16xf32>
    %1304 = arith.addf %1294, %1303 : vector<16x16xf32>
    %c4_i32_252 = arith.constant 4 : i32
    %1305 = vector.broadcast %c4_i32_252 : i32 to vector<16x1xi32>
    %1306 = arith.addi %1286, %1305 : vector<16x1xi32>
    %1307 = vector.broadcast %1306 : vector<16x1xi32> to vector<16x16xi32>
    %1308 = arith.cmpi eq, %1307, %984 : vector<16x16xi32>
    %1309 = arith.mulf %1281, %1285 : vector<16x1xf32>
    %cst_253 = arith.constant 0.000000e+00 : f32
    %1310 = vector.shape_cast %1309 : vector<16x1xf32> to vector<16x1xf32>
    %1311 = vector.broadcast %1310 : vector<16x1xf32> to vector<16x16xf32>
    %1312 = vector.broadcast %cst_253 : f32 to vector<16x16xf32>
    %1313 = arith.select %1308, %1311, %1312 : vector<16x16xi1>, vector<16x16xf32>
    %1314 = arith.addf %1304, %1313 : vector<16x16xf32>
    %c4_i32_254 = arith.constant 4 : i32
    %1315 = vector.broadcast %c4_i32_254 : i32 to vector<16x1xi32>
    %1316 = arith.addi %1286, %1315 : vector<16x1xi32>
    %c1_i32_255 = arith.constant 1 : i32
    %1317 = vector.broadcast %c1_i32_255 : i32 to vector<16x1xi32>
    %1318 = arith.addi %1316, %1317 : vector<16x1xi32>
    %1319 = vector.broadcast %1318 : vector<16x1xi32> to vector<16x16xi32>
    %1320 = arith.cmpi eq, %1319, %984 : vector<16x16xi32>
    %1321 = arith.mulf %1283, %1285 : vector<16x1xf32>
    %cst_256 = arith.constant 0.000000e+00 : f32
    %1322 = vector.shape_cast %1321 : vector<16x1xf32> to vector<16x1xf32>
    %1323 = vector.broadcast %1322 : vector<16x1xf32> to vector<16x16xf32>
    %1324 = vector.broadcast %cst_256 : f32 to vector<16x16xf32>
    %1325 = arith.select %1320, %1323, %1324 : vector<16x16xi1>, vector<16x16xf32>
    %1326 = arith.addf %1314, %1325 : vector<16x16xf32>
    %1327 = vector.extract_strided_slice %38 {offsets = [0, 7], sizes = [16, 1], strides = [1, 1]} : vector<16x8xf32> to vector<16x1xf32>
    %1328 = vector.extract_strided_slice %975 {offsets = [0, 7], sizes = [16, 1], strides = [1, 1]} : vector<16x16xf32> to vector<16x1xf32>
    %1329 = arith.mulf %1327, %1328 : vector<16x1xf32>
    %1330 = vector.extract_strided_slice %976 {offsets = [0, 7], sizes = [16, 1], strides = [1, 1]} : vector<16x16xf32> to vector<16x1xf32>
    %1331 = arith.mulf %1327, %1330 : vector<16x1xf32>
    %1332 = vector.extract_strided_slice %979 {offsets = [0, 7], sizes = [16, 1], strides = [1, 1]} : vector<16x16xf32> to vector<16x1xf32>
    %1333 = vector.extract_strided_slice %980 {offsets = [0, 7], sizes = [16, 1], strides = [1, 1]} : vector<16x16xf32> to vector<16x1xf32>
    %1334 = vector.extract_strided_slice %983 {offsets = [0, 7], sizes = [16, 1], strides = [1, 1]} : vector<16x16xi32> to vector<16x1xi32>
    %1335 = vector.broadcast %1334 : vector<16x1xi32> to vector<16x16xi32>
    %1336 = arith.cmpi eq, %1335, %984 : vector<16x16xi32>
    %1337 = arith.mulf %1329, %1332 : vector<16x1xf32>
    %cst_257 = arith.constant 0.000000e+00 : f32
    %1338 = vector.shape_cast %1337 : vector<16x1xf32> to vector<16x1xf32>
    %1339 = vector.broadcast %1338 : vector<16x1xf32> to vector<16x16xf32>
    %1340 = vector.broadcast %cst_257 : f32 to vector<16x16xf32>
    %1341 = arith.select %1336, %1339, %1340 : vector<16x16xi1>, vector<16x16xf32>
    %1342 = arith.addf %1326, %1341 : vector<16x16xf32>
    %c1_i32_258 = arith.constant 1 : i32
    %1343 = vector.broadcast %c1_i32_258 : i32 to vector<16x1xi32>
    %1344 = arith.addi %1334, %1343 : vector<16x1xi32>
    %1345 = vector.broadcast %1344 : vector<16x1xi32> to vector<16x16xi32>
    %1346 = arith.cmpi eq, %1345, %984 : vector<16x16xi32>
    %1347 = arith.mulf %1331, %1332 : vector<16x1xf32>
    %cst_259 = arith.constant 0.000000e+00 : f32
    %1348 = vector.shape_cast %1347 : vector<16x1xf32> to vector<16x1xf32>
    %1349 = vector.broadcast %1348 : vector<16x1xf32> to vector<16x16xf32>
    %1350 = vector.broadcast %cst_259 : f32 to vector<16x16xf32>
    %1351 = arith.select %1346, %1349, %1350 : vector<16x16xi1>, vector<16x16xf32>
    %1352 = arith.addf %1342, %1351 : vector<16x16xf32>
    %c4_i32_260 = arith.constant 4 : i32
    %1353 = vector.broadcast %c4_i32_260 : i32 to vector<16x1xi32>
    %1354 = arith.addi %1334, %1353 : vector<16x1xi32>
    %1355 = vector.broadcast %1354 : vector<16x1xi32> to vector<16x16xi32>
    %1356 = arith.cmpi eq, %1355, %984 : vector<16x16xi32>
    %1357 = arith.mulf %1329, %1333 : vector<16x1xf32>
    %cst_261 = arith.constant 0.000000e+00 : f32
    %1358 = vector.shape_cast %1357 : vector<16x1xf32> to vector<16x1xf32>
    %1359 = vector.broadcast %1358 : vector<16x1xf32> to vector<16x16xf32>
    %1360 = vector.broadcast %cst_261 : f32 to vector<16x16xf32>
    %1361 = arith.select %1356, %1359, %1360 : vector<16x16xi1>, vector<16x16xf32>
    %1362 = arith.addf %1352, %1361 : vector<16x16xf32>
    %c4_i32_262 = arith.constant 4 : i32
    %1363 = vector.broadcast %c4_i32_262 : i32 to vector<16x1xi32>
    %1364 = arith.addi %1334, %1363 : vector<16x1xi32>
    %c1_i32_263 = arith.constant 1 : i32
    %1365 = vector.broadcast %c1_i32_263 : i32 to vector<16x1xi32>
    %1366 = arith.addi %1364, %1365 : vector<16x1xi32>
    %1367 = vector.broadcast %1366 : vector<16x1xi32> to vector<16x16xi32>
    %1368 = arith.cmpi eq, %1367, %984 : vector<16x16xi32>
    %1369 = arith.mulf %1331, %1333 : vector<16x1xf32>
    %cst_264 = arith.constant 0.000000e+00 : f32
    %1370 = vector.shape_cast %1369 : vector<16x1xf32> to vector<16x1xf32>
    %1371 = vector.broadcast %1370 : vector<16x1xf32> to vector<16x16xf32>
    %1372 = vector.broadcast %cst_264 : f32 to vector<16x16xf32>
    %1373 = arith.select %1368, %1371, %1372 : vector<16x16xi1>, vector<16x16xf32>
    %1374 = arith.addf %1362, %1373 : vector<16x16xf32>
    %c64_265 = arith.constant 64 : index
    %c8_266 = arith.constant 8 : index
    %1375 = vector.load %arg15[%c64_265, %c8_266] : memref<80x32xbf16, #tpu.memory_space<vmem>>, vector<16x8xbf16>
    %1376 = arith.truncf %1374 : vector<16x16xf32> to vector<16x16xbf16>
    %cst_267 = arith.constant dense<0.000000e+00> : vector<16x8xf32>
    %1377 = tpu.matmul %1376, %1375, %cst_267 {dimension_numbers = #tpu.dot_dimension_numbers<[1], [0], [0], [1], [0, 0, 1, 1], [], []>} : vector<16x16xbf16>, vector<16x8xbf16>, vector<16x8xf32> -> vector<16x8xf32>
    %1378 = arith.addf %524, %1377 : vector<16x8xf32>
    %cst_268 = arith.constant 0.000000e+00 : f32
    %1379 = vector.broadcast %cst_268 : f32 to vector<16x16xf32>
    %1380 = vector.extract_strided_slice %49 {offsets = [0, 4], sizes = [16, 1], strides = [1, 1]} : vector<16x8xf32> to vector<16x1xf32>
    %1381 = vector.extract_strided_slice %975 {offsets = [0, 8], sizes = [16, 1], strides = [1, 1]} : vector<16x16xf32> to vector<16x1xf32>
    %1382 = arith.mulf %1380, %1381 : vector<16x1xf32>
    %1383 = vector.extract_strided_slice %976 {offsets = [0, 8], sizes = [16, 1], strides = [1, 1]} : vector<16x16xf32> to vector<16x1xf32>
    %1384 = arith.mulf %1380, %1383 : vector<16x1xf32>
    %1385 = vector.extract_strided_slice %979 {offsets = [0, 8], sizes = [16, 1], strides = [1, 1]} : vector<16x16xf32> to vector<16x1xf32>
    %1386 = vector.extract_strided_slice %980 {offsets = [0, 8], sizes = [16, 1], strides = [1, 1]} : vector<16x16xf32> to vector<16x1xf32>
    %1387 = vector.extract_strided_slice %983 {offsets = [0, 8], sizes = [16, 1], strides = [1, 1]} : vector<16x16xi32> to vector<16x1xi32>
    %1388 = vector.broadcast %1387 : vector<16x1xi32> to vector<16x16xi32>
    %1389 = arith.cmpi eq, %1388, %984 : vector<16x16xi32>
    %1390 = arith.mulf %1382, %1385 : vector<16x1xf32>
    %cst_269 = arith.constant 0.000000e+00 : f32
    %1391 = vector.shape_cast %1390 : vector<16x1xf32> to vector<16x1xf32>
    %1392 = vector.broadcast %1391 : vector<16x1xf32> to vector<16x16xf32>
    %1393 = vector.broadcast %cst_269 : f32 to vector<16x16xf32>
    %1394 = arith.select %1389, %1392, %1393 : vector<16x16xi1>, vector<16x16xf32>
    %1395 = arith.addf %1379, %1394 : vector<16x16xf32>
    %c1_i32_270 = arith.constant 1 : i32
    %1396 = vector.broadcast %c1_i32_270 : i32 to vector<16x1xi32>
    %1397 = arith.addi %1387, %1396 : vector<16x1xi32>
    %1398 = vector.broadcast %1397 : vector<16x1xi32> to vector<16x16xi32>
    %1399 = arith.cmpi eq, %1398, %984 : vector<16x16xi32>
    %1400 = arith.mulf %1384, %1385 : vector<16x1xf32>
    %cst_271 = arith.constant 0.000000e+00 : f32
    %1401 = vector.shape_cast %1400 : vector<16x1xf32> to vector<16x1xf32>
    %1402 = vector.broadcast %1401 : vector<16x1xf32> to vector<16x16xf32>
    %1403 = vector.broadcast %cst_271 : f32 to vector<16x16xf32>
    %1404 = arith.select %1399, %1402, %1403 : vector<16x16xi1>, vector<16x16xf32>
    %1405 = arith.addf %1395, %1404 : vector<16x16xf32>
    %c4_i32_272 = arith.constant 4 : i32
    %1406 = vector.broadcast %c4_i32_272 : i32 to vector<16x1xi32>
    %1407 = arith.addi %1387, %1406 : vector<16x1xi32>
    %1408 = vector.broadcast %1407 : vector<16x1xi32> to vector<16x16xi32>
    %1409 = arith.cmpi eq, %1408, %984 : vector<16x16xi32>
    %1410 = arith.mulf %1382, %1386 : vector<16x1xf32>
    %cst_273 = arith.constant 0.000000e+00 : f32
    %1411 = vector.shape_cast %1410 : vector<16x1xf32> to vector<16x1xf32>
    %1412 = vector.broadcast %1411 : vector<16x1xf32> to vector<16x16xf32>
    %1413 = vector.broadcast %cst_273 : f32 to vector<16x16xf32>
    %1414 = arith.select %1409, %1412, %1413 : vector<16x16xi1>, vector<16x16xf32>
    %1415 = arith.addf %1405, %1414 : vector<16x16xf32>
    %c4_i32_274 = arith.constant 4 : i32
    %1416 = vector.broadcast %c4_i32_274 : i32 to vector<16x1xi32>
    %1417 = arith.addi %1387, %1416 : vector<16x1xi32>
    %c1_i32_275 = arith.constant 1 : i32
    %1418 = vector.broadcast %c1_i32_275 : i32 to vector<16x1xi32>
    %1419 = arith.addi %1417, %1418 : vector<16x1xi32>
    %1420 = vector.broadcast %1419 : vector<16x1xi32> to vector<16x16xi32>
    %1421 = arith.cmpi eq, %1420, %984 : vector<16x16xi32>
    %1422 = arith.mulf %1384, %1386 : vector<16x1xf32>
    %cst_276 = arith.constant 0.000000e+00 : f32
    %1423 = vector.shape_cast %1422 : vector<16x1xf32> to vector<16x1xf32>
    %1424 = vector.broadcast %1423 : vector<16x1xf32> to vector<16x16xf32>
    %1425 = vector.broadcast %cst_276 : f32 to vector<16x16xf32>
    %1426 = arith.select %1421, %1424, %1425 : vector<16x16xi1>, vector<16x16xf32>
    %1427 = arith.addf %1415, %1426 : vector<16x16xf32>
    %1428 = vector.extract_strided_slice %49 {offsets = [0, 5], sizes = [16, 1], strides = [1, 1]} : vector<16x8xf32> to vector<16x1xf32>
    %1429 = vector.extract_strided_slice %975 {offsets = [0, 9], sizes = [16, 1], strides = [1, 1]} : vector<16x16xf32> to vector<16x1xf32>
    %1430 = arith.mulf %1428, %1429 : vector<16x1xf32>
    %1431 = vector.extract_strided_slice %976 {offsets = [0, 9], sizes = [16, 1], strides = [1, 1]} : vector<16x16xf32> to vector<16x1xf32>
    %1432 = arith.mulf %1428, %1431 : vector<16x1xf32>
    %1433 = vector.extract_strided_slice %979 {offsets = [0, 9], sizes = [16, 1], strides = [1, 1]} : vector<16x16xf32> to vector<16x1xf32>
    %1434 = vector.extract_strided_slice %980 {offsets = [0, 9], sizes = [16, 1], strides = [1, 1]} : vector<16x16xf32> to vector<16x1xf32>
    %1435 = vector.extract_strided_slice %983 {offsets = [0, 9], sizes = [16, 1], strides = [1, 1]} : vector<16x16xi32> to vector<16x1xi32>
    %1436 = vector.broadcast %1435 : vector<16x1xi32> to vector<16x16xi32>
    %1437 = arith.cmpi eq, %1436, %984 : vector<16x16xi32>
    %1438 = arith.mulf %1430, %1433 : vector<16x1xf32>
    %cst_277 = arith.constant 0.000000e+00 : f32
    %1439 = vector.shape_cast %1438 : vector<16x1xf32> to vector<16x1xf32>
    %1440 = vector.broadcast %1439 : vector<16x1xf32> to vector<16x16xf32>
    %1441 = vector.broadcast %cst_277 : f32 to vector<16x16xf32>
    %1442 = arith.select %1437, %1440, %1441 : vector<16x16xi1>, vector<16x16xf32>
    %1443 = arith.addf %1427, %1442 : vector<16x16xf32>
    %c1_i32_278 = arith.constant 1 : i32
    %1444 = vector.broadcast %c1_i32_278 : i32 to vector<16x1xi32>
    %1445 = arith.addi %1435, %1444 : vector<16x1xi32>
    %1446 = vector.broadcast %1445 : vector<16x1xi32> to vector<16x16xi32>
    %1447 = arith.cmpi eq, %1446, %984 : vector<16x16xi32>
    %1448 = arith.mulf %1432, %1433 : vector<16x1xf32>
    %cst_279 = arith.constant 0.000000e+00 : f32
    %1449 = vector.shape_cast %1448 : vector<16x1xf32> to vector<16x1xf32>
    %1450 = vector.broadcast %1449 : vector<16x1xf32> to vector<16x16xf32>
    %1451 = vector.broadcast %cst_279 : f32 to vector<16x16xf32>
    %1452 = arith.select %1447, %1450, %1451 : vector<16x16xi1>, vector<16x16xf32>
    %1453 = arith.addf %1443, %1452 : vector<16x16xf32>
    %c4_i32_280 = arith.constant 4 : i32
    %1454 = vector.broadcast %c4_i32_280 : i32 to vector<16x1xi32>
    %1455 = arith.addi %1435, %1454 : vector<16x1xi32>
    %1456 = vector.broadcast %1455 : vector<16x1xi32> to vector<16x16xi32>
    %1457 = arith.cmpi eq, %1456, %984 : vector<16x16xi32>
    %1458 = arith.mulf %1430, %1434 : vector<16x1xf32>
    %cst_281 = arith.constant 0.000000e+00 : f32
    %1459 = vector.shape_cast %1458 : vector<16x1xf32> to vector<16x1xf32>
    %1460 = vector.broadcast %1459 : vector<16x1xf32> to vector<16x16xf32>
    %1461 = vector.broadcast %cst_281 : f32 to vector<16x16xf32>
    %1462 = arith.select %1457, %1460, %1461 : vector<16x16xi1>, vector<16x16xf32>
    %1463 = arith.addf %1453, %1462 : vector<16x16xf32>
    %c4_i32_282 = arith.constant 4 : i32
    %1464 = vector.broadcast %c4_i32_282 : i32 to vector<16x1xi32>
    %1465 = arith.addi %1435, %1464 : vector<16x1xi32>
    %c1_i32_283 = arith.constant 1 : i32
    %1466 = vector.broadcast %c1_i32_283 : i32 to vector<16x1xi32>
    %1467 = arith.addi %1465, %1466 : vector<16x1xi32>
    %1468 = vector.broadcast %1467 : vector<16x1xi32> to vector<16x16xi32>
    %1469 = arith.cmpi eq, %1468, %984 : vector<16x16xi32>
    %1470 = arith.mulf %1432, %1434 : vector<16x1xf32>
    %cst_284 = arith.constant 0.000000e+00 : f32
    %1471 = vector.shape_cast %1470 : vector<16x1xf32> to vector<16x1xf32>
    %1472 = vector.broadcast %1471 : vector<16x1xf32> to vector<16x16xf32>
    %1473 = vector.broadcast %cst_284 : f32 to vector<16x16xf32>
    %1474 = arith.select %1469, %1472, %1473 : vector<16x16xi1>, vector<16x16xf32>
    %1475 = arith.addf %1463, %1474 : vector<16x16xf32>
    %1476 = vector.extract_strided_slice %49 {offsets = [0, 6], sizes = [16, 1], strides = [1, 1]} : vector<16x8xf32> to vector<16x1xf32>
    %1477 = vector.extract_strided_slice %975 {offsets = [0, 10], sizes = [16, 1], strides = [1, 1]} : vector<16x16xf32> to vector<16x1xf32>
    %1478 = arith.mulf %1476, %1477 : vector<16x1xf32>
    %1479 = vector.extract_strided_slice %976 {offsets = [0, 10], sizes = [16, 1], strides = [1, 1]} : vector<16x16xf32> to vector<16x1xf32>
    %1480 = arith.mulf %1476, %1479 : vector<16x1xf32>
    %1481 = vector.extract_strided_slice %979 {offsets = [0, 10], sizes = [16, 1], strides = [1, 1]} : vector<16x16xf32> to vector<16x1xf32>
    %1482 = vector.extract_strided_slice %980 {offsets = [0, 10], sizes = [16, 1], strides = [1, 1]} : vector<16x16xf32> to vector<16x1xf32>
    %1483 = vector.extract_strided_slice %983 {offsets = [0, 10], sizes = [16, 1], strides = [1, 1]} : vector<16x16xi32> to vector<16x1xi32>
    %1484 = vector.broadcast %1483 : vector<16x1xi32> to vector<16x16xi32>
    %1485 = arith.cmpi eq, %1484, %984 : vector<16x16xi32>
    %1486 = arith.mulf %1478, %1481 : vector<16x1xf32>
    %cst_285 = arith.constant 0.000000e+00 : f32
    %1487 = vector.shape_cast %1486 : vector<16x1xf32> to vector<16x1xf32>
    %1488 = vector.broadcast %1487 : vector<16x1xf32> to vector<16x16xf32>
    %1489 = vector.broadcast %cst_285 : f32 to vector<16x16xf32>
    %1490 = arith.select %1485, %1488, %1489 : vector<16x16xi1>, vector<16x16xf32>
    %1491 = arith.addf %1475, %1490 : vector<16x16xf32>
    %c1_i32_286 = arith.constant 1 : i32
    %1492 = vector.broadcast %c1_i32_286 : i32 to vector<16x1xi32>
    %1493 = arith.addi %1483, %1492 : vector<16x1xi32>
    %1494 = vector.broadcast %1493 : vector<16x1xi32> to vector<16x16xi32>
    %1495 = arith.cmpi eq, %1494, %984 : vector<16x16xi32>
    %1496 = arith.mulf %1480, %1481 : vector<16x1xf32>
    %cst_287 = arith.constant 0.000000e+00 : f32
    %1497 = vector.shape_cast %1496 : vector<16x1xf32> to vector<16x1xf32>
    %1498 = vector.broadcast %1497 : vector<16x1xf32> to vector<16x16xf32>
    %1499 = vector.broadcast %cst_287 : f32 to vector<16x16xf32>
    %1500 = arith.select %1495, %1498, %1499 : vector<16x16xi1>, vector<16x16xf32>
    %1501 = arith.addf %1491, %1500 : vector<16x16xf32>
    %c4_i32_288 = arith.constant 4 : i32
    %1502 = vector.broadcast %c4_i32_288 : i32 to vector<16x1xi32>
    %1503 = arith.addi %1483, %1502 : vector<16x1xi32>
    %1504 = vector.broadcast %1503 : vector<16x1xi32> to vector<16x16xi32>
    %1505 = arith.cmpi eq, %1504, %984 : vector<16x16xi32>
    %1506 = arith.mulf %1478, %1482 : vector<16x1xf32>
    %cst_289 = arith.constant 0.000000e+00 : f32
    %1507 = vector.shape_cast %1506 : vector<16x1xf32> to vector<16x1xf32>
    %1508 = vector.broadcast %1507 : vector<16x1xf32> to vector<16x16xf32>
    %1509 = vector.broadcast %cst_289 : f32 to vector<16x16xf32>
    %1510 = arith.select %1505, %1508, %1509 : vector<16x16xi1>, vector<16x16xf32>
    %1511 = arith.addf %1501, %1510 : vector<16x16xf32>
    %c4_i32_290 = arith.constant 4 : i32
    %1512 = vector.broadcast %c4_i32_290 : i32 to vector<16x1xi32>
    %1513 = arith.addi %1483, %1512 : vector<16x1xi32>
    %c1_i32_291 = arith.constant 1 : i32
    %1514 = vector.broadcast %c1_i32_291 : i32 to vector<16x1xi32>
    %1515 = arith.addi %1513, %1514 : vector<16x1xi32>
    %1516 = vector.broadcast %1515 : vector<16x1xi32> to vector<16x16xi32>
    %1517 = arith.cmpi eq, %1516, %984 : vector<16x16xi32>
    %1518 = arith.mulf %1480, %1482 : vector<16x1xf32>
    %cst_292 = arith.constant 0.000000e+00 : f32
    %1519 = vector.shape_cast %1518 : vector<16x1xf32> to vector<16x1xf32>
    %1520 = vector.broadcast %1519 : vector<16x1xf32> to vector<16x16xf32>
    %1521 = vector.broadcast %cst_292 : f32 to vector<16x16xf32>
    %1522 = arith.select %1517, %1520, %1521 : vector<16x16xi1>, vector<16x16xf32>
    %1523 = arith.addf %1511, %1522 : vector<16x16xf32>
    %1524 = vector.extract_strided_slice %49 {offsets = [0, 7], sizes = [16, 1], strides = [1, 1]} : vector<16x8xf32> to vector<16x1xf32>
    %1525 = vector.extract_strided_slice %975 {offsets = [0, 11], sizes = [16, 1], strides = [1, 1]} : vector<16x16xf32> to vector<16x1xf32>
    %1526 = arith.mulf %1524, %1525 : vector<16x1xf32>
    %1527 = vector.extract_strided_slice %976 {offsets = [0, 11], sizes = [16, 1], strides = [1, 1]} : vector<16x16xf32> to vector<16x1xf32>
    %1528 = arith.mulf %1524, %1527 : vector<16x1xf32>
    %1529 = vector.extract_strided_slice %979 {offsets = [0, 11], sizes = [16, 1], strides = [1, 1]} : vector<16x16xf32> to vector<16x1xf32>
    %1530 = vector.extract_strided_slice %980 {offsets = [0, 11], sizes = [16, 1], strides = [1, 1]} : vector<16x16xf32> to vector<16x1xf32>
    %1531 = vector.extract_strided_slice %983 {offsets = [0, 11], sizes = [16, 1], strides = [1, 1]} : vector<16x16xi32> to vector<16x1xi32>
    %1532 = vector.broadcast %1531 : vector<16x1xi32> to vector<16x16xi32>
    %1533 = arith.cmpi eq, %1532, %984 : vector<16x16xi32>
    %1534 = arith.mulf %1526, %1529 : vector<16x1xf32>
    %cst_293 = arith.constant 0.000000e+00 : f32
    %1535 = vector.shape_cast %1534 : vector<16x1xf32> to vector<16x1xf32>
    %1536 = vector.broadcast %1535 : vector<16x1xf32> to vector<16x16xf32>
    %1537 = vector.broadcast %cst_293 : f32 to vector<16x16xf32>
    %1538 = arith.select %1533, %1536, %1537 : vector<16x16xi1>, vector<16x16xf32>
    %1539 = arith.addf %1523, %1538 : vector<16x16xf32>
    %c1_i32_294 = arith.constant 1 : i32
    %1540 = vector.broadcast %c1_i32_294 : i32 to vector<16x1xi32>
    %1541 = arith.addi %1531, %1540 : vector<16x1xi32>
    %1542 = vector.broadcast %1541 : vector<16x1xi32> to vector<16x16xi32>
    %1543 = arith.cmpi eq, %1542, %984 : vector<16x16xi32>
    %1544 = arith.mulf %1528, %1529 : vector<16x1xf32>
    %cst_295 = arith.constant 0.000000e+00 : f32
    %1545 = vector.shape_cast %1544 : vector<16x1xf32> to vector<16x1xf32>
    %1546 = vector.broadcast %1545 : vector<16x1xf32> to vector<16x16xf32>
    %1547 = vector.broadcast %cst_295 : f32 to vector<16x16xf32>
    %1548 = arith.select %1543, %1546, %1547 : vector<16x16xi1>, vector<16x16xf32>
    %1549 = arith.addf %1539, %1548 : vector<16x16xf32>
    %c4_i32_296 = arith.constant 4 : i32
    %1550 = vector.broadcast %c4_i32_296 : i32 to vector<16x1xi32>
    %1551 = arith.addi %1531, %1550 : vector<16x1xi32>
    %1552 = vector.broadcast %1551 : vector<16x1xi32> to vector<16x16xi32>
    %1553 = arith.cmpi eq, %1552, %984 : vector<16x16xi32>
    %1554 = arith.mulf %1526, %1530 : vector<16x1xf32>
    %cst_297 = arith.constant 0.000000e+00 : f32
    %1555 = vector.shape_cast %1554 : vector<16x1xf32> to vector<16x1xf32>
    %1556 = vector.broadcast %1555 : vector<16x1xf32> to vector<16x16xf32>
    %1557 = vector.broadcast %cst_297 : f32 to vector<16x16xf32>
    %1558 = arith.select %1553, %1556, %1557 : vector<16x16xi1>, vector<16x16xf32>
    %1559 = arith.addf %1549, %1558 : vector<16x16xf32>
    %c4_i32_298 = arith.constant 4 : i32
    %1560 = vector.broadcast %c4_i32_298 : i32 to vector<16x1xi32>
    %1561 = arith.addi %1531, %1560 : vector<16x1xi32>
    %c1_i32_299 = arith.constant 1 : i32
    %1562 = vector.broadcast %c1_i32_299 : i32 to vector<16x1xi32>
    %1563 = arith.addi %1561, %1562 : vector<16x1xi32>
    %1564 = vector.broadcast %1563 : vector<16x1xi32> to vector<16x16xi32>
    %1565 = arith.cmpi eq, %1564, %984 : vector<16x16xi32>
    %1566 = arith.mulf %1528, %1530 : vector<16x1xf32>
    %cst_300 = arith.constant 0.000000e+00 : f32
    %1567 = vector.shape_cast %1566 : vector<16x1xf32> to vector<16x1xf32>
    %1568 = vector.broadcast %1567 : vector<16x1xf32> to vector<16x16xf32>
    %1569 = vector.broadcast %cst_300 : f32 to vector<16x16xf32>
    %1570 = arith.select %1565, %1568, %1569 : vector<16x16xi1>, vector<16x16xf32>
    %1571 = arith.addf %1559, %1570 : vector<16x16xf32>
    %c64_301 = arith.constant 64 : index
    %c16_302 = arith.constant 16 : index
    %1572 = vector.load %arg15[%c64_301, %c16_302] : memref<80x32xbf16, #tpu.memory_space<vmem>>, vector<16x8xbf16>
    %1573 = arith.truncf %1571 : vector<16x16xf32> to vector<16x16xbf16>
    %cst_303 = arith.constant dense<0.000000e+00> : vector<16x8xf32>
    %1574 = tpu.matmul %1573, %1572, %cst_303 {dimension_numbers = #tpu.dot_dimension_numbers<[1], [0], [0], [1], [0, 0, 1, 1], [], []>} : vector<16x16xbf16>, vector<16x8xbf16>, vector<16x8xf32> -> vector<16x8xf32>
    %1575 = arith.addf %721, %1574 : vector<16x8xf32>
    %cst_304 = arith.constant 0.000000e+00 : f32
    %1576 = vector.broadcast %cst_304 : f32 to vector<16x16xf32>
    %1577 = vector.extract_strided_slice %60 {offsets = [0, 4], sizes = [16, 1], strides = [1, 1]} : vector<16x8xf32> to vector<16x1xf32>
    %1578 = vector.extract_strided_slice %975 {offsets = [0, 12], sizes = [16, 1], strides = [1, 1]} : vector<16x16xf32> to vector<16x1xf32>
    %1579 = arith.mulf %1577, %1578 : vector<16x1xf32>
    %1580 = vector.extract_strided_slice %976 {offsets = [0, 12], sizes = [16, 1], strides = [1, 1]} : vector<16x16xf32> to vector<16x1xf32>
    %1581 = arith.mulf %1577, %1580 : vector<16x1xf32>
    %1582 = vector.extract_strided_slice %979 {offsets = [0, 12], sizes = [16, 1], strides = [1, 1]} : vector<16x16xf32> to vector<16x1xf32>
    %1583 = vector.extract_strided_slice %980 {offsets = [0, 12], sizes = [16, 1], strides = [1, 1]} : vector<16x16xf32> to vector<16x1xf32>
    %1584 = vector.extract_strided_slice %983 {offsets = [0, 12], sizes = [16, 1], strides = [1, 1]} : vector<16x16xi32> to vector<16x1xi32>
    %1585 = vector.broadcast %1584 : vector<16x1xi32> to vector<16x16xi32>
    %1586 = arith.cmpi eq, %1585, %984 : vector<16x16xi32>
    %1587 = arith.mulf %1579, %1582 : vector<16x1xf32>
    %cst_305 = arith.constant 0.000000e+00 : f32
    %1588 = vector.shape_cast %1587 : vector<16x1xf32> to vector<16x1xf32>
    %1589 = vector.broadcast %1588 : vector<16x1xf32> to vector<16x16xf32>
    %1590 = vector.broadcast %cst_305 : f32 to vector<16x16xf32>
    %1591 = arith.select %1586, %1589, %1590 : vector<16x16xi1>, vector<16x16xf32>
    %1592 = arith.addf %1576, %1591 : vector<16x16xf32>
    %c1_i32_306 = arith.constant 1 : i32
    %1593 = vector.broadcast %c1_i32_306 : i32 to vector<16x1xi32>
    %1594 = arith.addi %1584, %1593 : vector<16x1xi32>
    %1595 = vector.broadcast %1594 : vector<16x1xi32> to vector<16x16xi32>
    %1596 = arith.cmpi eq, %1595, %984 : vector<16x16xi32>
    %1597 = arith.mulf %1581, %1582 : vector<16x1xf32>
    %cst_307 = arith.constant 0.000000e+00 : f32
    %1598 = vector.shape_cast %1597 : vector<16x1xf32> to vector<16x1xf32>
    %1599 = vector.broadcast %1598 : vector<16x1xf32> to vector<16x16xf32>
    %1600 = vector.broadcast %cst_307 : f32 to vector<16x16xf32>
    %1601 = arith.select %1596, %1599, %1600 : vector<16x16xi1>, vector<16x16xf32>
    %1602 = arith.addf %1592, %1601 : vector<16x16xf32>
    %c4_i32_308 = arith.constant 4 : i32
    %1603 = vector.broadcast %c4_i32_308 : i32 to vector<16x1xi32>
    %1604 = arith.addi %1584, %1603 : vector<16x1xi32>
    %1605 = vector.broadcast %1604 : vector<16x1xi32> to vector<16x16xi32>
    %1606 = arith.cmpi eq, %1605, %984 : vector<16x16xi32>
    %1607 = arith.mulf %1579, %1583 : vector<16x1xf32>
    %cst_309 = arith.constant 0.000000e+00 : f32
    %1608 = vector.shape_cast %1607 : vector<16x1xf32> to vector<16x1xf32>
    %1609 = vector.broadcast %1608 : vector<16x1xf32> to vector<16x16xf32>
    %1610 = vector.broadcast %cst_309 : f32 to vector<16x16xf32>
    %1611 = arith.select %1606, %1609, %1610 : vector<16x16xi1>, vector<16x16xf32>
    %1612 = arith.addf %1602, %1611 : vector<16x16xf32>
    %c4_i32_310 = arith.constant 4 : i32
    %1613 = vector.broadcast %c4_i32_310 : i32 to vector<16x1xi32>
    %1614 = arith.addi %1584, %1613 : vector<16x1xi32>
    %c1_i32_311 = arith.constant 1 : i32
    %1615 = vector.broadcast %c1_i32_311 : i32 to vector<16x1xi32>
    %1616 = arith.addi %1614, %1615 : vector<16x1xi32>
    %1617 = vector.broadcast %1616 : vector<16x1xi32> to vector<16x16xi32>
    %1618 = arith.cmpi eq, %1617, %984 : vector<16x16xi32>
    %1619 = arith.mulf %1581, %1583 : vector<16x1xf32>
    %cst_312 = arith.constant 0.000000e+00 : f32
    %1620 = vector.shape_cast %1619 : vector<16x1xf32> to vector<16x1xf32>
    %1621 = vector.broadcast %1620 : vector<16x1xf32> to vector<16x16xf32>
    %1622 = vector.broadcast %cst_312 : f32 to vector<16x16xf32>
    %1623 = arith.select %1618, %1621, %1622 : vector<16x16xi1>, vector<16x16xf32>
    %1624 = arith.addf %1612, %1623 : vector<16x16xf32>
    %1625 = vector.extract_strided_slice %60 {offsets = [0, 5], sizes = [16, 1], strides = [1, 1]} : vector<16x8xf32> to vector<16x1xf32>
    %1626 = vector.extract_strided_slice %975 {offsets = [0, 13], sizes = [16, 1], strides = [1, 1]} : vector<16x16xf32> to vector<16x1xf32>
    %1627 = arith.mulf %1625, %1626 : vector<16x1xf32>
    %1628 = vector.extract_strided_slice %976 {offsets = [0, 13], sizes = [16, 1], strides = [1, 1]} : vector<16x16xf32> to vector<16x1xf32>
    %1629 = arith.mulf %1625, %1628 : vector<16x1xf32>
    %1630 = vector.extract_strided_slice %979 {offsets = [0, 13], sizes = [16, 1], strides = [1, 1]} : vector<16x16xf32> to vector<16x1xf32>
    %1631 = vector.extract_strided_slice %980 {offsets = [0, 13], sizes = [16, 1], strides = [1, 1]} : vector<16x16xf32> to vector<16x1xf32>
    %1632 = vector.extract_strided_slice %983 {offsets = [0, 13], sizes = [16, 1], strides = [1, 1]} : vector<16x16xi32> to vector<16x1xi32>
    %1633 = vector.broadcast %1632 : vector<16x1xi32> to vector<16x16xi32>
    %1634 = arith.cmpi eq, %1633, %984 : vector<16x16xi32>
    %1635 = arith.mulf %1627, %1630 : vector<16x1xf32>
    %cst_313 = arith.constant 0.000000e+00 : f32
    %1636 = vector.shape_cast %1635 : vector<16x1xf32> to vector<16x1xf32>
    %1637 = vector.broadcast %1636 : vector<16x1xf32> to vector<16x16xf32>
    %1638 = vector.broadcast %cst_313 : f32 to vector<16x16xf32>
    %1639 = arith.select %1634, %1637, %1638 : vector<16x16xi1>, vector<16x16xf32>
    %1640 = arith.addf %1624, %1639 : vector<16x16xf32>
    %c1_i32_314 = arith.constant 1 : i32
    %1641 = vector.broadcast %c1_i32_314 : i32 to vector<16x1xi32>
    %1642 = arith.addi %1632, %1641 : vector<16x1xi32>
    %1643 = vector.broadcast %1642 : vector<16x1xi32> to vector<16x16xi32>
    %1644 = arith.cmpi eq, %1643, %984 : vector<16x16xi32>
    %1645 = arith.mulf %1629, %1630 : vector<16x1xf32>
    %cst_315 = arith.constant 0.000000e+00 : f32
    %1646 = vector.shape_cast %1645 : vector<16x1xf32> to vector<16x1xf32>
    %1647 = vector.broadcast %1646 : vector<16x1xf32> to vector<16x16xf32>
    %1648 = vector.broadcast %cst_315 : f32 to vector<16x16xf32>
    %1649 = arith.select %1644, %1647, %1648 : vector<16x16xi1>, vector<16x16xf32>
    %1650 = arith.addf %1640, %1649 : vector<16x16xf32>
    %c4_i32_316 = arith.constant 4 : i32
    %1651 = vector.broadcast %c4_i32_316 : i32 to vector<16x1xi32>
    %1652 = arith.addi %1632, %1651 : vector<16x1xi32>
    %1653 = vector.broadcast %1652 : vector<16x1xi32> to vector<16x16xi32>
    %1654 = arith.cmpi eq, %1653, %984 : vector<16x16xi32>
    %1655 = arith.mulf %1627, %1631 : vector<16x1xf32>
    %cst_317 = arith.constant 0.000000e+00 : f32
    %1656 = vector.shape_cast %1655 : vector<16x1xf32> to vector<16x1xf32>
    %1657 = vector.broadcast %1656 : vector<16x1xf32> to vector<16x16xf32>
    %1658 = vector.broadcast %cst_317 : f32 to vector<16x16xf32>
    %1659 = arith.select %1654, %1657, %1658 : vector<16x16xi1>, vector<16x16xf32>
    %1660 = arith.addf %1650, %1659 : vector<16x16xf32>
    %c4_i32_318 = arith.constant 4 : i32
    %1661 = vector.broadcast %c4_i32_318 : i32 to vector<16x1xi32>
    %1662 = arith.addi %1632, %1661 : vector<16x1xi32>
    %c1_i32_319 = arith.constant 1 : i32
    %1663 = vector.broadcast %c1_i32_319 : i32 to vector<16x1xi32>
    %1664 = arith.addi %1662, %1663 : vector<16x1xi32>
    %1665 = vector.broadcast %1664 : vector<16x1xi32> to vector<16x16xi32>
    %1666 = arith.cmpi eq, %1665, %984 : vector<16x16xi32>
    %1667 = arith.mulf %1629, %1631 : vector<16x1xf32>
    %cst_320 = arith.constant 0.000000e+00 : f32
    %1668 = vector.shape_cast %1667 : vector<16x1xf32> to vector<16x1xf32>
    %1669 = vector.broadcast %1668 : vector<16x1xf32> to vector<16x16xf32>
    %1670 = vector.broadcast %cst_320 : f32 to vector<16x16xf32>
    %1671 = arith.select %1666, %1669, %1670 : vector<16x16xi1>, vector<16x16xf32>
    %1672 = arith.addf %1660, %1671 : vector<16x16xf32>
    %1673 = vector.extract_strided_slice %60 {offsets = [0, 6], sizes = [16, 1], strides = [1, 1]} : vector<16x8xf32> to vector<16x1xf32>
    %1674 = vector.extract_strided_slice %975 {offsets = [0, 14], sizes = [16, 1], strides = [1, 1]} : vector<16x16xf32> to vector<16x1xf32>
    %1675 = arith.mulf %1673, %1674 : vector<16x1xf32>
    %1676 = vector.extract_strided_slice %976 {offsets = [0, 14], sizes = [16, 1], strides = [1, 1]} : vector<16x16xf32> to vector<16x1xf32>
    %1677 = arith.mulf %1673, %1676 : vector<16x1xf32>
    %1678 = vector.extract_strided_slice %979 {offsets = [0, 14], sizes = [16, 1], strides = [1, 1]} : vector<16x16xf32> to vector<16x1xf32>
    %1679 = vector.extract_strided_slice %980 {offsets = [0, 14], sizes = [16, 1], strides = [1, 1]} : vector<16x16xf32> to vector<16x1xf32>
    %1680 = vector.extract_strided_slice %983 {offsets = [0, 14], sizes = [16, 1], strides = [1, 1]} : vector<16x16xi32> to vector<16x1xi32>
    %1681 = vector.broadcast %1680 : vector<16x1xi32> to vector<16x16xi32>
    %1682 = arith.cmpi eq, %1681, %984 : vector<16x16xi32>
    %1683 = arith.mulf %1675, %1678 : vector<16x1xf32>
    %cst_321 = arith.constant 0.000000e+00 : f32
    %1684 = vector.shape_cast %1683 : vector<16x1xf32> to vector<16x1xf32>
    %1685 = vector.broadcast %1684 : vector<16x1xf32> to vector<16x16xf32>
    %1686 = vector.broadcast %cst_321 : f32 to vector<16x16xf32>
    %1687 = arith.select %1682, %1685, %1686 : vector<16x16xi1>, vector<16x16xf32>
    %1688 = arith.addf %1672, %1687 : vector<16x16xf32>
    %c1_i32_322 = arith.constant 1 : i32
    %1689 = vector.broadcast %c1_i32_322 : i32 to vector<16x1xi32>
    %1690 = arith.addi %1680, %1689 : vector<16x1xi32>
    %1691 = vector.broadcast %1690 : vector<16x1xi32> to vector<16x16xi32>
    %1692 = arith.cmpi eq, %1691, %984 : vector<16x16xi32>
    %1693 = arith.mulf %1677, %1678 : vector<16x1xf32>
    %cst_323 = arith.constant 0.000000e+00 : f32
    %1694 = vector.shape_cast %1693 : vector<16x1xf32> to vector<16x1xf32>
    %1695 = vector.broadcast %1694 : vector<16x1xf32> to vector<16x16xf32>
    %1696 = vector.broadcast %cst_323 : f32 to vector<16x16xf32>
    %1697 = arith.select %1692, %1695, %1696 : vector<16x16xi1>, vector<16x16xf32>
    %1698 = arith.addf %1688, %1697 : vector<16x16xf32>
    %c4_i32_324 = arith.constant 4 : i32
    %1699 = vector.broadcast %c4_i32_324 : i32 to vector<16x1xi32>
    %1700 = arith.addi %1680, %1699 : vector<16x1xi32>
    %1701 = vector.broadcast %1700 : vector<16x1xi32> to vector<16x16xi32>
    %1702 = arith.cmpi eq, %1701, %984 : vector<16x16xi32>
    %1703 = arith.mulf %1675, %1679 : vector<16x1xf32>
    %cst_325 = arith.constant 0.000000e+00 : f32
    %1704 = vector.shape_cast %1703 : vector<16x1xf32> to vector<16x1xf32>
    %1705 = vector.broadcast %1704 : vector<16x1xf32> to vector<16x16xf32>
    %1706 = vector.broadcast %cst_325 : f32 to vector<16x16xf32>
    %1707 = arith.select %1702, %1705, %1706 : vector<16x16xi1>, vector<16x16xf32>
    %1708 = arith.addf %1698, %1707 : vector<16x16xf32>
    %c4_i32_326 = arith.constant 4 : i32
    %1709 = vector.broadcast %c4_i32_326 : i32 to vector<16x1xi32>
    %1710 = arith.addi %1680, %1709 : vector<16x1xi32>
    %c1_i32_327 = arith.constant 1 : i32
    %1711 = vector.broadcast %c1_i32_327 : i32 to vector<16x1xi32>
    %1712 = arith.addi %1710, %1711 : vector<16x1xi32>
    %1713 = vector.broadcast %1712 : vector<16x1xi32> to vector<16x16xi32>
    %1714 = arith.cmpi eq, %1713, %984 : vector<16x16xi32>
    %1715 = arith.mulf %1677, %1679 : vector<16x1xf32>
    %cst_328 = arith.constant 0.000000e+00 : f32
    %1716 = vector.shape_cast %1715 : vector<16x1xf32> to vector<16x1xf32>
    %1717 = vector.broadcast %1716 : vector<16x1xf32> to vector<16x16xf32>
    %1718 = vector.broadcast %cst_328 : f32 to vector<16x16xf32>
    %1719 = arith.select %1714, %1717, %1718 : vector<16x16xi1>, vector<16x16xf32>
    %1720 = arith.addf %1708, %1719 : vector<16x16xf32>
    %1721 = vector.extract_strided_slice %60 {offsets = [0, 7], sizes = [16, 1], strides = [1, 1]} : vector<16x8xf32> to vector<16x1xf32>
    %1722 = vector.extract_strided_slice %975 {offsets = [0, 15], sizes = [16, 1], strides = [1, 1]} : vector<16x16xf32> to vector<16x1xf32>
    %1723 = arith.mulf %1721, %1722 : vector<16x1xf32>
    %1724 = vector.extract_strided_slice %976 {offsets = [0, 15], sizes = [16, 1], strides = [1, 1]} : vector<16x16xf32> to vector<16x1xf32>
    %1725 = arith.mulf %1721, %1724 : vector<16x1xf32>
    %1726 = vector.extract_strided_slice %979 {offsets = [0, 15], sizes = [16, 1], strides = [1, 1]} : vector<16x16xf32> to vector<16x1xf32>
    %1727 = vector.extract_strided_slice %980 {offsets = [0, 15], sizes = [16, 1], strides = [1, 1]} : vector<16x16xf32> to vector<16x1xf32>
    %1728 = vector.extract_strided_slice %983 {offsets = [0, 15], sizes = [16, 1], strides = [1, 1]} : vector<16x16xi32> to vector<16x1xi32>
    %1729 = vector.broadcast %1728 : vector<16x1xi32> to vector<16x16xi32>
    %1730 = arith.cmpi eq, %1729, %984 : vector<16x16xi32>
    %1731 = arith.mulf %1723, %1726 : vector<16x1xf32>
    %cst_329 = arith.constant 0.000000e+00 : f32
    %1732 = vector.shape_cast %1731 : vector<16x1xf32> to vector<16x1xf32>
    %1733 = vector.broadcast %1732 : vector<16x1xf32> to vector<16x16xf32>
    %1734 = vector.broadcast %cst_329 : f32 to vector<16x16xf32>
    %1735 = arith.select %1730, %1733, %1734 : vector<16x16xi1>, vector<16x16xf32>
    %1736 = arith.addf %1720, %1735 : vector<16x16xf32>
    %c1_i32_330 = arith.constant 1 : i32
    %1737 = vector.broadcast %c1_i32_330 : i32 to vector<16x1xi32>
    %1738 = arith.addi %1728, %1737 : vector<16x1xi32>
    %1739 = vector.broadcast %1738 : vector<16x1xi32> to vector<16x16xi32>
    %1740 = arith.cmpi eq, %1739, %984 : vector<16x16xi32>
    %1741 = arith.mulf %1725, %1726 : vector<16x1xf32>
    %cst_331 = arith.constant 0.000000e+00 : f32
    %1742 = vector.shape_cast %1741 : vector<16x1xf32> to vector<16x1xf32>
    %1743 = vector.broadcast %1742 : vector<16x1xf32> to vector<16x16xf32>
    %1744 = vector.broadcast %cst_331 : f32 to vector<16x16xf32>
    %1745 = arith.select %1740, %1743, %1744 : vector<16x16xi1>, vector<16x16xf32>
    %1746 = arith.addf %1736, %1745 : vector<16x16xf32>
    %c4_i32_332 = arith.constant 4 : i32
    %1747 = vector.broadcast %c4_i32_332 : i32 to vector<16x1xi32>
    %1748 = arith.addi %1728, %1747 : vector<16x1xi32>
    %1749 = vector.broadcast %1748 : vector<16x1xi32> to vector<16x16xi32>
    %1750 = arith.cmpi eq, %1749, %984 : vector<16x16xi32>
    %1751 = arith.mulf %1723, %1727 : vector<16x1xf32>
    %cst_333 = arith.constant 0.000000e+00 : f32
    %1752 = vector.shape_cast %1751 : vector<16x1xf32> to vector<16x1xf32>
    %1753 = vector.broadcast %1752 : vector<16x1xf32> to vector<16x16xf32>
    %1754 = vector.broadcast %cst_333 : f32 to vector<16x16xf32>
    %1755 = arith.select %1750, %1753, %1754 : vector<16x16xi1>, vector<16x16xf32>
    %1756 = arith.addf %1746, %1755 : vector<16x16xf32>
    %c4_i32_334 = arith.constant 4 : i32
    %1757 = vector.broadcast %c4_i32_334 : i32 to vector<16x1xi32>
    %1758 = arith.addi %1728, %1757 : vector<16x1xi32>
    %c1_i32_335 = arith.constant 1 : i32
    %1759 = vector.broadcast %c1_i32_335 : i32 to vector<16x1xi32>
    %1760 = arith.addi %1758, %1759 : vector<16x1xi32>
    %1761 = vector.broadcast %1760 : vector<16x1xi32> to vector<16x16xi32>
    %1762 = arith.cmpi eq, %1761, %984 : vector<16x16xi32>
    %1763 = arith.mulf %1725, %1727 : vector<16x1xf32>
    %cst_336 = arith.constant 0.000000e+00 : f32
    %1764 = vector.shape_cast %1763 : vector<16x1xf32> to vector<16x1xf32>
    %1765 = vector.broadcast %1764 : vector<16x1xf32> to vector<16x16xf32>
    %1766 = vector.broadcast %cst_336 : f32 to vector<16x16xf32>
    %1767 = arith.select %1762, %1765, %1766 : vector<16x16xi1>, vector<16x16xf32>
    %1768 = arith.addf %1756, %1767 : vector<16x16xf32>
    %c64_337 = arith.constant 64 : index
    %c24_338 = arith.constant 24 : index
    %1769 = vector.load %arg15[%c64_337, %c24_338] : memref<80x32xbf16, #tpu.memory_space<vmem>>, vector<16x8xbf16>
    %1770 = arith.truncf %1768 : vector<16x16xf32> to vector<16x16xbf16>
    %cst_339 = arith.constant dense<0.000000e+00> : vector<16x8xf32>
    %1771 = tpu.matmul %1770, %1769, %cst_339 {dimension_numbers = #tpu.dot_dimension_numbers<[1], [0], [0], [1], [0, 0, 1, 1], [], []>} : vector<16x16xbf16>, vector<16x8xbf16>, vector<16x8xf32> -> vector<16x8xf32>
    %1772 = arith.addf %918, %1771 : vector<16x8xf32>
    %1773 = tpu.concatenate %1181, %1378, %1575, %1772 in 1 : vector<16x8xf32>, vector<16x8xf32>, vector<16x8xf32>, vector<16x8xf32> -> vector<16x32xf32>
    %1774 = arith.truncf %1773 : vector<16x32xf32> to vector<16x32xbf16>
    %c0_340 = arith.constant 0 : index
    %c0_341 = arith.constant 0 : index
    %1775 = vector.load %arg12[%c0_340, %c0_341] : memref<32x32xbf16, #tpu.memory_space<vmem>>, vector<32x32xbf16>
    %cst_342 = arith.constant dense<0.000000e+00> : vector<16x32xf32>
    %1776 = tpu.matmul %1774, %1775, %cst_342 {dimension_numbers = #tpu.dot_dimension_numbers<[1], [0], [0], [1], [0, 0, 1, 1], [], []>} : vector<16x32xbf16>, vector<32x32xbf16>, vector<16x32xf32> -> vector<16x32xf32>
    %c0_343 = arith.constant 0 : index
    %c0_344 = arith.constant 0 : index
    %1777 = vector.load %arg13[%c0_343, %c0_344] : memref<1x32xf32, #tpu.memory_space<vmem>>, vector<1x32xf32>
    %1778 = vector.broadcast %1777 : vector<1x32xf32> to vector<16x32xf32>
    %1779 = arith.addf %1776, %1778 : vector<16x32xf32>
    %c0_345 = arith.constant 0 : index
    %c0_346 = arith.constant 0 : index
    %c0_347 = arith.constant 0 : index
    %1780 = vector.load %arg14[%c0_345, %c0_346, %c0_347] : memref<1x16x32xf32, #tpu.memory_space<vmem>>, vector<1x16x32xf32>
    %1781 = vector.shape_cast %1780 : vector<1x16x32xf32> to vector<16x32xf32>
    %1782 = vector.shape_cast %1779 : vector<16x32xf32> to vector<1x16x32xf32>
    tpu.vector_store %arg14[%c0_345, %c0_346, %c0_347], %1782 {strides = array<i32>} : memref<1x16x32xf32, #tpu.memory_space<vmem>>, vector<1x16x32xf32>,
    return
  }
  func.func @transform_0(%arg0: i32, %arg1: i32) -> (i32, i32, i32) {
    %c0_i32 = arith.constant 0 : i32
    %c0_i32_0 = arith.constant 0 : i32
    return %arg0, %arg1, %c0_i32 : i32, i32, i32
  }
  func.func @transform_1(%arg0: i32, %arg1: i32) -> (i32, i32, i32) {
    %c0_i32 = arith.constant 0 : i32
    %c0_i32_0 = arith.constant 0 : i32
    return %arg0, %arg1, %c0_i32 : i32, i32, i32
  }
  func.func @transform_2(%arg0: i32, %arg1: i32) -> (i32, i32, i32) {
    %c0_i32 = arith.constant 0 : i32
    %c0_i32_0 = arith.constant 0 : i32
    %c0_i32_1 = arith.constant 0 : i32
    return %arg0, %c0_i32, %c0_i32_0 : i32, i32, i32
  }
  func.func @transform_3(%arg0: i32, %arg1: i32) -> (i32, i32, i32) {
    %c0_i32 = arith.constant 0 : i32
    %c0_i32_0 = arith.constant 0 : i32
    %c0_i32_1 = arith.constant 0 : i32
    return %arg0, %c0_i32, %c0_i32_0 : i32, i32, i32
  }
  func.func @transform_4(%arg0: i32, %arg1: i32) -> (i32, i32) {
    %c0_i32 = arith.constant 0 : i32
    %c0_i32_0 = arith.constant 0 : i32
    %c0_i32_1 = arith.constant 0 : i32
    return %c0_i32, %c0_i32_0 : i32, i32
  }
  func.func @transform_5(%arg0: i32, %arg1: i32) -> (i32, i32) {
    %c0_i32 = arith.constant 0 : i32
    %c0_i32_0 = arith.constant 0 : i32
    %c0_i32_1 = arith.constant 0 : i32
    return %c0_i32, %c0_i32_0 : i32, i32
  }
  func.func @transform_6(%arg0: i32, %arg1: i32) -> (i32, i32) {
    %c0_i32 = arith.constant 0 : i32
    %c0_i32_0 = arith.constant 0 : i32
    %c0_i32_1 = arith.constant 0 : i32
    return %c0_i32, %c0_i32_0 : i32, i32
  }
  func.func @transform_7(%arg0: i32, %arg1: i32) -> (i32, i32) {
    %c0_i32 = arith.constant 0 : i32
    %c0_i32_0 = arith.constant 0 : i32
    %c0_i32_1 = arith.constant 0 : i32
    return %c0_i32, %c0_i32_0 : i32, i32
  }
  func.func @transform_8(%arg0: i32, %arg1: i32) -> (i32, i32) {
    %c0_i32 = arith.constant 0 : i32
    %c0_i32_0 = arith.constant 0 : i32
    %c0_i32_1 = arith.constant 0 : i32
    return %c0_i32, %c0_i32_0 : i32, i32
  }
  func.func @transform_9(%arg0: i32, %arg1: i32) -> (i32, i32) {
    %c0_i32 = arith.constant 0 : i32
    %c0_i32_0 = arith.constant 0 : i32
    %c0_i32_1 = arith.constant 0 : i32
    return %c0_i32, %c0_i32_0 : i32, i32
  }
  func.func @transform_10(%arg0: i32, %arg1: i32) -> (i32, i32) {
    %c0_i32 = arith.constant 0 : i32
    %c0_i32_0 = arith.constant 0 : i32
    %c0_i32_1 = arith.constant 0 : i32
    return %c0_i32, %c0_i32_0 : i32, i32
  }
  func.func @transform_11(%arg0: i32, %arg1: i32) -> (i32, i32) {
    %c0_i32 = arith.constant 0 : i32
    %c0_i32_0 = arith.constant 0 : i32
    %c0_i32_1 = arith.constant 0 : i32
    return %c0_i32, %c0_i32_0 : i32, i32
  }
  func.func @transform_12(%arg0: i32, %arg1: i32) -> (i32, i32, i32) {
    %c0_i32 = arith.constant 0 : i32
    %c0_i32_0 = arith.constant 0 : i32
    return %arg0, %arg1, %c0_i32 : i32, i32, i32
  }
}

</mosaic_0001>

<llo_original>
// kernel: tpu_custom_call.1
$region0: #{tpu_custom_call.1}
  #allocation0 [shape = 'u32[]', space=smem, size = 0x4, offset = 0x4, fixed_abs, tag = 'smem constant byte address 0x4 - core index']
  #allocation1 [shape = 'u32[72,128]{1,0:T(1,128)}', space=vmem, size = 0x9000, scoped, tag = 'internal scratch']
  #allocation2 [shape = 'bf16[80,32]{1,0:T(8,128)(2,1)}', space=vmem, size = 0x5000, scoped, tag = 'scratch operand']
  %s0 = inlined_call_operand.vmem [shape: bf16[2,32,32], index: 0, kind: input, shape index: {}]
  %s1 = inlined_call_operand.vmem [shape: f32[2,32,4], index: 1, kind: input, shape index: {}]
  %s2 = inlined_call_operand.vmem [shape: bf16[2,80,32], index: 2, kind: input, shape index: {}]
  %s3 = inlined_call_operand.vmem [shape: f32[2,80,1], index: 3, kind: input, shape index: {}]
  %s4 = inlined_call_operand.vmem [shape: bf16[32,32], index: 4, kind: input, shape index: {}]
  %s5 = inlined_call_operand.vmem [shape: f32[1,32], index: 5, kind: input, shape index: {}]
  %s6 = inlined_call_operand.vmem [shape: bf16[32,64], index: 6, kind: input, shape index: {}]
  %s7 = inlined_call_operand.vmem [shape: f32[1,64], index: 7, kind: input, shape index: {}]
  %s8 = inlined_call_operand.vmem [shape: bf16[32,32], index: 8, kind: input, shape index: {}]
  %s9 = inlined_call_operand.vmem [shape: f32[1,32], index: 9, kind: input, shape index: {}]
  %s10 = inlined_call_operand.vmem [shape: bf16[32,32], index: 10, kind: input, shape index: {}]
  %s11 = inlined_call_operand.vmem [shape: f32[1,32], index: 11, kind: input, shape index: {}]
  %s12 = inlined_call_operand.hbm [shape: f32[2,32,32], index: 12, kind: output, shape index: {}]
  %s13 = sld [smem:[#allocation0]]
  $region85: #{tpu_custom_call.1} parent=0
    _
  %s15 = ssub.s32 1, %s13
  %s16 = scalar_select 0, %s15, %s13
  $region1: #{tpu_custom_call.1} parent=0
    #allocation3 [shape = 'u8[16384]{0}', space=vmem, size = 0x4000, scoped, tag = 'output window, operand 0']
    #allocation4 [shape = 's32[2]{0}', space=sflag, size = 0x8, scoped, tag = 'scoped memory for tpu_custom_call.1']
    %17 = vsyncpa [#allocation4], 0
    %s18 = scalar_lea.sflag [#allocation4], 1
    %19 = vsyncpa %s18, 0
    loop: start=0, step=1, limit=6
    $region2: #{tpu_custom_call.1} parent=1 // loop_pre_header
      _
    $region3: #{tpu_custom_call.1} parent=1 // loop_header
      %s21 = sphi 0, %s25
      %p22 = scmp.ge.s32.totalorder %s21, 6
      %s28 = sphi 0, %s40
      %s29 = sphi 0, %s36
      %s30 = sphi 0, %s28
      %s31 = sphi 0, %s29
      %s32 = sphi 0, %s30
      %s33 = sphi 0, %s31
      %s45 = sphi 0, %s47
      %s48 = sphi 0, %s45
      %s49 = sphi 0, %s48
      %s65 = sphi 0, %s49
      %s73 = sphi 0, %s75
      %s76 = sphi 0, %s73
      %s77 = sphi 0, %s76
      %s93 = sphi 0, %s77
      %s99 = sphi 0, %s101
      %s102 = sphi 0, %s99
      %s103 = sphi 0, %s102
      %s119 = sphi 0, %s103
      %s125 = sphi 0, %s127
      %s128 = sphi 0, %s125
      %s129 = sphi 0, %s128
      %s145 = sphi 0, %s129
      %s149 = sphi 0, %s149
      %s151 = sphi 0, %s149
      %s152 = sphi 0, %s151
      %s166 = sphi 0, %s152
      %s170 = sphi 0, %s170
      %s172 = sphi 0, %s170
      %s173 = sphi 0, %s172
      %s187 = sphi 0, %s173
      %s191 = sphi 0, %s191
      %s193 = sphi 0, %s191
      %s194 = sphi 0, %s193
      %s208 = sphi 0, %s194
      %s212 = sphi 0, %s212
      %s214 = sphi 0, %s212
      %s215 = sphi 0, %s214
      %s229 = sphi 0, %s215
      %s233 = sphi 0, %s233
      %s235 = sphi 0, %s233
      %s236 = sphi 0, %s235
      %s250 = sphi 0, %s236
      %s254 = sphi 0, %s254
      %s256 = sphi 0, %s254
      %s257 = sphi 0, %s256
      %s271 = sphi 0, %s257
      %s275 = sphi 0, %s275
      %s277 = sphi 0, %s275
      %s278 = sphi 0, %s277
      %s292 = sphi 0, %s278
      %s296 = sphi 0, %s296
      %s298 = sphi 0, %s296
      %s299 = sphi 0, %s298
      %s313 = sphi 0, %s299
      %s321 = sphi 0, %s323
      %s324 = sphi 0, %s321
      %s325 = sphi 0, %s324
      %s341 = sphi 0, %s325
    $region4: #{tpu_custom_call.1} parent=1 // loop_header_branch
      %24 = sbr.rel (%p22) target = $region8
    $region5: #{tpu_custom_call.1} parent=1 // loop_body
      %s26 = ssub.s32 %s21, 1
      %s27 = ssub.s32 %s21, 2
      %s34 = sadd.s32 1, %s29
      %p35 = scmp.ge.s32.totalorder %s34, 2
      %s36 = scalar_select %p35, 0, %s34
      %s37 = sadd.s32 1, %s28
      %s38 = scalar_select %p35, %s37, %s28
      %p39 = scmp.ge.s32.totalorder %s38, 2
      %s40 = scalar_select %p39, 0, %s38
      %s41 = ssub.s32 %s28, %s40
      %s42 = ssub.s32 %s29, %s36
      %s43 = sor.u32 %s41, %s42
      %p44 = scmp.eq.s32.totalorder %s43, 0
      %s46 = sadd.s32 %s45, 1
      %s47 = scalar_select %p44, %s45, %s46
      %p50 = pneg %p44
      %p51 = scmp.eq.s32.totalorder %s21, 3
      %p52 = por %p50, %p51
      %p53 = scmp.ne.s32.totalorder %s45, %s48
      %p54 = scmp.eq.s32.totalorder %s21, 0
      %p55 = por %p53, %p54
      %p56 = scmp.ne.s32.totalorder %s45, %s48
      %p57 = scmp.eq.s32.totalorder %s26, 3
      %p58 = por %p56, %p57
      %p59 = scmp.ne.s32.totalorder %s48, %s49
      %p60 = scmp.eq.s32.totalorder %s26, 0
      %p61 = por %p59, %p60
      %p62 = scmp.ne.s32.totalorder %s48, %s49
      %p63 = scmp.eq.s32.totalorder %s27, 3
      %p64 = por %p62, %p63
      %p66 = scmp.ne.s32.totalorder %s49, %s65
      %p67 = scmp.eq.s32.totalorder %s27, 0
      %p68 = por %p66, %p67
      %s69 = ssub.s32 %s28, %s40
      %s70 = ssub.s32 %s29, %s36
      %s71 = sor.u32 %s69, %s70
      %p72 = scmp.eq.s32.totalorder %s71, 0
      %s74 = sadd.s32 %s73, 1
      %s75 = scalar_select %p72, %s73, %s74
      %p78 = pneg %p72
      %p79 = scmp.eq.s32.totalorder %s21, 3
      %p80 = por %p78, %p79
      %p81 = scmp.ne.s32.totalorder %s73, %s76
      %p82 = scmp.eq.s32.totalorder %s21, 0
      %p83 = por %p81, %p82
      %p84 = scmp.ne.s32.totalorder %s73, %s76
      %p85 = scmp.eq.s32.totalorder %s26, 3
      %p86 = por %p84, %p85
      %p87 = scmp.ne.s32.totalorder %s76, %s77
      %p88 = scmp.eq.s32.totalorder %s26, 0
      %p89 = por %p87, %p88
      %p90 = scmp.ne.s32.totalorder %s76, %s77
      %p91 = scmp.eq.s32.totalorder %s27, 3
      %p92 = por %p90, %p91
      %p94 = scmp.ne.s32.totalorder %s77, %s93
      %p95 = scmp.eq.s32.totalorder %s27, 0
      %p96 = por %p94, %p95
      %s97 = ssub.s32 %s28, %s40
      %p98 = scmp.eq.s32.totalorder %s97, 0
      %s100 = sadd.s32 %s99, 1
      %s101 = scalar_select %p98, %s99, %s100
      %p104 = pneg %p98
      %p105 = scmp.eq.s32.totalorder %s21, 3
      %p106 = por %p104, %p105
      %p107 = scmp.ne.s32.totalorder %s99, %s102
      %p108 = scmp.eq.s32.totalorder %s21, 0
      %p109 = por %p107, %p108
      %p110 = scmp.ne.s32.totalorder %s99, %s102
      %p111 = scmp.eq.s32.totalorder %s26, 3
      %p112 = por %p110, %p111
      %p113 = scmp.ne.s32.totalorder %s102, %s103
      %p114 = scmp.eq.s32.totalorder %s26, 0
      %p115 = por %p113, %p114
      %p116 = scmp.ne.s32.totalorder %s102, %s103
      %p117 = scmp.eq.s32.totalorder %s27, 3
      %p118 = por %p116, %p117
      %p120 = scmp.ne.s32.totalorder %s103, %s119
      %p121 = scmp.eq.s32.totalorder %s27, 0
      %p122 = por %p120, %p121
      %s123 = ssub.s32 %s28, %s40
      %p124 = scmp.eq.s32.totalorder %s123, 0
      %s126 = sadd.s32 %s125, 1
      %s127 = scalar_select %p124, %s125, %s126
      %p130 = pneg %p124
      %p131 = scmp.eq.s32.totalorder %s21, 3
      %p132 = por %p130, %p131
      %p133 = scmp.ne.s32.totalorder %s125, %s128
      %p134 = scmp.eq.s32.totalorder %s21, 0
      %p135 = por %p133, %p134
      %p136 = scmp.ne.s32.totalorder %s125, %s128
      %p137 = scmp.eq.s32.totalorder %s26, 3
      %p138 = por %p136, %p137
      %p139 = scmp.ne.s32.totalorder %s128, %s129
      %p140 = scmp.eq.s32.totalorder %s26, 0
      %p141 = por %p139, %p140
      %p142 = scmp.ne.s32.totalorder %s128, %s129
      %p143 = scmp.eq.s32.totalorder %s27, 3
      %p144 = por %p142, %p143
      %p146 = scmp.ne.s32.totalorder %s129, %s145
      %p147 = scmp.eq.s32.totalorder %s27, 0
      %p148 = por %p146, %p147
      %s150 = sadd.s32 %s149, 1
      %p153 = scmp.eq.s32.totalorder %s21, 3
      %p154 = scmp.ne.s32.totalorder %s149, %s151
      %p155 = scmp.eq.s32.totalorder %s21, 0
      %p156 = por %p154, %p155
      %p157 = scmp.ne.s32.totalorder %s149, %s151
      %p158 = scmp.eq.s32.totalorder %s26, 3
      %p159 = por %p157, %p158
      %p160 = scmp.ne.s32.totalorder %s151, %s152
      %p161 = scmp.eq.s32.totalorder %s26, 0
      %p162 = por %p160, %p161
      %p163 = scmp.ne.s32.totalorder %s151, %s152
      %p164 = scmp.eq.s32.totalorder %s27, 3
      %p165 = por %p163, %p164
      %p167 = scmp.ne.s32.totalorder %s152, %s166
      %p168 = scmp.eq.s32.totalorder %s27, 0
      %p169 = por %p167, %p168
      %s171 = sadd.s32 %s170, 1
      %p174 = scmp.eq.s32.totalorder %s21, 3
      %p175 = scmp.ne.s32.totalorder %s170, %s172
      %p176 = scmp.eq.s32.totalorder %s21, 0
      %p177 = por %p175, %p176
      %p178 = scmp.ne.s32.totalorder %s170, %s172
      %p179 = scmp.eq.s32.totalorder %s26, 3
      %p180 = por %p178, %p179
      %p181 = scmp.ne.s32.totalorder %s172, %s173
      %p182 = scmp.eq.s32.totalorder %s26, 0
      %p183 = por %p181, %p182
      %p184 = scmp.ne.s32.totalorder %s172, %s173
      %p185 = scmp.eq.s32.totalorder %s27, 3
      %p186 = por %p184, %p185
      %p188 = scmp.ne.s32.totalorder %s173, %s187
      %p189 = scmp.eq.s32.totalorder %s27, 0
      %p190 = por %p188, %p189
      %s192 = sadd.s32 %s191, 1
      %p195 = scmp.eq.s32.totalorder %s21, 3
      %p196 = scmp.ne.s32.totalorder %s191, %s193
      %p197 = scmp.eq.s32.totalorder %s21, 0
      %p198 = por %p196, %p197
      %p199 = scmp.ne.s32.totalorder %s191, %s193
      %p200 = scmp.eq.s32.totalorder %s26, 3
      %p201 = por %p199, %p200
      %p202 = scmp.ne.s32.totalorder %s193, %s194
      %p203 = scmp.eq.s32.totalorder %s26, 0
      %p204 = por %p202, %p203
      %p205 = scmp.ne.s32.totalorder %s193, %s194
      %p206 = scmp.eq.s32.totalorder %s27, 3
      %p207 = por %p205, %p206
      %p209 = scmp.ne.s32.totalorder %s194, %s208
      %p210 = scmp.eq.s32.totalorder %s27, 0
      %p211 = por %p209, %p210
      %s213 = sadd.s32 %s212, 1
      %p216 = scmp.eq.s32.totalorder %s21, 3
      %p217 = scmp.ne.s32.totalorder %s212, %s214
      %p218 = scmp.eq.s32.totalorder %s21, 0
      %p219 = por %p217, %p218
      %p220 = scmp.ne.s32.totalorder %s212, %s214
      %p221 = scmp.eq.s32.totalorder %s26, 3
      %p222 = por %p220, %p221
      %p223 = scmp.ne.s32.totalorder %s214, %s215
      %p224 = scmp.eq.s32.totalorder %s26, 0
      %p225 = por %p223, %p224
      %p226 = scmp.ne.s32.totalorder %s214, %s215
      %p227 = scmp.eq.s32.totalorder %s27, 3
      %p228 = por %p226, %p227
      %p230 = scmp.ne.s32.totalorder %s215, %s229
      %p231 = scmp.eq.s32.totalorder %s27, 0
      %p232 = por %p230, %p231
      %s234 = sadd.s32 %s233, 1
      %p237 = scmp.eq.s32.totalorder %s21, 3
      %p238 = scmp.ne.s32.totalorder %s233, %s235
      %p239 = scmp.eq.s32.totalorder %s21, 0
      %p240 = por %p238, %p239
      %p241 = scmp.ne.s32.totalorder %s233, %s235
      %p242 = scmp.eq.s32.totalorder %s26, 3
      %p243 = por %p241, %p242
      %p244 = scmp.ne.s32.totalorder %s235, %s236
      %p245 = scmp.eq.s32.totalorder %s26, 0
      %p246 = por %p244, %p245
      %p247 = scmp.ne.s32.totalorder %s235, %s236
      %p248 = scmp.eq.s32.totalorder %s27, 3
      %p249 = por %p247, %p248
      %p251 = scmp.ne.s32.totalorder %s236, %s250
      %p252 = scmp.eq.s32.totalorder %s27, 0
      %p253 = por %p251, %p252
      %s255 = sadd.s32 %s254, 1
      %p258 = scmp.eq.s32.totalorder %s21, 3
      %p259 = scmp.ne.s32.totalorder %s254, %s256
      %p260 = scmp.eq.s32.totalorder %s21, 0
      %p261 = por %p259, %p260
      %p262 = scmp.ne.s32.totalorder %s254, %s256
      %p263 = scmp.eq.s32.totalorder %s26, 3
      %p264 = por %p262, %p263
      %p265 = scmp.ne.s32.totalorder %s256, %s257
      %p266 = scmp.eq.s32.totalorder %s26, 0
      %p267 = por %p265, %p266
      %p268 = scmp.ne.s32.totalorder %s256, %s257
      %p269 = scmp.eq.s32.totalorder %s27, 3
      %p270 = por %p268, %p269
      %p272 = scmp.ne.s32.totalorder %s257, %s271
      %p273 = scmp.eq.s32.totalorder %s27, 0
      %p274 = por %p272, %p273
      %s276 = sadd.s32 %s275, 1
      %p279 = scmp.eq.s32.totalorder %s21, 3
      %p280 = scmp.ne.s32.totalorder %s275, %s277
      %p281 = scmp.eq.s32.totalorder %s21, 0
      %p282 = por %p280, %p281
      %p283 = scmp.ne.s32.totalorder %s275, %s277
      %p284 = scmp.eq.s32.totalorder %s26, 3
      %p285 = por %p283, %p284
      %p286 = scmp.ne.s32.totalorder %s277, %s278
      %p287 = scmp.eq.s32.totalorder %s26, 0
      %p288 = por %p286, %p287
      %p289 = scmp.ne.s32.totalorder %s277, %s278
      %p290 = scmp.eq.s32.totalorder %s27, 3
      %p291 = por %p289, %p290
      %p293 = scmp.ne.s32.totalorder %s278, %s292
      %p294 = scmp.eq.s32.totalorder %s27, 0
      %p295 = por %p293, %p294
      %s297 = sadd.s32 %s296, 1
      %p300 = scmp.eq.s32.totalorder %s21, 3
      %p301 = scmp.ne.s32.totalorder %s296, %s298
      %p302 = scmp.eq.s32.totalorder %s21, 0
      %p303 = por %p301, %p302
      %p304 = scmp.ne.s32.totalorder %s296, %s298
      %p305 = scmp.eq.s32.totalorder %s26, 3
      %p306 = por %p304, %p305
      %p307 = scmp.ne.s32.totalorder %s298, %s299
      %p308 = scmp.eq.s32.totalorder %s26, 0
      %p309 = por %p307, %p308
      %p310 = scmp.ne.s32.totalorder %s298, %s299
      %p311 = scmp.eq.s32.totalorder %s27, 3
      %p312 = por %p310, %p311
      %p314 = scmp.ne.s32.totalorder %s299, %s313
      %p315 = scmp.eq.s32.totalorder %s27, 0
      %p316 = por %p314, %p315
      %s317 = ssub.s32 %s28, %s40
      %s318 = ssub.s32 %s29, %s36
      %s319 = sor.u32 %s317, %s318
      %p320 = scmp.eq.s32.totalorder %s319, 0
      %s322 = sadd.s32 %s321, 1
      %s323 = scalar_select %p320, %s321, %s322
      %p326 = pneg %p320
      %p327 = scmp.eq.s32.totalorder %s21, 3
      %p328 = por %p326, %p327
      %p329 = scmp.ne.s32.totalorder %s321, %s324
      %p330 = scmp.eq.s32.totalorder %s21, 0
      %p331 = por %p329, %p330
      %p332 = scmp.ne.s32.totalorder %s321, %s324
      %p333 = scmp.eq.s32.totalorder %s26, 3
      %p334 = por %p332, %p333
      %p335 = scmp.ne.s32.totalorder %s324, %s325
      %p336 = scmp.eq.s32.totalorder %s26, 0
      %p337 = por %p335, %p336
      %p338 = scmp.ne.s32.totalorder %s324, %s325
      %p339 = scmp.eq.s32.totalorder %s27, 3
      %p340 = por %p338, %p339
      %p342 = scmp.ne.s32.totalorder %s325, %s341
      %p343 = scmp.eq.s32.totalorder %s27, 0
      %p344 = por %p342, %p343
      %p345 = scmp.le.s32.totalorder 1, %s21
      %p346 = scmp.lt.s32.totalorder %s21, 5
      %p347 = pnand %p345, %p346
      %p348 = pneg %p347
      // Predicated region
      $region9: #{tpu_custom_call.1} parent=5 // pred_check
        _
      $region10: #{tpu_custom_call.1} parent=5 // pred_check_branch
        %350 = sbr.rel (%p347) target = $region12
      $region11: #{tpu_custom_call.1} parent=5 // pred_region
        %s351 = ssub.s32 %s21, 1
        // Predicated region
        $region13: #{tpu_custom_call.1} parent=11 // pred_check
          %p352 = pneg %p162
        $region14: #{tpu_custom_call.1} parent=11 // pred_check_branch
          %354 = sbr.rel (%p352) target = $region16
        $region15: #{tpu_custom_call.1} parent=11 // pred_region
          _
        $region16: #{tpu_custom_call.1} parent=11 // pred_fallthru
          _
        // Predicated region
        $region17: #{tpu_custom_call.1} parent=11 // pred_check
          %p355 = pneg %p183
        $region18: #{tpu_custom_call.1} parent=11 // pred_check_branch
          %357 = sbr.rel (%p355) target = $region20
        $region19: #{tpu_custom_call.1} parent=11 // pred_region
          _
        $region20: #{tpu_custom_call.1} parent=11 // pred_fallthru
          _
        // Predicated region
        $region21: #{tpu_custom_call.1} parent=11 // pred_check
          %p358 = pneg %p204
        $region22: #{tpu_custom_call.1} parent=11 // pred_check_branch
          %360 = sbr.rel (%p358) target = $region24
        $region23: #{tpu_custom_call.1} parent=11 // pred_region
          _
        $region24: #{tpu_custom_call.1} parent=11 // pred_fallthru
          _
        // Predicated region
        $region25: #{tpu_custom_call.1} parent=11 // pred_check
          %p361 = pneg %p225
        $region26: #{tpu_custom_call.1} parent=11 // pred_check_branch
          %363 = sbr.rel (%p361) target = $region28
        $region27: #{tpu_custom_call.1} parent=11 // pred_region
          _
        $region28: #{tpu_custom_call.1} parent=11 // pred_fallthru
          _
        // Predicated region
        $region29: #{tpu_custom_call.1} parent=11 // pred_check
          %p364 = pneg %p246
        $region30: #{tpu_custom_call.1} parent=11 // pred_check_branch
          %366 = sbr.rel (%p364) target = $region32
        $region31: #{tpu_custom_call.1} parent=11 // pred_region
          _
        $region32: #{tpu_custom_call.1} parent=11 // pred_fallthru
          _
        // Predicated region
        $region33: #{tpu_custom_call.1} parent=11 // pred_check
          %p367 = pneg %p267
        $region34: #{tpu_custom_call.1} parent=11 // pred_check_branch
          %369 = sbr.rel (%p367) target = $region36
        $region35: #{tpu_custom_call.1} parent=11 // pred_region
          _
        $region36: #{tpu_custom_call.1} parent=11 // pred_fallthru
          _
        // Predicated region
        $region37: #{tpu_custom_call.1} parent=11 // pred_check
          %p370 = pneg %p288
        $region38: #{tpu_custom_call.1} parent=11 // pred_check_branch
          %372 = sbr.rel (%p370) target = $region40
        $region39: #{tpu_custom_call.1} parent=11 // pred_region
          _
        $region40: #{tpu_custom_call.1} parent=11 // pred_fallthru
          _
        // Predicated region
        $region41: #{tpu_custom_call.1} parent=11 // pred_check
          %p373 = pneg %p309
        $region42: #{tpu_custom_call.1} parent=11 // pred_check_branch
          %375 = sbr.rel (%p373) target = $region44
        $region43: #{tpu_custom_call.1} parent=11 // pred_region
          _
        $region44: #{tpu_custom_call.1} parent=11 // pred_fallthru
          _
      $region12: #{tpu_custom_call.1} parent=5 // pred_fallthru
        _
      %p376 = scmp.lt.s32.totalorder %s21, 4
      // Predicated region
      $region45: #{tpu_custom_call.1} parent=5 // pred_check
        %p377 = pneg %p376
      $region46: #{tpu_custom_call.1} parent=5 // pred_check_branch
        %379 = sbr.rel (%p377) target = $region48
      $region47: #{tpu_custom_call.1} parent=5 // pred_region
        // Predicated region
        $region49: #{tpu_custom_call.1} parent=47 // pred_check
          %p380 = pneg %p55
        $region50: #{tpu_custom_call.1} parent=47 // pred_check_branch
          %382 = sbr.rel (%p380) target = $region52
        $region51: #{tpu_custom_call.1} parent=47 // pred_region
          %s383 = smul.u32 2, %s29
          %p384 = scmp.lt.s32.totalorder %s28, 1
          %s385 = scalar_select %p384, %s28, 1
          %p386 = scmp.lt.s32.totalorder %s383, 3
          %s387 = scalar_select %p386, %s383, 3
          %s388 = smul.addr %s385, 4
          %s389 = sadd.s32 %s387, %s388
          %s390 = smul.addr %s389, 4
          %s391 = scalar_lea.vmem %s0, %s390
          %s392 = smul.u32 2, %s29
        $region52: #{tpu_custom_call.1} parent=47 // pred_fallthru
          _
        // Predicated region
        $region53: #{tpu_custom_call.1} parent=47 // pred_check
          %p393 = pneg %p83
        $region54: #{tpu_custom_call.1} parent=47 // pred_check_branch
          %395 = sbr.rel (%p393) target = $region56
        $region55: #{tpu_custom_call.1} parent=47 // pred_region
          %s396 = smul.u32 2, %s29
          %p397 = scmp.lt.s32.totalorder %s28, 1
          %s398 = scalar_select %p397, %s28, 1
          %p399 = scmp.lt.s32.totalorder %s396, 3
          %s400 = scalar_select %p399, %s396, 3
          %s401 = smul.addr %s398, 4
          %s402 = sadd.s32 %s400, %s401
          %s403 = smul.addr %s402, 8
          %s404 = scalar_lea.vmem %s1, %s403
          %s405 = smul.u32 2, %s29
        $region56: #{tpu_custom_call.1} parent=47 // pred_fallthru
          _
        // Predicated region
        $region57: #{tpu_custom_call.1} parent=47 // pred_check
          %p406 = pneg %p109
        $region58: #{tpu_custom_call.1} parent=47 // pred_check_branch
          %408 = sbr.rel (%p406) target = $region60
        $region59: #{tpu_custom_call.1} parent=47 // pred_region
          %p409 = scmp.lt.s32.totalorder %s28, 1
          %s410 = scalar_select %p409, %s28, 1
          %s411 = smul.addr %s410, 10
          %s412 = smul.addr %s411, 4
          %s413 = scalar_lea.vmem %s2, %s412
        $region60: #{tpu_custom_call.1} parent=47 // pred_fallthru
          _
        // Predicated region
        $region61: #{tpu_custom_call.1} parent=47 // pred_check
          %p414 = pneg %p135
        $region62: #{tpu_custom_call.1} parent=47 // pred_check_branch
          %416 = sbr.rel (%p414) target = $region64
        $region63: #{tpu_custom_call.1} parent=47 // pred_region
          %p417 = scmp.lt.s32.totalorder %s28, 1
          %s418 = scalar_select %p417, %s28, 1
          %s419 = smul.addr %s418, 10
          %s420 = smul.addr %s419, 8
          %s421 = scalar_lea.vmem %s3, %s420
        $region64: #{tpu_custom_call.1} parent=47 // pred_fallthru
          _
      $region48: #{tpu_custom_call.1} parent=5 // pred_fallthru
        _
      %p422 = scmp.le.s32.totalorder 1, %s21
      %p423 = scmp.lt.s32.totalorder %s21, 5
      %p424 = pnand %p422, %p423
      %p425 = pneg %p424
      // Predicated region
      $region65: #{tpu_custom_call.1} parent=5 // pred_check
        _
      $region66: #{tpu_custom_call.1} parent=5 // pred_check_branch
        %427 = sbr.rel (%p424) target = $region68
      $region67: #{tpu_custom_call.1} parent=5 // pred_region
        %s428 = ssub.s32 %s21, 1
        %s429 = smul.u32 2, %s31
        %p430 = scmp.lt.s32.totalorder %s30, 1
        %s431 = scalar_select %p430, %s30, 1
        %p432 = scmp.lt.s32.totalorder %s429, 3
        %s433 = scalar_select %p432, %s429, 3
        %s434 = smul.addr %s431, 4
        %s435 = sadd.s32 %s433, %s434
        %s436 = smul.addr %s435, 4
        %s437 = scalar_lea.vmem %s0, %s436
        %p438 = pneg %p61
        %p439 = pneg %p58
        %s440 = smul.u32 2, %s31
        %p441 = scmp.lt.s32.totalorder %s30, 1
        %s442 = scalar_select %p441, %s30, 1
        %p443 = scmp.lt.s32.totalorder %s440, 3
        %s444 = scalar_select %p443, %s440, 3
        %s445 = smul.addr %s442, 4
        %s446 = sadd.s32 %s444, %s445
        %s447 = smul.addr %s446, 8
        %s448 = scalar_lea.vmem %s1, %s447
        %p449 = pneg %p89
        %p450 = pneg %p86
        %p451 = scmp.lt.s32.totalorder %s30, 1
        %s452 = scalar_select %p451, %s30, 1
        %s453 = smul.addr %s452, 10
        %s454 = smul.addr %s453, 4
        %s455 = scalar_lea.vmem %s2, %s454
        %p456 = pneg %p115
        %p457 = pneg %p112
        %p458 = scmp.lt.s32.totalorder %s30, 1
        %s459 = scalar_select %p458, %s30, 1
        %s460 = smul.addr %s459, 10
        %s461 = smul.addr %s460, 8
        %s462 = scalar_lea.vmem %s3, %s461
        %p463 = pneg %p141
        %p464 = pneg %p138
        %p465 = pneg %p162
        %p466 = pneg %p159
        %p467 = pneg %p183
        %p468 = pneg %p180
        %p469 = pneg %p204
        %p470 = pneg %p201
        %p471 = pneg %p225
        %p472 = pneg %p222
        %p473 = pneg %p246
        %p474 = pneg %p243
        %p475 = pneg %p267
        %p476 = pneg %p264
        %p477 = pneg %p288
        %p478 = pneg %p285
        %p479 = pneg %p309
        %p480 = pneg %p306
        %p481 = pneg %p337
        %p482 = pneg %p334
        %s483 = sand.u32 %s324, 1
        %s484 = scalar_lea.sflag [#allocation4], %s483
        %s485 = sand.u32 %s324, 1
        %s486 = smul.addr %s485, 16
        %s487 = scalar_lea.vmem [#allocation3], %s486
        %s488 = smul.u32 2, %s31
        %p489 = scmp.lt.s32.totalorder %s30, 1
        %s490 = scalar_select %p489, %s30, 1
        %p491 = scmp.lt.s32.totalorder %s488, 3
        %s492 = scalar_select %p491, %s488, 3
        %s493 = smul.addr %s490, 4
        %s494 = sadd.s32 %s492, %s493
        %s495 = smul.addr %s494, 4
        %s496 = scalar_lea.vmem %s0, %s495
        %s497 = smul.u32 2, %s31
        %s498 = smul.u32 2, %s31
        %p499 = scmp.lt.s32.totalorder %s30, 1
        %s500 = scalar_select %p499, %s30, 1
        %p501 = scmp.lt.s32.totalorder %s498, 3
        %s502 = scalar_select %p501, %s498, 3
        %s503 = smul.addr %s500, 4
        %s504 = sadd.s32 %s502, %s503
        %s505 = smul.addr %s504, 8
        %s506 = scalar_lea.vmem %s1, %s505
        %s507 = smul.u32 2, %s31
        %p508 = scmp.lt.s32.totalorder %s30, 1
        %s509 = scalar_select %p508, %s30, 1
        %s510 = smul.addr %s509, 10
        %s511 = smul.addr %s510, 4
        %s512 = scalar_lea.vmem %s2, %s511
        %p513 = scmp.lt.s32.totalorder %s30, 1
        %s514 = scalar_select %p513, %s30, 1
        %s515 = smul.addr %s514, 10
        %s516 = smul.addr %s515, 8
        %s517 = scalar_lea.vmem %s3, %s516
        %s518 = smul.u32 2, %s31
        %p520 = scmp.eq.s32.totalorder %s31, 0
        // Predicated region
        $region69: #{tpu_custom_call.1} parent=67 // pred_check
          %p521 = pneg %p520
        $region70: #{tpu_custom_call.1} parent=67 // pred_check_branch
          %523 = sbr.rel (%p521) target = $region72
        $region71: #{tpu_custom_call.1} parent=67 // pred_region
          %v524 = vld [vmem:[%s512] sm:$0xf]
          %v525 = vld [vmem:[%s512 + $0x4] sm:$0xf]
          %v526 = vld [vmem:[%s512 + $0x8] sm:$0xf]
          %v527 = vld [vmem:[%s512 + $0xc] sm:$0xf]
          %v528 = vld [vmem:[%s512 + $0x10] sm:$0xf]
          %v529 = vld [vmem:[%s512 + $0x14] sm:$0xf]
          %v530 = vld [vmem:[%s512 + $0x18] sm:$0xf]
          %v531 = vld [vmem:[%s512 + $0x1c] sm:$0xf]
          %v532 = vld [vmem:[%s512 + $0x20] sm:$0xf]
          %v533 = vld [vmem:[%s512 + $0x24] sm:$0xf]
          %v534 = vld [vmem:[%s4] sm:$0xf]
          %v535 = vld [vmem:[%s4 + $0x4] sm:$0xf]
          %v536 = vld [vmem:[%s4 + $0x8] sm:$0xf]
          %v537 = vld [vmem:[%s4 + $0xc] sm:$0xf]
          %v538 = vld [vmem:[%s5] sm:$0x1]
          %v540 = vperm.slane %v538, 0
          %v552 = vunpack.c.l.b16 %v524
          %v553 = vunpack.c.l.b16 %v525
          %v554 = vunpack.c.l.b16 %v526
          %v555 = vunpack.c.l.b16 %v527
          %v556 = vunpack.c.l.b16 %v528
          %v557 = vunpack.c.l.b16 %v529
          %v558 = vunpack.c.l.b16 %v530
          %v559 = vunpack.c.l.b16 %v531
          %v560 = vunpack.c.l.b16 %v532
          %v561 = vunpack.c.l.b16 %v533
          %v562 = vpack.c.b16 %v553, %v552
          %v563 = vpack.c.b16 %v555, %v554
          %v564 = vpack.c.b16 %v557, %v556
          %v565 = vpack.c.b16 %v559, %v558
          %v566 = vpack.c.b16 %v561, %v560
          %v571 = vunpack.c.l.b16 %v534
          %v572 = vunpack.c.l.b16 %v535
          %v573 = vunpack.c.l.b16 %v536
          %v574 = vunpack.c.l.b16 %v537
          %v575 = vpack.c.b16 %v572, %v571
          %v576 = vpack.c.b16 %v574, %v573
          %vm579 = vcmask 261120
          %v581 = vsel %vm579, %v562, 0
          %v584 = vsel %vm579, %v563, 0
          %v587 = vsel %vm579, %v564, 0
          %v590 = vsel %vm579, %v565, 0
          %v593 = vsel %vm579, %v566, 0
          %595 = vmatpush.bf16.msra.mxu0 0
          %596 = vmatpush.bf16.msra.mxu0 0
          %597 = vmatpush.bf16.msra.mxu0 0
          %598 = vmatpush.bf16.msra.mxu0 0
          %599 = vmatpush.bf16.msra.mxu0 0
          %600 = vmatpush.bf16.msra.mxu0 0
          %601 = vmatpush.bf16.msra.mxu0 %v576
          %602 = vmatpush.bf16.msra.mxu0 %v575
          %603 = vmatmul.bf16.gmra.mxu0 %v581
          %v604 = vpop.f32.mrf.mxu0
          %v605 = vadd.f32 %v540, %v604
          %v606 = vpop.f32.mrf.mxu0
          %v607 = vadd.f32 %v540, %v606
          %608 = vmatmul.bf16.gmra.mxu0 %v584
          %v609 = vpop.f32.mrf.mxu0
          %v610 = vadd.f32 %v540, %v609
          %v611 = vpop.f32.mrf.mxu0
          %v612 = vadd.f32 %v540, %v611
          %613 = vmatmul.bf16.gmra.mxu0 %v587
          %v614 = vpop.f32.mrf.mxu0
          %v615 = vadd.f32 %v540, %v614
          %v616 = vpop.f32.mrf.mxu0
          %v617 = vadd.f32 %v540, %v616
          %618 = vmatmul.bf16.gmra.mxu0 %v590
          %v619 = vpop.f32.mrf.mxu0
          %v620 = vadd.f32 %v540, %v619
          %v621 = vpop.f32.mrf.mxu0
          %v622 = vadd.f32 %v540, %v621
          %623 = vmatmul.bf16.gmra.mxu0 %v593
          %v624 = vpop.f32.mrf.mxu0
          %v625 = vadd.f32 %v540, %v624
          %v626 = vpop.f32.mrf.mxu0
          %v627 = vadd.f32 %v540, %v626
          %628 = vdwg.mxu0
          %v629 = vld [vmem:[%s517] sm:$0xff]
          %v630 = vld [vmem:[%s517 + $0x8] sm:$0xff]
          %v631 = vld [vmem:[%s517 + $0x10] sm:$0xff]
          %v632 = vld [vmem:[%s517 + $0x18] sm:$0xff]
          %v633 = vld [vmem:[%s517 + $0x20] sm:$0xff]
          %v634 = vld [vmem:[%s517 + $0x28] sm:$0xff]
          %v635 = vld [vmem:[%s517 + $0x30] sm:$0xff]
          %v636 = vld [vmem:[%s517 + $0x38] sm:$0xff]
          %v637 = vld [vmem:[%s517 + $0x40] sm:$0xff]
          %v638 = vld [vmem:[%s517 + $0x48] sm:$0xff]
          %v639 = vsub.f32 1.0, %v629
          %v640 = vsub.f32 1.0, %v630
          %v641 = vsub.f32 1.0, %v631
          %v642 = vsub.f32 1.0, %v632
          %v643 = vsub.f32 1.0, %v633
          %v644 = vsub.f32 1.0, %v634
          %v645 = vsub.f32 1.0, %v635
          %v646 = vsub.f32 1.0, %v636
          %v647 = vsub.f32 1.0, %v637
          %v648 = vsub.f32 1.0, %v638
          %650 = vset.pattern.permute.xlu0 0
          %651 = vperm.xlu0 %650, %v639
          %v652 = vpop.permute.xlu0 %651
          %655 = vset.pattern.permute.xlu0 0
          %656 = vperm.xlu0 %655, %v640
          %v657 = vpop.permute.xlu0 %656
          %660 = vset.pattern.permute.xlu0 0
          %661 = vperm.xlu0 %660, %v641
          %v662 = vpop.permute.xlu0 %661
          %665 = vset.pattern.permute.xlu0 0
          %666 = vperm.xlu0 %665, %v642
          %v667 = vpop.permute.xlu0 %666
          %670 = vset.pattern.permute.xlu0 0
          %671 = vperm.xlu0 %670, %v643
          %v672 = vpop.permute.xlu0 %671
          %675 = vset.pattern.permute.xlu0 0
          %676 = vperm.xlu0 %675, %v644
          %v677 = vpop.permute.xlu0 %676
          %680 = vset.pattern.permute.xlu0 0
          %681 = vperm.xlu0 %680, %v645
          %v682 = vpop.permute.xlu0 %681
          %685 = vset.pattern.permute.xlu0 0
          %686 = vperm.xlu0 %685, %v646
          %v687 = vpop.permute.xlu0 %686
          %690 = vset.pattern.permute.xlu0 0
          %691 = vperm.xlu0 %690, %v647
          %v692 = vpop.permute.xlu0 %691
          %695 = vset.pattern.permute.xlu0 0
          %696 = vperm.xlu0 %695, %v648
          %v697 = vpop.permute.xlu0 %696
          %v699 = vmul.f32 %v605, %v652
          %v700 = vmul.f32 %v607, %v657
          %v701 = vmul.f32 %v610, %v662
          %v702 = vmul.f32 %v612, %v667
          %v703 = vmul.f32 %v615, %v672
          %v704 = vmul.f32 %v617, %v677
          %v705 = vmul.f32 %v620, %v682
          %v706 = vmul.f32 %v622, %v687
          %v707 = vmul.f32 %v625, %v692
          %v708 = vmul.f32 %v627, %v697
          %v709 = vpack.c.bf16 %v699, %v699
          %v710 = vpack.c.bf16 %v700, %v700
          %v711 = vpack.c.bf16 %v701, %v701
          %v712 = vpack.c.bf16 %v702, %v702
          %v713 = vpack.c.bf16 %v703, %v703
          %v714 = vpack.c.bf16 %v704, %v704
          %v715 = vpack.c.bf16 %v705, %v705
          %v716 = vpack.c.bf16 %v706, %v706
          %v717 = vpack.c.bf16 %v707, %v707
          %v718 = vpack.c.bf16 %v708, %v708
          %vm719 = vcmask 257024
          %720 = vst.msk [vmem:[#allocation2] sm:$0xf] %vm719, %v709
          %721 = vst.msk [vmem:[#allocation2 + $0x4] sm:$0xf] %vm719, %v710
          %722 = vst.msk [vmem:[#allocation2 + $0x8] sm:$0xf] %vm719, %v711
          %723 = vst.msk [vmem:[#allocation2 + $0xc] sm:$0xf] %vm719, %v712
          %724 = vst.msk [vmem:[#allocation2 + $0x10] sm:$0xf] %vm719, %v713
          %725 = vst.msk [vmem:[#allocation2 + $0x14] sm:$0xf] %vm719, %v714
          %726 = vst.msk [vmem:[#allocation2 + $0x18] sm:$0xf] %vm719, %v715
          %727 = vst.msk [vmem:[#allocation2 + $0x1c] sm:$0xf] %vm719, %v716
          %728 = vst.msk [vmem:[#allocation2 + $0x20] sm:$0xf] %vm719, %v717
          %729 = vst.msk [vmem:[#allocation2 + $0x24] sm:$0xf] %vm719, %v718
        $region72: #{tpu_custom_call.1} parent=67 // pred_fallthru
          _
        %v730 = vld [vmem:[%s496] sm:$0xf]
        %v731 = vld [vmem:[%s496 + $0x4] sm:$0xf]
        %v732 = vld [vmem:[%s506] sm:$0xff]
        %v733 = vld [vmem:[%s506 + $0x8] sm:$0xff]
        %v734 = vld [vmem:[%s6] sm:$0xf]
        %v735 = vld [vmem:[%s6 + $0x4] sm:$0xf]
        %v736 = vld [vmem:[%s6 + $0x8] sm:$0xf]
        %v737 = vld [vmem:[%s6 + $0xc] sm:$0xf]
        %v738 = vld [vmem:[%s7] sm:$0x1]
        %v740 = vperm.slane %v738, 0
        %v744 = vunpack.c.l.b16 %v730
        %v745 = vunpack.c.l.b16 %v731
        %v746 = vpack.c.b16 %v745, %v744
        %v751 = vunpack.c.l.b16 %v734
        %v752 = vunpack.c.l.b16 %v735
        %v753 = vunpack.c.l.b16 %v736
        %v754 = vunpack.c.l.b16 %v737
        %v755 = vpack.c.b16 %v752, %v751
        %v756 = vpack.c.b16 %v754, %v753
        %vm759 = vcmask 261120
        %v761 = vsel %vm759, %v746, 0
        %763 = vmatpush.bf16.msra.mxu0 0
        %764 = vmatpush.bf16.msra.mxu0 0
        %765 = vmatpush.bf16.msra.mxu0 0
        %766 = vmatpush.bf16.msra.mxu0 0
        %767 = vmatpush.bf16.msra.mxu0 0
        %768 = vmatpush.bf16.msra.mxu0 0
        %769 = vmatpush.bf16.msra.mxu0 %v756
        %770 = vmatpush.bf16.msra.mxu0 %v755
        %771 = vmatmul.bf16.gmra.mxu0 %v761
        %v772 = vpop.f32.mrf.mxu0
        %v773 = vadd.f32 %v740, %v772
        %v774 = vpop.f32.mrf.mxu0
        %v775 = vadd.f32 %v740, %v774
        %776 = vdwg.mxu0
        %v777 = vld [vmem:[%s8] sm:$0xf]
        %v778 = vld [vmem:[%s8 + $0x4] sm:$0xf]
        %v779 = vld [vmem:[%s8 + $0x8] sm:$0xf]
        %v780 = vld [vmem:[%s8 + $0xc] sm:$0xf]
        %v781 = vld [vmem:[%s9] sm:$0x1]
        %v783 = vperm.slane %v781, 0
        %v789 = vunpack.c.l.b16 %v777
        %v790 = vunpack.c.l.b16 %v778
        %v791 = vunpack.c.l.b16 %v779
        %v792 = vunpack.c.l.b16 %v780
        %v793 = vpack.c.b16 %v790, %v789
        %v794 = vpack.c.b16 %v792, %v791
        %797 = vmatpush.bf16.msra.mxu0 0
        %798 = vmatpush.bf16.msra.mxu0 0
        %799 = vmatpush.bf16.msra.mxu0 0
        %800 = vmatpush.bf16.msra.mxu0 0
        %801 = vmatpush.bf16.msra.mxu0 0
        %802 = vmatpush.bf16.msra.mxu0 0
        %803 = vmatpush.bf16.msra.mxu0 %v794
        %804 = vmatpush.bf16.msra.mxu0 %v793
        %805 = vmatmul.bf16.gmra.mxu0 %v761
        %v806 = vpop.f32.mrf.mxu0
        %v807 = vadd.f32 %v783, %v806
        %v808 = vpop.f32.mrf.mxu0
        %v809 = vadd.f32 %v783, %v808
        %810 = vdwg.mxu0
        %vm811 = vcmask 64512
        %v812 = vsel %vm811, %v807, -inf
        %813 = vmax.xlane.f32.xlu0 %v812
        %v814 = vpop.xlane.xlu0 %813
        %v815 = vsel %vm811, %v809, -inf
        %816 = vmax.xlane.f32.xlu0 %v815
        %v817 = vpop.xlane.xlu0 %816
        %v818 = vsub.f32 %v807, %v814
        %v819 = vsub.f32 %v809, %v817
        %v820 = vmul.f32 %v818, 1.442695
        %v821 = vpow.pop %v820
        %v822 = vmul.f32 %v819, 1.442695
        %v823 = vpow.pop %v822
        %v824 = vsel %vm811, %v821, 0.0
        %825 = vadd.xlane.f32.xlu0 %v824
        %v826 = vpop.xlane.xlu0 %825
        %v827 = vsel %vm811, %v823, 0.0
        %828 = vadd.xlane.f32.xlu0 %v827
        %v829 = vpop.xlane.xlu0 %828
        %v830 = vrcp.pop %v826
        %v831 = vrcp.pop %v829
        %v832 = vmul.f32 %v821, %v830
        %v833 = vmul.f32 %v823, %v831
        %vm834 = vcmask 130112
        %v835 = vsel %vm834, %v807, -inf
        %836 = vmax.xlane.f32.xlu0 %v835
        %v837 = vpop.xlane.xlu0 %836
        %v838 = vsel %vm834, %v809, -inf
        %839 = vmax.xlane.f32.xlu0 %v838
        %v840 = vpop.xlane.xlu0 %839
        %v841 = vsub.f32 %v807, %v837
        %v842 = vsub.f32 %v809, %v840
        %v843 = vmul.f32 %v841, 1.442695
        %v844 = vpow.pop %v843
        %v845 = vmul.f32 %v842, 1.442695
        %v846 = vpow.pop %v845
        %849 = vrot.lane.b32.xlu0 %v844, 120
        %v850 = vpop.permute.xlu0 %849
        %851 = vrot.lane.b32.xlu0 %v846, 120
        %v852 = vpop.permute.xlu0 %851
        %v855 = vsel %vm811, %v850, 0.0
        %856 = vadd.xlane.f32.xlu0 %v855
        %v857 = vpop.xlane.xlu0 %856
        %v858 = vsel %vm811, %v852, 0.0
        %859 = vadd.xlane.f32.xlu0 %v858
        %v860 = vpop.xlane.xlu0 %859
        %v861 = vrcp.pop %v857
        %v862 = vrcp.pop %v860
        %v863 = vmul.f32 %v844, %v861
        %v864 = vmul.f32 %v846, %v862
        %vm865 = vcmask 195712
        %v866 = vsel %vm865, %v807, -inf
        %867 = vmax.xlane.f32.xlu0 %v866
        %v868 = vpop.xlane.xlu0 %867
        %v869 = vsel %vm865, %v809, -inf
        %870 = vmax.xlane.f32.xlu0 %v869
        %v871 = vpop.xlane.xlu0 %870
        %v872 = vsub.f32 %v807, %v868
        %v873 = vsub.f32 %v809, %v871
        %v874 = vmul.f32 %v872, 1.442695
        %v875 = vpow.pop %v874
        %v876 = vmul.f32 %v873, 1.442695
        %v877 = vpow.pop %v876
        %880 = vrot.lane.b32.xlu0 %v875, 112
        %v881 = vpop.permute.xlu0 %880
        %882 = vrot.lane.b32.xlu0 %v877, 112
        %v883 = vpop.permute.xlu0 %882
        %v886 = vsel %vm811, %v881, 0.0
        %887 = vadd.xlane.f32.xlu0 %v886
        %v888 = vpop.xlane.xlu0 %887
        %v889 = vsel %vm811, %v883, 0.0
        %890 = vadd.xlane.f32.xlu0 %v889
        %v891 = vpop.xlane.xlu0 %890
        %v892 = vrcp.pop %v888
        %v893 = vrcp.pop %v891
        %v894 = vmul.f32 %v875, %v892
        %v895 = vmul.f32 %v877, %v893
        %vm896 = vcmask 261312
        %v897 = vsel %vm896, %v807, -inf
        %898 = vmax.xlane.f32.xlu0 %v897
        %v899 = vpop.xlane.xlu0 %898
        %v900 = vsel %vm896, %v809, -inf
        %901 = vmax.xlane.f32.xlu0 %v900
        %v902 = vpop.xlane.xlu0 %901
        %v903 = vsub.f32 %v807, %v899
        %v904 = vsub.f32 %v809, %v902
        %v905 = vmul.f32 %v903, 1.442695
        %v906 = vpow.pop %v905
        %v907 = vmul.f32 %v904, 1.442695
        %v908 = vpow.pop %v907
        %911 = vrot.lane.b32.xlu0 %v906, 104
        %v912 = vpop.permute.xlu0 %911
        %913 = vrot.lane.b32.xlu0 %v908, 104
        %v914 = vpop.permute.xlu0 %913
        %v917 = vsel %vm811, %v912, 0.0
        %918 = vadd.xlane.f32.xlu0 %v917
        %v919 = vpop.xlane.xlu0 %918
        %v920 = vsel %vm811, %v914, 0.0
        %921 = vadd.xlane.f32.xlu0 %v920
        %v922 = vpop.xlane.xlu0 %921
        %v923 = vrcp.pop %v919
        %v924 = vrcp.pop %v922
        %v925 = vmul.f32 %v906, %v923
        %v926 = vmul.f32 %v908, %v924
        %v927 = vmul.f32 %v732, 8.0
        %v928 = vmul.f32 %v733, 8.0
        %930 = vset.pattern.permute.xlu0 0
        %931 = vperm.xlu0 %930, %v927
        %v932 = vpop.permute.xlu0 %931
        %935 = vset.pattern.permute.xlu0 0
        %936 = vperm.xlu0 %935, %v928
        %v937 = vpop.permute.xlu0 %936
        %v939 = vadd.f32 %v932, %v773
        %v940 = vadd.f32 %v937, %v775
        %v941 = vsub.f32 %v939, 0.5
        %v942 = vsub.f32 %v940, 0.5
        %943 = vset.pattern.permute.xlu0 1
        %944 = vperm.xlu0 %943, %v927
        %v945 = vpop.permute.xlu0 %944
        %947 = vset.pattern.permute.xlu0 1
        %948 = vperm.xlu0 %947, %v928
        %v949 = vpop.permute.xlu0 %948
        %v951 = vadd.f32 %v945, %v773
        %v952 = vadd.f32 %v949, %v775
        %v953 = vsub.f32 %v951, 0.5
        %v954 = vsub.f32 %v952, 0.5
        %v955 = vfloor.f32 %v941
        %v956 = vfloor.f32 %v942
        %v957 = vfloor.f32 %v953
        %v958 = vfloor.f32 %v954
        %v959 = vsub.f32 %v941, %v955
        %v960 = vsub.f32 %v942, %v956
        %v961 = vsub.f32 %v953, %v957
        %v962 = vsub.f32 %v954, %v958
        %v963 = vcvt.f32.s32.to.zero.pseudo %v955
        %v964 = vcvt.f32.s32.to.zero.pseudo %v956
        %v965 = vcvt.f32.s32.to.zero.pseudo %v957
        %v966 = vcvt.f32.s32.to.zero.pseudo %v958
        %v967 = vadd.s32 %v963, 1
        %v968 = vadd.s32 %v964, 1
        %v969 = vadd.s32 %v965, 1
        %v970 = vadd.s32 %v966, 1
        %vm971 = vcmp.ge.s32.totalorder %v963, 0
        %vm972 = vcmp.ge.s32.totalorder %v964, 0
        %vm973 = vcmp.le.s32.totalorder %v963, 7
        %vm974 = vcmp.le.s32.totalorder %v964, 7
        %vm975 = vmand %vm971, %vm973
        %vm976 = vmand %vm972, %vm974
        %v977 = vsel %vm975, 1, 0
        %v978 = vsel %vm976, 1, 0
        %v979 = vcvt.s32.f32 %v977
        %v980 = vcvt.s32.f32 %v978
        %vm981 = vcmp.ge.s32.totalorder %v967, 0
        %vm982 = vcmp.ge.s32.totalorder %v968, 0
        %vm983 = vcmp.le.s32.totalorder %v967, 7
        %vm984 = vcmp.le.s32.totalorder %v968, 7
        %vm985 = vmand %vm981, %vm983
        %vm986 = vmand %vm982, %vm984
        %v987 = vsel %vm985, 1, 0
        %v988 = vsel %vm986, 1, 0
        %v989 = vcvt.s32.f32 %v987
        %v990 = vcvt.s32.f32 %v988
        %vm991 = vcmp.ge.s32.totalorder %v965, 0
        %vm992 = vcmp.ge.s32.totalorder %v966, 0
        %vm993 = vcmp.le.s32.totalorder %v965, 7
        %vm994 = vcmp.le.s32.totalorder %v966, 7
        %vm995 = vmand %vm991, %vm993
        %vm996 = vmand %vm992, %vm994
        %v997 = vsel %vm995, 1, 0
        %v998 = vsel %vm996, 1, 0
        %v999 = vcvt.s32.f32 %v997
        %v1000 = vcvt.s32.f32 %v998
        %vm1001 = vcmp.ge.s32.totalorder %v969, 0
        %vm1002 = vcmp.ge.s32.totalorder %v970, 0
        %vm1003 = vcmp.le.s32.totalorder %v969, 7
        %vm1004 = vcmp.le.s32.totalorder %v970, 7
        %vm1005 = vmand %vm1001, %vm1003
        %vm1006 = vmand %vm1002, %vm1004
        %v1007 = vsel %vm1005, 1, 0
        %v1008 = vsel %vm1006, 1, 0
        %v1009 = vcvt.s32.f32 %v1007
        %v1010 = vcvt.s32.f32 %v1008
        %v1011 = vsub.f32 1.0, %v959
        %v1012 = vsub.f32 1.0, %v960
        %v1013 = vmul.f32 %v1011, %v979
        %v1014 = vmul.f32 %v1012, %v980
        %v1015 = vmul.f32 %v959, %v989
        %v1016 = vmul.f32 %v960, %v990
        %v1017 = vsub.f32 1.0, %v961
        %v1018 = vsub.f32 1.0, %v962
        %v1019 = vmul.f32 %v1017, %v999
        %v1020 = vmul.f32 %v1018, %v1000
        %v1021 = vmul.f32 %v961, %v1009
        %v1022 = vmul.f32 %v962, %v1010
        %v1023 = vmul.u32 %v965, 8
        %v1024 = vmul.u32 %v966, 8
        %1025 = vrot.lane.b32.xlu0 %v963, 16
        %v1026 = vpop.permute.xlu0 %1025
        %1027 = vrot.lane.b32.xlu0 %v964, 16
        %v1028 = vpop.permute.xlu0 %1027
        %v1029 = vadd.s32 %v1023, %v1026
        %v1030 = vadd.s32 %v1024, %v1028
        %v1031 = vlaneseq
        %v1032 = vand.u32 %v1031, 127
        %v1033 = vmul.f32 %v832, %v1013
        %v1034 = vmul.f32 %v833, %v1014
        %v1035 = vmul.f32 %v832, %v1015
        %v1036 = vmul.f32 %v833, %v1016
        %1037 = vset.pattern.permute.xlu0 16
        %1038 = vperm.xlu0 %1037, %v1029
        %v1039 = vpop.permute.xlu0 %1038
        %1040 = vset.pattern.permute.xlu0 16
        %1041 = vperm.xlu0 %1040, %v1030
        %v1042 = vpop.permute.xlu0 %1041
        %vm1043 = vcmp.eq.s32.totalorder %v1039, %v1032
        %vm1044 = vcmp.eq.s32.totalorder %v1042, %v1032
        %1047 = vrot.lane.b32.xlu0 %v1019, 112
        %v1048 = vpop.permute.xlu0 %1047
        %1049 = vrot.lane.b32.xlu0 %v1020, 112
        %v1050 = vpop.permute.xlu0 %1049
        %v1053 = vmul.f32 %v1033, %v1048
        %v1054 = vmul.f32 %v1034, %v1050
        %1056 = vset.pattern.permute.xlu0 0
        %1057 = vperm.xlu0 %1056, %v1053
        %v1058 = vpop.permute.xlu0 %1057
        %1061 = vset.pattern.permute.xlu0 0
        %1062 = vperm.xlu0 %1061, %v1054
        %v1063 = vpop.permute.xlu0 %1062
        %v1065 = vsel %vm1043, %v1058, 0.0
        %v1066 = vsel %vm1044, %v1063, 0.0
        %v1067 = vadd.f32 %v1065, 0.0
        %v1068 = vadd.f32 %v1066, 0.0
        %v1069 = vadd.s32 %v1029, 1
        %v1070 = vadd.s32 %v1030, 1
        %1071 = vset.pattern.permute.xlu0 16
        %1072 = vperm.xlu0 %1071, %v1069
        %v1073 = vpop.permute.xlu0 %1072
        %1074 = vset.pattern.permute.xlu0 16
        %1075 = vperm.xlu0 %1074, %v1070
        %v1076 = vpop.permute.xlu0 %1075
        %vm1077 = vcmp.eq.s32.totalorder %v1073, %v1032
        %vm1078 = vcmp.eq.s32.totalorder %v1076, %v1032
        %v1079 = vmul.f32 %v1035, %v1048
        %v1080 = vmul.f32 %v1036, %v1050
        %1082 = vset.pattern.permute.xlu0 0
        %1083 = vperm.xlu0 %1082, %v1079
        %v1084 = vpop.permute.xlu0 %1083
        %1087 = vset.pattern.permute.xlu0 0
        %1088 = vperm.xlu0 %1087, %v1080
        %v1089 = vpop.permute.xlu0 %1088
        %v1091 = vsel %vm1077, %v1084, 0.0
        %v1092 = vsel %vm1078, %v1089, 0.0
        %v1093 = vadd.f32 %v1067, %v1091
        %v1094 = vadd.f32 %v1068, %v1092
        %v1095 = vadd.s32 %v1029, 8
        %v1096 = vadd.s32 %v1030, 8
        %1097 = vset.pattern.permute.xlu0 16
        %1098 = vperm.xlu0 %1097, %v1095
        %v1099 = vpop.permute.xlu0 %1098
        %1100 = vset.pattern.permute.xlu0 16
        %1101 = vperm.xlu0 %1100, %v1096
        %v1102 = vpop.permute.xlu0 %1101
        %vm1103 = vcmp.eq.s32.totalorder %v1099, %v1032
        %vm1104 = vcmp.eq.s32.totalorder %v1102, %v1032
        %1107 = vrot.lane.b32.xlu0 %v1021, 112
        %v1108 = vpop.permute.xlu0 %1107
        %1109 = vrot.lane.b32.xlu0 %v1022, 112
        %v1110 = vpop.permute.xlu0 %1109
        %v1113 = vmul.f32 %v1033, %v1108
        %v1114 = vmul.f32 %v1034, %v1110
        %1116 = vset.pattern.permute.xlu0 0
        %1117 = vperm.xlu0 %1116, %v1113
        %v1118 = vpop.permute.xlu0 %1117
        %1121 = vset.pattern.permute.xlu0 0
        %1122 = vperm.xlu0 %1121, %v1114
        %v1123 = vpop.permute.xlu0 %1122
        %v1125 = vsel %vm1103, %v1118, 0.0
        %v1126 = vsel %vm1104, %v1123, 0.0
        %v1127 = vadd.f32 %v1093, %v1125
        %v1128 = vadd.f32 %v1094, %v1126
        %v1129 = vadd.s32 %v1095, 1
        %v1130 = vadd.s32 %v1096, 1
        %1131 = vset.pattern.permute.xlu0 16
        %1132 = vperm.xlu0 %1131, %v1129
        %v1133 = vpop.permute.xlu0 %1132
        %1134 = vset.pattern.permute.xlu0 16
        %1135 = vperm.xlu0 %1134, %v1130
        %v1136 = vpop.permute.xlu0 %1135
        %vm1137 = vcmp.eq.s32.totalorder %v1133, %v1032
        %vm1138 = vcmp.eq.s32.totalorder %v1136, %v1032
        %v1139 = vmul.f32 %v1035, %v1108
        %v1140 = vmul.f32 %v1036, %v1110
        %1142 = vset.pattern.permute.xlu0 0
        %1143 = vperm.xlu0 %1142, %v1139
        %v1144 = vpop.permute.xlu0 %1143
        %1147 = vset.pattern.permute.xlu0 0
        %1148 = vperm.xlu0 %1147, %v1140
        %v1149 = vpop.permute.xlu0 %1148
        %v1151 = vsel %vm1137, %v1144, 0.0
        %v1152 = vsel %vm1138, %v1149, 0.0
        %v1153 = vadd.f32 %v1127, %v1151
        %v1154 = vadd.f32 %v1128, %v1152
        %1155 = vset.pattern.permute.xlu0 17
        %1156 = vperm.xlu0 %1155, %v1029
        %v1157 = vpop.permute.xlu0 %1156
        %1158 = vset.pattern.permute.xlu0 17
        %1159 = vperm.xlu0 %1158, %v1030
        %v1160 = vpop.permute.xlu0 %1159
        %vm1161 = vcmp.eq.s32.totalorder %v1157, %v1032
        %vm1162 = vcmp.eq.s32.totalorder %v1160, %v1032
        %1163 = vset.pattern.permute.xlu0 1
        %1164 = vperm.xlu0 %1163, %v1053
        %v1165 = vpop.permute.xlu0 %1164
        %1167 = vset.pattern.permute.xlu0 1
        %1168 = vperm.xlu0 %1167, %v1054
        %v1169 = vpop.permute.xlu0 %1168
        %v1171 = vsel %vm1161, %v1165, 0.0
        %v1172 = vsel %vm1162, %v1169, 0.0
        %v1173 = vadd.f32 %v1153, %v1171
        %v1174 = vadd.f32 %v1154, %v1172
        %1175 = vset.pattern.permute.xlu0 17
        %1176 = vperm.xlu0 %1175, %v1069
        %v1177 = vpop.permute.xlu0 %1176
        %1178 = vset.pattern.permute.xlu0 17
        %1179 = vperm.xlu0 %1178, %v1070
        %v1180 = vpop.permute.xlu0 %1179
        %vm1181 = vcmp.eq.s32.totalorder %v1177, %v1032
        %vm1182 = vcmp.eq.s32.totalorder %v1180, %v1032
        %1183 = vset.pattern.permute.xlu0 1
        %1184 = vperm.xlu0 %1183, %v1079
        %v1185 = vpop.permute.xlu0 %1184
        %1187 = vset.pattern.permute.xlu0 1
        %1188 = vperm.xlu0 %1187, %v1080
        %v1189 = vpop.permute.xlu0 %1188
        %v1191 = vsel %vm1181, %v1185, 0.0
        %v1192 = vsel %vm1182, %v1189, 0.0
        %v1193 = vadd.f32 %v1173, %v1191
        %v1194 = vadd.f32 %v1174, %v1192
        %1195 = vset.pattern.permute.xlu0 17
        %1196 = vperm.xlu0 %1195, %v1095
        %v1197 = vpop.permute.xlu0 %1196
        %1198 = vset.pattern.permute.xlu0 17
        %1199 = vperm.xlu0 %1198, %v1096
        %v1200 = vpop.permute.xlu0 %1199
        %vm1201 = vcmp.eq.s32.totalorder %v1197, %v1032
        %vm1202 = vcmp.eq.s32.totalorder %v1200, %v1032
        %1203 = vset.pattern.permute.xlu0 1
        %1204 = vperm.xlu0 %1203, %v1113
        %v1205 = vpop.permute.xlu0 %1204
        %1207 = vset.pattern.permute.xlu0 1
        %1208 = vperm.xlu0 %1207, %v1114
        %v1209 = vpop.permute.xlu0 %1208
        %v1211 = vsel %vm1201, %v1205, 0.0
        %v1212 = vsel %vm1202, %v1209, 0.0
        %v1213 = vadd.f32 %v1193, %v1211
        %v1214 = vadd.f32 %v1194, %v1212
        %1215 = vset.pattern.permute.xlu0 17
        %1216 = vperm.xlu0 %1215, %v1129
        %v1217 = vpop.permute.xlu0 %1216
        %1218 = vset.pattern.permute.xlu0 17
        %1219 = vperm.xlu0 %1218, %v1130
        %v1220 = vpop.permute.xlu0 %1219
        %vm1221 = vcmp.eq.s32.totalorder %v1217, %v1032
        %vm1222 = vcmp.eq.s32.totalorder %v1220, %v1032
        %1223 = vset.pattern.permute.xlu0 1
        %1224 = vperm.xlu0 %1223, %v1139
        %v1225 = vpop.permute.xlu0 %1224
        %1227 = vset.pattern.permute.xlu0 1
        %1228 = vperm.xlu0 %1227, %v1140
        %v1229 = vpop.permute.xlu0 %1228
        %v1231 = vsel %vm1221, %v1225, 0.0
        %v1232 = vsel %vm1222, %v1229, 0.0
        %v1233 = vadd.f32 %v1213, %v1231
        %v1234 = vadd.f32 %v1214, %v1232
        %1235 = vset.pattern.permute.xlu0 18
        %1236 = vperm.xlu0 %1235, %v1029
        %v1237 = vpop.permute.xlu0 %1236
        %1238 = vset.pattern.permute.xlu0 18
        %1239 = vperm.xlu0 %1238, %v1030
        %v1240 = vpop.permute.xlu0 %1239
        %vm1241 = vcmp.eq.s32.totalorder %v1237, %v1032
        %vm1242 = vcmp.eq.s32.totalorder %v1240, %v1032
        %1243 = vset.pattern.permute.xlu0 2
        %1244 = vperm.xlu0 %1243, %v1053
        %v1245 = vpop.permute.xlu0 %1244
        %1247 = vset.pattern.permute.xlu0 2
        %1248 = vperm.xlu0 %1247, %v1054
        %v1249 = vpop.permute.xlu0 %1248
        %v1251 = vsel %vm1241, %v1245, 0.0
        %v1252 = vsel %vm1242, %v1249, 0.0
        %v1253 = vadd.f32 %v1233, %v1251
        %v1254 = vadd.f32 %v1234, %v1252
        %1255 = vset.pattern.permute.xlu0 18
        %1256 = vperm.xlu0 %1255, %v1069
        %v1257 = vpop.permute.xlu0 %1256
        %1258 = vset.pattern.permute.xlu0 18
        %1259 = vperm.xlu0 %1258, %v1070
        %v1260 = vpop.permute.xlu0 %1259
        %vm1261 = vcmp.eq.s32.totalorder %v1257, %v1032
        %vm1262 = vcmp.eq.s32.totalorder %v1260, %v1032
        %1263 = vset.pattern.permute.xlu0 2
        %1264 = vperm.xlu0 %1263, %v1079
        %v1265 = vpop.permute.xlu0 %1264
        %1267 = vset.pattern.permute.xlu0 2
        %1268 = vperm.xlu0 %1267, %v1080
        %v1269 = vpop.permute.xlu0 %1268
        %v1271 = vsel %vm1261, %v1265, 0.0
        %v1272 = vsel %vm1262, %v1269, 0.0
        %v1273 = vadd.f32 %v1253, %v1271
        %v1274 = vadd.f32 %v1254, %v1272
        %1275 = vset.pattern.permute.xlu0 18
        %1276 = vperm.xlu0 %1275, %v1095
        %v1277 = vpop.permute.xlu0 %1276
        %1278 = vset.pattern.permute.xlu0 18
        %1279 = vperm.xlu0 %1278, %v1096
        %v1280 = vpop.permute.xlu0 %1279
        %vm1281 = vcmp.eq.s32.totalorder %v1277, %v1032
        %vm1282 = vcmp.eq.s32.totalorder %v1280, %v1032
        %1283 = vset.pattern.permute.xlu0 2
        %1284 = vperm.xlu0 %1283, %v1113
        %v1285 = vpop.permute.xlu0 %1284
        %1287 = vset.pattern.permute.xlu0 2
        %1288 = vperm.xlu0 %1287, %v1114
        %v1289 = vpop.permute.xlu0 %1288
        %v1291 = vsel %vm1281, %v1285, 0.0
        %v1292 = vsel %vm1282, %v1289, 0.0
        %v1293 = vadd.f32 %v1273, %v1291
        %v1294 = vadd.f32 %v1274, %v1292
        %1295 = vset.pattern.permute.xlu0 18
        %1296 = vperm.xlu0 %1295, %v1129
        %v1297 = vpop.permute.xlu0 %1296
        %1298 = vset.pattern.permute.xlu0 18
        %1299 = vperm.xlu0 %1298, %v1130
        %v1300 = vpop.permute.xlu0 %1299
        %vm1301 = vcmp.eq.s32.totalorder %v1297, %v1032
        %vm1302 = vcmp.eq.s32.totalorder %v1300, %v1032
        %1303 = vset.pattern.permute.xlu0 2
        %1304 = vperm.xlu0 %1303, %v1139
        %v1305 = vpop.permute.xlu0 %1304
        %1307 = vset.pattern.permute.xlu0 2
        %1308 = vperm.xlu0 %1307, %v1140
        %v1309 = vpop.permute.xlu0 %1308
        %v1311 = vsel %vm1301, %v1305, 0.0
        %v1312 = vsel %vm1302, %v1309, 0.0
        %v1313 = vadd.f32 %v1293, %v1311
        %v1314 = vadd.f32 %v1294, %v1312
        %1315 = vset.pattern.permute.xlu0 19
        %1316 = vperm.xlu0 %1315, %v1029
        %v1317 = vpop.permute.xlu0 %1316
        %1318 = vset.pattern.permute.xlu0 19
        %1319 = vperm.xlu0 %1318, %v1030
        %v1320 = vpop.permute.xlu0 %1319
        %vm1321 = vcmp.eq.s32.totalorder %v1317, %v1032
        %vm1322 = vcmp.eq.s32.totalorder %v1320, %v1032
        %1323 = vset.pattern.permute.xlu0 3
        %1324 = vperm.xlu0 %1323, %v1053
        %v1325 = vpop.permute.xlu0 %1324
        %1327 = vset.pattern.permute.xlu0 3
        %1328 = vperm.xlu0 %1327, %v1054
        %v1329 = vpop.permute.xlu0 %1328
        %v1331 = vsel %vm1321, %v1325, 0.0
        %v1332 = vsel %vm1322, %v1329, 0.0
        %v1333 = vadd.f32 %v1313, %v1331
        %v1334 = vadd.f32 %v1314, %v1332
        %1335 = vset.pattern.permute.xlu0 19
        %1336 = vperm.xlu0 %1335, %v1069
        %v1337 = vpop.permute.xlu0 %1336
        %1338 = vset.pattern.permute.xlu0 19
        %1339 = vperm.xlu0 %1338, %v1070
        %v1340 = vpop.permute.xlu0 %1339
        %vm1341 = vcmp.eq.s32.totalorder %v1337, %v1032
        %vm1342 = vcmp.eq.s32.totalorder %v1340, %v1032
        %1343 = vset.pattern.permute.xlu0 3
        %1344 = vperm.xlu0 %1343, %v1079
        %v1345 = vpop.permute.xlu0 %1344
        %1347 = vset.pattern.permute.xlu0 3
        %1348 = vperm.xlu0 %1347, %v1080
        %v1349 = vpop.permute.xlu0 %1348
        %v1351 = vsel %vm1341, %v1345, 0.0
        %v1352 = vsel %vm1342, %v1349, 0.0
        %v1353 = vadd.f32 %v1333, %v1351
        %v1354 = vadd.f32 %v1334, %v1352
        %1355 = vset.pattern.permute.xlu0 19
        %1356 = vperm.xlu0 %1355, %v1095
        %v1357 = vpop.permute.xlu0 %1356
        %1358 = vset.pattern.permute.xlu0 19
        %1359 = vperm.xlu0 %1358, %v1096
        %v1360 = vpop.permute.xlu0 %1359
        %vm1361 = vcmp.eq.s32.totalorder %v1357, %v1032
        %vm1362 = vcmp.eq.s32.totalorder %v1360, %v1032
        %1363 = vset.pattern.permute.xlu0 3
        %1364 = vperm.xlu0 %1363, %v1113
        %v1365 = vpop.permute.xlu0 %1364
        %1367 = vset.pattern.permute.xlu0 3
        %1368 = vperm.xlu0 %1367, %v1114
        %v1369 = vpop.permute.xlu0 %1368
        %v1371 = vsel %vm1361, %v1365, 0.0
        %v1372 = vsel %vm1362, %v1369, 0.0
        %v1373 = vadd.f32 %v1353, %v1371
        %v1374 = vadd.f32 %v1354, %v1372
        %1375 = vset.pattern.permute.xlu0 19
        %1376 = vperm.xlu0 %1375, %v1129
        %v1377 = vpop.permute.xlu0 %1376
        %1378 = vset.pattern.permute.xlu0 19
        %1379 = vperm.xlu0 %1378, %v1130
        %v1380 = vpop.permute.xlu0 %1379
        %vm1381 = vcmp.eq.s32.totalorder %v1377, %v1032
        %vm1382 = vcmp.eq.s32.totalorder %v1380, %v1032
        %1383 = vset.pattern.permute.xlu0 3
        %1384 = vperm.xlu0 %1383, %v1139
        %v1385 = vpop.permute.xlu0 %1384
        %1387 = vset.pattern.permute.xlu0 3
        %1388 = vperm.xlu0 %1387, %v1140
        %v1389 = vpop.permute.xlu0 %1388
        %v1391 = vsel %vm1381, %v1385, 0.0
        %v1392 = vsel %vm1382, %v1389, 0.0
        %v1393 = vadd.f32 %v1373, %v1391
        %v1394 = vadd.f32 %v1374, %v1392
        %v1395 = vld [vmem:[#allocation2] sm:$0xf]
        %v1396 = vld [vmem:[#allocation2 + $0x4] sm:$0xf]
        %v1397 = vld [vmem:[#allocation2 + $0x8] sm:$0xf]
        %v1398 = vld [vmem:[#allocation2 + $0xc] sm:$0xf]
        %v1399 = vld [vmem:[#allocation2 + $0x10] sm:$0xf]
        %v1400 = vld [vmem:[#allocation2 + $0x14] sm:$0xf]
        %v1401 = vld [vmem:[#allocation2 + $0x18] sm:$0xf]
        %v1402 = vld [vmem:[#allocation2 + $0x1c] sm:$0xf]
        %v1403 = vpack.c.bf16 %v1394, %v1393
        %1406 = vrot.lane.b32.xlu0 %v1013, 4
        %v1407 = vpop.permute.xlu0 %1406
        %1408 = vrot.lane.b32.xlu0 %v1014, 4
        %v1409 = vpop.permute.xlu0 %1408
        %v1412 = vmul.f32 %v863, %v1407
        %v1413 = vmul.f32 %v864, %v1409
        %1416 = vrot.lane.b32.xlu0 %v1015, 4
        %v1417 = vpop.permute.xlu0 %1416
        %1418 = vrot.lane.b32.xlu0 %v1016, 4
        %v1419 = vpop.permute.xlu0 %1418
        %v1422 = vmul.f32 %v863, %v1417
        %v1423 = vmul.f32 %v864, %v1419
        %1424 = vset.pattern.permute.xlu0 20
        %1425 = vperm.xlu0 %1424, %v1029
        %v1426 = vpop.permute.xlu0 %1425
        %1427 = vset.pattern.permute.xlu0 20
        %1428 = vperm.xlu0 %1427, %v1030
        %v1429 = vpop.permute.xlu0 %1428
        %vm1430 = vcmp.eq.s32.totalorder %v1426, %v1032
        %vm1431 = vcmp.eq.s32.totalorder %v1429, %v1032
        %1432 = vrot.lane.b32.xlu0 %v1019, 116
        %v1433 = vpop.permute.xlu0 %1432
        %1434 = vrot.lane.b32.xlu0 %v1020, 116
        %v1435 = vpop.permute.xlu0 %1434
        %v1438 = vmul.f32 %v1412, %v1433
        %v1439 = vmul.f32 %v1413, %v1435
        %1441 = vset.pattern.permute.xlu0 8
        %1442 = vperm.xlu0 %1441, %v1438
        %v1443 = vpop.permute.xlu0 %1442
        %1446 = vset.pattern.permute.xlu0 8
        %1447 = vperm.xlu0 %1446, %v1439
        %v1448 = vpop.permute.xlu0 %1447
        %v1450 = vsel %vm1430, %v1443, 0.0
        %v1451 = vsel %vm1431, %v1448, 0.0
        %v1452 = vadd.f32 %v1450, 0.0
        %v1453 = vadd.f32 %v1451, 0.0
        %1454 = vset.pattern.permute.xlu0 20
        %1455 = vperm.xlu0 %1454, %v1069
        %v1456 = vpop.permute.xlu0 %1455
        %1457 = vset.pattern.permute.xlu0 20
        %1458 = vperm.xlu0 %1457, %v1070
        %v1459 = vpop.permute.xlu0 %1458
        %vm1460 = vcmp.eq.s32.totalorder %v1456, %v1032
        %vm1461 = vcmp.eq.s32.totalorder %v1459, %v1032
        %v1462 = vmul.f32 %v1422, %v1433
        %v1463 = vmul.f32 %v1423, %v1435
        %1465 = vset.pattern.permute.xlu0 8
        %1466 = vperm.xlu0 %1465, %v1462
        %v1467 = vpop.permute.xlu0 %1466
        %1470 = vset.pattern.permute.xlu0 8
        %1471 = vperm.xlu0 %1470, %v1463
        %v1472 = vpop.permute.xlu0 %1471
        %v1474 = vsel %vm1460, %v1467, 0.0
        %v1475 = vsel %vm1461, %v1472, 0.0
        %v1476 = vadd.f32 %v1452, %v1474
        %v1477 = vadd.f32 %v1453, %v1475
        %1478 = vset.pattern.permute.xlu0 20
        %1479 = vperm.xlu0 %1478, %v1095
        %v1480 = vpop.permute.xlu0 %1479
        %1481 = vset.pattern.permute.xlu0 20
        %1482 = vperm.xlu0 %1481, %v1096
        %v1483 = vpop.permute.xlu0 %1482
        %vm1484 = vcmp.eq.s32.totalorder %v1480, %v1032
        %vm1485 = vcmp.eq.s32.totalorder %v1483, %v1032
        %1486 = vrot.lane.b32.xlu0 %v1021, 116
        %v1487 = vpop.permute.xlu0 %1486
        %1488 = vrot.lane.b32.xlu0 %v1022, 116
        %v1489 = vpop.permute.xlu0 %1488
        %v1492 = vmul.f32 %v1412, %v1487
        %v1493 = vmul.f32 %v1413, %v1489
        %1495 = vset.pattern.permute.xlu0 8
        %1496 = vperm.xlu0 %1495, %v1492
        %v1497 = vpop.permute.xlu0 %1496
        %1500 = vset.pattern.permute.xlu0 8
        %1501 = vperm.xlu0 %1500, %v1493
        %v1502 = vpop.permute.xlu0 %1501
        %v1504 = vsel %vm1484, %v1497, 0.0
        %v1505 = vsel %vm1485, %v1502, 0.0
        %v1506 = vadd.f32 %v1476, %v1504
        %v1507 = vadd.f32 %v1477, %v1505
        %1508 = vset.pattern.permute.xlu0 20
        %1509 = vperm.xlu0 %1508, %v1129
        %v1510 = vpop.permute.xlu0 %1509
        %1511 = vset.pattern.permute.xlu0 20
        %1512 = vperm.xlu0 %1511, %v1130
        %v1513 = vpop.permute.xlu0 %1512
        %vm1514 = vcmp.eq.s32.totalorder %v1510, %v1032
        %vm1515 = vcmp.eq.s32.totalorder %v1513, %v1032
        %v1516 = vmul.f32 %v1422, %v1487
        %v1517 = vmul.f32 %v1423, %v1489
        %1519 = vset.pattern.permute.xlu0 8
        %1520 = vperm.xlu0 %1519, %v1516
        %v1521 = vpop.permute.xlu0 %1520
        %1524 = vset.pattern.permute.xlu0 8
        %1525 = vperm.xlu0 %1524, %v1517
        %v1526 = vpop.permute.xlu0 %1525
        %v1528 = vsel %vm1514, %v1521, 0.0
        %v1529 = vsel %vm1515, %v1526, 0.0
        %v1530 = vadd.f32 %v1506, %v1528
        %v1531 = vadd.f32 %v1507, %v1529
        %1532 = vset.pattern.permute.xlu0 21
        %1533 = vperm.xlu0 %1532, %v1029
        %v1534 = vpop.permute.xlu0 %1533
        %1535 = vset.pattern.permute.xlu0 21
        %1536 = vperm.xlu0 %1535, %v1030
        %v1537 = vpop.permute.xlu0 %1536
        %vm1538 = vcmp.eq.s32.totalorder %v1534, %v1032
        %vm1539 = vcmp.eq.s32.totalorder %v1537, %v1032
        %1540 = vset.pattern.permute.xlu0 9
        %1541 = vperm.xlu0 %1540, %v1438
        %v1542 = vpop.permute.xlu0 %1541
        %1544 = vset.pattern.permute.xlu0 9
        %1545 = vperm.xlu0 %1544, %v1439
        %v1546 = vpop.permute.xlu0 %1545
        %v1548 = vsel %vm1538, %v1542, 0.0
        %v1549 = vsel %vm1539, %v1546, 0.0
        %v1550 = vadd.f32 %v1530, %v1548
        %v1551 = vadd.f32 %v1531, %v1549
        %1552 = vset.pattern.permute.xlu0 21
        %1553 = vperm.xlu0 %1552, %v1069
        %v1554 = vpop.permute.xlu0 %1553
        %1555 = vset.pattern.permute.xlu0 21
        %1556 = vperm.xlu0 %1555, %v1070
        %v1557 = vpop.permute.xlu0 %1556
        %vm1558 = vcmp.eq.s32.totalorder %v1554, %v1032
        %vm1559 = vcmp.eq.s32.totalorder %v1557, %v1032
        %1560 = vset.pattern.permute.xlu0 9
        %1561 = vperm.xlu0 %1560, %v1462
        %v1562 = vpop.permute.xlu0 %1561
        %1564 = vset.pattern.permute.xlu0 9
        %1565 = vperm.xlu0 %1564, %v1463
        %v1566 = vpop.permute.xlu0 %1565
        %v1568 = vsel %vm1558, %v1562, 0.0
        %v1569 = vsel %vm1559, %v1566, 0.0
        %v1570 = vadd.f32 %v1550, %v1568
        %v1571 = vadd.f32 %v1551, %v1569
        %1572 = vset.pattern.permute.xlu0 21
        %1573 = vperm.xlu0 %1572, %v1095
        %v1574 = vpop.permute.xlu0 %1573
        %1575 = vset.pattern.permute.xlu0 21
        %1576 = vperm.xlu0 %1575, %v1096
        %v1577 = vpop.permute.xlu0 %1576
        %vm1578 = vcmp.eq.s32.totalorder %v1574, %v1032
        %vm1579 = vcmp.eq.s32.totalorder %v1577, %v1032
        %1580 = vset.pattern.permute.xlu0 9
        %1581 = vperm.xlu0 %1580, %v1492
        %v1582 = vpop.permute.xlu0 %1581
        %1584 = vset.pattern.permute.xlu0 9
        %1585 = vperm.xlu0 %1584, %v1493
        %v1586 = vpop.permute.xlu0 %1585
        %v1588 = vsel %vm1578, %v1582, 0.0
        %v1589 = vsel %vm1579, %v1586, 0.0
        %v1590 = vadd.f32 %v1570, %v1588
        %v1591 = vadd.f32 %v1571, %v1589
        %1592 = vset.pattern.permute.xlu0 21
        %1593 = vperm.xlu0 %1592, %v1129
        %v1594 = vpop.permute.xlu0 %1593
        %1595 = vset.pattern.permute.xlu0 21
        %1596 = vperm.xlu0 %1595, %v1130
        %v1597 = vpop.permute.xlu0 %1596
        %vm1598 = vcmp.eq.s32.totalorder %v1594, %v1032
        %vm1599 = vcmp.eq.s32.totalorder %v1597, %v1032
        %1600 = vset.pattern.permute.xlu0 9
        %1601 = vperm.xlu0 %1600, %v1516
        %v1602 = vpop.permute.xlu0 %1601
        %1604 = vset.pattern.permute.xlu0 9
        %1605 = vperm.xlu0 %1604, %v1517
        %v1606 = vpop.permute.xlu0 %1605
        %v1608 = vsel %vm1598, %v1602, 0.0
        %v1609 = vsel %vm1599, %v1606, 0.0
        %v1610 = vadd.f32 %v1590, %v1608
        %v1611 = vadd.f32 %v1591, %v1609
        %1612 = vset.pattern.permute.xlu0 22
        %1613 = vperm.xlu0 %1612, %v1029
        %v1614 = vpop.permute.xlu0 %1613
        %1615 = vset.pattern.permute.xlu0 22
        %1616 = vperm.xlu0 %1615, %v1030
        %v1617 = vpop.permute.xlu0 %1616
        %vm1618 = vcmp.eq.s32.totalorder %v1614, %v1032
        %vm1619 = vcmp.eq.s32.totalorder %v1617, %v1032
        %1620 = vset.pattern.permute.xlu0 10
        %1621 = vperm.xlu0 %1620, %v1438
        %v1622 = vpop.permute.xlu0 %1621
        %1624 = vset.pattern.permute.xlu0 10
        %1625 = vperm.xlu0 %1624, %v1439
        %v1626 = vpop.permute.xlu0 %1625
        %v1628 = vsel %vm1618, %v1622, 0.0
        %v1629 = vsel %vm1619, %v1626, 0.0
        %v1630 = vadd.f32 %v1610, %v1628
        %v1631 = vadd.f32 %v1611, %v1629
        %1632 = vset.pattern.permute.xlu0 22
        %1633 = vperm.xlu0 %1632, %v1069
        %v1634 = vpop.permute.xlu0 %1633
        %1635 = vset.pattern.permute.xlu0 22
        %1636 = vperm.xlu0 %1635, %v1070
        %v1637 = vpop.permute.xlu0 %1636
        %vm1638 = vcmp.eq.s32.totalorder %v1634, %v1032
        %vm1639 = vcmp.eq.s32.totalorder %v1637, %v1032
        %1640 = vset.pattern.permute.xlu0 10
        %1641 = vperm.xlu0 %1640, %v1462
        %v1642 = vpop.permute.xlu0 %1641
        %1644 = vset.pattern.permute.xlu0 10
        %1645 = vperm.xlu0 %1644, %v1463
        %v1646 = vpop.permute.xlu0 %1645
        %v1648 = vsel %vm1638, %v1642, 0.0
        %v1649 = vsel %vm1639, %v1646, 0.0
        %v1650 = vadd.f32 %v1630, %v1648
        %v1651 = vadd.f32 %v1631, %v1649
        %1652 = vset.pattern.permute.xlu0 22
        %1653 = vperm.xlu0 %1652, %v1095
        %v1654 = vpop.permute.xlu0 %1653
        %1655 = vset.pattern.permute.xlu0 22
        %1656 = vperm.xlu0 %1655, %v1096
        %v1657 = vpop.permute.xlu0 %1656
        %vm1658 = vcmp.eq.s32.totalorder %v1654, %v1032
        %vm1659 = vcmp.eq.s32.totalorder %v1657, %v1032
        %1660 = vset.pattern.permute.xlu0 10
        %1661 = vperm.xlu0 %1660, %v1492
        %v1662 = vpop.permute.xlu0 %1661
        %1664 = vset.pattern.permute.xlu0 10
        %1665 = vperm.xlu0 %1664, %v1493
        %v1666 = vpop.permute.xlu0 %1665
        %v1668 = vsel %vm1658, %v1662, 0.0
        %v1669 = vsel %vm1659, %v1666, 0.0
        %v1670 = vadd.f32 %v1650, %v1668
        %v1671 = vadd.f32 %v1651, %v1669
        %1672 = vset.pattern.permute.xlu0 22
        %1673 = vperm.xlu0 %1672, %v1129
        %v1674 = vpop.permute.xlu0 %1673
        %1675 = vset.pattern.permute.xlu0 22
        %1676 = vperm.xlu0 %1675, %v1130
        %v1677 = vpop.permute.xlu0 %1676
        %vm1678 = vcmp.eq.s32.totalorder %v1674, %v1032
        %vm1679 = vcmp.eq.s32.totalorder %v1677, %v1032
        %1680 = vset.pattern.permute.xlu0 10
        %1681 = vperm.xlu0 %1680, %v1516
        %v1682 = vpop.permute.xlu0 %1681
        %1684 = vset.pattern.permute.xlu0 10
        %1685 = vperm.xlu0 %1684, %v1517
        %v1686 = vpop.permute.xlu0 %1685
        %v1688 = vsel %vm1678, %v1682, 0.0
        %v1689 = vsel %vm1679, %v1686, 0.0
        %v1690 = vadd.f32 %v1670, %v1688
        %v1691 = vadd.f32 %v1671, %v1689
        %1692 = vset.pattern.permute.xlu0 23
        %1693 = vperm.xlu0 %1692, %v1029
        %v1694 = vpop.permute.xlu0 %1693
        %1695 = vset.pattern.permute.xlu0 23
        %1696 = vperm.xlu0 %1695, %v1030
        %v1697 = vpop.permute.xlu0 %1696
        %vm1698 = vcmp.eq.s32.totalorder %v1694, %v1032
        %vm1699 = vcmp.eq.s32.totalorder %v1697, %v1032
        %1700 = vset.pattern.permute.xlu0 11
        %1701 = vperm.xlu0 %1700, %v1438
        %v1702 = vpop.permute.xlu0 %1701
        %1704 = vset.pattern.permute.xlu0 11
        %1705 = vperm.xlu0 %1704, %v1439
        %v1706 = vpop.permute.xlu0 %1705
        %v1708 = vsel %vm1698, %v1702, 0.0
        %v1709 = vsel %vm1699, %v1706, 0.0
        %v1710 = vadd.f32 %v1690, %v1708
        %v1711 = vadd.f32 %v1691, %v1709
        %1712 = vset.pattern.permute.xlu0 23
        %1713 = vperm.xlu0 %1712, %v1069
        %v1714 = vpop.permute.xlu0 %1713
        %1715 = vset.pattern.permute.xlu0 23
        %1716 = vperm.xlu0 %1715, %v1070
        %v1717 = vpop.permute.xlu0 %1716
        %vm1718 = vcmp.eq.s32.totalorder %v1714, %v1032
        %vm1719 = vcmp.eq.s32.totalorder %v1717, %v1032
        %1720 = vset.pattern.permute.xlu0 11
        %1721 = vperm.xlu0 %1720, %v1462
        %v1722 = vpop.permute.xlu0 %1721
        %1724 = vset.pattern.permute.xlu0 11
        %1725 = vperm.xlu0 %1724, %v1463
        %v1726 = vpop.permute.xlu0 %1725
        %v1728 = vsel %vm1718, %v1722, 0.0
        %v1729 = vsel %vm1719, %v1726, 0.0
        %v1730 = vadd.f32 %v1710, %v1728
        %v1731 = vadd.f32 %v1711, %v1729
        %1732 = vset.pattern.permute.xlu0 23
        %1733 = vperm.xlu0 %1732, %v1095
        %v1734 = vpop.permute.xlu0 %1733
        %1735 = vset.pattern.permute.xlu0 23
        %1736 = vperm.xlu0 %1735, %v1096
        %v1737 = vpop.permute.xlu0 %1736
        %vm1738 = vcmp.eq.s32.totalorder %v1734, %v1032
        %vm1739 = vcmp.eq.s32.totalorder %v1737, %v1032
        %1740 = vset.pattern.permute.xlu0 11
        %1741 = vperm.xlu0 %1740, %v1492
        %v1742 = vpop.permute.xlu0 %1741
        %1744 = vset.pattern.permute.xlu0 11
        %1745 = vperm.xlu0 %1744, %v1493
        %v1746 = vpop.permute.xlu0 %1745
        %v1748 = vsel %vm1738, %v1742, 0.0
        %v1749 = vsel %vm1739, %v1746, 0.0
        %v1750 = vadd.f32 %v1730, %v1748
        %v1751 = vadd.f32 %v1731, %v1749
        %1752 = vset.pattern.permute.xlu0 23
        %1753 = vperm.xlu0 %1752, %v1129
        %v1754 = vpop.permute.xlu0 %1753
        %1755 = vset.pattern.permute.xlu0 23
        %1756 = vperm.xlu0 %1755, %v1130
        %v1757 = vpop.permute.xlu0 %1756
        %vm1758 = vcmp.eq.s32.totalorder %v1754, %v1032
        %vm1759 = vcmp.eq.s32.totalorder %v1757, %v1032
        %1760 = vset.pattern.permute.xlu0 11
        %1761 = vperm.xlu0 %1760, %v1516
        %v1762 = vpop.permute.xlu0 %1761
        %1764 = vset.pattern.permute.xlu0 11
        %1765 = vperm.xlu0 %1764, %v1517
        %v1766 = vpop.permute.xlu0 %1765
        %v1768 = vsel %vm1758, %v1762, 0.0
        %v1769 = vsel %vm1759, %v1766, 0.0
        %v1770 = vadd.f32 %v1750, %v1768
        %v1771 = vadd.f32 %v1751, %v1769
        %v1772 = vpack.c.bf16 %v1771, %v1770
        %1773 = vrot.lane.b32.xlu0 %v1013, 8
        %v1774 = vpop.permute.xlu0 %1773
        %1775 = vrot.lane.b32.xlu0 %v1014, 8
        %v1776 = vpop.permute.xlu0 %1775
        %v1779 = vmul.f32 %v894, %v1774
        %v1780 = vmul.f32 %v895, %v1776
        %1781 = vrot.lane.b32.xlu0 %v1015, 8
        %v1782 = vpop.permute.xlu0 %1781
        %1783 = vrot.lane.b32.xlu0 %v1016, 8
        %v1784 = vpop.permute.xlu0 %1783
        %v1787 = vmul.f32 %v894, %v1782
        %v1788 = vmul.f32 %v895, %v1784
        %1789 = vset.pattern.permute.xlu0 24
        %1790 = vperm.xlu0 %1789, %v1029
        %v1791 = vpop.permute.xlu0 %1790
        %1792 = vset.pattern.permute.xlu0 24
        %1793 = vperm.xlu0 %1792, %v1030
        %v1794 = vpop.permute.xlu0 %1793
        %vm1795 = vcmp.eq.s32.totalorder %v1791, %v1032
        %vm1796 = vcmp.eq.s32.totalorder %v1794, %v1032
        %1797 = vrot.lane.b32.xlu0 %v1019, 120
        %v1798 = vpop.permute.xlu0 %1797
        %1799 = vrot.lane.b32.xlu0 %v1020, 120
        %v1800 = vpop.permute.xlu0 %1799
        %v1803 = vmul.f32 %v1779, %v1798
        %v1804 = vmul.f32 %v1780, %v1800
        %1806 = vset.pattern.permute.xlu0 16
        %1807 = vperm.xlu0 %1806, %v1803
        %v1808 = vpop.permute.xlu0 %1807
        %1811 = vset.pattern.permute.xlu0 16
        %1812 = vperm.xlu0 %1811, %v1804
        %v1813 = vpop.permute.xlu0 %1812
        %v1815 = vsel %vm1795, %v1808, 0.0
        %v1816 = vsel %vm1796, %v1813, 0.0
        %v1817 = vadd.f32 %v1815, 0.0
        %v1818 = vadd.f32 %v1816, 0.0
        %1819 = vset.pattern.permute.xlu0 24
        %1820 = vperm.xlu0 %1819, %v1069
        %v1821 = vpop.permute.xlu0 %1820
        %1822 = vset.pattern.permute.xlu0 24
        %1823 = vperm.xlu0 %1822, %v1070
        %v1824 = vpop.permute.xlu0 %1823
        %vm1825 = vcmp.eq.s32.totalorder %v1821, %v1032
        %vm1826 = vcmp.eq.s32.totalorder %v1824, %v1032
        %v1827 = vmul.f32 %v1787, %v1798
        %v1828 = vmul.f32 %v1788, %v1800
        %1830 = vset.pattern.permute.xlu0 16
        %1831 = vperm.xlu0 %1830, %v1827
        %v1832 = vpop.permute.xlu0 %1831
        %1835 = vset.pattern.permute.xlu0 16
        %1836 = vperm.xlu0 %1835, %v1828
        %v1837 = vpop.permute.xlu0 %1836
        %v1839 = vsel %vm1825, %v1832, 0.0
        %v1840 = vsel %vm1826, %v1837, 0.0
        %v1841 = vadd.f32 %v1817, %v1839
        %v1842 = vadd.f32 %v1818, %v1840
        %1843 = vset.pattern.permute.xlu0 24
        %1844 = vperm.xlu0 %1843, %v1095
        %v1845 = vpop.permute.xlu0 %1844
        %1846 = vset.pattern.permute.xlu0 24
        %1847 = vperm.xlu0 %1846, %v1096
        %v1848 = vpop.permute.xlu0 %1847
        %vm1849 = vcmp.eq.s32.totalorder %v1845, %v1032
        %vm1850 = vcmp.eq.s32.totalorder %v1848, %v1032
        %1851 = vrot.lane.b32.xlu0 %v1021, 120
        %v1852 = vpop.permute.xlu0 %1851
        %1853 = vrot.lane.b32.xlu0 %v1022, 120
        %v1854 = vpop.permute.xlu0 %1853
        %v1857 = vmul.f32 %v1779, %v1852
        %v1858 = vmul.f32 %v1780, %v1854
        %1860 = vset.pattern.permute.xlu0 16
        %1861 = vperm.xlu0 %1860, %v1857
        %v1862 = vpop.permute.xlu0 %1861
        %1865 = vset.pattern.permute.xlu0 16
        %1866 = vperm.xlu0 %1865, %v1858
        %v1867 = vpop.permute.xlu0 %1866
        %v1869 = vsel %vm1849, %v1862, 0.0
        %v1870 = vsel %vm1850, %v1867, 0.0
        %v1871 = vadd.f32 %v1841, %v1869
        %v1872 = vadd.f32 %v1842, %v1870
        %1873 = vset.pattern.permute.xlu0 24
        %1874 = vperm.xlu0 %1873, %v1129
        %v1875 = vpop.permute.xlu0 %1874
        %1876 = vset.pattern.permute.xlu0 24
        %1877 = vperm.xlu0 %1876, %v1130
        %v1878 = vpop.permute.xlu0 %1877
        %vm1879 = vcmp.eq.s32.totalorder %v1875, %v1032
        %vm1880 = vcmp.eq.s32.totalorder %v1878, %v1032
        %v1881 = vmul.f32 %v1787, %v1852
        %v1882 = vmul.f32 %v1788, %v1854
        %1884 = vset.pattern.permute.xlu0 16
        %1885 = vperm.xlu0 %1884, %v1881
        %v1886 = vpop.permute.xlu0 %1885
        %1889 = vset.pattern.permute.xlu0 16
        %1890 = vperm.xlu0 %1889, %v1882
        %v1891 = vpop.permute.xlu0 %1890
        %v1893 = vsel %vm1879, %v1886, 0.0
        %v1894 = vsel %vm1880, %v1891, 0.0
        %v1895 = vadd.f32 %v1871, %v1893
        %v1896 = vadd.f32 %v1872, %v1894
        %1897 = vset.pattern.permute.xlu0 25
        %1898 = vperm.xlu0 %1897, %v1029
        %v1899 = vpop.permute.xlu0 %1898
        %1900 = vset.pattern.permute.xlu0 25
        %1901 = vperm.xlu0 %1900, %v1030
        %v1902 = vpop.permute.xlu0 %1901
        %vm1903 = vcmp.eq.s32.totalorder %v1899, %v1032
        %vm1904 = vcmp.eq.s32.totalorder %v1902, %v1032
        %1905 = vset.pattern.permute.xlu0 17
        %1906 = vperm.xlu0 %1905, %v1803
        %v1907 = vpop.permute.xlu0 %1906
        %1909 = vset.pattern.permute.xlu0 17
        %1910 = vperm.xlu0 %1909, %v1804
        %v1911 = vpop.permute.xlu0 %1910
        %v1913 = vsel %vm1903, %v1907, 0.0
        %v1914 = vsel %vm1904, %v1911, 0.0
        %v1915 = vadd.f32 %v1895, %v1913
        %v1916 = vadd.f32 %v1896, %v1914
        %1917 = vset.pattern.permute.xlu0 25
        %1918 = vperm.xlu0 %1917, %v1069
        %v1919 = vpop.permute.xlu0 %1918
        %1920 = vset.pattern.permute.xlu0 25
        %1921 = vperm.xlu0 %1920, %v1070
        %v1922 = vpop.permute.xlu0 %1921
        %vm1923 = vcmp.eq.s32.totalorder %v1919, %v1032
        %vm1924 = vcmp.eq.s32.totalorder %v1922, %v1032
        %1925 = vset.pattern.permute.xlu0 17
        %1926 = vperm.xlu0 %1925, %v1827
        %v1927 = vpop.permute.xlu0 %1926
        %1929 = vset.pattern.permute.xlu0 17
        %1930 = vperm.xlu0 %1929, %v1828
        %v1931 = vpop.permute.xlu0 %1930
        %v1933 = vsel %vm1923, %v1927, 0.0
        %v1934 = vsel %vm1924, %v1931, 0.0
        %v1935 = vadd.f32 %v1915, %v1933
        %v1936 = vadd.f32 %v1916, %v1934
        %1937 = vset.pattern.permute.xlu0 25
        %1938 = vperm.xlu0 %1937, %v1095
        %v1939 = vpop.permute.xlu0 %1938
        %1940 = vset.pattern.permute.xlu0 25
        %1941 = vperm.xlu0 %1940, %v1096
        %v1942 = vpop.permute.xlu0 %1941
        %vm1943 = vcmp.eq.s32.totalorder %v1939, %v1032
        %vm1944 = vcmp.eq.s32.totalorder %v1942, %v1032
        %1945 = vset.pattern.permute.xlu0 17
        %1946 = vperm.xlu0 %1945, %v1857
        %v1947 = vpop.permute.xlu0 %1946
        %1949 = vset.pattern.permute.xlu0 17
        %1950 = vperm.xlu0 %1949, %v1858
        %v1951 = vpop.permute.xlu0 %1950
        %v1953 = vsel %vm1943, %v1947, 0.0
        %v1954 = vsel %vm1944, %v1951, 0.0
        %v1955 = vadd.f32 %v1935, %v1953
        %v1956 = vadd.f32 %v1936, %v1954
        %1957 = vset.pattern.permute.xlu0 25
        %1958 = vperm.xlu0 %1957, %v1129
        %v1959 = vpop.permute.xlu0 %1958
        %1960 = vset.pattern.permute.xlu0 25
        %1961 = vperm.xlu0 %1960, %v1130
        %v1962 = vpop.permute.xlu0 %1961
        %vm1963 = vcmp.eq.s32.totalorder %v1959, %v1032
        %vm1964 = vcmp.eq.s32.totalorder %v1962, %v1032
        %1965 = vset.pattern.permute.xlu0 17
        %1966 = vperm.xlu0 %1965, %v1881
        %v1967 = vpop.permute.xlu0 %1966
        %1969 = vset.pattern.permute.xlu0 17
        %1970 = vperm.xlu0 %1969, %v1882
        %v1971 = vpop.permute.xlu0 %1970
        %v1973 = vsel %vm1963, %v1967, 0.0
        %v1974 = vsel %vm1964, %v1971, 0.0
        %v1975 = vadd.f32 %v1955, %v1973
        %v1976 = vadd.f32 %v1956, %v1974
        %1977 = vset.pattern.permute.xlu0 26
        %1978 = vperm.xlu0 %1977, %v1029
        %v1979 = vpop.permute.xlu0 %1978
        %1980 = vset.pattern.permute.xlu0 26
        %1981 = vperm.xlu0 %1980, %v1030
        %v1982 = vpop.permute.xlu0 %1981
        %vm1983 = vcmp.eq.s32.totalorder %v1979, %v1032
        %vm1984 = vcmp.eq.s32.totalorder %v1982, %v1032
        %1985 = vset.pattern.permute.xlu0 18
        %1986 = vperm.xlu0 %1985, %v1803
        %v1987 = vpop.permute.xlu0 %1986
        %1989 = vset.pattern.permute.xlu0 18
        %1990 = vperm.xlu0 %1989, %v1804
        %v1991 = vpop.permute.xlu0 %1990
        %v1993 = vsel %vm1983, %v1987, 0.0
        %v1994 = vsel %vm1984, %v1991, 0.0
        %v1995 = vadd.f32 %v1975, %v1993
        %v1996 = vadd.f32 %v1976, %v1994
        %1997 = vset.pattern.permute.xlu0 26
        %1998 = vperm.xlu0 %1997, %v1069
        %v1999 = vpop.permute.xlu0 %1998
        %2000 = vset.pattern.permute.xlu0 26
        %2001 = vperm.xlu0 %2000, %v1070
        %v2002 = vpop.permute.xlu0 %2001
        %vm2003 = vcmp.eq.s32.totalorder %v1999, %v1032
        %vm2004 = vcmp.eq.s32.totalorder %v2002, %v1032
        %2005 = vset.pattern.permute.xlu0 18
        %2006 = vperm.xlu0 %2005, %v1827
        %v2007 = vpop.permute.xlu0 %2006
        %2009 = vset.pattern.permute.xlu0 18
        %2010 = vperm.xlu0 %2009, %v1828
        %v2011 = vpop.permute.xlu0 %2010
        %v2013 = vsel %vm2003, %v2007, 0.0
        %v2014 = vsel %vm2004, %v2011, 0.0
        %v2015 = vadd.f32 %v1995, %v2013
        %v2016 = vadd.f32 %v1996, %v2014
        %2017 = vset.pattern.permute.xlu0 26
        %2018 = vperm.xlu0 %2017, %v1095
        %v2019 = vpop.permute.xlu0 %2018
        %2020 = vset.pattern.permute.xlu0 26
        %2021 = vperm.xlu0 %2020, %v1096
        %v2022 = vpop.permute.xlu0 %2021
        %vm2023 = vcmp.eq.s32.totalorder %v2019, %v1032
        %vm2024 = vcmp.eq.s32.totalorder %v2022, %v1032
        %2025 = vset.pattern.permute.xlu0 18
        %2026 = vperm.xlu0 %2025, %v1857
        %v2027 = vpop.permute.xlu0 %2026
        %2029 = vset.pattern.permute.xlu0 18
        %2030 = vperm.xlu0 %2029, %v1858
        %v2031 = vpop.permute.xlu0 %2030
        %v2033 = vsel %vm2023, %v2027, 0.0
        %v2034 = vsel %vm2024, %v2031, 0.0
        %v2035 = vadd.f32 %v2015, %v2033
        %v2036 = vadd.f32 %v2016, %v2034
        %2037 = vset.pattern.permute.xlu0 26
        %2038 = vperm.xlu0 %2037, %v1129
        %v2039 = vpop.permute.xlu0 %2038
        %2040 = vset.pattern.permute.xlu0 26
        %2041 = vperm.xlu0 %2040, %v1130
        %v2042 = vpop.permute.xlu0 %2041
        %vm2043 = vcmp.eq.s32.totalorder %v2039, %v1032
        %vm2044 = vcmp.eq.s32.totalorder %v2042, %v1032
        %2045 = vset.pattern.permute.xlu0 18
        %2046 = vperm.xlu0 %2045, %v1881
        %v2047 = vpop.permute.xlu0 %2046
        %2049 = vset.pattern.permute.xlu0 18
        %2050 = vperm.xlu0 %2049, %v1882
        %v2051 = vpop.permute.xlu0 %2050
        %v2053 = vsel %vm2043, %v2047, 0.0
        %v2054 = vsel %vm2044, %v2051, 0.0
        %v2055 = vadd.f32 %v2035, %v2053
        %v2056 = vadd.f32 %v2036, %v2054
        %2057 = vset.pattern.permute.xlu0 27
        %2058 = vperm.xlu0 %2057, %v1029
        %v2059 = vpop.permute.xlu0 %2058
        %2060 = vset.pattern.permute.xlu0 27
        %2061 = vperm.xlu0 %2060, %v1030
        %v2062 = vpop.permute.xlu0 %2061
        %vm2063 = vcmp.eq.s32.totalorder %v2059, %v1032
        %vm2064 = vcmp.eq.s32.totalorder %v2062, %v1032
        %2065 = vset.pattern.permute.xlu0 19
        %2066 = vperm.xlu0 %2065, %v1803
        %v2067 = vpop.permute.xlu0 %2066
        %2069 = vset.pattern.permute.xlu0 19
        %2070 = vperm.xlu0 %2069, %v1804
        %v2071 = vpop.permute.xlu0 %2070
        %v2073 = vsel %vm2063, %v2067, 0.0
        %v2074 = vsel %vm2064, %v2071, 0.0
        %v2075 = vadd.f32 %v2055, %v2073
        %v2076 = vadd.f32 %v2056, %v2074
        %2077 = vset.pattern.permute.xlu0 27
        %2078 = vperm.xlu0 %2077, %v1069
        %v2079 = vpop.permute.xlu0 %2078
        %2080 = vset.pattern.permute.xlu0 27
        %2081 = vperm.xlu0 %2080, %v1070
        %v2082 = vpop.permute.xlu0 %2081
        %vm2083 = vcmp.eq.s32.totalorder %v2079, %v1032
        %vm2084 = vcmp.eq.s32.totalorder %v2082, %v1032
        %2085 = vset.pattern.permute.xlu0 19
        %2086 = vperm.xlu0 %2085, %v1827
        %v2087 = vpop.permute.xlu0 %2086
        %2089 = vset.pattern.permute.xlu0 19
        %2090 = vperm.xlu0 %2089, %v1828
        %v2091 = vpop.permute.xlu0 %2090
        %v2093 = vsel %vm2083, %v2087, 0.0
        %v2094 = vsel %vm2084, %v2091, 0.0
        %v2095 = vadd.f32 %v2075, %v2093
        %v2096 = vadd.f32 %v2076, %v2094
        %2097 = vset.pattern.permute.xlu0 27
        %2098 = vperm.xlu0 %2097, %v1095
        %v2099 = vpop.permute.xlu0 %2098
        %2100 = vset.pattern.permute.xlu0 27
        %2101 = vperm.xlu0 %2100, %v1096
        %v2102 = vpop.permute.xlu0 %2101
        %vm2103 = vcmp.eq.s32.totalorder %v2099, %v1032
        %vm2104 = vcmp.eq.s32.totalorder %v2102, %v1032
        %2105 = vset.pattern.permute.xlu0 19
        %2106 = vperm.xlu0 %2105, %v1857
        %v2107 = vpop.permute.xlu0 %2106
        %2109 = vset.pattern.permute.xlu0 19
        %2110 = vperm.xlu0 %2109, %v1858
        %v2111 = vpop.permute.xlu0 %2110
        %v2113 = vsel %vm2103, %v2107, 0.0
        %v2114 = vsel %vm2104, %v2111, 0.0
        %v2115 = vadd.f32 %v2095, %v2113
        %v2116 = vadd.f32 %v2096, %v2114
        %2117 = vset.pattern.permute.xlu0 27
        %2118 = vperm.xlu0 %2117, %v1129
        %v2119 = vpop.permute.xlu0 %2118
        %2120 = vset.pattern.permute.xlu0 27
        %2121 = vperm.xlu0 %2120, %v1130
        %v2122 = vpop.permute.xlu0 %2121
        %vm2123 = vcmp.eq.s32.totalorder %v2119, %v1032
        %vm2124 = vcmp.eq.s32.totalorder %v2122, %v1032
        %2125 = vset.pattern.permute.xlu0 19
        %2126 = vperm.xlu0 %2125, %v1881
        %v2127 = vpop.permute.xlu0 %2126
        %2129 = vset.pattern.permute.xlu0 19
        %2130 = vperm.xlu0 %2129, %v1882
        %v2131 = vpop.permute.xlu0 %2130
        %v2133 = vsel %vm2123, %v2127, 0.0
        %v2134 = vsel %vm2124, %v2131, 0.0
        %v2135 = vadd.f32 %v2115, %v2133
        %v2136 = vadd.f32 %v2116, %v2134
        %v2137 = vpack.c.bf16 %v2136, %v2135
        %2138 = vrot.lane.b32.xlu0 %v1013, 12
        %v2139 = vpop.permute.xlu0 %2138
        %2140 = vrot.lane.b32.xlu0 %v1014, 12
        %v2141 = vpop.permute.xlu0 %2140
        %v2144 = vmul.f32 %v925, %v2139
        %v2145 = vmul.f32 %v926, %v2141
        %2146 = vrot.lane.b32.xlu0 %v1015, 12
        %v2147 = vpop.permute.xlu0 %2146
        %2148 = vrot.lane.b32.xlu0 %v1016, 12
        %v2149 = vpop.permute.xlu0 %2148
        %v2152 = vmul.f32 %v925, %v2147
        %v2153 = vmul.f32 %v926, %v2149
        %2154 = vset.pattern.permute.xlu0 28
        %2155 = vperm.xlu0 %2154, %v1029
        %v2156 = vpop.permute.xlu0 %2155
        %2157 = vset.pattern.permute.xlu0 28
        %2158 = vperm.xlu0 %2157, %v1030
        %v2159 = vpop.permute.xlu0 %2158
        %vm2160 = vcmp.eq.s32.totalorder %v2156, %v1032
        %vm2161 = vcmp.eq.s32.totalorder %v2159, %v1032
        %2162 = vrot.lane.b32.xlu0 %v1019, 124
        %v2163 = vpop.permute.xlu0 %2162
        %2164 = vrot.lane.b32.xlu0 %v1020, 124
        %v2165 = vpop.permute.xlu0 %2164
        %v2168 = vmul.f32 %v2144, %v2163
        %v2169 = vmul.f32 %v2145, %v2165
        %2171 = vset.pattern.permute.xlu0 24
        %2172 = vperm.xlu0 %2171, %v2168
        %v2173 = vpop.permute.xlu0 %2172
        %2176 = vset.pattern.permute.xlu0 24
        %2177 = vperm.xlu0 %2176, %v2169
        %v2178 = vpop.permute.xlu0 %2177
        %v2180 = vsel %vm2160, %v2173, 0.0
        %v2181 = vsel %vm2161, %v2178, 0.0
        %v2182 = vadd.f32 %v2180, 0.0
        %v2183 = vadd.f32 %v2181, 0.0
        %2184 = vset.pattern.permute.xlu0 28
        %2185 = vperm.xlu0 %2184, %v1069
        %v2186 = vpop.permute.xlu0 %2185
        %2187 = vset.pattern.permute.xlu0 28
        %2188 = vperm.xlu0 %2187, %v1070
        %v2189 = vpop.permute.xlu0 %2188
        %vm2190 = vcmp.eq.s32.totalorder %v2186, %v1032
        %vm2191 = vcmp.eq.s32.totalorder %v2189, %v1032
        %v2192 = vmul.f32 %v2152, %v2163
        %v2193 = vmul.f32 %v2153, %v2165
        %2195 = vset.pattern.permute.xlu0 24
        %2196 = vperm.xlu0 %2195, %v2192
        %v2197 = vpop.permute.xlu0 %2196
        %2200 = vset.pattern.permute.xlu0 24
        %2201 = vperm.xlu0 %2200, %v2193
        %v2202 = vpop.permute.xlu0 %2201
        %v2204 = vsel %vm2190, %v2197, 0.0
        %v2205 = vsel %vm2191, %v2202, 0.0
        %v2206 = vadd.f32 %v2182, %v2204
        %v2207 = vadd.f32 %v2183, %v2205
        %2208 = vset.pattern.permute.xlu0 28
        %2209 = vperm.xlu0 %2208, %v1095
        %v2210 = vpop.permute.xlu0 %2209
        %2211 = vset.pattern.permute.xlu0 28
        %2212 = vperm.xlu0 %2211, %v1096
        %v2213 = vpop.permute.xlu0 %2212
        %vm2214 = vcmp.eq.s32.totalorder %v2210, %v1032
        %vm2215 = vcmp.eq.s32.totalorder %v2213, %v1032
        %2216 = vrot.lane.b32.xlu0 %v1021, 124
        %v2217 = vpop.permute.xlu0 %2216
        %2218 = vrot.lane.b32.xlu0 %v1022, 124
        %v2219 = vpop.permute.xlu0 %2218
        %v2222 = vmul.f32 %v2144, %v2217
        %v2223 = vmul.f32 %v2145, %v2219
        %2225 = vset.pattern.permute.xlu0 24
        %2226 = vperm.xlu0 %2225, %v2222
        %v2227 = vpop.permute.xlu0 %2226
        %2230 = vset.pattern.permute.xlu0 24
        %2231 = vperm.xlu0 %2230, %v2223
        %v2232 = vpop.permute.xlu0 %2231
        %v2234 = vsel %vm2214, %v2227, 0.0
        %v2235 = vsel %vm2215, %v2232, 0.0
        %v2236 = vadd.f32 %v2206, %v2234
        %v2237 = vadd.f32 %v2207, %v2235
        %2238 = vset.pattern.permute.xlu0 28
        %2239 = vperm.xlu0 %2238, %v1129
        %v2240 = vpop.permute.xlu0 %2239
        %2241 = vset.pattern.permute.xlu0 28
        %2242 = vperm.xlu0 %2241, %v1130
        %v2243 = vpop.permute.xlu0 %2242
        %vm2244 = vcmp.eq.s32.totalorder %v2240, %v1032
        %vm2245 = vcmp.eq.s32.totalorder %v2243, %v1032
        %v2246 = vmul.f32 %v2152, %v2217
        %v2247 = vmul.f32 %v2153, %v2219
        %2249 = vset.pattern.permute.xlu0 24
        %2250 = vperm.xlu0 %2249, %v2246
        %v2251 = vpop.permute.xlu0 %2250
        %2254 = vset.pattern.permute.xlu0 24
        %2255 = vperm.xlu0 %2254, %v2247
        %v2256 = vpop.permute.xlu0 %2255
        %v2258 = vsel %vm2244, %v2251, 0.0
        %v2259 = vsel %vm2245, %v2256, 0.0
        %v2260 = vadd.f32 %v2236, %v2258
        %v2261 = vadd.f32 %v2237, %v2259
        %2262 = vset.pattern.permute.xlu0 29
        %2263 = vperm.xlu0 %2262, %v1029
        %v2264 = vpop.permute.xlu0 %2263
        %2265 = vset.pattern.permute.xlu0 29
        %2266 = vperm.xlu0 %2265, %v1030
        %v2267 = vpop.permute.xlu0 %2266
        %vm2268 = vcmp.eq.s32.totalorder %v2264, %v1032
        %vm2269 = vcmp.eq.s32.totalorder %v2267, %v1032
        %2270 = vset.pattern.permute.xlu0 25
        %2271 = vperm.xlu0 %2270, %v2168
        %v2272 = vpop.permute.xlu0 %2271
        %2274 = vset.pattern.permute.xlu0 25
        %2275 = vperm.xlu0 %2274, %v2169
        %v2276 = vpop.permute.xlu0 %2275
        %v2278 = vsel %vm2268, %v2272, 0.0
        %v2279 = vsel %vm2269, %v2276, 0.0
        %v2280 = vadd.f32 %v2260, %v2278
        %v2281 = vadd.f32 %v2261, %v2279
        %2282 = vset.pattern.permute.xlu0 29
        %2283 = vperm.xlu0 %2282, %v1069
        %v2284 = vpop.permute.xlu0 %2283
        %2285 = vset.pattern.permute.xlu0 29
        %2286 = vperm.xlu0 %2285, %v1070
        %v2287 = vpop.permute.xlu0 %2286
        %vm2288 = vcmp.eq.s32.totalorder %v2284, %v1032
        %vm2289 = vcmp.eq.s32.totalorder %v2287, %v1032
        %2290 = vset.pattern.permute.xlu0 25
        %2291 = vperm.xlu0 %2290, %v2192
        %v2292 = vpop.permute.xlu0 %2291
        %2294 = vset.pattern.permute.xlu0 25
        %2295 = vperm.xlu0 %2294, %v2193
        %v2296 = vpop.permute.xlu0 %2295
        %v2298 = vsel %vm2288, %v2292, 0.0
        %v2299 = vsel %vm2289, %v2296, 0.0
        %v2300 = vadd.f32 %v2280, %v2298
        %v2301 = vadd.f32 %v2281, %v2299
        %2302 = vset.pattern.permute.xlu0 29
        %2303 = vperm.xlu0 %2302, %v1095
        %v2304 = vpop.permute.xlu0 %2303
        %2305 = vset.pattern.permute.xlu0 29
        %2306 = vperm.xlu0 %2305, %v1096
        %v2307 = vpop.permute.xlu0 %2306
        %vm2308 = vcmp.eq.s32.totalorder %v2304, %v1032
        %vm2309 = vcmp.eq.s32.totalorder %v2307, %v1032
        %2310 = vset.pattern.permute.xlu0 25
        %2311 = vperm.xlu0 %2310, %v2222
        %v2312 = vpop.permute.xlu0 %2311
        %2314 = vset.pattern.permute.xlu0 25
        %2315 = vperm.xlu0 %2314, %v2223
        %v2316 = vpop.permute.xlu0 %2315
        %v2318 = vsel %vm2308, %v2312, 0.0
        %v2319 = vsel %vm2309, %v2316, 0.0
        %v2320 = vadd.f32 %v2300, %v2318
        %v2321 = vadd.f32 %v2301, %v2319
        %2322 = vset.pattern.permute.xlu0 29
        %2323 = vperm.xlu0 %2322, %v1129
        %v2324 = vpop.permute.xlu0 %2323
        %2325 = vset.pattern.permute.xlu0 29
        %2326 = vperm.xlu0 %2325, %v1130
        %v2327 = vpop.permute.xlu0 %2326
        %vm2328 = vcmp.eq.s32.totalorder %v2324, %v1032
        %vm2329 = vcmp.eq.s32.totalorder %v2327, %v1032
        %2330 = vset.pattern.permute.xlu0 25
        %2331 = vperm.xlu0 %2330, %v2246
        %v2332 = vpop.permute.xlu0 %2331
        %2334 = vset.pattern.permute.xlu0 25
        %2335 = vperm.xlu0 %2334, %v2247
        %v2336 = vpop.permute.xlu0 %2335
        %v2338 = vsel %vm2328, %v2332, 0.0
        %v2339 = vsel %vm2329, %v2336, 0.0
        %v2340 = vadd.f32 %v2320, %v2338
        %v2341 = vadd.f32 %v2321, %v2339
        %2342 = vset.pattern.permute.xlu0 30
        %2343 = vperm.xlu0 %2342, %v1029
        %v2344 = vpop.permute.xlu0 %2343
        %2345 = vset.pattern.permute.xlu0 30
        %2346 = vperm.xlu0 %2345, %v1030
        %v2347 = vpop.permute.xlu0 %2346
        %vm2348 = vcmp.eq.s32.totalorder %v2344, %v1032
        %vm2349 = vcmp.eq.s32.totalorder %v2347, %v1032
        %2350 = vset.pattern.permute.xlu0 26
        %2351 = vperm.xlu0 %2350, %v2168
        %v2352 = vpop.permute.xlu0 %2351
        %2354 = vset.pattern.permute.xlu0 26
        %2355 = vperm.xlu0 %2354, %v2169
        %v2356 = vpop.permute.xlu0 %2355
        %v2358 = vsel %vm2348, %v2352, 0.0
        %v2359 = vsel %vm2349, %v2356, 0.0
        %v2360 = vadd.f32 %v2340, %v2358
        %v2361 = vadd.f32 %v2341, %v2359
        %2362 = vset.pattern.permute.xlu0 30
        %2363 = vperm.xlu0 %2362, %v1069
        %v2364 = vpop.permute.xlu0 %2363
        %2365 = vset.pattern.permute.xlu0 30
        %2366 = vperm.xlu0 %2365, %v1070
        %v2367 = vpop.permute.xlu0 %2366
        %vm2368 = vcmp.eq.s32.totalorder %v2364, %v1032
        %vm2369 = vcmp.eq.s32.totalorder %v2367, %v1032
        %2370 = vset.pattern.permute.xlu0 26
        %2371 = vperm.xlu0 %2370, %v2192
        %v2372 = vpop.permute.xlu0 %2371
        %2374 = vset.pattern.permute.xlu0 26
        %2375 = vperm.xlu0 %2374, %v2193
        %v2376 = vpop.permute.xlu0 %2375
        %v2378 = vsel %vm2368, %v2372, 0.0
        %v2379 = vsel %vm2369, %v2376, 0.0
        %v2380 = vadd.f32 %v2360, %v2378
        %v2381 = vadd.f32 %v2361, %v2379
        %2382 = vset.pattern.permute.xlu0 30
        %2383 = vperm.xlu0 %2382, %v1095
        %v2384 = vpop.permute.xlu0 %2383
        %2385 = vset.pattern.permute.xlu0 30
        %2386 = vperm.xlu0 %2385, %v1096
        %v2387 = vpop.permute.xlu0 %2386
        %vm2388 = vcmp.eq.s32.totalorder %v2384, %v1032
        %vm2389 = vcmp.eq.s32.totalorder %v2387, %v1032
        %2390 = vset.pattern.permute.xlu0 26
        %2391 = vperm.xlu0 %2390, %v2222
        %v2392 = vpop.permute.xlu0 %2391
        %2394 = vset.pattern.permute.xlu0 26
        %2395 = vperm.xlu0 %2394, %v2223
        %v2396 = vpop.permute.xlu0 %2395
        %v2398 = vsel %vm2388, %v2392, 0.0
        %v2399 = vsel %vm2389, %v2396, 0.0
        %v2400 = vadd.f32 %v2380, %v2398
        %v2401 = vadd.f32 %v2381, %v2399
        %2402 = vset.pattern.permute.xlu0 30
        %2403 = vperm.xlu0 %2402, %v1129
        %v2404 = vpop.permute.xlu0 %2403
        %2405 = vset.pattern.permute.xlu0 30
        %2406 = vperm.xlu0 %2405, %v1130
        %v2407 = vpop.permute.xlu0 %2406
        %vm2408 = vcmp.eq.s32.totalorder %v2404, %v1032
        %vm2409 = vcmp.eq.s32.totalorder %v2407, %v1032
        %2410 = vset.pattern.permute.xlu0 26
        %2411 = vperm.xlu0 %2410, %v2246
        %v2412 = vpop.permute.xlu0 %2411
        %2414 = vset.pattern.permute.xlu0 26
        %2415 = vperm.xlu0 %2414, %v2247
        %v2416 = vpop.permute.xlu0 %2415
        %v2418 = vsel %vm2408, %v2412, 0.0
        %v2419 = vsel %vm2409, %v2416, 0.0
        %v2420 = vadd.f32 %v2400, %v2418
        %v2421 = vadd.f32 %v2401, %v2419
        %2422 = vset.pattern.permute.xlu0 31
        %2423 = vperm.xlu0 %2422, %v1029
        %v2424 = vpop.permute.xlu0 %2423
        %2425 = vset.pattern.permute.xlu0 31
        %2426 = vperm.xlu0 %2425, %v1030
        %v2427 = vpop.permute.xlu0 %2426
        %vm2428 = vcmp.eq.s32.totalorder %v2424, %v1032
        %vm2429 = vcmp.eq.s32.totalorder %v2427, %v1032
        %2430 = vset.pattern.permute.xlu0 27
        %2431 = vperm.xlu0 %2430, %v2168
        %v2432 = vpop.permute.xlu0 %2431
        %2434 = vset.pattern.permute.xlu0 27
        %2435 = vperm.xlu0 %2434, %v2169
        %v2436 = vpop.permute.xlu0 %2435
        %v2438 = vsel %vm2428, %v2432, 0.0
        %v2439 = vsel %vm2429, %v2436, 0.0
        %v2440 = vadd.f32 %v2420, %v2438
        %v2441 = vadd.f32 %v2421, %v2439
        %2442 = vset.pattern.permute.xlu0 31
        %2443 = vperm.xlu0 %2442, %v1069
        %v2444 = vpop.permute.xlu0 %2443
        %2445 = vset.pattern.permute.xlu0 31
        %2446 = vperm.xlu0 %2445, %v1070
        %v2447 = vpop.permute.xlu0 %2446
        %vm2448 = vcmp.eq.s32.totalorder %v2444, %v1032
        %vm2449 = vcmp.eq.s32.totalorder %v2447, %v1032
        %2450 = vset.pattern.permute.xlu0 27
        %2451 = vperm.xlu0 %2450, %v2192
        %v2452 = vpop.permute.xlu0 %2451
        %2454 = vset.pattern.permute.xlu0 27
        %2455 = vperm.xlu0 %2454, %v2193
        %v2456 = vpop.permute.xlu0 %2455
        %v2458 = vsel %vm2448, %v2452, 0.0
        %v2459 = vsel %vm2449, %v2456, 0.0
        %v2460 = vadd.f32 %v2440, %v2458
        %v2461 = vadd.f32 %v2441, %v2459
        %2462 = vset.pattern.permute.xlu0 31
        %2463 = vperm.xlu0 %2462, %v1095
        %v2464 = vpop.permute.xlu0 %2463
        %2465 = vset.pattern.permute.xlu0 31
        %2466 = vperm.xlu0 %2465, %v1096
        %v2467 = vpop.permute.xlu0 %2466
        %vm2468 = vcmp.eq.s32.totalorder %v2464, %v1032
        %vm2469 = vcmp.eq.s32.totalorder %v2467, %v1032
        %2470 = vset.pattern.permute.xlu0 27
        %2471 = vperm.xlu0 %2470, %v2222
        %v2472 = vpop.permute.xlu0 %2471
        %2474 = vset.pattern.permute.xlu0 27
        %2475 = vperm.xlu0 %2474, %v2223
        %v2476 = vpop.permute.xlu0 %2475
        %v2478 = vsel %vm2468, %v2472, 0.0
        %v2479 = vsel %vm2469, %v2476, 0.0
        %v2480 = vadd.f32 %v2460, %v2478
        %v2481 = vadd.f32 %v2461, %v2479
        %2482 = vset.pattern.permute.xlu0 31
        %2483 = vperm.xlu0 %2482, %v1129
        %v2484 = vpop.permute.xlu0 %2483
        %2485 = vset.pattern.permute.xlu0 31
        %2486 = vperm.xlu0 %2485, %v1130
        %v2487 = vpop.permute.xlu0 %2486
        %vm2488 = vcmp.eq.s32.totalorder %v2484, %v1032
        %vm2489 = vcmp.eq.s32.totalorder %v2487, %v1032
        %2490 = vset.pattern.permute.xlu0 27
        %2491 = vperm.xlu0 %2490, %v2246
        %v2492 = vpop.permute.xlu0 %2491
        %2494 = vset.pattern.permute.xlu0 27
        %2495 = vperm.xlu0 %2494, %v2247
        %v2496 = vpop.permute.xlu0 %2495
        %v2498 = vsel %vm2488, %v2492, 0.0
        %v2499 = vsel %vm2489, %v2496, 0.0
        %v2500 = vadd.f32 %v2480, %v2498
        %v2501 = vadd.f32 %v2481, %v2499
        %v2502 = vpack.c.bf16 %v2501, %v2500
        %v2503 = vmul.f32 %v732, 4.0
        %v2504 = vmul.f32 %v733, 4.0
        %2506 = vset.pattern.permute.xlu0 2
        %2507 = vperm.xlu0 %2506, %v2503
        %v2508 = vpop.permute.xlu0 %2507
        %2511 = vset.pattern.permute.xlu0 2
        %2512 = vperm.xlu0 %2511, %v2504
        %v2513 = vpop.permute.xlu0 %2512
        %v2515 = vadd.f32 %v2508, %v773
        %v2516 = vadd.f32 %v2513, %v775
        %v2517 = vsub.f32 %v2515, 0.5
        %v2518 = vsub.f32 %v2516, 0.5
        %2519 = vset.pattern.permute.xlu0 3
        %2520 = vperm.xlu0 %2519, %v2503
        %v2521 = vpop.permute.xlu0 %2520
        %2523 = vset.pattern.permute.xlu0 3
        %2524 = vperm.xlu0 %2523, %v2504
        %v2525 = vpop.permute.xlu0 %2524
        %v2527 = vadd.f32 %v2521, %v773
        %v2528 = vadd.f32 %v2525, %v775
        %v2529 = vsub.f32 %v2527, 0.5
        %v2530 = vsub.f32 %v2528, 0.5
        %v2531 = vfloor.f32 %v2517
        %v2532 = vfloor.f32 %v2518
        %v2533 = vfloor.f32 %v2529
        %v2534 = vfloor.f32 %v2530
        %v2535 = vsub.f32 %v2517, %v2531
        %v2536 = vsub.f32 %v2518, %v2532
        %v2537 = vsub.f32 %v2529, %v2533
        %v2538 = vsub.f32 %v2530, %v2534
        %v2539 = vcvt.f32.s32.to.zero.pseudo %v2531
        %v2540 = vcvt.f32.s32.to.zero.pseudo %v2532
        %v2541 = vcvt.f32.s32.to.zero.pseudo %v2533
        %v2542 = vcvt.f32.s32.to.zero.pseudo %v2534
        %v2543 = vadd.s32 %v2539, 1
        %v2544 = vadd.s32 %v2540, 1
        %v2545 = vadd.s32 %v2541, 1
        %v2546 = vadd.s32 %v2542, 1
        %vm2547 = vcmp.ge.s32.totalorder %v2539, 0
        %vm2548 = vcmp.ge.s32.totalorder %v2540, 0
        %vm2549 = vcmp.le.s32.totalorder %v2539, 3
        %vm2550 = vcmp.le.s32.totalorder %v2540, 3
        %vm2551 = vmand %vm2547, %vm2549
        %vm2552 = vmand %vm2548, %vm2550
        %v2553 = vsel %vm2551, 1, 0
        %v2554 = vsel %vm2552, 1, 0
        %v2555 = vcvt.s32.f32 %v2553
        %v2556 = vcvt.s32.f32 %v2554
        %vm2557 = vcmp.ge.s32.totalorder %v2543, 0
        %vm2558 = vcmp.ge.s32.totalorder %v2544, 0
        %vm2559 = vcmp.le.s32.totalorder %v2543, 3
        %vm2560 = vcmp.le.s32.totalorder %v2544, 3
        %vm2561 = vmand %vm2557, %vm2559
        %vm2562 = vmand %vm2558, %vm2560
        %v2563 = vsel %vm2561, 1, 0
        %v2564 = vsel %vm2562, 1, 0
        %v2565 = vcvt.s32.f32 %v2563
        %v2566 = vcvt.s32.f32 %v2564
        %vm2567 = vcmp.ge.s32.totalorder %v2541, 0
        %vm2568 = vcmp.ge.s32.totalorder %v2542, 0
        %vm2569 = vcmp.le.s32.totalorder %v2541, 3
        %vm2570 = vcmp.le.s32.totalorder %v2542, 3
        %vm2571 = vmand %vm2567, %vm2569
        %vm2572 = vmand %vm2568, %vm2570
        %v2573 = vsel %vm2571, 1, 0
        %v2574 = vsel %vm2572, 1, 0
        %v2575 = vcvt.s32.f32 %v2573
        %v2576 = vcvt.s32.f32 %v2574
        %vm2577 = vcmp.ge.s32.totalorder %v2545, 0
        %vm2578 = vcmp.ge.s32.totalorder %v2546, 0
        %vm2579 = vcmp.le.s32.totalorder %v2545, 3
        %vm2580 = vcmp.le.s32.totalorder %v2546, 3
        %vm2581 = vmand %vm2577, %vm2579
        %vm2582 = vmand %vm2578, %vm2580
        %v2583 = vsel %vm2581, 1, 0
        %v2584 = vsel %vm2582, 1, 0
        %v2585 = vcvt.s32.f32 %v2583
        %v2586 = vcvt.s32.f32 %v2584
        %v2587 = vsub.f32 1.0, %v2535
        %v2588 = vsub.f32 1.0, %v2536
        %v2589 = vmul.f32 %v2587, %v2555
        %v2590 = vmul.f32 %v2588, %v2556
        %v2591 = vmul.f32 %v2535, %v2565
        %v2592 = vmul.f32 %v2536, %v2566
        %v2593 = vsub.f32 1.0, %v2537
        %v2594 = vsub.f32 1.0, %v2538
        %v2595 = vmul.f32 %v2593, %v2575
        %v2596 = vmul.f32 %v2594, %v2576
        %v2597 = vmul.f32 %v2537, %v2585
        %v2598 = vmul.f32 %v2538, %v2586
        %v2599 = vmul.u32 %v2541, 4
        %v2600 = vmul.u32 %v2542, 4
        %2601 = vrot.lane.b32.xlu0 %v2539, 16
        %v2602 = vpop.permute.xlu0 %2601
        %2603 = vrot.lane.b32.xlu0 %v2540, 16
        %v2604 = vpop.permute.xlu0 %2603
        %v2605 = vadd.s32 %v2599, %v2602
        %v2606 = vadd.s32 %v2600, %v2604
        %2609 = vrot.lane.b32.xlu0 %v2589, 100
        %v2610 = vpop.permute.xlu0 %2609
        %2611 = vrot.lane.b32.xlu0 %v2590, 100
        %v2612 = vpop.permute.xlu0 %2611
        %v2615 = vmul.f32 %v832, %v2610
        %v2616 = vmul.f32 %v833, %v2612
        %2619 = vrot.lane.b32.xlu0 %v2591, 100
        %v2620 = vpop.permute.xlu0 %2619
        %2621 = vrot.lane.b32.xlu0 %v2592, 100
        %v2622 = vpop.permute.xlu0 %2621
        %v2625 = vmul.f32 %v832, %v2620
        %v2626 = vmul.f32 %v833, %v2622
        %2627 = vset.pattern.permute.xlu0 48
        %2628 = vperm.xlu0 %2627, %v2605
        %v2629 = vpop.permute.xlu0 %2628
        %2630 = vset.pattern.permute.xlu0 48
        %2631 = vperm.xlu0 %2630, %v2606
        %v2632 = vpop.permute.xlu0 %2631
        %vm2633 = vcmp.eq.s32.totalorder %v2629, %v1032
        %vm2634 = vcmp.eq.s32.totalorder %v2632, %v1032
        %2637 = vrot.lane.b32.xlu0 %v2595, 84
        %v2638 = vpop.permute.xlu0 %2637
        %2639 = vrot.lane.b32.xlu0 %v2596, 84
        %v2640 = vpop.permute.xlu0 %2639
        %v2643 = vmul.f32 %v2615, %v2638
        %v2644 = vmul.f32 %v2616, %v2640
        %2646 = vset.pattern.permute.xlu0 4
        %2647 = vperm.xlu0 %2646, %v2643
        %v2648 = vpop.permute.xlu0 %2647
        %2651 = vset.pattern.permute.xlu0 4
        %2652 = vperm.xlu0 %2651, %v2644
        %v2653 = vpop.permute.xlu0 %2652
        %v2655 = vsel %vm2633, %v2648, 0.0
        %v2656 = vsel %vm2634, %v2653, 0.0
        %v2657 = vadd.f32 %v2655, 0.0
        %v2658 = vadd.f32 %v2656, 0.0
        %v2659 = vadd.s32 %v2605, 1
        %v2660 = vadd.s32 %v2606, 1
        %2661 = vset.pattern.permute.xlu0 48
        %2662 = vperm.xlu0 %2661, %v2659
        %v2663 = vpop.permute.xlu0 %2662
        %2664 = vset.pattern.permute.xlu0 48
        %2665 = vperm.xlu0 %2664, %v2660
        %v2666 = vpop.permute.xlu0 %2665
        %vm2667 = vcmp.eq.s32.totalorder %v2663, %v1032
        %vm2668 = vcmp.eq.s32.totalorder %v2666, %v1032
        %v2669 = vmul.f32 %v2625, %v2638
        %v2670 = vmul.f32 %v2626, %v2640
        %2672 = vset.pattern.permute.xlu0 4
        %2673 = vperm.xlu0 %2672, %v2669
        %v2674 = vpop.permute.xlu0 %2673
        %2677 = vset.pattern.permute.xlu0 4
        %2678 = vperm.xlu0 %2677, %v2670
        %v2679 = vpop.permute.xlu0 %2678
        %v2681 = vsel %vm2667, %v2674, 0.0
        %v2682 = vsel %vm2668, %v2679, 0.0
        %v2683 = vadd.f32 %v2657, %v2681
        %v2684 = vadd.f32 %v2658, %v2682
        %v2685 = vadd.s32 %v2605, 4
        %v2686 = vadd.s32 %v2606, 4
        %2687 = vset.pattern.permute.xlu0 48
        %2688 = vperm.xlu0 %2687, %v2685
        %v2689 = vpop.permute.xlu0 %2688
        %2690 = vset.pattern.permute.xlu0 48
        %2691 = vperm.xlu0 %2690, %v2686
        %v2692 = vpop.permute.xlu0 %2691
        %vm2693 = vcmp.eq.s32.totalorder %v2689, %v1032
        %vm2694 = vcmp.eq.s32.totalorder %v2692, %v1032
        %2697 = vrot.lane.b32.xlu0 %v2597, 84
        %v2698 = vpop.permute.xlu0 %2697
        %2699 = vrot.lane.b32.xlu0 %v2598, 84
        %v2700 = vpop.permute.xlu0 %2699
        %v2703 = vmul.f32 %v2615, %v2698
        %v2704 = vmul.f32 %v2616, %v2700
        %2706 = vset.pattern.permute.xlu0 4
        %2707 = vperm.xlu0 %2706, %v2703
        %v2708 = vpop.permute.xlu0 %2707
        %2711 = vset.pattern.permute.xlu0 4
        %2712 = vperm.xlu0 %2711, %v2704
        %v2713 = vpop.permute.xlu0 %2712
        %v2715 = vsel %vm2693, %v2708, 0.0
        %v2716 = vsel %vm2694, %v2713, 0.0
        %v2717 = vadd.f32 %v2683, %v2715
        %v2718 = vadd.f32 %v2684, %v2716
        %v2719 = vadd.s32 %v2685, 1
        %v2720 = vadd.s32 %v2686, 1
        %2721 = vset.pattern.permute.xlu0 48
        %2722 = vperm.xlu0 %2721, %v2719
        %v2723 = vpop.permute.xlu0 %2722
        %2724 = vset.pattern.permute.xlu0 48
        %2725 = vperm.xlu0 %2724, %v2720
        %v2726 = vpop.permute.xlu0 %2725
        %vm2727 = vcmp.eq.s32.totalorder %v2723, %v1032
        %vm2728 = vcmp.eq.s32.totalorder %v2726, %v1032
        %v2729 = vmul.f32 %v2625, %v2698
        %v2730 = vmul.f32 %v2626, %v2700
        %2732 = vset.pattern.permute.xlu0 4
        %2733 = vperm.xlu0 %2732, %v2729
        %v2734 = vpop.permute.xlu0 %2733
        %2737 = vset.pattern.permute.xlu0 4
        %2738 = vperm.xlu0 %2737, %v2730
        %v2739 = vpop.permute.xlu0 %2738
        %v2741 = vsel %vm2727, %v2734, 0.0
        %v2742 = vsel %vm2728, %v2739, 0.0
        %v2743 = vadd.f32 %v2717, %v2741
        %v2744 = vadd.f32 %v2718, %v2742
        %2745 = vset.pattern.permute.xlu0 49
        %2746 = vperm.xlu0 %2745, %v2605
        %v2747 = vpop.permute.xlu0 %2746
        %2748 = vset.pattern.permute.xlu0 49
        %2749 = vperm.xlu0 %2748, %v2606
        %v2750 = vpop.permute.xlu0 %2749
        %vm2751 = vcmp.eq.s32.totalorder %v2747, %v1032
        %vm2752 = vcmp.eq.s32.totalorder %v2750, %v1032
        %2753 = vset.pattern.permute.xlu0 5
        %2754 = vperm.xlu0 %2753, %v2643
        %v2755 = vpop.permute.xlu0 %2754
        %2757 = vset.pattern.permute.xlu0 5
        %2758 = vperm.xlu0 %2757, %v2644
        %v2759 = vpop.permute.xlu0 %2758
        %v2761 = vsel %vm2751, %v2755, 0.0
        %v2762 = vsel %vm2752, %v2759, 0.0
        %v2763 = vadd.f32 %v2743, %v2761
        %v2764 = vadd.f32 %v2744, %v2762
        %2765 = vset.pattern.permute.xlu0 49
        %2766 = vperm.xlu0 %2765, %v2659
        %v2767 = vpop.permute.xlu0 %2766
        %2768 = vset.pattern.permute.xlu0 49
        %2769 = vperm.xlu0 %2768, %v2660
        %v2770 = vpop.permute.xlu0 %2769
        %vm2771 = vcmp.eq.s32.totalorder %v2767, %v1032
        %vm2772 = vcmp.eq.s32.totalorder %v2770, %v1032
        %2773 = vset.pattern.permute.xlu0 5
        %2774 = vperm.xlu0 %2773, %v2669
        %v2775 = vpop.permute.xlu0 %2774
        %2777 = vset.pattern.permute.xlu0 5
        %2778 = vperm.xlu0 %2777, %v2670
        %v2779 = vpop.permute.xlu0 %2778
        %v2781 = vsel %vm2771, %v2775, 0.0
        %v2782 = vsel %vm2772, %v2779, 0.0
        %v2783 = vadd.f32 %v2763, %v2781
        %v2784 = vadd.f32 %v2764, %v2782
        %2785 = vset.pattern.permute.xlu0 49
        %2786 = vperm.xlu0 %2785, %v2685
        %v2787 = vpop.permute.xlu0 %2786
        %2788 = vset.pattern.permute.xlu0 49
        %2789 = vperm.xlu0 %2788, %v2686
        %v2790 = vpop.permute.xlu0 %2789
        %vm2791 = vcmp.eq.s32.totalorder %v2787, %v1032
        %vm2792 = vcmp.eq.s32.totalorder %v2790, %v1032
        %2793 = vset.pattern.permute.xlu0 5
        %2794 = vperm.xlu0 %2793, %v2703
        %v2795 = vpop.permute.xlu0 %2794
        %2797 = vset.pattern.permute.xlu0 5
        %2798 = vperm.xlu0 %2797, %v2704
        %v2799 = vpop.permute.xlu0 %2798
        %v2801 = vsel %vm2791, %v2795, 0.0
        %v2802 = vsel %vm2792, %v2799, 0.0
        %v2803 = vadd.f32 %v2783, %v2801
        %v2804 = vadd.f32 %v2784, %v2802
        %2805 = vset.pattern.permute.xlu0 49
        %2806 = vperm.xlu0 %2805, %v2719
        %v2807 = vpop.permute.xlu0 %2806
        %2808 = vset.pattern.permute.xlu0 49
        %2809 = vperm.xlu0 %2808, %v2720
        %v2810 = vpop.permute.xlu0 %2809
        %vm2811 = vcmp.eq.s32.totalorder %v2807, %v1032
        %vm2812 = vcmp.eq.s32.totalorder %v2810, %v1032
        %2813 = vset.pattern.permute.xlu0 5
        %2814 = vperm.xlu0 %2813, %v2729
        %v2815 = vpop.permute.xlu0 %2814
        %2817 = vset.pattern.permute.xlu0 5
        %2818 = vperm.xlu0 %2817, %v2730
        %v2819 = vpop.permute.xlu0 %2818
        %v2821 = vsel %vm2811, %v2815, 0.0
        %v2822 = vsel %vm2812, %v2819, 0.0
        %v2823 = vadd.f32 %v2803, %v2821
        %v2824 = vadd.f32 %v2804, %v2822
        %2825 = vset.pattern.permute.xlu0 50
        %2826 = vperm.xlu0 %2825, %v2605
        %v2827 = vpop.permute.xlu0 %2826
        %2828 = vset.pattern.permute.xlu0 50
        %2829 = vperm.xlu0 %2828, %v2606
        %v2830 = vpop.permute.xlu0 %2829
        %vm2831 = vcmp.eq.s32.totalorder %v2827, %v1032
        %vm2832 = vcmp.eq.s32.totalorder %v2830, %v1032
        %2833 = vset.pattern.permute.xlu0 6
        %2834 = vperm.xlu0 %2833, %v2643
        %v2835 = vpop.permute.xlu0 %2834
        %2837 = vset.pattern.permute.xlu0 6
        %2838 = vperm.xlu0 %2837, %v2644
        %v2839 = vpop.permute.xlu0 %2838
        %v2841 = vsel %vm2831, %v2835, 0.0
        %v2842 = vsel %vm2832, %v2839, 0.0
        %v2843 = vadd.f32 %v2823, %v2841
        %v2844 = vadd.f32 %v2824, %v2842
        %2845 = vset.pattern.permute.xlu0 50
        %2846 = vperm.xlu0 %2845, %v2659
        %v2847 = vpop.permute.xlu0 %2846
        %2848 = vset.pattern.permute.xlu0 50
        %2849 = vperm.xlu0 %2848, %v2660
        %v2850 = vpop.permute.xlu0 %2849
        %vm2851 = vcmp.eq.s32.totalorder %v2847, %v1032
        %vm2852 = vcmp.eq.s32.totalorder %v2850, %v1032
        %2853 = vset.pattern.permute.xlu0 6
        %2854 = vperm.xlu0 %2853, %v2669
        %v2855 = vpop.permute.xlu0 %2854
        %2857 = vset.pattern.permute.xlu0 6
        %2858 = vperm.xlu0 %2857, %v2670
        %v2859 = vpop.permute.xlu0 %2858
        %v2861 = vsel %vm2851, %v2855, 0.0
        %v2862 = vsel %vm2852, %v2859, 0.0
        %v2863 = vadd.f32 %v2843, %v2861
        %v2864 = vadd.f32 %v2844, %v2862
        %2865 = vset.pattern.permute.xlu0 50
        %2866 = vperm.xlu0 %2865, %v2685
        %v2867 = vpop.permute.xlu0 %2866
        %2868 = vset.pattern.permute.xlu0 50
        %2869 = vperm.xlu0 %2868, %v2686
        %v2870 = vpop.permute.xlu0 %2869
        %vm2871 = vcmp.eq.s32.totalorder %v2867, %v1032
        %vm2872 = vcmp.eq.s32.totalorder %v2870, %v1032
        %2873 = vset.pattern.permute.xlu0 6
        %2874 = vperm.xlu0 %2873, %v2703
        %v2875 = vpop.permute.xlu0 %2874
        %2877 = vset.pattern.permute.xlu0 6
        %2878 = vperm.xlu0 %2877, %v2704
        %v2879 = vpop.permute.xlu0 %2878
        %v2881 = vsel %vm2871, %v2875, 0.0
        %v2882 = vsel %vm2872, %v2879, 0.0
        %v2883 = vadd.f32 %v2863, %v2881
        %v2884 = vadd.f32 %v2864, %v2882
        %2885 = vset.pattern.permute.xlu0 50
        %2886 = vperm.xlu0 %2885, %v2719
        %v2887 = vpop.permute.xlu0 %2886
        %2888 = vset.pattern.permute.xlu0 50
        %2889 = vperm.xlu0 %2888, %v2720
        %v2890 = vpop.permute.xlu0 %2889
        %vm2891 = vcmp.eq.s32.totalorder %v2887, %v1032
        %vm2892 = vcmp.eq.s32.totalorder %v2890, %v1032
        %2893 = vset.pattern.permute.xlu0 6
        %2894 = vperm.xlu0 %2893, %v2729
        %v2895 = vpop.permute.xlu0 %2894
        %2897 = vset.pattern.permute.xlu0 6
        %2898 = vperm.xlu0 %2897, %v2730
        %v2899 = vpop.permute.xlu0 %2898
        %v2901 = vsel %vm2891, %v2895, 0.0
        %v2902 = vsel %vm2892, %v2899, 0.0
        %v2903 = vadd.f32 %v2883, %v2901
        %v2904 = vadd.f32 %v2884, %v2902
        %2905 = vset.pattern.permute.xlu0 51
        %2906 = vperm.xlu0 %2905, %v2605
        %v2907 = vpop.permute.xlu0 %2906
        %2908 = vset.pattern.permute.xlu0 51
        %2909 = vperm.xlu0 %2908, %v2606
        %v2910 = vpop.permute.xlu0 %2909
        %vm2911 = vcmp.eq.s32.totalorder %v2907, %v1032
        %vm2912 = vcmp.eq.s32.totalorder %v2910, %v1032
        %2913 = vset.pattern.permute.xlu0 7
        %2914 = vperm.xlu0 %2913, %v2643
        %v2915 = vpop.permute.xlu0 %2914
        %2917 = vset.pattern.permute.xlu0 7
        %2918 = vperm.xlu0 %2917, %v2644
        %v2919 = vpop.permute.xlu0 %2918
        %v2921 = vsel %vm2911, %v2915, 0.0
        %v2922 = vsel %vm2912, %v2919, 0.0
        %v2923 = vadd.f32 %v2903, %v2921
        %v2924 = vadd.f32 %v2904, %v2922
        %2925 = vset.pattern.permute.xlu0 51
        %2926 = vperm.xlu0 %2925, %v2659
        %v2927 = vpop.permute.xlu0 %2926
        %2928 = vset.pattern.permute.xlu0 51
        %2929 = vperm.xlu0 %2928, %v2660
        %v2930 = vpop.permute.xlu0 %2929
        %vm2931 = vcmp.eq.s32.totalorder %v2927, %v1032
        %vm2932 = vcmp.eq.s32.totalorder %v2930, %v1032
        %2933 = vset.pattern.permute.xlu0 7
        %2934 = vperm.xlu0 %2933, %v2669
        %v2935 = vpop.permute.xlu0 %2934
        %2937 = vset.pattern.permute.xlu0 7
        %2938 = vperm.xlu0 %2937, %v2670
        %v2939 = vpop.permute.xlu0 %2938
        %v2941 = vsel %vm2931, %v2935, 0.0
        %v2942 = vsel %vm2932, %v2939, 0.0
        %v2943 = vadd.f32 %v2923, %v2941
        %v2944 = vadd.f32 %v2924, %v2942
        %2945 = vset.pattern.permute.xlu0 51
        %2946 = vperm.xlu0 %2945, %v2685
        %v2947 = vpop.permute.xlu0 %2946
        %2948 = vset.pattern.permute.xlu0 51
        %2949 = vperm.xlu0 %2948, %v2686
        %v2950 = vpop.permute.xlu0 %2949
        %vm2951 = vcmp.eq.s32.totalorder %v2947, %v1032
        %vm2952 = vcmp.eq.s32.totalorder %v2950, %v1032
        %2953 = vset.pattern.permute.xlu0 7
        %2954 = vperm.xlu0 %2953, %v2703
        %v2955 = vpop.permute.xlu0 %2954
        %2957 = vset.pattern.permute.xlu0 7
        %2958 = vperm.xlu0 %2957, %v2704
        %v2959 = vpop.permute.xlu0 %2958
        %v2961 = vsel %vm2951, %v2955, 0.0
        %v2962 = vsel %vm2952, %v2959, 0.0
        %v2963 = vadd.f32 %v2943, %v2961
        %v2964 = vadd.f32 %v2944, %v2962
        %2965 = vset.pattern.permute.xlu0 51
        %2966 = vperm.xlu0 %2965, %v2719
        %v2967 = vpop.permute.xlu0 %2966
        %2968 = vset.pattern.permute.xlu0 51
        %2969 = vperm.xlu0 %2968, %v2720
        %v2970 = vpop.permute.xlu0 %2969
        %vm2971 = vcmp.eq.s32.totalorder %v2967, %v1032
        %vm2972 = vcmp.eq.s32.totalorder %v2970, %v1032
        %2973 = vset.pattern.permute.xlu0 7
        %2974 = vperm.xlu0 %2973, %v2729
        %v2975 = vpop.permute.xlu0 %2974
        %2977 = vset.pattern.permute.xlu0 7
        %2978 = vperm.xlu0 %2977, %v2730
        %v2979 = vpop.permute.xlu0 %2978
        %v2981 = vsel %vm2971, %v2975, 0.0
        %v2982 = vsel %vm2972, %v2979, 0.0
        %v2983 = vadd.f32 %v2963, %v2981
        %v2984 = vadd.f32 %v2964, %v2982
        %v2985 = vld [vmem:[#allocation2 + $0x20] sm:$0xf]
        %v2986 = vld [vmem:[#allocation2 + $0x24] sm:$0xf]
        %v2987 = vpack.c.bf16 %v2984, %v2983
        %v2990 = vunpack.c.l.b16 %v2985
        %v2991 = vunpack.c.l.b16 %v2986
        %v2992 = vpack.c.b16 %v2991, %v2990
        %vm2994 = vcmask 130048
        %v2996 = vsel %vm2994, %v2987, 0
        %2998 = vmatpush.bf16.msra.mxu0 0
        %2999 = vmatpush.bf16.msra.mxu0 0
        %3000 = vmatpush.bf16.msra.mxu0 0
        %3001 = vmatpush.bf16.msra.mxu0 0
        %3002 = vmatpush.bf16.msra.mxu0 0
        %3003 = vmatpush.bf16.msra.mxu0 0
        %3004 = vmatpush.bf16.msra.mxu0 0
        %3005 = vmatpush.bf16.msra.mxu0 %v2992
        %3006 = vmatmul.bf16.gmra.mxu0 %v2996
        %v3007 = vpop.f32.mrf.mxu0
        %v3008 = vadd.f32 0.0, %v3007
        %v3009 = vpop.f32.mrf.mxu0
        %v3010 = vadd.f32 0.0, %v3009
        %3011 = vdwg.mxu0
        %v3020 = vunpack.c.l.b16 %v1395
        %v3021 = vunpack.c.l.b16 %v1396
        %v3022 = vunpack.c.l.b16 %v1397
        %v3023 = vunpack.c.l.b16 %v1398
        %v3024 = vunpack.c.l.b16 %v1399
        %v3025 = vunpack.c.l.b16 %v1400
        %v3026 = vunpack.c.l.b16 %v1401
        %v3027 = vunpack.c.l.b16 %v1402
        %v3028 = vpack.c.b16 %v3021, %v3020
        %v3029 = vpack.c.b16 %v3023, %v3022
        %v3030 = vpack.c.b16 %v3025, %v3024
        %v3031 = vpack.c.b16 %v3027, %v3026
        %vm3036 = vcmask 523264
        %v3038 = vsel %vm3036, %v1403, 0
        %3040 = vmatpush.bf16.msra.mxu0 0
        %3041 = vmatpush.bf16.msra.mxu0 0
        %3042 = vmatpush.bf16.msra.mxu0 0
        %3043 = vmatpush.bf16.msra.mxu0 0
        %3044 = vmatpush.bf16.msra.mxu0 %v3031
        %3045 = vmatpush.bf16.msra.mxu0 %v3030
        %3046 = vmatpush.bf16.msra.mxu0 %v3029
        %3047 = vmatpush.bf16.msra.mxu0 %v3028
        %3048 = vmatmul.bf16.gmra.mxu0 %v3038
        %v3049 = vpop.f32.mrf.mxu0
        %v3050 = vadd.f32 %v3008, %v3049
        %v3051 = vpop.f32.mrf.mxu0
        %v3052 = vadd.f32 %v3010, %v3051
        %3053 = vdwg.mxu0
        %3054 = vrot.lane.b32.xlu0 %v2589, 104
        %v3055 = vpop.permute.xlu0 %3054
        %3056 = vrot.lane.b32.xlu0 %v2590, 104
        %v3057 = vpop.permute.xlu0 %3056
        %v3060 = vmul.f32 %v863, %v3055
        %v3061 = vmul.f32 %v864, %v3057
        %3062 = vrot.lane.b32.xlu0 %v2591, 104
        %v3063 = vpop.permute.xlu0 %3062
        %3064 = vrot.lane.b32.xlu0 %v2592, 104
        %v3065 = vpop.permute.xlu0 %3064
        %v3068 = vmul.f32 %v863, %v3063
        %v3069 = vmul.f32 %v864, %v3065
        %3070 = vset.pattern.permute.xlu0 52
        %3071 = vperm.xlu0 %3070, %v2605
        %v3072 = vpop.permute.xlu0 %3071
        %3073 = vset.pattern.permute.xlu0 52
        %3074 = vperm.xlu0 %3073, %v2606
        %v3075 = vpop.permute.xlu0 %3074
        %vm3076 = vcmp.eq.s32.totalorder %v3072, %v1032
        %vm3077 = vcmp.eq.s32.totalorder %v3075, %v1032
        %3078 = vrot.lane.b32.xlu0 %v2595, 88
        %v3079 = vpop.permute.xlu0 %3078
        %3080 = vrot.lane.b32.xlu0 %v2596, 88
        %v3081 = vpop.permute.xlu0 %3080
        %v3084 = vmul.f32 %v3060, %v3079
        %v3085 = vmul.f32 %v3061, %v3081
        %3087 = vset.pattern.permute.xlu0 12
        %3088 = vperm.xlu0 %3087, %v3084
        %v3089 = vpop.permute.xlu0 %3088
        %3092 = vset.pattern.permute.xlu0 12
        %3093 = vperm.xlu0 %3092, %v3085
        %v3094 = vpop.permute.xlu0 %3093
        %v3096 = vsel %vm3076, %v3089, 0.0
        %v3097 = vsel %vm3077, %v3094, 0.0
        %v3098 = vadd.f32 %v3096, 0.0
        %v3099 = vadd.f32 %v3097, 0.0
        %3100 = vset.pattern.permute.xlu0 52
        %3101 = vperm.xlu0 %3100, %v2659
        %v3102 = vpop.permute.xlu0 %3101
        %3103 = vset.pattern.permute.xlu0 52
        %3104 = vperm.xlu0 %3103, %v2660
        %v3105 = vpop.permute.xlu0 %3104
        %vm3106 = vcmp.eq.s32.totalorder %v3102, %v1032
        %vm3107 = vcmp.eq.s32.totalorder %v3105, %v1032
        %v3108 = vmul.f32 %v3068, %v3079
        %v3109 = vmul.f32 %v3069, %v3081
        %3111 = vset.pattern.permute.xlu0 12
        %3112 = vperm.xlu0 %3111, %v3108
        %v3113 = vpop.permute.xlu0 %3112
        %3116 = vset.pattern.permute.xlu0 12
        %3117 = vperm.xlu0 %3116, %v3109
        %v3118 = vpop.permute.xlu0 %3117
        %v3120 = vsel %vm3106, %v3113, 0.0
        %v3121 = vsel %vm3107, %v3118, 0.0
        %v3122 = vadd.f32 %v3098, %v3120
        %v3123 = vadd.f32 %v3099, %v3121
        %3124 = vset.pattern.permute.xlu0 52
        %3125 = vperm.xlu0 %3124, %v2685
        %v3126 = vpop.permute.xlu0 %3125
        %3127 = vset.pattern.permute.xlu0 52
        %3128 = vperm.xlu0 %3127, %v2686
        %v3129 = vpop.permute.xlu0 %3128
        %vm3130 = vcmp.eq.s32.totalorder %v3126, %v1032
        %vm3131 = vcmp.eq.s32.totalorder %v3129, %v1032
        %3132 = vrot.lane.b32.xlu0 %v2597, 88
        %v3133 = vpop.permute.xlu0 %3132
        %3134 = vrot.lane.b32.xlu0 %v2598, 88
        %v3135 = vpop.permute.xlu0 %3134
        %v3138 = vmul.f32 %v3060, %v3133
        %v3139 = vmul.f32 %v3061, %v3135
        %3141 = vset.pattern.permute.xlu0 12
        %3142 = vperm.xlu0 %3141, %v3138
        %v3143 = vpop.permute.xlu0 %3142
        %3146 = vset.pattern.permute.xlu0 12
        %3147 = vperm.xlu0 %3146, %v3139
        %v3148 = vpop.permute.xlu0 %3147
        %v3150 = vsel %vm3130, %v3143, 0.0
        %v3151 = vsel %vm3131, %v3148, 0.0
        %v3152 = vadd.f32 %v3122, %v3150
        %v3153 = vadd.f32 %v3123, %v3151
        %3154 = vset.pattern.permute.xlu0 52
        %3155 = vperm.xlu0 %3154, %v2719
        %v3156 = vpop.permute.xlu0 %3155
        %3157 = vset.pattern.permute.xlu0 52
        %3158 = vperm.xlu0 %3157, %v2720
        %v3159 = vpop.permute.xlu0 %3158
        %vm3160 = vcmp.eq.s32.totalorder %v3156, %v1032
        %vm3161 = vcmp.eq.s32.totalorder %v3159, %v1032
        %v3162 = vmul.f32 %v3068, %v3133
        %v3163 = vmul.f32 %v3069, %v3135
        %3165 = vset.pattern.permute.xlu0 12
        %3166 = vperm.xlu0 %3165, %v3162
        %v3167 = vpop.permute.xlu0 %3166
        %3170 = vset.pattern.permute.xlu0 12
        %3171 = vperm.xlu0 %3170, %v3163
        %v3172 = vpop.permute.xlu0 %3171
        %v3174 = vsel %vm3160, %v3167, 0.0
        %v3175 = vsel %vm3161, %v3172, 0.0
        %v3176 = vadd.f32 %v3152, %v3174
        %v3177 = vadd.f32 %v3153, %v3175
        %3178 = vset.pattern.permute.xlu0 53
        %3179 = vperm.xlu0 %3178, %v2605
        %v3180 = vpop.permute.xlu0 %3179
        %3181 = vset.pattern.permute.xlu0 53
        %3182 = vperm.xlu0 %3181, %v2606
        %v3183 = vpop.permute.xlu0 %3182
        %vm3184 = vcmp.eq.s32.totalorder %v3180, %v1032
        %vm3185 = vcmp.eq.s32.totalorder %v3183, %v1032
        %3186 = vset.pattern.permute.xlu0 13
        %3187 = vperm.xlu0 %3186, %v3084
        %v3188 = vpop.permute.xlu0 %3187
        %3190 = vset.pattern.permute.xlu0 13
        %3191 = vperm.xlu0 %3190, %v3085
        %v3192 = vpop.permute.xlu0 %3191
        %v3194 = vsel %vm3184, %v3188, 0.0
        %v3195 = vsel %vm3185, %v3192, 0.0
        %v3196 = vadd.f32 %v3176, %v3194
        %v3197 = vadd.f32 %v3177, %v3195
        %3198 = vset.pattern.permute.xlu0 53
        %3199 = vperm.xlu0 %3198, %v2659
        %v3200 = vpop.permute.xlu0 %3199
        %3201 = vset.pattern.permute.xlu0 53
        %3202 = vperm.xlu0 %3201, %v2660
        %v3203 = vpop.permute.xlu0 %3202
        %vm3204 = vcmp.eq.s32.totalorder %v3200, %v1032
        %vm3205 = vcmp.eq.s32.totalorder %v3203, %v1032
        %3206 = vset.pattern.permute.xlu0 13
        %3207 = vperm.xlu0 %3206, %v3108
        %v3208 = vpop.permute.xlu0 %3207
        %3210 = vset.pattern.permute.xlu0 13
        %3211 = vperm.xlu0 %3210, %v3109
        %v3212 = vpop.permute.xlu0 %3211
        %v3214 = vsel %vm3204, %v3208, 0.0
        %v3215 = vsel %vm3205, %v3212, 0.0
        %v3216 = vadd.f32 %v3196, %v3214
        %v3217 = vadd.f32 %v3197, %v3215
        %3218 = vset.pattern.permute.xlu0 53
        %3219 = vperm.xlu0 %3218, %v2685
        %v3220 = vpop.permute.xlu0 %3219
        %3221 = vset.pattern.permute.xlu0 53
        %3222 = vperm.xlu0 %3221, %v2686
        %v3223 = vpop.permute.xlu0 %3222
        %vm3224 = vcmp.eq.s32.totalorder %v3220, %v1032
        %vm3225 = vcmp.eq.s32.totalorder %v3223, %v1032
        %3226 = vset.pattern.permute.xlu0 13
        %3227 = vperm.xlu0 %3226, %v3138
        %v3228 = vpop.permute.xlu0 %3227
        %3230 = vset.pattern.permute.xlu0 13
        %3231 = vperm.xlu0 %3230, %v3139
        %v3232 = vpop.permute.xlu0 %3231
        %v3234 = vsel %vm3224, %v3228, 0.0
        %v3235 = vsel %vm3225, %v3232, 0.0
        %v3236 = vadd.f32 %v3216, %v3234
        %v3237 = vadd.f32 %v3217, %v3235
        %3238 = vset.pattern.permute.xlu0 53
        %3239 = vperm.xlu0 %3238, %v2719
        %v3240 = vpop.permute.xlu0 %3239
        %3241 = vset.pattern.permute.xlu0 53
        %3242 = vperm.xlu0 %3241, %v2720
        %v3243 = vpop.permute.xlu0 %3242
        %vm3244 = vcmp.eq.s32.totalorder %v3240, %v1032
        %vm3245 = vcmp.eq.s32.totalorder %v3243, %v1032
        %3246 = vset.pattern.permute.xlu0 13
        %3247 = vperm.xlu0 %3246, %v3162
        %v3248 = vpop.permute.xlu0 %3247
        %3250 = vset.pattern.permute.xlu0 13
        %3251 = vperm.xlu0 %3250, %v3163
        %v3252 = vpop.permute.xlu0 %3251
        %v3254 = vsel %vm3244, %v3248, 0.0
        %v3255 = vsel %vm3245, %v3252, 0.0
        %v3256 = vadd.f32 %v3236, %v3254
        %v3257 = vadd.f32 %v3237, %v3255
        %3258 = vset.pattern.permute.xlu0 54
        %3259 = vperm.xlu0 %3258, %v2605
        %v3260 = vpop.permute.xlu0 %3259
        %3261 = vset.pattern.permute.xlu0 54
        %3262 = vperm.xlu0 %3261, %v2606
        %v3263 = vpop.permute.xlu0 %3262
        %vm3264 = vcmp.eq.s32.totalorder %v3260, %v1032
        %vm3265 = vcmp.eq.s32.totalorder %v3263, %v1032
        %3266 = vset.pattern.permute.xlu0 14
        %3267 = vperm.xlu0 %3266, %v3084
        %v3268 = vpop.permute.xlu0 %3267
        %3270 = vset.pattern.permute.xlu0 14
        %3271 = vperm.xlu0 %3270, %v3085
        %v3272 = vpop.permute.xlu0 %3271
        %v3274 = vsel %vm3264, %v3268, 0.0
        %v3275 = vsel %vm3265, %v3272, 0.0
        %v3276 = vadd.f32 %v3256, %v3274
        %v3277 = vadd.f32 %v3257, %v3275
        %3278 = vset.pattern.permute.xlu0 54
        %3279 = vperm.xlu0 %3278, %v2659
        %v3280 = vpop.permute.xlu0 %3279
        %3281 = vset.pattern.permute.xlu0 54
        %3282 = vperm.xlu0 %3281, %v2660
        %v3283 = vpop.permute.xlu0 %3282
        %vm3284 = vcmp.eq.s32.totalorder %v3280, %v1032
        %vm3285 = vcmp.eq.s32.totalorder %v3283, %v1032
        %3286 = vset.pattern.permute.xlu0 14
        %3287 = vperm.xlu0 %3286, %v3108
        %v3288 = vpop.permute.xlu0 %3287
        %3290 = vset.pattern.permute.xlu0 14
        %3291 = vperm.xlu0 %3290, %v3109
        %v3292 = vpop.permute.xlu0 %3291
        %v3294 = vsel %vm3284, %v3288, 0.0
        %v3295 = vsel %vm3285, %v3292, 0.0
        %v3296 = vadd.f32 %v3276, %v3294
        %v3297 = vadd.f32 %v3277, %v3295
        %3298 = vset.pattern.permute.xlu0 54
        %3299 = vperm.xlu0 %3298, %v2685
        %v3300 = vpop.permute.xlu0 %3299
        %3301 = vset.pattern.permute.xlu0 54
        %3302 = vperm.xlu0 %3301, %v2686
        %v3303 = vpop.permute.xlu0 %3302
        %vm3304 = vcmp.eq.s32.totalorder %v3300, %v1032
        %vm3305 = vcmp.eq.s32.totalorder %v3303, %v1032
        %3306 = vset.pattern.permute.xlu0 14
        %3307 = vperm.xlu0 %3306, %v3138
        %v3308 = vpop.permute.xlu0 %3307
        %3310 = vset.pattern.permute.xlu0 14
        %3311 = vperm.xlu0 %3310, %v3139
        %v3312 = vpop.permute.xlu0 %3311
        %v3314 = vsel %vm3304, %v3308, 0.0
        %v3315 = vsel %vm3305, %v3312, 0.0
        %v3316 = vadd.f32 %v3296, %v3314
        %v3317 = vadd.f32 %v3297, %v3315
        %3318 = vset.pattern.permute.xlu0 54
        %3319 = vperm.xlu0 %3318, %v2719
        %v3320 = vpop.permute.xlu0 %3319
        %3321 = vset.pattern.permute.xlu0 54
        %3322 = vperm.xlu0 %3321, %v2720
        %v3323 = vpop.permute.xlu0 %3322
        %vm3324 = vcmp.eq.s32.totalorder %v3320, %v1032
        %vm3325 = vcmp.eq.s32.totalorder %v3323, %v1032
        %3326 = vset.pattern.permute.xlu0 14
        %3327 = vperm.xlu0 %3326, %v3162
        %v3328 = vpop.permute.xlu0 %3327
        %3330 = vset.pattern.permute.xlu0 14
        %3331 = vperm.xlu0 %3330, %v3163
        %v3332 = vpop.permute.xlu0 %3331
        %v3334 = vsel %vm3324, %v3328, 0.0
        %v3335 = vsel %vm3325, %v3332, 0.0
        %v3336 = vadd.f32 %v3316, %v3334
        %v3337 = vadd.f32 %v3317, %v3335
        %3338 = vset.pattern.permute.xlu0 55
        %3339 = vperm.xlu0 %3338, %v2605
        %v3340 = vpop.permute.xlu0 %3339
        %3341 = vset.pattern.permute.xlu0 55
        %3342 = vperm.xlu0 %3341, %v2606
        %v3343 = vpop.permute.xlu0 %3342
        %vm3344 = vcmp.eq.s32.totalorder %v3340, %v1032
        %vm3345 = vcmp.eq.s32.totalorder %v3343, %v1032
        %3346 = vset.pattern.permute.xlu0 15
        %3347 = vperm.xlu0 %3346, %v3084
        %v3348 = vpop.permute.xlu0 %3347
        %3350 = vset.pattern.permute.xlu0 15
        %3351 = vperm.xlu0 %3350, %v3085
        %v3352 = vpop.permute.xlu0 %3351
        %v3354 = vsel %vm3344, %v3348, 0.0
        %v3355 = vsel %vm3345, %v3352, 0.0
        %v3356 = vadd.f32 %v3336, %v3354
        %v3357 = vadd.f32 %v3337, %v3355
        %3358 = vset.pattern.permute.xlu0 55
        %3359 = vperm.xlu0 %3358, %v2659
        %v3360 = vpop.permute.xlu0 %3359
        %3361 = vset.pattern.permute.xlu0 55
        %3362 = vperm.xlu0 %3361, %v2660
        %v3363 = vpop.permute.xlu0 %3362
        %vm3364 = vcmp.eq.s32.totalorder %v3360, %v1032
        %vm3365 = vcmp.eq.s32.totalorder %v3363, %v1032
        %3366 = vset.pattern.permute.xlu0 15
        %3367 = vperm.xlu0 %3366, %v3108
        %v3368 = vpop.permute.xlu0 %3367
        %3370 = vset.pattern.permute.xlu0 15
        %3371 = vperm.xlu0 %3370, %v3109
        %v3372 = vpop.permute.xlu0 %3371
        %v3374 = vsel %vm3364, %v3368, 0.0
        %v3375 = vsel %vm3365, %v3372, 0.0
        %v3376 = vadd.f32 %v3356, %v3374
        %v3377 = vadd.f32 %v3357, %v3375
        %3378 = vset.pattern.permute.xlu0 55
        %3379 = vperm.xlu0 %3378, %v2685
        %v3380 = vpop.permute.xlu0 %3379
        %3381 = vset.pattern.permute.xlu0 55
        %3382 = vperm.xlu0 %3381, %v2686
        %v3383 = vpop.permute.xlu0 %3382
        %vm3384 = vcmp.eq.s32.totalorder %v3380, %v1032
        %vm3385 = vcmp.eq.s32.totalorder %v3383, %v1032
        %3386 = vset.pattern.permute.xlu0 15
        %3387 = vperm.xlu0 %3386, %v3138
        %v3388 = vpop.permute.xlu0 %3387
        %3390 = vset.pattern.permute.xlu0 15
        %3391 = vperm.xlu0 %3390, %v3139
        %v3392 = vpop.permute.xlu0 %3391
        %v3394 = vsel %vm3384, %v3388, 0.0
        %v3395 = vsel %vm3385, %v3392, 0.0
        %v3396 = vadd.f32 %v3376, %v3394
        %v3397 = vadd.f32 %v3377, %v3395
        %3398 = vset.pattern.permute.xlu0 55
        %3399 = vperm.xlu0 %3398, %v2719
        %v3400 = vpop.permute.xlu0 %3399
        %3401 = vset.pattern.permute.xlu0 55
        %3402 = vperm.xlu0 %3401, %v2720
        %v3403 = vpop.permute.xlu0 %3402
        %vm3404 = vcmp.eq.s32.totalorder %v3400, %v1032
        %vm3405 = vcmp.eq.s32.totalorder %v3403, %v1032
        %3406 = vset.pattern.permute.xlu0 15
        %3407 = vperm.xlu0 %3406, %v3162
        %v3408 = vpop.permute.xlu0 %3407
        %3410 = vset.pattern.permute.xlu0 15
        %3411 = vperm.xlu0 %3410, %v3163
        %v3412 = vpop.permute.xlu0 %3411
        %v3414 = vsel %vm3404, %v3408, 0.0
        %v3415 = vsel %vm3405, %v3412, 0.0
        %v3416 = vadd.f32 %v3396, %v3414
        %v3417 = vadd.f32 %v3397, %v3415
        %v3418 = vpack.c.bf16 %v3417, %v3416
        %3419 = vrot.lane.b32.xlu0 %v2992, 120
        %v3420 = vpop.permute.xlu0 %3419
        %v3423 = vsel %vm2994, %v3418, 0
        %3425 = vmatpush.bf16.msra.mxu0 0
        %3426 = vmatpush.bf16.msra.mxu0 0
        %3427 = vmatpush.bf16.msra.mxu0 0
        %3428 = vmatpush.bf16.msra.mxu0 0
        %3429 = vmatpush.bf16.msra.mxu0 0
        %3430 = vmatpush.bf16.msra.mxu0 0
        %3431 = vmatpush.bf16.msra.mxu0 0
        %3432 = vmatpush.bf16.msra.mxu0 %v3420
        %3433 = vmatmul.bf16.gmra.mxu0 %v3423
        %v3434 = vpop.f32.mrf.mxu0
        %v3435 = vadd.f32 0.0, %v3434
        %v3436 = vpop.f32.mrf.mxu0
        %v3437 = vadd.f32 0.0, %v3436
        %3438 = vdwg.mxu0
        %3439 = vrot.lane.b32.xlu0 %v3028, 120
        %v3440 = vpop.permute.xlu0 %3439
        %3441 = vrot.lane.b32.xlu0 %v3029, 120
        %v3442 = vpop.permute.xlu0 %3441
        %3443 = vrot.lane.b32.xlu0 %v3030, 120
        %v3444 = vpop.permute.xlu0 %3443
        %3445 = vrot.lane.b32.xlu0 %v3031, 120
        %v3446 = vpop.permute.xlu0 %3445
        %v3452 = vsel %vm3036, %v1772, 0
        %3454 = vmatpush.bf16.msra.mxu0 0
        %3455 = vmatpush.bf16.msra.mxu0 0
        %3456 = vmatpush.bf16.msra.mxu0 0
        %3457 = vmatpush.bf16.msra.mxu0 0
        %3458 = vmatpush.bf16.msra.mxu0 %v3446
        %3459 = vmatpush.bf16.msra.mxu0 %v3444
        %3460 = vmatpush.bf16.msra.mxu0 %v3442
        %3461 = vmatpush.bf16.msra.mxu0 %v3440
        %3462 = vmatmul.bf16.gmra.mxu0 %v3452
        %v3463 = vpop.f32.mrf.mxu0
        %v3464 = vadd.f32 %v3435, %v3463
        %v3465 = vpop.f32.mrf.mxu0
        %v3466 = vadd.f32 %v3437, %v3465
        %3467 = vdwg.mxu0
        %3468 = vrot.lane.b32.xlu0 %v2589, 108
        %v3469 = vpop.permute.xlu0 %3468
        %3470 = vrot.lane.b32.xlu0 %v2590, 108
        %v3471 = vpop.permute.xlu0 %3470
        %v3474 = vmul.f32 %v894, %v3469
        %v3475 = vmul.f32 %v895, %v3471
        %3476 = vrot.lane.b32.xlu0 %v2591, 108
        %v3477 = vpop.permute.xlu0 %3476
        %3478 = vrot.lane.b32.xlu0 %v2592, 108
        %v3479 = vpop.permute.xlu0 %3478
        %v3482 = vmul.f32 %v894, %v3477
        %v3483 = vmul.f32 %v895, %v3479
        %3484 = vset.pattern.permute.xlu0 56
        %3485 = vperm.xlu0 %3484, %v2605
        %v3486 = vpop.permute.xlu0 %3485
        %3487 = vset.pattern.permute.xlu0 56
        %3488 = vperm.xlu0 %3487, %v2606
        %v3489 = vpop.permute.xlu0 %3488
        %vm3490 = vcmp.eq.s32.totalorder %v3486, %v1032
        %vm3491 = vcmp.eq.s32.totalorder %v3489, %v1032
        %3492 = vrot.lane.b32.xlu0 %v2595, 92
        %v3493 = vpop.permute.xlu0 %3492
        %3494 = vrot.lane.b32.xlu0 %v2596, 92
        %v3495 = vpop.permute.xlu0 %3494
        %v3498 = vmul.f32 %v3474, %v3493
        %v3499 = vmul.f32 %v3475, %v3495
        %3501 = vset.pattern.permute.xlu0 20
        %3502 = vperm.xlu0 %3501, %v3498
        %v3503 = vpop.permute.xlu0 %3502
        %3506 = vset.pattern.permute.xlu0 20
        %3507 = vperm.xlu0 %3506, %v3499
        %v3508 = vpop.permute.xlu0 %3507
        %v3510 = vsel %vm3490, %v3503, 0.0
        %v3511 = vsel %vm3491, %v3508, 0.0
        %v3512 = vadd.f32 %v3510, 0.0
        %v3513 = vadd.f32 %v3511, 0.0
        %3514 = vset.pattern.permute.xlu0 56
        %3515 = vperm.xlu0 %3514, %v2659
        %v3516 = vpop.permute.xlu0 %3515
        %3517 = vset.pattern.permute.xlu0 56
        %3518 = vperm.xlu0 %3517, %v2660
        %v3519 = vpop.permute.xlu0 %3518
        %vm3520 = vcmp.eq.s32.totalorder %v3516, %v1032
        %vm3521 = vcmp.eq.s32.totalorder %v3519, %v1032
        %v3522 = vmul.f32 %v3482, %v3493
        %v3523 = vmul.f32 %v3483, %v3495
        %3525 = vset.pattern.permute.xlu0 20
        %3526 = vperm.xlu0 %3525, %v3522
        %v3527 = vpop.permute.xlu0 %3526
        %3530 = vset.pattern.permute.xlu0 20
        %3531 = vperm.xlu0 %3530, %v3523
        %v3532 = vpop.permute.xlu0 %3531
        %v3534 = vsel %vm3520, %v3527, 0.0
        %v3535 = vsel %vm3521, %v3532, 0.0
        %v3536 = vadd.f32 %v3512, %v3534
        %v3537 = vadd.f32 %v3513, %v3535
        %3538 = vset.pattern.permute.xlu0 56
        %3539 = vperm.xlu0 %3538, %v2685
        %v3540 = vpop.permute.xlu0 %3539
        %3541 = vset.pattern.permute.xlu0 56
        %3542 = vperm.xlu0 %3541, %v2686
        %v3543 = vpop.permute.xlu0 %3542
        %vm3544 = vcmp.eq.s32.totalorder %v3540, %v1032
        %vm3545 = vcmp.eq.s32.totalorder %v3543, %v1032
        %3546 = vrot.lane.b32.xlu0 %v2597, 92
        %v3547 = vpop.permute.xlu0 %3546
        %3548 = vrot.lane.b32.xlu0 %v2598, 92
        %v3549 = vpop.permute.xlu0 %3548
        %v3552 = vmul.f32 %v3474, %v3547
        %v3553 = vmul.f32 %v3475, %v3549
        %3555 = vset.pattern.permute.xlu0 20
        %3556 = vperm.xlu0 %3555, %v3552
        %v3557 = vpop.permute.xlu0 %3556
        %3560 = vset.pattern.permute.xlu0 20
        %3561 = vperm.xlu0 %3560, %v3553
        %v3562 = vpop.permute.xlu0 %3561
        %v3564 = vsel %vm3544, %v3557, 0.0
        %v3565 = vsel %vm3545, %v3562, 0.0
        %v3566 = vadd.f32 %v3536, %v3564
        %v3567 = vadd.f32 %v3537, %v3565
        %3568 = vset.pattern.permute.xlu0 56
        %3569 = vperm.xlu0 %3568, %v2719
        %v3570 = vpop.permute.xlu0 %3569
        %3571 = vset.pattern.permute.xlu0 56
        %3572 = vperm.xlu0 %3571, %v2720
        %v3573 = vpop.permute.xlu0 %3572
        %vm3574 = vcmp.eq.s32.totalorder %v3570, %v1032
        %vm3575 = vcmp.eq.s32.totalorder %v3573, %v1032
        %v3576 = vmul.f32 %v3482, %v3547
        %v3577 = vmul.f32 %v3483, %v3549
        %3579 = vset.pattern.permute.xlu0 20
        %3580 = vperm.xlu0 %3579, %v3576
        %v3581 = vpop.permute.xlu0 %3580
        %3584 = vset.pattern.permute.xlu0 20
        %3585 = vperm.xlu0 %3584, %v3577
        %v3586 = vpop.permute.xlu0 %3585
        %v3588 = vsel %vm3574, %v3581, 0.0
        %v3589 = vsel %vm3575, %v3586, 0.0
        %v3590 = vadd.f32 %v3566, %v3588
        %v3591 = vadd.f32 %v3567, %v3589
        %3592 = vset.pattern.permute.xlu0 57
        %3593 = vperm.xlu0 %3592, %v2605
        %v3594 = vpop.permute.xlu0 %3593
        %3595 = vset.pattern.permute.xlu0 57
        %3596 = vperm.xlu0 %3595, %v2606
        %v3597 = vpop.permute.xlu0 %3596
        %vm3598 = vcmp.eq.s32.totalorder %v3594, %v1032
        %vm3599 = vcmp.eq.s32.totalorder %v3597, %v1032
        %3600 = vset.pattern.permute.xlu0 21
        %3601 = vperm.xlu0 %3600, %v3498
        %v3602 = vpop.permute.xlu0 %3601
        %3604 = vset.pattern.permute.xlu0 21
        %3605 = vperm.xlu0 %3604, %v3499
        %v3606 = vpop.permute.xlu0 %3605
        %v3608 = vsel %vm3598, %v3602, 0.0
        %v3609 = vsel %vm3599, %v3606, 0.0
        %v3610 = vadd.f32 %v3590, %v3608
        %v3611 = vadd.f32 %v3591, %v3609
        %3612 = vset.pattern.permute.xlu0 57
        %3613 = vperm.xlu0 %3612, %v2659
        %v3614 = vpop.permute.xlu0 %3613
        %3615 = vset.pattern.permute.xlu0 57
        %3616 = vperm.xlu0 %3615, %v2660
        %v3617 = vpop.permute.xlu0 %3616
        %vm3618 = vcmp.eq.s32.totalorder %v3614, %v1032
        %vm3619 = vcmp.eq.s32.totalorder %v3617, %v1032
        %3620 = vset.pattern.permute.xlu0 21
        %3621 = vperm.xlu0 %3620, %v3522
        %v3622 = vpop.permute.xlu0 %3621
        %3624 = vset.pattern.permute.xlu0 21
        %3625 = vperm.xlu0 %3624, %v3523
        %v3626 = vpop.permute.xlu0 %3625
        %v3628 = vsel %vm3618, %v3622, 0.0
        %v3629 = vsel %vm3619, %v3626, 0.0
        %v3630 = vadd.f32 %v3610, %v3628
        %v3631 = vadd.f32 %v3611, %v3629
        %3632 = vset.pattern.permute.xlu0 57
        %3633 = vperm.xlu0 %3632, %v2685
        %v3634 = vpop.permute.xlu0 %3633
        %3635 = vset.pattern.permute.xlu0 57
        %3636 = vperm.xlu0 %3635, %v2686
        %v3637 = vpop.permute.xlu0 %3636
        %vm3638 = vcmp.eq.s32.totalorder %v3634, %v1032
        %vm3639 = vcmp.eq.s32.totalorder %v3637, %v1032
        %3640 = vset.pattern.permute.xlu0 21
        %3641 = vperm.xlu0 %3640, %v3552
        %v3642 = vpop.permute.xlu0 %3641
        %3644 = vset.pattern.permute.xlu0 21
        %3645 = vperm.xlu0 %3644, %v3553
        %v3646 = vpop.permute.xlu0 %3645
        %v3648 = vsel %vm3638, %v3642, 0.0
        %v3649 = vsel %vm3639, %v3646, 0.0
        %v3650 = vadd.f32 %v3630, %v3648
        %v3651 = vadd.f32 %v3631, %v3649
        %3652 = vset.pattern.permute.xlu0 57
        %3653 = vperm.xlu0 %3652, %v2719
        %v3654 = vpop.permute.xlu0 %3653
        %3655 = vset.pattern.permute.xlu0 57
        %3656 = vperm.xlu0 %3655, %v2720
        %v3657 = vpop.permute.xlu0 %3656
        %vm3658 = vcmp.eq.s32.totalorder %v3654, %v1032
        %vm3659 = vcmp.eq.s32.totalorder %v3657, %v1032
        %3660 = vset.pattern.permute.xlu0 21
        %3661 = vperm.xlu0 %3660, %v3576
        %v3662 = vpop.permute.xlu0 %3661
        %3664 = vset.pattern.permute.xlu0 21
        %3665 = vperm.xlu0 %3664, %v3577
        %v3666 = vpop.permute.xlu0 %3665
        %v3668 = vsel %vm3658, %v3662, 0.0
        %v3669 = vsel %vm3659, %v3666, 0.0
        %v3670 = vadd.f32 %v3650, %v3668
        %v3671 = vadd.f32 %v3651, %v3669
        %3672 = vset.pattern.permute.xlu0 58
        %3673 = vperm.xlu0 %3672, %v2605
        %v3674 = vpop.permute.xlu0 %3673
        %3675 = vset.pattern.permute.xlu0 58
        %3676 = vperm.xlu0 %3675, %v2606
        %v3677 = vpop.permute.xlu0 %3676
        %vm3678 = vcmp.eq.s32.totalorder %v3674, %v1032
        %vm3679 = vcmp.eq.s32.totalorder %v3677, %v1032
        %3680 = vset.pattern.permute.xlu0 22
        %3681 = vperm.xlu0 %3680, %v3498
        %v3682 = vpop.permute.xlu0 %3681
        %3684 = vset.pattern.permute.xlu0 22
        %3685 = vperm.xlu0 %3684, %v3499
        %v3686 = vpop.permute.xlu0 %3685
        %v3688 = vsel %vm3678, %v3682, 0.0
        %v3689 = vsel %vm3679, %v3686, 0.0
        %v3690 = vadd.f32 %v3670, %v3688
        %v3691 = vadd.f32 %v3671, %v3689
        %3692 = vset.pattern.permute.xlu0 58
        %3693 = vperm.xlu0 %3692, %v2659
        %v3694 = vpop.permute.xlu0 %3693
        %3695 = vset.pattern.permute.xlu0 58
        %3696 = vperm.xlu0 %3695, %v2660
        %v3697 = vpop.permute.xlu0 %3696
        %vm3698 = vcmp.eq.s32.totalorder %v3694, %v1032
        %vm3699 = vcmp.eq.s32.totalorder %v3697, %v1032
        %3700 = vset.pattern.permute.xlu0 22
        %3701 = vperm.xlu0 %3700, %v3522
        %v3702 = vpop.permute.xlu0 %3701
        %3704 = vset.pattern.permute.xlu0 22
        %3705 = vperm.xlu0 %3704, %v3523
        %v3706 = vpop.permute.xlu0 %3705
        %v3708 = vsel %vm3698, %v3702, 0.0
        %v3709 = vsel %vm3699, %v3706, 0.0
        %v3710 = vadd.f32 %v3690, %v3708
        %v3711 = vadd.f32 %v3691, %v3709
        %3712 = vset.pattern.permute.xlu0 58
        %3713 = vperm.xlu0 %3712, %v2685
        %v3714 = vpop.permute.xlu0 %3713
        %3715 = vset.pattern.permute.xlu0 58
        %3716 = vperm.xlu0 %3715, %v2686
        %v3717 = vpop.permute.xlu0 %3716
        %vm3718 = vcmp.eq.s32.totalorder %v3714, %v1032
        %vm3719 = vcmp.eq.s32.totalorder %v3717, %v1032
        %3720 = vset.pattern.permute.xlu0 22
        %3721 = vperm.xlu0 %3720, %v3552
        %v3722 = vpop.permute.xlu0 %3721
        %3724 = vset.pattern.permute.xlu0 22
        %3725 = vperm.xlu0 %3724, %v3553
        %v3726 = vpop.permute.xlu0 %3725
        %v3728 = vsel %vm3718, %v3722, 0.0
        %v3729 = vsel %vm3719, %v3726, 0.0
        %v3730 = vadd.f32 %v3710, %v3728
        %v3731 = vadd.f32 %v3711, %v3729
        %3732 = vset.pattern.permute.xlu0 58
        %3733 = vperm.xlu0 %3732, %v2719
        %v3734 = vpop.permute.xlu0 %3733
        %3735 = vset.pattern.permute.xlu0 58
        %3736 = vperm.xlu0 %3735, %v2720
        %v3737 = vpop.permute.xlu0 %3736
        %vm3738 = vcmp.eq.s32.totalorder %v3734, %v1032
        %vm3739 = vcmp.eq.s32.totalorder %v3737, %v1032
        %3740 = vset.pattern.permute.xlu0 22
        %3741 = vperm.xlu0 %3740, %v3576
        %v3742 = vpop.permute.xlu0 %3741
        %3744 = vset.pattern.permute.xlu0 22
        %3745 = vperm.xlu0 %3744, %v3577
        %v3746 = vpop.permute.xlu0 %3745
        %v3748 = vsel %vm3738, %v3742, 0.0
        %v3749 = vsel %vm3739, %v3746, 0.0
        %v3750 = vadd.f32 %v3730, %v3748
        %v3751 = vadd.f32 %v3731, %v3749
        %3752 = vset.pattern.permute.xlu0 59
        %3753 = vperm.xlu0 %3752, %v2605
        %v3754 = vpop.permute.xlu0 %3753
        %3755 = vset.pattern.permute.xlu0 59
        %3756 = vperm.xlu0 %3755, %v2606
        %v3757 = vpop.permute.xlu0 %3756
        %vm3758 = vcmp.eq.s32.totalorder %v3754, %v1032
        %vm3759 = vcmp.eq.s32.totalorder %v3757, %v1032
        %3760 = vset.pattern.permute.xlu0 23
        %3761 = vperm.xlu0 %3760, %v3498
        %v3762 = vpop.permute.xlu0 %3761
        %3764 = vset.pattern.permute.xlu0 23
        %3765 = vperm.xlu0 %3764, %v3499
        %v3766 = vpop.permute.xlu0 %3765
        %v3768 = vsel %vm3758, %v3762, 0.0
        %v3769 = vsel %vm3759, %v3766, 0.0
        %v3770 = vadd.f32 %v3750, %v3768
        %v3771 = vadd.f32 %v3751, %v3769
        %3772 = vset.pattern.permute.xlu0 59
        %3773 = vperm.xlu0 %3772, %v2659
        %v3774 = vpop.permute.xlu0 %3773
        %3775 = vset.pattern.permute.xlu0 59
        %3776 = vperm.xlu0 %3775, %v2660
        %v3777 = vpop.permute.xlu0 %3776
        %vm3778 = vcmp.eq.s32.totalorder %v3774, %v1032
        %vm3779 = vcmp.eq.s32.totalorder %v3777, %v1032
        %3780 = vset.pattern.permute.xlu0 23
        %3781 = vperm.xlu0 %3780, %v3522
        %v3782 = vpop.permute.xlu0 %3781
        %3784 = vset.pattern.permute.xlu0 23
        %3785 = vperm.xlu0 %3784, %v3523
        %v3786 = vpop.permute.xlu0 %3785
        %v3788 = vsel %vm3778, %v3782, 0.0
        %v3789 = vsel %vm3779, %v3786, 0.0
        %v3790 = vadd.f32 %v3770, %v3788
        %v3791 = vadd.f32 %v3771, %v3789
        %3792 = vset.pattern.permute.xlu0 59
        %3793 = vperm.xlu0 %3792, %v2685
        %v3794 = vpop.permute.xlu0 %3793
        %3795 = vset.pattern.permute.xlu0 59
        %3796 = vperm.xlu0 %3795, %v2686
        %v3797 = vpop.permute.xlu0 %3796
        %vm3798 = vcmp.eq.s32.totalorder %v3794, %v1032
        %vm3799 = vcmp.eq.s32.totalorder %v3797, %v1032
        %3800 = vset.pattern.permute.xlu0 23
        %3801 = vperm.xlu0 %3800, %v3552
        %v3802 = vpop.permute.xlu0 %3801
        %3804 = vset.pattern.permute.xlu0 23
        %3805 = vperm.xlu0 %3804, %v3553
        %v3806 = vpop.permute.xlu0 %3805
        %v3808 = vsel %vm3798, %v3802, 0.0
        %v3809 = vsel %vm3799, %v3806, 0.0
        %v3810 = vadd.f32 %v3790, %v3808
        %v3811 = vadd.f32 %v3791, %v3809
        %3812 = vset.pattern.permute.xlu0 59
        %3813 = vperm.xlu0 %3812, %v2719
        %v3814 = vpop.permute.xlu0 %3813
        %3815 = vset.pattern.permute.xlu0 59
        %3816 = vperm.xlu0 %3815, %v2720
        %v3817 = vpop.permute.xlu0 %3816
        %vm3818 = vcmp.eq.s32.totalorder %v3814, %v1032
        %vm3819 = vcmp.eq.s32.totalorder %v3817, %v1032
        %3820 = vset.pattern.permute.xlu0 23
        %3821 = vperm.xlu0 %3820, %v3576
        %v3822 = vpop.permute.xlu0 %3821
        %3824 = vset.pattern.permute.xlu0 23
        %3825 = vperm.xlu0 %3824, %v3577
        %v3826 = vpop.permute.xlu0 %3825
        %v3828 = vsel %vm3818, %v3822, 0.0
        %v3829 = vsel %vm3819, %v3826, 0.0
        %v3830 = vadd.f32 %v3810, %v3828
        %v3831 = vadd.f32 %v3811, %v3829
        %v3832 = vpack.c.bf16 %v3831, %v3830
        %3833 = vrot.lane.b32.xlu0 %v2992, 112
        %v3834 = vpop.permute.xlu0 %3833
        %v3837 = vsel %vm2994, %v3832, 0
        %3839 = vmatpush.bf16.msra.mxu0 0
        %3840 = vmatpush.bf16.msra.mxu0 0
        %3841 = vmatpush.bf16.msra.mxu0 0
        %3842 = vmatpush.bf16.msra.mxu0 0
        %3843 = vmatpush.bf16.msra.mxu0 0
        %3844 = vmatpush.bf16.msra.mxu0 0
        %3845 = vmatpush.bf16.msra.mxu0 0
        %3846 = vmatpush.bf16.msra.mxu0 %v3834
        %3847 = vmatmul.bf16.gmra.mxu0 %v3837
        %v3848 = vpop.f32.mrf.mxu0
        %v3849 = vadd.f32 0.0, %v3848
        %v3850 = vpop.f32.mrf.mxu0
        %v3851 = vadd.f32 0.0, %v3850
        %3852 = vdwg.mxu0
        %3853 = vrot.lane.b32.xlu0 %v3028, 112
        %v3854 = vpop.permute.xlu0 %3853
        %3855 = vrot.lane.b32.xlu0 %v3029, 112
        %v3856 = vpop.permute.xlu0 %3855
        %3857 = vrot.lane.b32.xlu0 %v3030, 112
        %v3858 = vpop.permute.xlu0 %3857
        %3859 = vrot.lane.b32.xlu0 %v3031, 112
        %v3860 = vpop.permute.xlu0 %3859
        %v3866 = vsel %vm3036, %v2137, 0
        %3868 = vmatpush.bf16.msra.mxu0 0
        %3869 = vmatpush.bf16.msra.mxu0 0
        %3870 = vmatpush.bf16.msra.mxu0 0
        %3871 = vmatpush.bf16.msra.mxu0 0
        %3872 = vmatpush.bf16.msra.mxu0 %v3860
        %3873 = vmatpush.bf16.msra.mxu0 %v3858
        %3874 = vmatpush.bf16.msra.mxu0 %v3856
        %3875 = vmatpush.bf16.msra.mxu0 %v3854
        %3876 = vmatmul.bf16.gmra.mxu0 %v3866
        %v3877 = vpop.f32.mrf.mxu0
        %v3878 = vadd.f32 %v3849, %v3877
        %v3879 = vpop.f32.mrf.mxu0
        %v3880 = vadd.f32 %v3851, %v3879
        %3881 = vdwg.mxu0
        %3882 = vrot.lane.b32.xlu0 %v2589, 112
        %v3883 = vpop.permute.xlu0 %3882
        %3884 = vrot.lane.b32.xlu0 %v2590, 112
        %v3885 = vpop.permute.xlu0 %3884
        %v3888 = vmul.f32 %v925, %v3883
        %v3889 = vmul.f32 %v926, %v3885
        %3890 = vrot.lane.b32.xlu0 %v2591, 112
        %v3891 = vpop.permute.xlu0 %3890
        %3892 = vrot.lane.b32.xlu0 %v2592, 112
        %v3893 = vpop.permute.xlu0 %3892
        %v3896 = vmul.f32 %v925, %v3891
        %v3897 = vmul.f32 %v926, %v3893
        %3898 = vset.pattern.permute.xlu0 60
        %3899 = vperm.xlu0 %3898, %v2605
        %v3900 = vpop.permute.xlu0 %3899
        %3901 = vset.pattern.permute.xlu0 60
        %3902 = vperm.xlu0 %3901, %v2606
        %v3903 = vpop.permute.xlu0 %3902
        %vm3904 = vcmp.eq.s32.totalorder %v3900, %v1032
        %vm3905 = vcmp.eq.s32.totalorder %v3903, %v1032
        %3906 = vrot.lane.b32.xlu0 %v2595, 96
        %v3907 = vpop.permute.xlu0 %3906
        %3908 = vrot.lane.b32.xlu0 %v2596, 96
        %v3909 = vpop.permute.xlu0 %3908
        %v3912 = vmul.f32 %v3888, %v3907
        %v3913 = vmul.f32 %v3889, %v3909
        %3915 = vset.pattern.permute.xlu0 28
        %3916 = vperm.xlu0 %3915, %v3912
        %v3917 = vpop.permute.xlu0 %3916
        %3920 = vset.pattern.permute.xlu0 28
        %3921 = vperm.xlu0 %3920, %v3913
        %v3922 = vpop.permute.xlu0 %3921
        %v3924 = vsel %vm3904, %v3917, 0.0
        %v3925 = vsel %vm3905, %v3922, 0.0
        %v3926 = vadd.f32 %v3924, 0.0
        %v3927 = vadd.f32 %v3925, 0.0
        %3928 = vset.pattern.permute.xlu0 60
        %3929 = vperm.xlu0 %3928, %v2659
        %v3930 = vpop.permute.xlu0 %3929
        %3931 = vset.pattern.permute.xlu0 60
        %3932 = vperm.xlu0 %3931, %v2660
        %v3933 = vpop.permute.xlu0 %3932
        %vm3934 = vcmp.eq.s32.totalorder %v3930, %v1032
        %vm3935 = vcmp.eq.s32.totalorder %v3933, %v1032
        %v3936 = vmul.f32 %v3896, %v3907
        %v3937 = vmul.f32 %v3897, %v3909
        %3939 = vset.pattern.permute.xlu0 28
        %3940 = vperm.xlu0 %3939, %v3936
        %v3941 = vpop.permute.xlu0 %3940
        %3944 = vset.pattern.permute.xlu0 28
        %3945 = vperm.xlu0 %3944, %v3937
        %v3946 = vpop.permute.xlu0 %3945
        %v3948 = vsel %vm3934, %v3941, 0.0
        %v3949 = vsel %vm3935, %v3946, 0.0
        %v3950 = vadd.f32 %v3926, %v3948
        %v3951 = vadd.f32 %v3927, %v3949
        %3952 = vset.pattern.permute.xlu0 60
        %3953 = vperm.xlu0 %3952, %v2685
        %v3954 = vpop.permute.xlu0 %3953
        %3955 = vset.pattern.permute.xlu0 60
        %3956 = vperm.xlu0 %3955, %v2686
        %v3957 = vpop.permute.xlu0 %3956
        %vm3958 = vcmp.eq.s32.totalorder %v3954, %v1032
        %vm3959 = vcmp.eq.s32.totalorder %v3957, %v1032
        %3960 = vrot.lane.b32.xlu0 %v2597, 96
        %v3961 = vpop.permute.xlu0 %3960
        %3962 = vrot.lane.b32.xlu0 %v2598, 96
        %v3963 = vpop.permute.xlu0 %3962
        %v3966 = vmul.f32 %v3888, %v3961
        %v3967 = vmul.f32 %v3889, %v3963
        %3969 = vset.pattern.permute.xlu0 28
        %3970 = vperm.xlu0 %3969, %v3966
        %v3971 = vpop.permute.xlu0 %3970
        %3974 = vset.pattern.permute.xlu0 28
        %3975 = vperm.xlu0 %3974, %v3967
        %v3976 = vpop.permute.xlu0 %3975
        %v3978 = vsel %vm3958, %v3971, 0.0
        %v3979 = vsel %vm3959, %v3976, 0.0
        %v3980 = vadd.f32 %v3950, %v3978
        %v3981 = vadd.f32 %v3951, %v3979
        %3982 = vset.pattern.permute.xlu0 60
        %3983 = vperm.xlu0 %3982, %v2719
        %v3984 = vpop.permute.xlu0 %3983
        %3985 = vset.pattern.permute.xlu0 60
        %3986 = vperm.xlu0 %3985, %v2720
        %v3987 = vpop.permute.xlu0 %3986
        %vm3988 = vcmp.eq.s32.totalorder %v3984, %v1032
        %vm3989 = vcmp.eq.s32.totalorder %v3987, %v1032
        %v3990 = vmul.f32 %v3896, %v3961
        %v3991 = vmul.f32 %v3897, %v3963
        %3993 = vset.pattern.permute.xlu0 28
        %3994 = vperm.xlu0 %3993, %v3990
        %v3995 = vpop.permute.xlu0 %3994
        %3998 = vset.pattern.permute.xlu0 28
        %3999 = vperm.xlu0 %3998, %v3991
        %v4000 = vpop.permute.xlu0 %3999
        %v4002 = vsel %vm3988, %v3995, 0.0
        %v4003 = vsel %vm3989, %v4000, 0.0
        %v4004 = vadd.f32 %v3980, %v4002
        %v4005 = vadd.f32 %v3981, %v4003
        %4006 = vset.pattern.permute.xlu0 61
        %4007 = vperm.xlu0 %4006, %v2605
        %v4008 = vpop.permute.xlu0 %4007
        %4009 = vset.pattern.permute.xlu0 61
        %4010 = vperm.xlu0 %4009, %v2606
        %v4011 = vpop.permute.xlu0 %4010
        %vm4012 = vcmp.eq.s32.totalorder %v4008, %v1032
        %vm4013 = vcmp.eq.s32.totalorder %v4011, %v1032
        %4014 = vset.pattern.permute.xlu0 29
        %4015 = vperm.xlu0 %4014, %v3912
        %v4016 = vpop.permute.xlu0 %4015
        %4018 = vset.pattern.permute.xlu0 29
        %4019 = vperm.xlu0 %4018, %v3913
        %v4020 = vpop.permute.xlu0 %4019
        %v4022 = vsel %vm4012, %v4016, 0.0
        %v4023 = vsel %vm4013, %v4020, 0.0
        %v4024 = vadd.f32 %v4004, %v4022
        %v4025 = vadd.f32 %v4005, %v4023
        %4026 = vset.pattern.permute.xlu0 61
        %4027 = vperm.xlu0 %4026, %v2659
        %v4028 = vpop.permute.xlu0 %4027
        %4029 = vset.pattern.permute.xlu0 61
        %4030 = vperm.xlu0 %4029, %v2660
        %v4031 = vpop.permute.xlu0 %4030
        %vm4032 = vcmp.eq.s32.totalorder %v4028, %v1032
        %vm4033 = vcmp.eq.s32.totalorder %v4031, %v1032
        %4034 = vset.pattern.permute.xlu0 29
        %4035 = vperm.xlu0 %4034, %v3936
        %v4036 = vpop.permute.xlu0 %4035
        %4038 = vset.pattern.permute.xlu0 29
        %4039 = vperm.xlu0 %4038, %v3937
        %v4040 = vpop.permute.xlu0 %4039
        %v4042 = vsel %vm4032, %v4036, 0.0
        %v4043 = vsel %vm4033, %v4040, 0.0
        %v4044 = vadd.f32 %v4024, %v4042
        %v4045 = vadd.f32 %v4025, %v4043
        %4046 = vset.pattern.permute.xlu0 61
        %4047 = vperm.xlu0 %4046, %v2685
        %v4048 = vpop.permute.xlu0 %4047
        %4049 = vset.pattern.permute.xlu0 61
        %4050 = vperm.xlu0 %4049, %v2686
        %v4051 = vpop.permute.xlu0 %4050
        %vm4052 = vcmp.eq.s32.totalorder %v4048, %v1032
        %vm4053 = vcmp.eq.s32.totalorder %v4051, %v1032
        %4054 = vset.pattern.permute.xlu0 29
        %4055 = vperm.xlu0 %4054, %v3966
        %v4056 = vpop.permute.xlu0 %4055
        %4058 = vset.pattern.permute.xlu0 29
        %4059 = vperm.xlu0 %4058, %v3967
        %v4060 = vpop.permute.xlu0 %4059
        %v4062 = vsel %vm4052, %v4056, 0.0
        %v4063 = vsel %vm4053, %v4060, 0.0
        %v4064 = vadd.f32 %v4044, %v4062
        %v4065 = vadd.f32 %v4045, %v4063
        %4066 = vset.pattern.permute.xlu0 61
        %4067 = vperm.xlu0 %4066, %v2719
        %v4068 = vpop.permute.xlu0 %4067
        %4069 = vset.pattern.permute.xlu0 61
        %4070 = vperm.xlu0 %4069, %v2720
        %v4071 = vpop.permute.xlu0 %4070
        %vm4072 = vcmp.eq.s32.totalorder %v4068, %v1032
        %vm4073 = vcmp.eq.s32.totalorder %v4071, %v1032
        %4074 = vset.pattern.permute.xlu0 29
        %4075 = vperm.xlu0 %4074, %v3990
        %v4076 = vpop.permute.xlu0 %4075
        %4078 = vset.pattern.permute.xlu0 29
        %4079 = vperm.xlu0 %4078, %v3991
        %v4080 = vpop.permute.xlu0 %4079
        %v4082 = vsel %vm4072, %v4076, 0.0
        %v4083 = vsel %vm4073, %v4080, 0.0
        %v4084 = vadd.f32 %v4064, %v4082
        %v4085 = vadd.f32 %v4065, %v4083
        %4086 = vset.pattern.permute.xlu0 62
        %4087 = vperm.xlu0 %4086, %v2605
        %v4088 = vpop.permute.xlu0 %4087
        %4089 = vset.pattern.permute.xlu0 62
        %4090 = vperm.xlu0 %4089, %v2606
        %v4091 = vpop.permute.xlu0 %4090
        %vm4092 = vcmp.eq.s32.totalorder %v4088, %v1032
        %vm4093 = vcmp.eq.s32.totalorder %v4091, %v1032
        %4094 = vset.pattern.permute.xlu0 30
        %4095 = vperm.xlu0 %4094, %v3912
        %v4096 = vpop.permute.xlu0 %4095
        %4098 = vset.pattern.permute.xlu0 30
        %4099 = vperm.xlu0 %4098, %v3913
        %v4100 = vpop.permute.xlu0 %4099
        %v4102 = vsel %vm4092, %v4096, 0.0
        %v4103 = vsel %vm4093, %v4100, 0.0
        %v4104 = vadd.f32 %v4084, %v4102
        %v4105 = vadd.f32 %v4085, %v4103
        %4106 = vset.pattern.permute.xlu0 62
        %4107 = vperm.xlu0 %4106, %v2659
        %v4108 = vpop.permute.xlu0 %4107
        %4109 = vset.pattern.permute.xlu0 62
        %4110 = vperm.xlu0 %4109, %v2660
        %v4111 = vpop.permute.xlu0 %4110
        %vm4112 = vcmp.eq.s32.totalorder %v4108, %v1032
        %vm4113 = vcmp.eq.s32.totalorder %v4111, %v1032
        %4114 = vset.pattern.permute.xlu0 30
        %4115 = vperm.xlu0 %4114, %v3936
        %v4116 = vpop.permute.xlu0 %4115
        %4118 = vset.pattern.permute.xlu0 30
        %4119 = vperm.xlu0 %4118, %v3937
        %v4120 = vpop.permute.xlu0 %4119
        %v4122 = vsel %vm4112, %v4116, 0.0
        %v4123 = vsel %vm4113, %v4120, 0.0
        %v4124 = vadd.f32 %v4104, %v4122
        %v4125 = vadd.f32 %v4105, %v4123
        %4126 = vset.pattern.permute.xlu0 62
        %4127 = vperm.xlu0 %4126, %v2685
        %v4128 = vpop.permute.xlu0 %4127
        %4129 = vset.pattern.permute.xlu0 62
        %4130 = vperm.xlu0 %4129, %v2686
        %v4131 = vpop.permute.xlu0 %4130
        %vm4132 = vcmp.eq.s32.totalorder %v4128, %v1032
        %vm4133 = vcmp.eq.s32.totalorder %v4131, %v1032
        %4134 = vset.pattern.permute.xlu0 30
        %4135 = vperm.xlu0 %4134, %v3966
        %v4136 = vpop.permute.xlu0 %4135
        %4138 = vset.pattern.permute.xlu0 30
        %4139 = vperm.xlu0 %4138, %v3967
        %v4140 = vpop.permute.xlu0 %4139
        %v4142 = vsel %vm4132, %v4136, 0.0
        %v4143 = vsel %vm4133, %v4140, 0.0
        %v4144 = vadd.f32 %v4124, %v4142
        %v4145 = vadd.f32 %v4125, %v4143
        %4146 = vset.pattern.permute.xlu0 62
        %4147 = vperm.xlu0 %4146, %v2719
        %v4148 = vpop.permute.xlu0 %4147
        %4149 = vset.pattern.permute.xlu0 62
        %4150 = vperm.xlu0 %4149, %v2720
        %v4151 = vpop.permute.xlu0 %4150
        %vm4152 = vcmp.eq.s32.totalorder %v4148, %v1032
        %vm4153 = vcmp.eq.s32.totalorder %v4151, %v1032
        %4154 = vset.pattern.permute.xlu0 30
        %4155 = vperm.xlu0 %4154, %v3990
        %v4156 = vpop.permute.xlu0 %4155
        %4158 = vset.pattern.permute.xlu0 30
        %4159 = vperm.xlu0 %4158, %v3991
        %v4160 = vpop.permute.xlu0 %4159
        %v4162 = vsel %vm4152, %v4156, 0.0
        %v4163 = vsel %vm4153, %v4160, 0.0
        %v4164 = vadd.f32 %v4144, %v4162
        %v4165 = vadd.f32 %v4145, %v4163
        %4166 = vset.pattern.permute.xlu0 63
        %4167 = vperm.xlu0 %4166, %v2605
        %v4168 = vpop.permute.xlu0 %4167
        %4169 = vset.pattern.permute.xlu0 63
        %4170 = vperm.xlu0 %4169, %v2606
        %v4171 = vpop.permute.xlu0 %4170
        %vm4172 = vcmp.eq.s32.totalorder %v4168, %v1032
        %vm4173 = vcmp.eq.s32.totalorder %v4171, %v1032
        %4174 = vset.pattern.permute.xlu0 31
        %4175 = vperm.xlu0 %4174, %v3912
        %v4176 = vpop.permute.xlu0 %4175
        %4178 = vset.pattern.permute.xlu0 31
        %4179 = vperm.xlu0 %4178, %v3913
        %v4180 = vpop.permute.xlu0 %4179
        %v4182 = vsel %vm4172, %v4176, 0.0
        %v4183 = vsel %vm4173, %v4180, 0.0
        %v4184 = vadd.f32 %v4164, %v4182
        %v4185 = vadd.f32 %v4165, %v4183
        %4186 = vset.pattern.permute.xlu0 63
        %4187 = vperm.xlu0 %4186, %v2659
        %v4188 = vpop.permute.xlu0 %4187
        %4189 = vset.pattern.permute.xlu0 63
        %4190 = vperm.xlu0 %4189, %v2660
        %v4191 = vpop.permute.xlu0 %4190
        %vm4192 = vcmp.eq.s32.totalorder %v4188, %v1032
        %vm4193 = vcmp.eq.s32.totalorder %v4191, %v1032
        %4194 = vset.pattern.permute.xlu0 31
        %4195 = vperm.xlu0 %4194, %v3936
        %v4196 = vpop.permute.xlu0 %4195
        %4198 = vset.pattern.permute.xlu0 31
        %4199 = vperm.xlu0 %4198, %v3937
        %v4200 = vpop.permute.xlu0 %4199
        %v4202 = vsel %vm4192, %v4196, 0.0
        %v4203 = vsel %vm4193, %v4200, 0.0
        %v4204 = vadd.f32 %v4184, %v4202
        %v4205 = vadd.f32 %v4185, %v4203
        %4206 = vset.pattern.permute.xlu0 63
        %4207 = vperm.xlu0 %4206, %v2685
        %v4208 = vpop.permute.xlu0 %4207
        %4209 = vset.pattern.permute.xlu0 63
        %4210 = vperm.xlu0 %4209, %v2686
        %v4211 = vpop.permute.xlu0 %4210
        %vm4212 = vcmp.eq.s32.totalorder %v4208, %v1032
        %vm4213 = vcmp.eq.s32.totalorder %v4211, %v1032
        %4214 = vset.pattern.permute.xlu0 31
        %4215 = vperm.xlu0 %4214, %v3966
        %v4216 = vpop.permute.xlu0 %4215
        %4218 = vset.pattern.permute.xlu0 31
        %4219 = vperm.xlu0 %4218, %v3967
        %v4220 = vpop.permute.xlu0 %4219
        %v4222 = vsel %vm4212, %v4216, 0.0
        %v4223 = vsel %vm4213, %v4220, 0.0
        %v4224 = vadd.f32 %v4204, %v4222
        %v4225 = vadd.f32 %v4205, %v4223
        %4226 = vset.pattern.permute.xlu0 63
        %4227 = vperm.xlu0 %4226, %v2719
        %v4228 = vpop.permute.xlu0 %4227
        %4229 = vset.pattern.permute.xlu0 63
        %4230 = vperm.xlu0 %4229, %v2720
        %v4231 = vpop.permute.xlu0 %4230
        %vm4232 = vcmp.eq.s32.totalorder %v4228, %v1032
        %vm4233 = vcmp.eq.s32.totalorder %v4231, %v1032
        %4234 = vset.pattern.permute.xlu0 31
        %4235 = vperm.xlu0 %4234, %v3990
        %v4236 = vpop.permute.xlu0 %4235
        %4238 = vset.pattern.permute.xlu0 31
        %4239 = vperm.xlu0 %4238, %v3991
        %v4240 = vpop.permute.xlu0 %4239
        %v4242 = vsel %vm4232, %v4236, 0.0
        %v4243 = vsel %vm4233, %v4240, 0.0
        %v4244 = vadd.f32 %v4224, %v4242
        %v4245 = vadd.f32 %v4225, %v4243
        %v4246 = vpack.c.bf16 %v4245, %v4244
        %4247 = vrot.lane.b32.xlu0 %v2992, 104
        %v4248 = vpop.permute.xlu0 %4247
        %v4251 = vsel %vm2994, %v4246, 0
        %4253 = vmatpush.bf16.msra.mxu0 0
        %4254 = vmatpush.bf16.msra.mxu0 0
        %4255 = vmatpush.bf16.msra.mxu0 0
        %4256 = vmatpush.bf16.msra.mxu0 0
        %4257 = vmatpush.bf16.msra.mxu0 0
        %4258 = vmatpush.bf16.msra.mxu0 0
        %4259 = vmatpush.bf16.msra.mxu0 0
        %4260 = vmatpush.bf16.msra.mxu0 %v4248
        %4261 = vmatmul.bf16.gmra.mxu0 %v4251
        %v4262 = vpop.f32.mrf.mxu0
        %v4263 = vadd.f32 0.0, %v4262
        %v4264 = vpop.f32.mrf.mxu0
        %v4265 = vadd.f32 0.0, %v4264
        %4266 = vdwg.mxu0
        %4267 = vrot.lane.b32.xlu0 %v3028, 104
        %v4268 = vpop.permute.xlu0 %4267
        %4269 = vrot.lane.b32.xlu0 %v3029, 104
        %v4270 = vpop.permute.xlu0 %4269
        %4271 = vrot.lane.b32.xlu0 %v3030, 104
        %v4272 = vpop.permute.xlu0 %4271
        %4273 = vrot.lane.b32.xlu0 %v3031, 104
        %v4274 = vpop.permute.xlu0 %4273
        %v4280 = vsel %vm3036, %v2502, 0
        %4282 = vmatpush.bf16.msra.mxu0 0
        %4283 = vmatpush.bf16.msra.mxu0 0
        %4284 = vmatpush.bf16.msra.mxu0 0
        %4285 = vmatpush.bf16.msra.mxu0 0
        %4286 = vmatpush.bf16.msra.mxu0 %v4274
        %4287 = vmatpush.bf16.msra.mxu0 %v4272
        %4288 = vmatpush.bf16.msra.mxu0 %v4270
        %4289 = vmatpush.bf16.msra.mxu0 %v4268
        %4290 = vmatmul.bf16.gmra.mxu0 %v4280
        %v4291 = vpop.f32.mrf.mxu0
        %v4292 = vadd.f32 %v4263, %v4291
        %v4293 = vpop.f32.mrf.mxu0
        %v4294 = vadd.f32 %v4265, %v4293
        %4295 = vdwg.mxu0
        %4298 = vrot.lane.b32.xlu0 %v3464, 8
        %v4299 = vpop.permute.xlu0 %4298
        %4300 = vrot.lane.b32.xlu0 %v3466, 8
        %v4301 = vpop.permute.xlu0 %4300
        %4306 = vrot.lane.b32.xlu0 %v3878, 16
        %v4307 = vpop.permute.xlu0 %4306
        %4308 = vrot.lane.b32.xlu0 %v3880, 16
        %v4309 = vpop.permute.xlu0 %4308
        %4314 = vrot.lane.b32.xlu0 %v4292, 24
        %v4315 = vpop.permute.xlu0 %4314
        %4316 = vrot.lane.b32.xlu0 %v4294, 24
        %v4317 = vpop.permute.xlu0 %4316
        %v4320 = vsel %vm811, %v3050, %v4299
        %v4321 = vsel %vm811, %v3052, %v4301
        %v4322 = vsel %vm2994, %v4320, %v4307
        %v4323 = vsel %vm2994, %v4321, %v4309
        %vm4324 = vcmask 195584
        %v4325 = vsel %vm4324, %v4322, %v4315
        %v4326 = vsel %vm4324, %v4323, %v4317
        %v4327 = vpack.c.bf16 %v4326, %v4325
        %v4328 = vld [vmem:[%s10] sm:$0xf]
        %v4329 = vld [vmem:[%s10 + $0x4] sm:$0xf]
        %v4330 = vld [vmem:[%s10 + $0x8] sm:$0xf]
        %v4331 = vld [vmem:[%s10 + $0xc] sm:$0xf]
        %v4332 = vld [vmem:[%s11] sm:$0x1]
        %v4334 = vperm.slane %v4332, 0
        %v4340 = vunpack.c.l.b16 %v4328
        %v4341 = vunpack.c.l.b16 %v4329
        %v4342 = vunpack.c.l.b16 %v4330
        %v4343 = vunpack.c.l.b16 %v4331
        %v4344 = vpack.c.b16 %v4341, %v4340
        %v4345 = vpack.c.b16 %v4343, %v4342
        %v4349 = vsel %vm759, %v4327, 0
        %4351 = vmatpush.bf16.msra.mxu0 0
        %4352 = vmatpush.bf16.msra.mxu0 0
        %4353 = vmatpush.bf16.msra.mxu0 0
        %4354 = vmatpush.bf16.msra.mxu0 0
        %4355 = vmatpush.bf16.msra.mxu0 0
        %4356 = vmatpush.bf16.msra.mxu0 0
        %4357 = vmatpush.bf16.msra.mxu0 %v4345
        %4358 = vmatpush.bf16.msra.mxu0 %v4344
        %4359 = vmatmul.bf16.gmra.mxu0 %v4349
        %v4360 = vpop.f32.mrf.mxu0
        %v4361 = vadd.f32 %v4334, %v4360
        %v4362 = vpop.f32.mrf.mxu0
        %v4363 = vadd.f32 %v4334, %v4362
        %4364 = vdwg.mxu0
        %4365 = vst.msk [vmem:[%s487] sm:$0xff] %vm759, %v4361
        %4366 = vst.msk [vmem:[%s487 + $0x8] sm:$0xff] %vm759, %v4363
        %s4367 = sand.u32 %s324, 1
        %s4368 = scalar_lea.sflag [#allocation4], %s4367
        %s4369 = sand.u32 %s324, 1
        %s4370 = smul.addr %s4369, 16
        %s4371 = scalar_lea.vmem [#allocation3], %s4370
        // Predicated region
        $region73: #{tpu_custom_call.1} parent=67 // pred_check
          %p4372 = pneg %p334
        $region74: #{tpu_custom_call.1} parent=67 // pred_check_branch
          %4374 = sbr.rel (%p4372) target = $region76
        $region75: #{tpu_custom_call.1} parent=67 // pred_region
          %s4375 = smul.u32 2, %s31
          %4377 = vsyncadd %s4368, 0
          %s4378 = smul.addr %s30, 4
          %s4379 = sadd.s32 %s4375, %s4378
          %s4380 = smul.addr %s4379, 8
          %s4381 = scalar_lea.hbm %s12, %s4380
          %s4382 = sshll.u32 %s4371, 4
          %s4383 = int_to_ptr.vmem [resolvable:$true] %s4382
          %s4384 = sshll.u32 %s4381, 4
          %s4385 = int_to_ptr.hbm [resolvable:$true] %s4384
          %4390 = dma.vmem_to_hbm [thread:$0]  %s4383, 256, %s4385, %s4368, 128, 128, 8
        $region76: #{tpu_custom_call.1} parent=67 // pred_fallthru
          _
      $region68: #{tpu_custom_call.1} parent=5 // pred_fallthru
        _
      %p4391 = scmp.le.s32.totalorder 2, %s21
      // Predicated region
      $region77: #{tpu_custom_call.1} parent=5 // pred_check
        %p4392 = pneg %p4391
      $region78: #{tpu_custom_call.1} parent=5 // pred_check_branch
        %4394 = sbr.rel (%p4392) target = $region80
      $region79: #{tpu_custom_call.1} parent=5 // pred_region
        %s4395 = ssub.s32 %s21, 2
        // Predicated region
        $region81: #{tpu_custom_call.1} parent=79 // pred_check
          %p4396 = pneg %p340
        $region82: #{tpu_custom_call.1} parent=79 // pred_check_branch
          %4398 = sbr.rel (%p4396) target = $region84
        $region83: #{tpu_custom_call.1} parent=79 // pred_region
          %s4399 = sand.u32 %s325, 1
          %s4400 = scalar_lea.sflag [#allocation4], %s4399
          %s4401 = sand.u32 %s325, 1
          %s4402 = smul.addr %s4401, 16
          %s4403 = scalar_lea.vmem [#allocation3], %s4402
          %4405 = dma.done %s4400, 256
        $region84: #{tpu_custom_call.1} parent=79 // pred_fallthru
          _
      $region80: #{tpu_custom_call.1} parent=5 // pred_fallthru
        _
    $region6: #{tpu_custom_call.1} parent=1 // loop_footer
      %s25 = sadd.s32 1, %s21
    $region7: #{tpu_custom_call.1} parent=1 // loop_footer_branch
      %20 = sbr.rel target = $region3
    $region8: #{tpu_custom_call.1} parent=1 // loop_exit
      _
    %4406 = vsyncpa [#allocation4], 1
    %s4407 = scalar_lea.sflag [#allocation4], 1
    %4408 = vsyncpa %s4407, 1

</llo_original>
